<compile_context>
chip_gen: v6e
topology: v6e:2x2x1
jax: 0.10.0
libtpu: 0.0.40
codegen_flags: <defaults>
</compile_context>

<pallas_src>
import functools

import jax
import jax.numpy as jnp
import numpy as np
from jax.experimental import pallas as pl
from jax.experimental.pallas import tpu as pltpu


def discriminator_kernel(x_ref, w1_ref, b1_ref, w2_ref, b2_ref,
                         w3_ref, b3_ref, w4_ref, b4_ref,
                         out_ref, acc_ref):
    k = pl.program_id(0)

    @pl.when(k == 0)
    def _():
        acc_ref[...] = jnp.zeros_like(acc_ref)

    # fc1 partial accumulation over the K (=4096) grid axis.
    # x arrives f32 and is cast to bf16 on the VPU (free under the W1 DMA);
    # bf16 x bf16 MXU matmul with float32 accumulation in VMEM scratch.
    acc_ref[...] += jnp.dot(x_ref[...].astype(jnp.bfloat16), w1_ref[...],
                            preferred_element_type=jnp.float32)

    @pl.when(k == pl.num_programs(0) - 1)
    def _():
        h1 = jnp.maximum(acc_ref[...] + b1_ref[...], 0.0)            # relu(fc1)
        # fc2: bf16 MXU matmul (single-pass on v5e/v6e), f32 accumulation.
        h2 = jnp.dot(h1.astype(jnp.bfloat16), w2_ref[...],
                     preferred_element_type=jnp.float32) + b2_ref[...]
        h2 = jnp.maximum(h2, 0.0)                                    # relu(fc2)
        h3 = jnp.dot(h2, w3_ref[...],
                     preferred_element_type=jnp.float32) + b3_ref[...]
        h3 = jnp.maximum(h3, 0.0)                                    # relu(fc3)
        # fc4: (B,16) x (16,1) -> broadcast-multiply + lane reduce on VPU/XLU
        # (avoids a wasteful tiny MXU pass in the serial epilogue).
        h4 = jnp.sum(h3 * w4_ref[...], axis=-1, keepdims=True) + b4_ref[...]
        out_ref[...] = jax.nn.sigmoid(h4)                            # sigmoid(fc4)


def prepare_params(params_f32):
    """One-time conversion of f32 params into the kernel's storage format.

    W1/W2 are stored bf16 (halves their HBM stream on every forward call);
    W4 (16,1) is reshaped to a (1,16) row for the VPU reduce. Call this ONCE
    and reuse the result -- do NOT re-convert per forward call.
    """
    w1, b1, w2, b2, w3, b3, w4, b4 = params_f32
    return (w1.astype(jnp.bfloat16), b1,
            w2.astype(jnp.bfloat16), b2,
            w3, b3,
            w4.reshape(1, w4.shape[0]), b4)


@functools.partial(jax.jit, static_argnames=("tk",))
def discriminator_forward(x, kernel_params, *, tk=2048):
    """x: (B, 1, 64, 64) float32 (NCHW). kernel_params from prepare_params().
    Returns (B,) float32."""
    B = x.shape[0]
    x2d = x.reshape(B, -1)                    # (B, 4096), x.view(x.size(0), -1)
    K = x2d.shape[1]
    tk = min(tk, K)
    assert K % tk == 0

    w1, b1, w2, b2, w3, b3, w4_row, b4 = kernel_params
    D1, D2, D3, D4 = w1.shape[1], w2.shape[1], w3.shape[1], b4.shape[1]

    # Operands whose block index never changes: fetched once, single-buffered.
    const = dict(pipeline_mode=pl.Buffered(1))

    out = pl.pallas_call(
        discriminator_kernel,
        out_shape=jax.ShapeDtypeStruct((B, D4), jnp.float32),
        grid_spec=pltpu.PrefetchScalarGridSpec(
            num_scalar_prefetch=0,
            grid=(K // tk,),
            in_specs=[
                pl.BlockSpec((B, tk), lambda k: (0, k)),            # x tile (f32)
                pl.BlockSpec((tk, D1), lambda k: (k, 0)),           # W1 tile (bf16)
                pl.BlockSpec((1, D1), lambda k: (0, 0), **const),   # b1
                pl.BlockSpec((D1, D2), lambda k: (0, 0), **const),  # W2 (bf16)
                pl.BlockSpec((1, D2), lambda k: (0, 0), **const),   # b2
                pl.BlockSpec((D2, D3), lambda k: (0, 0), **const),  # W3
                pl.BlockSpec((1, D3), lambda k: (0, 0), **const),   # b3
                pl.BlockSpec((1, D3), lambda k: (0, 0), **const),   # W4 as (1,16) row
                pl.BlockSpec((1, D4), lambda k: (0, 0), **const),   # b4
            ],
            out_specs=pl.BlockSpec((B, D4), lambda k: (0, 0)),
            scratch_shapes=[pltpu.VMEM((B, D1), jnp.float32)],      # fc1 f32 acc
        ),
        # Working set ~8.5 MiB (2 x 4 MiB bf16 W1 buffers + constants + acc):
        # fits the default scoped-VMEM limit on v5e/v6e/v7x, so no explicit
        # vmem_limit_bytes override is needed at tk=2048.
        compiler_params=pltpu.CompilerParams(
            dimension_semantics=("arbitrary",),
        ),
    )(x2d, w1, b1, w2, b2, w3, b3, w4_row, b4)

    return out.reshape(-1)                    # x.flatten()


def init_params(key):
    """Deterministic init mimicking torch.nn.Linear default (uniform +-1/sqrt(fan_in))."""
    dims = [(4096, 1024), (1024, 128), (128, 16), (16, 1)]
    params = []
    for fan_in, fan_out in dims:
        kw, kb, key = jax.random.split(key, 3)
        bound = 1.0 / np.sqrt(fan_in)
        w = jax.random.uniform(kw, (fan_in, fan_out), jnp.float32, -bound, bound)
        b = jax.random.uniform(kb, (1, fan_out), jnp.float32, -bound, bound)
        params += [w, b]
    return tuple(params)


def reference_forward(x, kernel_params):
    """Pure-JAX reference using the same stored-bf16 fc1/fc2 weights as the kernel."""
    w1, b1, w2, b2, w3, b3, w4_row, b4 = kernel_params
    h = x.reshape(x.shape[0], -1)
    h = jnp.dot(h.astype(jnp.bfloat16), w1,
                preferred_element_type=jnp.float32) + b1
    h = jax.nn.relu(h)
    h = jnp.dot(h.astype(jnp.bfloat16), w2,
                preferred_element_type=jnp.float32) + b2
    h = jax.nn.relu(h)
    h = jax.nn.relu(h @ w3 + b3)
    h = jax.nn.sigmoid(jnp.sum(h * w4_row, axis=-1, keepdims=True) + b4)
    return h.reshape(-1)


if __name__ == "__main__":
    key = jax.random.PRNGKey(0)
    kx, kp = jax.random.split(key)
    # fc1 expects 4096 input features -> (B, 1, 64, 64) NCHW input.
    x = jax.random.normal(kx, (2, 1, 64, 64), jnp.float32)

    params_f32 = init_params(kp)
    # One-time weight preparation (bf16 W1/W2, W4 row) -- reused every call.
    kernel_params = prepare_params(params_f32)

    y = jax.block_until_ready(discriminator_forward(x, kernel_params))
    y_ref = jax.block_until_ready(reference_forward(x, kernel_params))
    np.testing.assert_allclose(np.asarray(y), np.asarray(y_ref),
                               rtol=5e-4, atol=5e-4)

    print("KERNEL_OK")
</pallas_src>

<mosaic_0001>
module attributes {stable_mosaic.version = 11 : i64} {
  func.func @discriminator_kernel(%arg0: i32, %arg1: memref<2x2048xf32, #tpu.memory_space<vmem>>, %arg2: memref<2048x1024xbf16, #tpu.memory_space<vmem>>, %arg3: memref<1x1024xf32, #tpu.memory_space<vmem>>, %arg4: memref<1024x128xbf16, #tpu.memory_space<vmem>>, %arg5: memref<1x128xf32, #tpu.memory_space<vmem>>, %arg6: memref<128x16xf32, #tpu.memory_space<vmem>>, %arg7: memref<1x16xf32, #tpu.memory_space<vmem>>, %arg8: memref<1x16xf32, #tpu.memory_space<vmem>>, %arg9: memref<1x1xf32, #tpu.memory_space<vmem>>, %arg10: memref<2x1xf32, #tpu.memory_space<vmem>>, %arg11: memref<2x1024xf32, #tpu.memory_space<vmem>>) attributes {dimension_semantics = [#tpu.dimension_semantics<arbitrary>], iteration_bounds = array<i64: 2>, scalar_prefetch = 0 : i64, scratch_operands = 1 : i64, tpu.core_type = #tpu.core_type<tc>, window_params = [{transform_indices = @transform_0, window_bounds = array<i64: 2, 2048>}, {transform_indices = @transform_1, window_bounds = array<i64: 2048, 1024>}, {pipeline_mode = #tpu.pipeline_mode<synchronous>, transform_indices = @transform_2, window_bounds = array<i64: 1, 1024>}, {pipeline_mode = #tpu.pipeline_mode<synchronous>, transform_indices = @transform_3, window_bounds = array<i64: 1024, 128>}, {pipeline_mode = #tpu.pipeline_mode<synchronous>, transform_indices = @transform_4, window_bounds = array<i64: 1, 128>}, {pipeline_mode = #tpu.pipeline_mode<synchronous>, transform_indices = @transform_5, window_bounds = array<i64: 128, 16>}, {pipeline_mode = #tpu.pipeline_mode<synchronous>, transform_indices = @transform_6, window_bounds = array<i64: 1, 16>}, {pipeline_mode = #tpu.pipeline_mode<synchronous>, transform_indices = @transform_7, window_bounds = array<i64: 1, 16>}, {pipeline_mode = #tpu.pipeline_mode<synchronous>, transform_indices = @transform_8, window_bounds = array<i64: 1, 1>}, {pipeline_mode = #tpu.pipeline_mode<synchronous>, transform_indices = @transform_9, window_bounds = array<i64: 2, 1>}]} {
    %c0_i32 = arith.constant 0 : i32
    %0 = arith.cmpi eq, %arg0, %c0_i32 : i32
    %1 = arith.extui %0 : i1 to i32
    %c0_i32_0 = arith.constant 0 : i32
    %2 = arith.cmpi ne, %1, %c0_i32_0 : i32
    scf.if %2 {
      %cst_9 = arith.constant 0.000000e+00 : f32
      %13 = vector.broadcast %cst_9 : f32 to vector<2x1024xf32>
      %c0_10 = arith.constant 0 : index
      %c0_11 = arith.constant 0 : index
      %14 = vector.load %arg11[%c0_10, %c0_11] : memref<2x1024xf32, #tpu.memory_space<vmem>>, vector<2x1024xf32>
      tpu.vector_store %arg11[%c0_10, %c0_11], %13 {strides = array<i32>} : memref<2x1024xf32, #tpu.memory_space<vmem>>, vector<2x1024xf32>,
    } else {
    }
    %c0 = arith.constant 0 : index
    %c0_1 = arith.constant 0 : index
    %3 = vector.load %arg11[%c0, %c0_1] : memref<2x1024xf32, #tpu.memory_space<vmem>>, vector<2x1024xf32>
    %c0_2 = arith.constant 0 : index
    %c0_3 = arith.constant 0 : index
    %4 = vector.load %arg1[%c0_2, %c0_3] : memref<2x2048xf32, #tpu.memory_space<vmem>>, vector<2x2048xf32>
    %5 = arith.truncf %4 : vector<2x2048xf32> to vector<2x2048xbf16>
    %c0_4 = arith.constant 0 : index
    %c0_5 = arith.constant 0 : index
    %6 = vector.load %arg2[%c0_4, %c0_5] : memref<2048x1024xbf16, #tpu.memory_space<vmem>>, vector<2048x1024xbf16>
    %cst = arith.constant dense<0.000000e+00> : vector<2x1024xf32>
    %7 = tpu.matmul %5, %6, %cst {dimension_numbers = #tpu.dot_dimension_numbers<[1], [0], [0], [1], [0, 0, 1, 1], [], []>} : vector<2x2048xbf16>, vector<2048x1024xbf16>, vector<2x1024xf32> -> vector<2x1024xf32>
    %8 = arith.addf %3, %7 : vector<2x1024xf32>
    %c0_6 = arith.constant 0 : index
    %c0_7 = arith.constant 0 : index
    %9 = vector.load %arg11[%c0_6, %c0_7] : memref<2x1024xf32, #tpu.memory_space<vmem>>, vector<2x1024xf32>
    tpu.vector_store %arg11[%c0_6, %c0_7], %8 {strides = array<i32>} : memref<2x1024xf32, #tpu.memory_space<vmem>>, vector<2x1024xf32>,
    %c1_i32 = arith.constant 1 : i32
    %10 = arith.cmpi eq, %arg0, %c1_i32 : i32
    %11 = arith.extui %10 : i1 to i32
    %c0_i32_8 = arith.constant 0 : i32
    %12 = arith.cmpi ne, %11, %c0_i32_8 : i32
    scf.if %12 {
      %c0_9 = arith.constant 0 : index
      %c0_10 = arith.constant 0 : index
      %13 = vector.load %arg11[%c0_9, %c0_10] : memref<2x1024xf32, #tpu.memory_space<vmem>>, vector<2x1024xf32>
      %c0_11 = arith.constant 0 : index
      %c0_12 = arith.constant 0 : index
      %14 = vector.load %arg3[%c0_11, %c0_12] : memref<1x1024xf32, #tpu.memory_space<vmem>>, vector<1x1024xf32>
      %15 = vector.broadcast %14 : vector<1x1024xf32> to vector<2x1024xf32>
      %16 = arith.addf %13, %15 : vector<2x1024xf32>
      %cst_13 = arith.constant 0.000000e+00 : f32
      %17 = vector.broadcast %cst_13 : f32 to vector<2x1024xf32>
      %18 = arith.maximumf %16, %17 : vector<2x1024xf32>
      %19 = arith.truncf %18 : vector<2x1024xf32> to vector<2x1024xbf16>
      %c0_14 = arith.constant 0 : index
      %c0_15 = arith.constant 0 : index
      %20 = vector.load %arg4[%c0_14, %c0_15] : memref<1024x128xbf16, #tpu.memory_space<vmem>>, vector<1024x128xbf16>
      %cst_16 = arith.constant dense<0.000000e+00> : vector<2x128xf32>
      %21 = tpu.matmul %19, %20, %cst_16 {dimension_numbers = #tpu.dot_dimension_numbers<[1], [0], [0], [1], [0, 0, 1, 1], [], []>} : vector<2x1024xbf16>, vector<1024x128xbf16>, vector<2x128xf32> -> vector<2x128xf32>
      %c0_17 = arith.constant 0 : index
      %c0_18 = arith.constant 0 : index
      %22 = vector.load %arg5[%c0_17, %c0_18] : memref<1x128xf32, #tpu.memory_space<vmem>>, vector<1x128xf32>
      %23 = vector.broadcast %22 : vector<1x128xf32> to vector<2x128xf32>
      %24 = arith.addf %21, %23 : vector<2x128xf32>
      %cst_19 = arith.constant 0.000000e+00 : f32
      %25 = vector.broadcast %cst_19 : f32 to vector<2x128xf32>
      %26 = arith.maximumf %24, %25 : vector<2x128xf32>
      %c0_20 = arith.constant 0 : index
      %c0_21 = arith.constant 0 : index
      %27 = vector.load %arg6[%c0_20, %c0_21] : memref<128x16xf32, #tpu.memory_space<vmem>>, vector<128x16xf32>
      %cst_22 = arith.constant dense<0.000000e+00> : vector<2x16xf32>
      %28 = tpu.matmul %26, %27, %cst_22 {dimension_numbers = #tpu.dot_dimension_numbers<[1], [0], [0], [1], [0, 0, 1, 1], [], []>} : vector<2x128xf32>, vector<128x16xf32>, vector<2x16xf32> -> vector<2x16xf32>
      %c0_23 = arith.constant 0 : index
      %c0_24 = arith.constant 0 : index
      %29 = vector.load %arg7[%c0_23, %c0_24] : memref<1x16xf32, #tpu.memory_space<vmem>>, vector<1x16xf32>
      %30 = vector.broadcast %29 : vector<1x16xf32> to vector<2x16xf32>
      %31 = arith.addf %28, %30 : vector<2x16xf32>
      %cst_25 = arith.constant 0.000000e+00 : f32
      %32 = vector.broadcast %cst_25 : f32 to vector<2x16xf32>
      %33 = arith.maximumf %31, %32 : vector<2x16xf32>
      %c0_26 = arith.constant 0 : index
      %c0_27 = arith.constant 0 : index
      %34 = vector.load %arg8[%c0_26, %c0_27] : memref<1x16xf32, #tpu.memory_space<vmem>>, vector<1x16xf32>
      %35 = vector.broadcast %34 : vector<1x16xf32> to vector<2x16xf32>
      %36 = arith.mulf %33, %35 : vector<2x16xf32>
      %cst_28 = arith.constant dense<0.000000e+00> : vector<2xf32>
      %37 = vector.multi_reduction <add>, %36, %cst_28 [1] : vector<2x16xf32> to vector<2xf32>
      %38 = vector.shape_cast %37 : vector<2xf32> to vector<2x1xf32>
      %c0_29 = arith.constant 0 : index
      %c0_30 = arith.constant 0 : index
      %39 = vector.load %arg9[%c0_29, %c0_30] : memref<1x1xf32, #tpu.memory_space<vmem>>, vector<1x1xf32>
      %40 = vector.broadcast %39 : vector<1x1xf32> to vector<2x1xf32>
      %41 = arith.addf %38, %40 : vector<2x1xf32>
      %42 = arith.negf %41 : vector<2x1xf32>
      %43 = math.exp %42 : vector<2x1xf32>
      %cst_31 = arith.constant 1.000000e+00 : f32
      %44 = vector.broadcast %cst_31 : f32 to vector<2x1xf32>
      %45 = arith.addf %44, %43 : vector<2x1xf32>
      %46 = arith.divf %44, %45 : vector<2x1xf32>
      %c0_32 = arith.constant 0 : index
      %c0_33 = arith.constant 0 : index
      %47 = vector.load %arg10[%c0_32, %c0_33] : memref<2x1xf32, #tpu.memory_space<vmem>>, vector<2x1xf32>
      tpu.vector_store %arg10[%c0_32, %c0_33], %46 {strides = array<i32>} : memref<2x1xf32, #tpu.memory_space<vmem>>, vector<2x1xf32>,
    } else {
    }
    return
  }
  func.func @transform_0(%arg0: i32) -> (i32, i32) {
    %c0_i32 = arith.constant 0 : i32
    %c0_i32_0 = arith.constant 0 : i32
    return %c0_i32, %arg0 : i32, i32
  }
  func.func @transform_1(%arg0: i32) -> (i32, i32) {
    %c0_i32 = arith.constant 0 : i32
    %c0_i32_0 = arith.constant 0 : i32
    return %arg0, %c0_i32 : i32, i32
  }
  func.func @transform_2(%arg0: i32) -> (i32, i32) {
    %c0_i32 = arith.constant 0 : i32
    %c0_i32_0 = arith.constant 0 : i32
    %c0_i32_1 = arith.constant 0 : i32
    return %c0_i32, %c0_i32_0 : i32, i32
  }
  func.func @transform_3(%arg0: i32) -> (i32, i32) {
    %c0_i32 = arith.constant 0 : i32
    %c0_i32_0 = arith.constant 0 : i32
    %c0_i32_1 = arith.constant 0 : i32
    return %c0_i32, %c0_i32_0 : i32, i32
  }
  func.func @transform_4(%arg0: i32) -> (i32, i32) {
    %c0_i32 = arith.constant 0 : i32
    %c0_i32_0 = arith.constant 0 : i32
    %c0_i32_1 = arith.constant 0 : i32
    return %c0_i32, %c0_i32_0 : i32, i32
  }
  func.func @transform_5(%arg0: i32) -> (i32, i32) {
    %c0_i32 = arith.constant 0 : i32
    %c0_i32_0 = arith.constant 0 : i32
    %c0_i32_1 = arith.constant 0 : i32
    return %c0_i32, %c0_i32_0 : i32, i32
  }
  func.func @transform_6(%arg0: i32) -> (i32, i32) {
    %c0_i32 = arith.constant 0 : i32
    %c0_i32_0 = arith.constant 0 : i32
    %c0_i32_1 = arith.constant 0 : i32
    return %c0_i32, %c0_i32_0 : i32, i32
  }
  func.func @transform_7(%arg0: i32) -> (i32, i32) {
    %c0_i32 = arith.constant 0 : i32
    %c0_i32_0 = arith.constant 0 : i32
    %c0_i32_1 = arith.constant 0 : i32
    return %c0_i32, %c0_i32_0 : i32, i32
  }
  func.func @transform_8(%arg0: i32) -> (i32, i32) {
    %c0_i32 = arith.constant 0 : i32
    %c0_i32_0 = arith.constant 0 : i32
    %c0_i32_1 = arith.constant 0 : i32
    return %c0_i32, %c0_i32_0 : i32, i32
  }
  func.func @transform_9(%arg0: i32) -> (i32, i32) {
    %c0_i32 = arith.constant 0 : i32
    %c0_i32_0 = arith.constant 0 : i32
    %c0_i32_1 = arith.constant 0 : i32
    return %c0_i32, %c0_i32_0 : i32, i32
  }
}

</mosaic_0001>

<llo_original>
// kernel: discriminator_forward.1
$region0: #{discriminator_forward.1}
  #allocation0 [shape = 'u32[]', space=smem, size = 0x4, offset = 0x4, fixed_abs, tag = 'smem constant byte address 0x4 - core index']
  #allocation1 [shape = 'u32[144,128]{1,0:T(1,128)}', space=vmem, size = 0x12000, scoped, tag = 'internal scratch']
  #allocation2 [shape = 'f32[2,1024]{1,0:T(2,128)}', space=vmem, size = 0x2000, scoped, tag = 'scratch operand']
  #allocation3 [shape = 'f32[1,1]{1,0:T(1,128)S(1)}', space=vmem, size = 0x200, scoped, tag = 'scoped memory for discriminator_forward.1']
  %s0 = inlined_call_operand.vmem [shape: f32[2,4096], index: 0, kind: input, shape index: {}]
  %s1 = inlined_call_operand.hbm [shape: bf16[4096,1024], index: 1, kind: input, shape index: {}]
  %s2 = inlined_call_operand.hbm [shape: f32[1,1024], index: 2, kind: input, shape index: {}]
  %s3 = inlined_call_operand.hbm [shape: bf16[1024,128], index: 3, kind: input, shape index: {}]
  %s4 = inlined_call_operand.hbm [shape: f32[1,128], index: 4, kind: input, shape index: {}]
  %s5 = inlined_call_operand.vmem [shape: f32[128,16], index: 5, kind: input, shape index: {}]
  %s6 = inlined_call_operand.hbm [shape: f32[1,16], index: 6, kind: input, shape index: {}]
  %s7 = inlined_call_operand.hbm [shape: f32[1,16], index: 7, kind: input, shape index: {}]
  %s8 = inlined_call_operand.<no memory space> [shape: f32[1,1], index: 8, kind: input, shape index: {}]
  %s9 = inlined_call_operand.vmem [shape: f32[2,1], index: 9, kind: output, shape index: {}]
  %s10 = sld [smem:[#allocation0]]
  $region101: #{discriminator_forward.1} parent=0
    _
  %s12 = ssub.s32 1, %s10
  %s13 = scalar_select 0, %s12, %s10
  %v14 = vstv %s8
  %15 = vst [vmem:[#allocation3] sm:$0x1] %v14
  $region1: #{discriminator_forward.1} parent=0
    #allocation4 [shape = 'u8[8388608]{0}', space=vmem, size = 0x800000, scoped, tag = 'input window, operand 1']
    #allocation5 [shape = 's32[2]{0}', space=sflag, size = 0x8, scoped, tag = 'scoped memory for discriminator_forward.1']
    #allocation6 [shape = 'u8[4096]{0}', space=vmem, size = 0x1000, scoped, tag = 'input window, operand 2, single buffered']
    #allocation7 [shape = 's32[1]{0}', space=sflag, size = 0x4, scoped, tag = 'scoped memory for discriminator_forward.1']
    #allocation8 [shape = 'u8[262144]{0}', space=vmem, size = 0x40000, scoped, tag = 'input window, operand 3, single buffered']
    #allocation9 [shape = 'u8[512]{0}', space=vmem, size = 0x400, scoped, tag = 'input window, operand 4, single buffered']
    #allocation10 [shape = 's32[1]{0}', space=sflag, size = 0x4, scoped, tag = 'scoped memory for discriminator_forward.1']
    #allocation11 [shape = 'u8[512]{0}', space=vmem, size = 0x400, scoped, tag = 'input window, operand 6, single buffered']
    #allocation12 [shape = 'u8[512]{0}', space=vmem, size = 0x400, scoped, tag = 'input window, operand 7, single buffered']
    #allocation13 [shape = 's32[1]{0}', space=sflag, size = 0x4, scoped, tag = 'scoped memory for discriminator_forward.1']
    %16 = vsyncpa [#allocation5], 0
    %s17 = scalar_lea.sflag [#allocation5], 1
    %18 = vsyncpa %s17, 0
    %19 = vsyncpa [#allocation7], 0
    %20 = vsyncpa [#allocation10], 0
    %21 = vsyncpa [#allocation13], 0
    loop: start=0, step=1, limit=4
    $region2: #{discriminator_forward.1} parent=1 // loop_pre_header
      _
    $region3: #{discriminator_forward.1} parent=1 // loop_header
      %s23 = sphi 0, %s27
      %p24 = scmp.ge.s32.totalorder %s23, 4
      %s33 = sphi 0, %s35
      %s36 = sphi 0, %s33
      %s37 = sphi 0, %s36
      %s53 = sphi 0, %s37
      %s59 = sphi 0, %s61
      %s62 = sphi 0, %s59
      %s63 = sphi 0, %s62
      %s79 = sphi 0, %s63
      %s83 = sphi 0, %s83
      %s85 = sphi 0, %s83
      %s86 = sphi 0, %s85
      %s100 = sphi 0, %s86
      %s104 = sphi 0, %s104
      %s106 = sphi 0, %s104
      %s107 = sphi 0, %s106
      %s121 = sphi 0, %s107
      %s125 = sphi 0, %s125
      %s127 = sphi 0, %s125
      %s128 = sphi 0, %s127
      %s142 = sphi 0, %s128
      %s146 = sphi 0, %s146
      %s148 = sphi 0, %s146
      %s149 = sphi 0, %s148
      %s163 = sphi 0, %s149
      %s167 = sphi 0, %s167
      %s169 = sphi 0, %s167
      %s170 = sphi 0, %s169
      %s184 = sphi 0, %s170
      %s188 = sphi 0, %s188
      %s190 = sphi 0, %s188
      %s191 = sphi 0, %s190
      %s205 = sphi 0, %s191
      %s209 = sphi 0, %s209
      %s211 = sphi 0, %s209
      %s212 = sphi 0, %s211
      %s226 = sphi 0, %s212
      %s230 = sphi 0, %s230
      %s232 = sphi 0, %s230
      %s233 = sphi 0, %s232
      %s247 = sphi 0, %s233
    $region4: #{discriminator_forward.1} parent=1 // loop_header_branch
      %26 = sbr.rel (%p24) target = $region8
    $region5: #{discriminator_forward.1} parent=1 // loop_body
      %s28 = ssub.s32 %s23, 1
      %s29 = ssub.s32 %s23, 2
      %s30 = sadd.s32 %s23, 1
      %s31 = ssub.s32 %s23, %s30
      %p32 = scmp.eq.s32.totalorder %s31, 0
      %s34 = sadd.s32 %s33, 1
      %s35 = scalar_select %p32, %s33, %s34
      %p38 = pneg %p32
      %p39 = scmp.eq.s32.totalorder %s23, 1
      %p40 = por %p38, %p39
      %p41 = scmp.ne.s32.totalorder %s33, %s36
      %p42 = scmp.eq.s32.totalorder %s23, 0
      %p43 = por %p41, %p42
      %p44 = scmp.ne.s32.totalorder %s33, %s36
      %p45 = scmp.eq.s32.totalorder %s28, 1
      %p46 = por %p44, %p45
      %p47 = scmp.ne.s32.totalorder %s36, %s37
      %p48 = scmp.eq.s32.totalorder %s28, 0
      %p49 = por %p47, %p48
      %p50 = scmp.ne.s32.totalorder %s36, %s37
      %p51 = scmp.eq.s32.totalorder %s29, 1
      %p52 = por %p50, %p51
      %p54 = scmp.ne.s32.totalorder %s37, %s53
      %p55 = scmp.eq.s32.totalorder %s29, 0
      %p56 = por %p54, %p55
      %s57 = ssub.s32 %s23, %s30
      %p58 = scmp.eq.s32.totalorder %s57, 0
      %s60 = sadd.s32 %s59, 1
      %s61 = scalar_select %p58, %s59, %s60
      %p64 = pneg %p58
      %p65 = scmp.eq.s32.totalorder %s23, 1
      %p66 = por %p64, %p65
      %p67 = scmp.ne.s32.totalorder %s59, %s62
      %p68 = scmp.eq.s32.totalorder %s23, 0
      %p69 = por %p67, %p68
      %p70 = scmp.ne.s32.totalorder %s59, %s62
      %p71 = scmp.eq.s32.totalorder %s28, 1
      %p72 = por %p70, %p71
      %p73 = scmp.ne.s32.totalorder %s62, %s63
      %p74 = scmp.eq.s32.totalorder %s28, 0
      %p75 = por %p73, %p74
      %p76 = scmp.ne.s32.totalorder %s62, %s63
      %p77 = scmp.eq.s32.totalorder %s29, 1
      %p78 = por %p76, %p77
      %p80 = scmp.ne.s32.totalorder %s63, %s79
      %p81 = scmp.eq.s32.totalorder %s29, 0
      %p82 = por %p80, %p81
      %s84 = sadd.s32 %s83, 1
      %p87 = scmp.eq.s32.totalorder %s23, 1
      %p88 = scmp.ne.s32.totalorder %s83, %s85
      %p89 = scmp.eq.s32.totalorder %s23, 0
      %p90 = por %p88, %p89
      %p91 = scmp.ne.s32.totalorder %s83, %s85
      %p92 = scmp.eq.s32.totalorder %s28, 1
      %p93 = por %p91, %p92
      %p94 = scmp.ne.s32.totalorder %s85, %s86
      %p95 = scmp.eq.s32.totalorder %s28, 0
      %p96 = por %p94, %p95
      %p97 = scmp.ne.s32.totalorder %s85, %s86
      %p98 = scmp.eq.s32.totalorder %s29, 1
      %p99 = por %p97, %p98
      %p101 = scmp.ne.s32.totalorder %s86, %s100
      %p102 = scmp.eq.s32.totalorder %s29, 0
      %p103 = por %p101, %p102
      %s105 = sadd.s32 %s104, 1
      %p108 = scmp.eq.s32.totalorder %s23, 1
      %p109 = scmp.ne.s32.totalorder %s104, %s106
      %p110 = scmp.eq.s32.totalorder %s23, 0
      %p111 = por %p109, %p110
      %p112 = scmp.ne.s32.totalorder %s104, %s106
      %p113 = scmp.eq.s32.totalorder %s28, 1
      %p114 = por %p112, %p113
      %p115 = scmp.ne.s32.totalorder %s106, %s107
      %p116 = scmp.eq.s32.totalorder %s28, 0
      %p117 = por %p115, %p116
      %p118 = scmp.ne.s32.totalorder %s106, %s107
      %p119 = scmp.eq.s32.totalorder %s29, 1
      %p120 = por %p118, %p119
      %p122 = scmp.ne.s32.totalorder %s107, %s121
      %p123 = scmp.eq.s32.totalorder %s29, 0
      %p124 = por %p122, %p123
      %s126 = sadd.s32 %s125, 1
      %p129 = scmp.eq.s32.totalorder %s23, 1
      %p130 = scmp.ne.s32.totalorder %s125, %s127
      %p131 = scmp.eq.s32.totalorder %s23, 0
      %p132 = por %p130, %p131
      %p133 = scmp.ne.s32.totalorder %s125, %s127
      %p134 = scmp.eq.s32.totalorder %s28, 1
      %p135 = por %p133, %p134
      %p136 = scmp.ne.s32.totalorder %s127, %s128
      %p137 = scmp.eq.s32.totalorder %s28, 0
      %p138 = por %p136, %p137
      %p139 = scmp.ne.s32.totalorder %s127, %s128
      %p140 = scmp.eq.s32.totalorder %s29, 1
      %p141 = por %p139, %p140
      %p143 = scmp.ne.s32.totalorder %s128, %s142
      %p144 = scmp.eq.s32.totalorder %s29, 0
      %p145 = por %p143, %p144
      %s147 = sadd.s32 %s146, 1
      %p150 = scmp.eq.s32.totalorder %s23, 1
      %p151 = scmp.ne.s32.totalorder %s146, %s148
      %p152 = scmp.eq.s32.totalorder %s23, 0
      %p153 = por %p151, %p152
      %p154 = scmp.ne.s32.totalorder %s146, %s148
      %p155 = scmp.eq.s32.totalorder %s28, 1
      %p156 = por %p154, %p155
      %p157 = scmp.ne.s32.totalorder %s148, %s149
      %p158 = scmp.eq.s32.totalorder %s28, 0
      %p159 = por %p157, %p158
      %p160 = scmp.ne.s32.totalorder %s148, %s149
      %p161 = scmp.eq.s32.totalorder %s29, 1
      %p162 = por %p160, %p161
      %p164 = scmp.ne.s32.totalorder %s149, %s163
      %p165 = scmp.eq.s32.totalorder %s29, 0
      %p166 = por %p164, %p165
      %s168 = sadd.s32 %s167, 1
      %p171 = scmp.eq.s32.totalorder %s23, 1
      %p172 = scmp.ne.s32.totalorder %s167, %s169
      %p173 = scmp.eq.s32.totalorder %s23, 0
      %p174 = por %p172, %p173
      %p175 = scmp.ne.s32.totalorder %s167, %s169
      %p176 = scmp.eq.s32.totalorder %s28, 1
      %p177 = por %p175, %p176
      %p178 = scmp.ne.s32.totalorder %s169, %s170
      %p179 = scmp.eq.s32.totalorder %s28, 0
      %p180 = por %p178, %p179
      %p181 = scmp.ne.s32.totalorder %s169, %s170
      %p182 = scmp.eq.s32.totalorder %s29, 1
      %p183 = por %p181, %p182
      %p185 = scmp.ne.s32.totalorder %s170, %s184
      %p186 = scmp.eq.s32.totalorder %s29, 0
      %p187 = por %p185, %p186
      %s189 = sadd.s32 %s188, 1
      %p192 = scmp.eq.s32.totalorder %s23, 1
      %p193 = scmp.ne.s32.totalorder %s188, %s190
      %p194 = scmp.eq.s32.totalorder %s23, 0
      %p195 = por %p193, %p194
      %p196 = scmp.ne.s32.totalorder %s188, %s190
      %p197 = scmp.eq.s32.totalorder %s28, 1
      %p198 = por %p196, %p197
      %p199 = scmp.ne.s32.totalorder %s190, %s191
      %p200 = scmp.eq.s32.totalorder %s28, 0
      %p201 = por %p199, %p200
      %p202 = scmp.ne.s32.totalorder %s190, %s191
      %p203 = scmp.eq.s32.totalorder %s29, 1
      %p204 = por %p202, %p203
      %p206 = scmp.ne.s32.totalorder %s191, %s205
      %p207 = scmp.eq.s32.totalorder %s29, 0
      %p208 = por %p206, %p207
      %s210 = sadd.s32 %s209, 1
      %p213 = scmp.eq.s32.totalorder %s23, 1
      %p214 = scmp.ne.s32.totalorder %s209, %s211
      %p215 = scmp.eq.s32.totalorder %s23, 0
      %p216 = por %p214, %p215
      %p217 = scmp.ne.s32.totalorder %s209, %s211
      %p218 = scmp.eq.s32.totalorder %s28, 1
      %p219 = por %p217, %p218
      %p220 = scmp.ne.s32.totalorder %s211, %s212
      %p221 = scmp.eq.s32.totalorder %s28, 0
      %p222 = por %p220, %p221
      %p223 = scmp.ne.s32.totalorder %s211, %s212
      %p224 = scmp.eq.s32.totalorder %s29, 1
      %p225 = por %p223, %p224
      %p227 = scmp.ne.s32.totalorder %s212, %s226
      %p228 = scmp.eq.s32.totalorder %s29, 0
      %p229 = por %p227, %p228
      %s231 = sadd.s32 %s230, 1
      %p234 = scmp.eq.s32.totalorder %s23, 1
      %p235 = scmp.ne.s32.totalorder %s230, %s232
      %p236 = scmp.eq.s32.totalorder %s23, 0
      %p237 = por %p235, %p236
      %p238 = scmp.ne.s32.totalorder %s230, %s232
      %p239 = scmp.eq.s32.totalorder %s28, 1
      %p240 = por %p238, %p239
      %p241 = scmp.ne.s32.totalorder %s232, %s233
      %p242 = scmp.eq.s32.totalorder %s28, 0
      %p243 = por %p241, %p242
      %p244 = scmp.ne.s32.totalorder %s232, %s233
      %p245 = scmp.eq.s32.totalorder %s29, 1
      %p246 = por %p244, %p245
      %p248 = scmp.ne.s32.totalorder %s233, %s247
      %p249 = scmp.eq.s32.totalorder %s29, 0
      %p250 = por %p248, %p249
      %p251 = scmp.le.s32.totalorder 1, %s23
      %p252 = scmp.lt.s32.totalorder %s23, 3
      %p253 = pnand %p251, %p252
      %p254 = pneg %p253
      // Predicated region
      $region9: #{discriminator_forward.1} parent=5 // pred_check
        _
      $region10: #{discriminator_forward.1} parent=5 // pred_check_branch
        %256 = sbr.rel (%p253) target = $region12
      $region11: #{discriminator_forward.1} parent=5 // pred_region
        %s257 = ssub.s32 %s23, 1
        // Predicated region
        $region13: #{discriminator_forward.1} parent=11 // pred_check
          %p258 = pneg %p96
        $region14: #{discriminator_forward.1} parent=11 // pred_check_branch
          %260 = sbr.rel (%p258) target = $region16
        $region15: #{discriminator_forward.1} parent=11 // pred_region
          %s262 = ssub.s32 128, 128
          %263 = vsyncadd [#allocation7], %s262
          %s265 = sshll.u32 [#allocation6], 4
          %s266 = int_to_ptr.vmem [resolvable:$true] %s265
          %268 = dma.hbm_to_vmem [thread:$0]  %s2, 128, %s266, [#allocation7]
        $region16: #{discriminator_forward.1} parent=11 // pred_fallthru
          _
        // Predicated region
        $region17: #{discriminator_forward.1} parent=11 // pred_check
          %p269 = pneg %p117
        $region18: #{discriminator_forward.1} parent=11 // pred_check_branch
          %271 = sbr.rel (%p269) target = $region20
        $region19: #{discriminator_forward.1} parent=11 // pred_region
          %s273 = ssub.s32 8192, 8192
          %274 = vsyncadd [#allocation7], %s273
          %s275 = sshll.u32 [#allocation8], 4
          %s276 = int_to_ptr.vmem [resolvable:$true] %s275
          %281 = dma.hbm_to_vmem [thread:$0]  %s3, 8192, %s276, [#allocation7], 64, 64, 4
        $region20: #{discriminator_forward.1} parent=11 // pred_fallthru
          _
        // Predicated region
        $region21: #{discriminator_forward.1} parent=11 // pred_check
          %p282 = pneg %p138
        $region22: #{discriminator_forward.1} parent=11 // pred_check_branch
          %284 = sbr.rel (%p282) target = $region24
        $region23: #{discriminator_forward.1} parent=11 // pred_region
          %s286 = ssub.s32 16, 16
          %287 = vsyncadd [#allocation10], %s286
          %s289 = sshll.u32 [#allocation9], 4
          %s290 = int_to_ptr.vmem [resolvable:$true] %s289
          %292 = dma.hbm_to_vmem [thread:$0]  %s4, 16, %s290, [#allocation10]
        $region24: #{discriminator_forward.1} parent=11 // pred_fallthru
          _
        // Predicated region
        $region25: #{discriminator_forward.1} parent=11 // pred_check
          %p293 = pneg %p159
        $region26: #{discriminator_forward.1} parent=11 // pred_check_branch
          %295 = sbr.rel (%p293) target = $region28
        $region27: #{discriminator_forward.1} parent=11 // pred_region
          _
        $region28: #{discriminator_forward.1} parent=11 // pred_fallthru
          _
        // Predicated region
        $region29: #{discriminator_forward.1} parent=11 // pred_check
          %p296 = pneg %p180
        $region30: #{discriminator_forward.1} parent=11 // pred_check_branch
          %298 = sbr.rel (%p296) target = $region32
        $region31: #{discriminator_forward.1} parent=11 // pred_region
          %s300 = ssub.s32 16, 16
          %301 = vsyncadd [#allocation10], %s300
          %s303 = sshll.u32 [#allocation11], 4
          %s304 = int_to_ptr.vmem [resolvable:$true] %s303
          %306 = dma.hbm_to_vmem [thread:$0]  %s6, 16, %s304, [#allocation10]
        $region32: #{discriminator_forward.1} parent=11 // pred_fallthru
          _
        // Predicated region
        $region33: #{discriminator_forward.1} parent=11 // pred_check
          %p307 = pneg %p201
        $region34: #{discriminator_forward.1} parent=11 // pred_check_branch
          %309 = sbr.rel (%p307) target = $region36
        $region35: #{discriminator_forward.1} parent=11 // pred_region
          %s311 = ssub.s32 16, 16
          %312 = vsyncadd [#allocation13], %s311
          %s314 = sshll.u32 [#allocation12], 4
          %s315 = int_to_ptr.vmem [resolvable:$true] %s314
          %317 = dma.hbm_to_vmem [thread:$0]  %s7, 16, %s315, [#allocation13]
        $region36: #{discriminator_forward.1} parent=11 // pred_fallthru
          _
        // Predicated region
        $region37: #{discriminator_forward.1} parent=11 // pred_check
          %p318 = pneg %p222
        $region38: #{discriminator_forward.1} parent=11 // pred_check_branch
          %320 = sbr.rel (%p318) target = $region40
        $region39: #{discriminator_forward.1} parent=11 // pred_region
          _
        $region40: #{discriminator_forward.1} parent=11 // pred_fallthru
          _
      $region12: #{discriminator_forward.1} parent=5 // pred_fallthru
        _
      %p321 = scmp.lt.s32.totalorder %s23, 2
      // Predicated region
      $region41: #{discriminator_forward.1} parent=5 // pred_check
        %p322 = pneg %p321
      $region42: #{discriminator_forward.1} parent=5 // pred_check_branch
        %324 = sbr.rel (%p322) target = $region44
      $region43: #{discriminator_forward.1} parent=5 // pred_region
        // Predicated region
        $region45: #{discriminator_forward.1} parent=43 // pred_check
          %p325 = pneg %p43
        $region46: #{discriminator_forward.1} parent=43 // pred_check_branch
          %327 = sbr.rel (%p325) target = $region48
        $region47: #{discriminator_forward.1} parent=43 // pred_region
          %s328 = smul.u32 16, %s23
          %p329 = scmp.lt.s32.totalorder %s328, 31
          %s330 = scalar_select %p329, %s328, 31
          %s331 = smul.addr %s330, 2
          %s332 = scalar_lea.vmem %s0, %s331
          %s333 = smul.u32 16, %s23
        $region48: #{discriminator_forward.1} parent=43 // pred_fallthru
          _
        // Predicated region
        $region49: #{discriminator_forward.1} parent=43 // pred_check
          %p334 = pneg %p69
        $region50: #{discriminator_forward.1} parent=43 // pred_check_branch
          %336 = sbr.rel (%p334) target = $region52
        $region51: #{discriminator_forward.1} parent=43 // pred_region
          %s337 = sand.u32 %s59, 1
          %s338 = scalar_lea.sflag [#allocation5], %s337
          %s339 = sand.u32 %s59, 1
          %s340 = smul.addr %s339, 8192
          %s341 = scalar_lea.vmem [#allocation4], %s340
          %s342 = smul.u32 256, %s23
          %s344 = ssub.s32 131072, 131072
          %345 = vsyncadd %s338, %s344
          %s346 = smul.addr %s342, 8
          %s347 = smul.addr %s346, 64
          %s348 = scalar_lea.hbm %s1, %s347
          %s349 = sshll.u32 %s341, 4
          %s350 = int_to_ptr.vmem [resolvable:$true] %s349
          %355 = dma.hbm_to_vmem [thread:$0]  %s348, 131072, %s350, %s338, 512, 512, 32
        $region52: #{discriminator_forward.1} parent=43 // pred_fallthru
          _
      $region44: #{discriminator_forward.1} parent=5 // pred_fallthru
        _
      %p356 = scmp.le.s32.totalorder 1, %s23
      %p357 = scmp.lt.s32.totalorder %s23, 3
      %p358 = pnand %p356, %p357
      %p359 = pneg %p358
      // Predicated region
      $region53: #{discriminator_forward.1} parent=5 // pred_check
        _
      $region54: #{discriminator_forward.1} parent=5 // pred_check_branch
        %361 = sbr.rel (%p358) target = $region56
      $region55: #{discriminator_forward.1} parent=5 // pred_region
        %s362 = ssub.s32 %s23, 1
        %s363 = sand.u32 %s62, 1
        %s364 = scalar_lea.sflag [#allocation5], %s363
        %s365 = sand.u32 %s62, 1
        %s366 = smul.addr %s365, 8192
        %s367 = scalar_lea.vmem [#allocation4], %s366
        // Predicated region
        $region57: #{discriminator_forward.1} parent=55 // pred_check
          %p368 = pneg %p75
        $region58: #{discriminator_forward.1} parent=55 // pred_check_branch
          %370 = sbr.rel (%p368) target = $region60
        $region59: #{discriminator_forward.1} parent=55 // pred_region
          %371 = dma.done %s364, 131072
        $region60: #{discriminator_forward.1} parent=55 // pred_fallthru
          _
        // Predicated region
        $region61: #{discriminator_forward.1} parent=55 // pred_check
          %p372 = pneg %p96
        $region62: #{discriminator_forward.1} parent=55 // pred_check_branch
          %374 = sbr.rel (%p372) target = $region64
        $region63: #{discriminator_forward.1} parent=55 // pred_region
          %375 = dma.done [#allocation7], 128
        $region64: #{discriminator_forward.1} parent=55 // pred_fallthru
          _
        // Predicated region
        $region65: #{discriminator_forward.1} parent=55 // pred_check
          %p376 = pneg %p117
        $region66: #{discriminator_forward.1} parent=55 // pred_check_branch
          %378 = sbr.rel (%p376) target = $region68
        $region67: #{discriminator_forward.1} parent=55 // pred_region
          %379 = dma.done [#allocation7], 8192
        $region68: #{discriminator_forward.1} parent=55 // pred_fallthru
          _
        // Predicated region
        $region69: #{discriminator_forward.1} parent=55 // pred_check
          %p380 = pneg %p138
        $region70: #{discriminator_forward.1} parent=55 // pred_check_branch
          %382 = sbr.rel (%p380) target = $region72
        $region71: #{discriminator_forward.1} parent=55 // pred_region
          %383 = dma.done [#allocation10], 16
        $region72: #{discriminator_forward.1} parent=55 // pred_fallthru
          _
        // Predicated region
        $region73: #{discriminator_forward.1} parent=55 // pred_check
          %p384 = pneg %p180
        $region74: #{discriminator_forward.1} parent=55 // pred_check_branch
          %386 = sbr.rel (%p384) target = $region76
        $region75: #{discriminator_forward.1} parent=55 // pred_region
          %387 = dma.done [#allocation10], 16
        $region76: #{discriminator_forward.1} parent=55 // pred_fallthru
          _
        // Predicated region
        $region77: #{discriminator_forward.1} parent=55 // pred_check
          %p388 = pneg %p201
        $region78: #{discriminator_forward.1} parent=55 // pred_check_branch
          %390 = sbr.rel (%p388) target = $region80
        $region79: #{discriminator_forward.1} parent=55 // pred_region
          %391 = dma.done [#allocation13], 16
        $region80: #{discriminator_forward.1} parent=55 // pred_fallthru
          _
        %s392 = smul.u32 16, %s28
        %p393 = scmp.lt.s32.totalorder %s392, 31
        %s394 = scalar_select %p393, %s392, 31
        %s395 = smul.addr %s394, 2
        %s396 = scalar_lea.vmem %s0, %s395
        %p397 = pneg %p49
        %p398 = pneg %p46
        %s399 = sand.u32 %s62, 1
        %s400 = scalar_lea.sflag [#allocation5], %s399
        %s401 = sand.u32 %s62, 1
        %s402 = smul.addr %s401, 8192
        %s403 = scalar_lea.vmem [#allocation4], %s402
        %p404 = pneg %p75
        %p405 = pneg %p72
        %p406 = pneg %p96
        %p407 = pneg %p93
        %p408 = pneg %p117
        %p409 = pneg %p114
        %p410 = pneg %p138
        %p411 = pneg %p135
        %p412 = pneg %p159
        %p413 = pneg %p156
        %p414 = pneg %p180
        %p415 = pneg %p177
        %p416 = pneg %p201
        %p417 = pneg %p198
        %p418 = pneg %p222
        %p419 = pneg %p219
        %p420 = pneg %p243
        %p421 = pneg %p240
        %s422 = smul.u32 16, %s28
        %p423 = scmp.lt.s32.totalorder %s422, 31
        %s424 = scalar_select %p423, %s422, 31
        %s425 = smul.addr %s424, 2
        %s426 = scalar_lea.vmem %s0, %s425
        %s427 = smul.u32 16, %s28
        %s428 = smul.u32 256, %s28
        %p430 = scmp.eq.s32.totalorder %s28, 0
        // Predicated region
        $region81: #{discriminator_forward.1} parent=55 // pred_check
          %p431 = pneg %p430
        $region82: #{discriminator_forward.1} parent=55 // pred_check_branch
          %433 = sbr.rel (%p431) target = $region84
        $region83: #{discriminator_forward.1} parent=55 // pred_region
          %434 = vst [vmem:[#allocation2] sm:$0xff] 0.0
          %435 = vst [vmem:[#allocation2 + $0x8] sm:$0xff] 0.0
        $region84: #{discriminator_forward.1} parent=55 // pred_fallthru
          _
        %v436 = vld [vmem:[#allocation2] sm:$0xff]
        %v437 = vld [vmem:[#allocation2 + $0x8] sm:$0xff]
        %v438 = vld [vmem:[%s426] sm:$0xff]
        %v439 = vld [vmem:[%s426 + $0x8] sm:$0xff]
        %v440 = vld [vmem:[%s426 + $0x10] sm:$0xff]
        %v441 = vld [vmem:[%s426 + $0x18] sm:$0xff]
        %v446 = vcombine.high %v438, %v438
        %v448 = vunpack.c.l.s4 1983009808
        %v449 = vunpack.c.0.s8 %v448
        %v450 = vlaneseq
        %v451 = vshrl.u32 %v450, 7
        %v452 = vsub.s32 %v449, %v451
        %v453 = vrot.slane %v438, %v452
        %v455 = vunpack.c.l.s4 1983009808
        %v456 = vunpack.c.0.s8 %v455
        %v457 = vlaneseq
        %v458 = vshrl.u32 %v457, 7
        %v459 = vsub.s32 %v456, %v458
        %v460 = vrot.slane %v446, %v459
        %v461 = vcombine.high %v453, %v453
        %v462 = vcombine.high %v460, %v460
        %v463 = vcombine.high %v439, %v439
        %v465 = vunpack.c.l.s4 1983009808
        %v466 = vunpack.c.0.s8 %v465
        %v467 = vlaneseq
        %v468 = vshrl.u32 %v467, 7
        %v469 = vsub.s32 %v466, %v468
        %v470 = vrot.slane %v439, %v469
        %v472 = vunpack.c.l.s4 1983009808
        %v473 = vunpack.c.0.s8 %v472
        %v474 = vlaneseq
        %v475 = vshrl.u32 %v474, 7
        %v476 = vsub.s32 %v473, %v475
        %v477 = vrot.slane %v463, %v476
        %v478 = vcombine.high %v470, %v470
        %v479 = vcombine.high %v477, %v477
        %v480 = vcombine.high %v440, %v440
        %v482 = vunpack.c.l.s4 1983009808
        %v483 = vunpack.c.0.s8 %v482
        %v484 = vlaneseq
        %v485 = vshrl.u32 %v484, 7
        %v486 = vsub.s32 %v483, %v485
        %v487 = vrot.slane %v440, %v486
        %v489 = vunpack.c.l.s4 1983009808
        %v490 = vunpack.c.0.s8 %v489
        %v491 = vlaneseq
        %v492 = vshrl.u32 %v491, 7
        %v493 = vsub.s32 %v490, %v492
        %v494 = vrot.slane %v480, %v493
        %v495 = vcombine.high %v487, %v487
        %v496 = vcombine.high %v494, %v494
        %v497 = vcombine.high %v441, %v441
        %v499 = vunpack.c.l.s4 1983009808
        %v500 = vunpack.c.0.s8 %v499
        %v501 = vlaneseq
        %v502 = vshrl.u32 %v501, 7
        %v503 = vsub.s32 %v500, %v502
        %v504 = vrot.slane %v441, %v503
        %v506 = vunpack.c.l.s4 1983009808
        %v507 = vunpack.c.0.s8 %v506
        %v508 = vlaneseq
        %v509 = vshrl.u32 %v508, 7
        %v510 = vsub.s32 %v507, %v509
        %v511 = vrot.slane %v497, %v510
        %v512 = vcombine.high %v504, %v504
        %v513 = vcombine.high %v511, %v511
        %v530 = vpack.c.bf16 %v453, %v453
        %v531 = vpack.c.bf16 %v461, %v461
        %v532 = vpack.c.bf16 %v460, %v460
        %v533 = vpack.c.bf16 %v462, %v462
        %v534 = vpack.c.bf16 %v470, %v470
        %v535 = vpack.c.bf16 %v478, %v478
        %v536 = vpack.c.bf16 %v477, %v477
        %v537 = vpack.c.bf16 %v479, %v479
        %v538 = vpack.c.bf16 %v487, %v487
        %v539 = vpack.c.bf16 %v495, %v495
        %v540 = vpack.c.bf16 %v494, %v494
        %v541 = vpack.c.bf16 %v496, %v496
        %v542 = vpack.c.bf16 %v504, %v504
        %v543 = vpack.c.bf16 %v512, %v512
        %v544 = vpack.c.bf16 %v511, %v511
        %v545 = vpack.c.bf16 %v513, %v513
        %v546 = vld [vmem:[%s367] sm:$0xff]
        %v547 = vld [vmem:[%s367 + $0x8] sm:$0xff]
        %v548 = vld [vmem:[%s367 + $0x10] sm:$0xff]
        %v549 = vld [vmem:[%s367 + $0x18] sm:$0xff]
        %v550 = vld [vmem:[%s367 + $0x20] sm:$0xff]
        %v551 = vld [vmem:[%s367 + $0x28] sm:$0xff]
        %v552 = vld [vmem:[%s367 + $0x30] sm:$0xff]
        %v553 = vld [vmem:[%s367 + $0x38] sm:$0xff]
        %v554 = vld [vmem:[%s367 + $0x40] sm:$0xff]
        %v555 = vld [vmem:[%s367 + $0x48] sm:$0xff]
        %v556 = vld [vmem:[%s367 + $0x50] sm:$0xff]
        %v557 = vld [vmem:[%s367 + $0x58] sm:$0xff]
        %v558 = vld [vmem:[%s367 + $0x60] sm:$0xff]
        %v559 = vld [vmem:[%s367 + $0x68] sm:$0xff]
        %v560 = vld [vmem:[%s367 + $0x70] sm:$0xff]
        %v561 = vld [vmem:[%s367 + $0x78] sm:$0xff]
        %v562 = vld [vmem:[%s367 + $0x80] sm:$0xff]
        %v563 = vld [vmem:[%s367 + $0x88] sm:$0xff]
        %v564 = vld [vmem:[%s367 + $0x90] sm:$0xff]
        %v565 = vld [vmem:[%s367 + $0x98] sm:$0xff]
        %v566 = vld [vmem:[%s367 + $0xa0] sm:$0xff]
        %v567 = vld [vmem:[%s367 + $0xa8] sm:$0xff]
        %v568 = vld [vmem:[%s367 + $0xb0] sm:$0xff]
        %v569 = vld [vmem:[%s367 + $0xb8] sm:$0xff]
        %v570 = vld [vmem:[%s367 + $0xc0] sm:$0xff]
        %v571 = vld [vmem:[%s367 + $0xc8] sm:$0xff]
        %v572 = vld [vmem:[%s367 + $0xd0] sm:$0xff]
        %v573 = vld [vmem:[%s367 + $0xd8] sm:$0xff]
        %v574 = vld [vmem:[%s367 + $0xe0] sm:$0xff]
        %v575 = vld [vmem:[%s367 + $0xe8] sm:$0xff]
        %v576 = vld [vmem:[%s367 + $0xf0] sm:$0xff]
        %v577 = vld [vmem:[%s367 + $0xf8] sm:$0xff]
        %v578 = vld [vmem:[%s367 + $0x100] sm:$0xff]
        %v579 = vld [vmem:[%s367 + $0x108] sm:$0xff]
        %v580 = vld [vmem:[%s367 + $0x110] sm:$0xff]
        %v581 = vld [vmem:[%s367 + $0x118] sm:$0xff]
        %v582 = vld [vmem:[%s367 + $0x120] sm:$0xff]
        %v583 = vld [vmem:[%s367 + $0x128] sm:$0xff]
        %v584 = vld [vmem:[%s367 + $0x130] sm:$0xff]
        %v585 = vld [vmem:[%s367 + $0x138] sm:$0xff]
        %v586 = vld [vmem:[%s367 + $0x140] sm:$0xff]
        %v587 = vld [vmem:[%s367 + $0x148] sm:$0xff]
        %v588 = vld [vmem:[%s367 + $0x150] sm:$0xff]
        %v589 = vld [vmem:[%s367 + $0x158] sm:$0xff]
        %v590 = vld [vmem:[%s367 + $0x160] sm:$0xff]
        %v591 = vld [vmem:[%s367 + $0x168] sm:$0xff]
        %v592 = vld [vmem:[%s367 + $0x170] sm:$0xff]
        %v593 = vld [vmem:[%s367 + $0x178] sm:$0xff]
        %v594 = vld [vmem:[%s367 + $0x180] sm:$0xff]
        %v595 = vld [vmem:[%s367 + $0x188] sm:$0xff]
        %v596 = vld [vmem:[%s367 + $0x190] sm:$0xff]
        %v597 = vld [vmem:[%s367 + $0x198] sm:$0xff]
        %v598 = vld [vmem:[%s367 + $0x1a0] sm:$0xff]
        %v599 = vld [vmem:[%s367 + $0x1a8] sm:$0xff]
        %v600 = vld [vmem:[%s367 + $0x1b0] sm:$0xff]
        %v601 = vld [vmem:[%s367 + $0x1b8] sm:$0xff]
        %v602 = vld [vmem:[%s367 + $0x1c0] sm:$0xff]
        %v603 = vld [vmem:[%s367 + $0x1c8] sm:$0xff]
        %v604 = vld [vmem:[%s367 + $0x1d0] sm:$0xff]
        %v605 = vld [vmem:[%s367 + $0x1d8] sm:$0xff]
        %v606 = vld [vmem:[%s367 + $0x1e0] sm:$0xff]
        %v607 = vld [vmem:[%s367 + $0x1e8] sm:$0xff]
        %v608 = vld [vmem:[%s367 + $0x1f0] sm:$0xff]
        %v609 = vld [vmem:[%s367 + $0x1f8] sm:$0xff]
        %v610 = vld [vmem:[%s367 + $0x200] sm:$0xff]
        %v611 = vld [vmem:[%s367 + $0x208] sm:$0xff]
        %v612 = vld [vmem:[%s367 + $0x210] sm:$0xff]
        %v613 = vld [vmem:[%s367 + $0x218] sm:$0xff]
        %v614 = vld [vmem:[%s367 + $0x220] sm:$0xff]
        %v615 = vld [vmem:[%s367 + $0x228] sm:$0xff]
        %v616 = vld [vmem:[%s367 + $0x230] sm:$0xff]
        %v617 = vld [vmem:[%s367 + $0x238] sm:$0xff]
        %v618 = vld [vmem:[%s367 + $0x240] sm:$0xff]
        %v619 = vld [vmem:[%s367 + $0x248] sm:$0xff]
        %v620 = vld [vmem:[%s367 + $0x250] sm:$0xff]
        %v621 = vld [vmem:[%s367 + $0x258] sm:$0xff]
        %v622 = vld [vmem:[%s367 + $0x260] sm:$0xff]
        %v623 = vld [vmem:[%s367 + $0x268] sm:$0xff]
        %v624 = vld [vmem:[%s367 + $0x270] sm:$0xff]
        %v625 = vld [vmem:[%s367 + $0x278] sm:$0xff]
        %v626 = vld [vmem:[%s367 + $0x280] sm:$0xff]
        %v627 = vld [vmem:[%s367 + $0x288] sm:$0xff]
        %v628 = vld [vmem:[%s367 + $0x290] sm:$0xff]
        %v629 = vld [vmem:[%s367 + $0x298] sm:$0xff]
        %v630 = vld [vmem:[%s367 + $0x2a0] sm:$0xff]
        %v631 = vld [vmem:[%s367 + $0x2a8] sm:$0xff]
        %v632 = vld [vmem:[%s367 + $0x2b0] sm:$0xff]
        %v633 = vld [vmem:[%s367 + $0x2b8] sm:$0xff]
        %v634 = vld [vmem:[%s367 + $0x2c0] sm:$0xff]
        %v635 = vld [vmem:[%s367 + $0x2c8] sm:$0xff]
        %v636 = vld [vmem:[%s367 + $0x2d0] sm:$0xff]
        %v637 = vld [vmem:[%s367 + $0x2d8] sm:$0xff]
        %v638 = vld [vmem:[%s367 + $0x2e0] sm:$0xff]
        %v639 = vld [vmem:[%s367 + $0x2e8] sm:$0xff]
        %v640 = vld [vmem:[%s367 + $0x2f0] sm:$0xff]
        %v641 = vld [vmem:[%s367 + $0x2f8] sm:$0xff]
        %v642 = vld [vmem:[%s367 + $0x300] sm:$0xff]
        %v643 = vld [vmem:[%s367 + $0x308] sm:$0xff]
        %v644 = vld [vmem:[%s367 + $0x310] sm:$0xff]
        %v645 = vld [vmem:[%s367 + $0x318] sm:$0xff]
        %v646 = vld [vmem:[%s367 + $0x320] sm:$0xff]
        %v647 = vld [vmem:[%s367 + $0x328] sm:$0xff]
        %v648 = vld [vmem:[%s367 + $0x330] sm:$0xff]
        %v649 = vld [vmem:[%s367 + $0x338] sm:$0xff]
        %v650 = vld [vmem:[%s367 + $0x340] sm:$0xff]
        %v651 = vld [vmem:[%s367 + $0x348] sm:$0xff]
        %v652 = vld [vmem:[%s367 + $0x350] sm:$0xff]
        %v653 = vld [vmem:[%s367 + $0x358] sm:$0xff]
        %v654 = vld [vmem:[%s367 + $0x360] sm:$0xff]
        %v655 = vld [vmem:[%s367 + $0x368] sm:$0xff]
        %v656 = vld [vmem:[%s367 + $0x370] sm:$0xff]
        %v657 = vld [vmem:[%s367 + $0x378] sm:$0xff]
        %v658 = vld [vmem:[%s367 + $0x380] sm:$0xff]
        %v659 = vld [vmem:[%s367 + $0x388] sm:$0xff]
        %v660 = vld [vmem:[%s367 + $0x390] sm:$0xff]
        %v661 = vld [vmem:[%s367 + $0x398] sm:$0xff]
        %v662 = vld [vmem:[%s367 + $0x3a0] sm:$0xff]
        %v663 = vld [vmem:[%s367 + $0x3a8] sm:$0xff]
        %v664 = vld [vmem:[%s367 + $0x3b0] sm:$0xff]
        %v665 = vld [vmem:[%s367 + $0x3b8] sm:$0xff]
        %v666 = vld [vmem:[%s367 + $0x3c0] sm:$0xff]
        %v667 = vld [vmem:[%s367 + $0x3c8] sm:$0xff]
        %v668 = vld [vmem:[%s367 + $0x3d0] sm:$0xff]
        %v669 = vld [vmem:[%s367 + $0x3d8] sm:$0xff]
        %v670 = vld [vmem:[%s367 + $0x3e0] sm:$0xff]
        %v671 = vld [vmem:[%s367 + $0x3e8] sm:$0xff]
        %v672 = vld [vmem:[%s367 + $0x3f0] sm:$0xff]
        %v673 = vld [vmem:[%s367 + $0x3f8] sm:$0xff]
        %v674 = vld [vmem:[%s367 + $0x400] sm:$0xff]
        %v675 = vld [vmem:[%s367 + $0x408] sm:$0xff]
        %v676 = vld [vmem:[%s367 + $0x410] sm:$0xff]
        %v677 = vld [vmem:[%s367 + $0x418] sm:$0xff]
        %v678 = vld [vmem:[%s367 + $0x420] sm:$0xff]
        %v679 = vld [vmem:[%s367 + $0x428] sm:$0xff]
        %v680 = vld [vmem:[%s367 + $0x430] sm:$0xff]
        %v681 = vld [vmem:[%s367 + $0x438] sm:$0xff]
        %v682 = vld [vmem:[%s367 + $0x440] sm:$0xff]
        %v683 = vld [vmem:[%s367 + $0x448] sm:$0xff]
        %v684 = vld [vmem:[%s367 + $0x450] sm:$0xff]
        %v685 = vld [vmem:[%s367 + $0x458] sm:$0xff]
        %v686 = vld [vmem:[%s367 + $0x460] sm:$0xff]
        %v687 = vld [vmem:[%s367 + $0x468] sm:$0xff]
        %v688 = vld [vmem:[%s367 + $0x470] sm:$0xff]
        %v689 = vld [vmem:[%s367 + $0x478] sm:$0xff]
        %v690 = vld [vmem:[%s367 + $0x480] sm:$0xff]
        %v691 = vld [vmem:[%s367 + $0x488] sm:$0xff]
        %v692 = vld [vmem:[%s367 + $0x490] sm:$0xff]
        %v693 = vld [vmem:[%s367 + $0x498] sm:$0xff]
        %v694 = vld [vmem:[%s367 + $0x4a0] sm:$0xff]
        %v695 = vld [vmem:[%s367 + $0x4a8] sm:$0xff]
        %v696 = vld [vmem:[%s367 + $0x4b0] sm:$0xff]
        %v697 = vld [vmem:[%s367 + $0x4b8] sm:$0xff]
        %v698 = vld [vmem:[%s367 + $0x4c0] sm:$0xff]
        %v699 = vld [vmem:[%s367 + $0x4c8] sm:$0xff]
        %v700 = vld [vmem:[%s367 + $0x4d0] sm:$0xff]
        %v701 = vld [vmem:[%s367 + $0x4d8] sm:$0xff]
        %v702 = vld [vmem:[%s367 + $0x4e0] sm:$0xff]
        %v703 = vld [vmem:[%s367 + $0x4e8] sm:$0xff]
        %v704 = vld [vmem:[%s367 + $0x4f0] sm:$0xff]
        %v705 = vld [vmem:[%s367 + $0x4f8] sm:$0xff]
        %v706 = vld [vmem:[%s367 + $0x500] sm:$0xff]
        %v707 = vld [vmem:[%s367 + $0x508] sm:$0xff]
        %v708 = vld [vmem:[%s367 + $0x510] sm:$0xff]
        %v709 = vld [vmem:[%s367 + $0x518] sm:$0xff]
        %v710 = vld [vmem:[%s367 + $0x520] sm:$0xff]
        %v711 = vld [vmem:[%s367 + $0x528] sm:$0xff]
        %v712 = vld [vmem:[%s367 + $0x530] sm:$0xff]
        %v713 = vld [vmem:[%s367 + $0x538] sm:$0xff]
        %v714 = vld [vmem:[%s367 + $0x540] sm:$0xff]
        %v715 = vld [vmem:[%s367 + $0x548] sm:$0xff]
        %v716 = vld [vmem:[%s367 + $0x550] sm:$0xff]
        %v717 = vld [vmem:[%s367 + $0x558] sm:$0xff]
        %v718 = vld [vmem:[%s367 + $0x560] sm:$0xff]
        %v719 = vld [vmem:[%s367 + $0x568] sm:$0xff]
        %v720 = vld [vmem:[%s367 + $0x570] sm:$0xff]
        %v721 = vld [vmem:[%s367 + $0x578] sm:$0xff]
        %v722 = vld [vmem:[%s367 + $0x580] sm:$0xff]
        %v723 = vld [vmem:[%s367 + $0x588] sm:$0xff]
        %v724 = vld [vmem:[%s367 + $0x590] sm:$0xff]
        %v725 = vld [vmem:[%s367 + $0x598] sm:$0xff]
        %v726 = vld [vmem:[%s367 + $0x5a0] sm:$0xff]
        %v727 = vld [vmem:[%s367 + $0x5a8] sm:$0xff]
        %v728 = vld [vmem:[%s367 + $0x5b0] sm:$0xff]
        %v729 = vld [vmem:[%s367 + $0x5b8] sm:$0xff]
        %v730 = vld [vmem:[%s367 + $0x5c0] sm:$0xff]
        %v731 = vld [vmem:[%s367 + $0x5c8] sm:$0xff]
        %v732 = vld [vmem:[%s367 + $0x5d0] sm:$0xff]
        %v733 = vld [vmem:[%s367 + $0x5d8] sm:$0xff]
        %v734 = vld [vmem:[%s367 + $0x5e0] sm:$0xff]
        %v735 = vld [vmem:[%s367 + $0x5e8] sm:$0xff]
        %v736 = vld [vmem:[%s367 + $0x5f0] sm:$0xff]
        %v737 = vld [vmem:[%s367 + $0x5f8] sm:$0xff]
        %v738 = vld [vmem:[%s367 + $0x600] sm:$0xff]
        %v739 = vld [vmem:[%s367 + $0x608] sm:$0xff]
        %v740 = vld [vmem:[%s367 + $0x610] sm:$0xff]
        %v741 = vld [vmem:[%s367 + $0x618] sm:$0xff]
        %v742 = vld [vmem:[%s367 + $0x620] sm:$0xff]
        %v743 = vld [vmem:[%s367 + $0x628] sm:$0xff]
        %v744 = vld [vmem:[%s367 + $0x630] sm:$0xff]
        %v745 = vld [vmem:[%s367 + $0x638] sm:$0xff]
        %v746 = vld [vmem:[%s367 + $0x640] sm:$0xff]
        %v747 = vld [vmem:[%s367 + $0x648] sm:$0xff]
        %v748 = vld [vmem:[%s367 + $0x650] sm:$0xff]
        %v749 = vld [vmem:[%s367 + $0x658] sm:$0xff]
        %v750 = vld [vmem:[%s367 + $0x660] sm:$0xff]
        %v751 = vld [vmem:[%s367 + $0x668] sm:$0xff]
        %v752 = vld [vmem:[%s367 + $0x670] sm:$0xff]
        %v753 = vld [vmem:[%s367 + $0x678] sm:$0xff]
        %v754 = vld [vmem:[%s367 + $0x680] sm:$0xff]
        %v755 = vld [vmem:[%s367 + $0x688] sm:$0xff]
        %v756 = vld [vmem:[%s367 + $0x690] sm:$0xff]
        %v757 = vld [vmem:[%s367 + $0x698] sm:$0xff]
        %v758 = vld [vmem:[%s367 + $0x6a0] sm:$0xff]
        %v759 = vld [vmem:[%s367 + $0x6a8] sm:$0xff]
        %v760 = vld [vmem:[%s367 + $0x6b0] sm:$0xff]
        %v761 = vld [vmem:[%s367 + $0x6b8] sm:$0xff]
        %v762 = vld [vmem:[%s367 + $0x6c0] sm:$0xff]
        %v763 = vld [vmem:[%s367 + $0x6c8] sm:$0xff]
        %v764 = vld [vmem:[%s367 + $0x6d0] sm:$0xff]
        %v765 = vld [vmem:[%s367 + $0x6d8] sm:$0xff]
        %v766 = vld [vmem:[%s367 + $0x6e0] sm:$0xff]
        %v767 = vld [vmem:[%s367 + $0x6e8] sm:$0xff]
        %v768 = vld [vmem:[%s367 + $0x6f0] sm:$0xff]
        %v769 = vld [vmem:[%s367 + $0x6f8] sm:$0xff]
        %v770 = vld [vmem:[%s367 + $0x700] sm:$0xff]
        %v771 = vld [vmem:[%s367 + $0x708] sm:$0xff]
        %v772 = vld [vmem:[%s367 + $0x710] sm:$0xff]
        %v773 = vld [vmem:[%s367 + $0x718] sm:$0xff]
        %v774 = vld [vmem:[%s367 + $0x720] sm:$0xff]
        %v775 = vld [vmem:[%s367 + $0x728] sm:$0xff]
        %v776 = vld [vmem:[%s367 + $0x730] sm:$0xff]
        %v777 = vld [vmem:[%s367 + $0x738] sm:$0xff]
        %v778 = vld [vmem:[%s367 + $0x740] sm:$0xff]
        %v779 = vld [vmem:[%s367 + $0x748] sm:$0xff]
        %v780 = vld [vmem:[%s367 + $0x750] sm:$0xff]
        %v781 = vld [vmem:[%s367 + $0x758] sm:$0xff]
        %v782 = vld [vmem:[%s367 + $0x760] sm:$0xff]
        %v783 = vld [vmem:[%s367 + $0x768] sm:$0xff]
        %v784 = vld [vmem:[%s367 + $0x770] sm:$0xff]
        %v785 = vld [vmem:[%s367 + $0x778] sm:$0xff]
        %v786 = vld [vmem:[%s367 + $0x780] sm:$0xff]
        %v787 = vld [vmem:[%s367 + $0x788] sm:$0xff]
        %v788 = vld [vmem:[%s367 + $0x790] sm:$0xff]
        %v789 = vld [vmem:[%s367 + $0x798] sm:$0xff]
        %v790 = vld [vmem:[%s367 + $0x7a0] sm:$0xff]
        %v791 = vld [vmem:[%s367 + $0x7a8] sm:$0xff]
        %v792 = vld [vmem:[%s367 + $0x7b0] sm:$0xff]
        %v793 = vld [vmem:[%s367 + $0x7b8] sm:$0xff]
        %v794 = vld [vmem:[%s367 + $0x7c0] sm:$0xff]
        %v795 = vld [vmem:[%s367 + $0x7c8] sm:$0xff]
        %v796 = vld [vmem:[%s367 + $0x7d0] sm:$0xff]
        %v797 = vld [vmem:[%s367 + $0x7d8] sm:$0xff]
        %v798 = vld [vmem:[%s367 + $0x7e0] sm:$0xff]
        %v799 = vld [vmem:[%s367 + $0x7e8] sm:$0xff]
        %v800 = vld [vmem:[%s367 + $0x7f0] sm:$0xff]
        %v801 = vld [vmem:[%s367 + $0x7f8] sm:$0xff]
        %v802 = vld [vmem:[%s367 + $0x800] sm:$0xff]
        %v803 = vld [vmem:[%s367 + $0x808] sm:$0xff]
        %v804 = vld [vmem:[%s367 + $0x810] sm:$0xff]
        %v805 = vld [vmem:[%s367 + $0x818] sm:$0xff]
        %v806 = vld [vmem:[%s367 + $0x820] sm:$0xff]
        %v807 = vld [vmem:[%s367 + $0x828] sm:$0xff]
        %v808 = vld [vmem:[%s367 + $0x830] sm:$0xff]
        %v809 = vld [vmem:[%s367 + $0x838] sm:$0xff]
        %v810 = vld [vmem:[%s367 + $0x840] sm:$0xff]
        %v811 = vld [vmem:[%s367 + $0x848] sm:$0xff]
        %v812 = vld [vmem:[%s367 + $0x850] sm:$0xff]
        %v813 = vld [vmem:[%s367 + $0x858] sm:$0xff]
        %v814 = vld [vmem:[%s367 + $0x860] sm:$0xff]
        %v815 = vld [vmem:[%s367 + $0x868] sm:$0xff]
        %v816 = vld [vmem:[%s367 + $0x870] sm:$0xff]
        %v817 = vld [vmem:[%s367 + $0x878] sm:$0xff]
        %v818 = vld [vmem:[%s367 + $0x880] sm:$0xff]
        %v819 = vld [vmem:[%s367 + $0x888] sm:$0xff]
        %v820 = vld [vmem:[%s367 + $0x890] sm:$0xff]
        %v821 = vld [vmem:[%s367 + $0x898] sm:$0xff]
        %v822 = vld [vmem:[%s367 + $0x8a0] sm:$0xff]
        %v823 = vld [vmem:[%s367 + $0x8a8] sm:$0xff]
        %v824 = vld [vmem:[%s367 + $0x8b0] sm:$0xff]
        %v825 = vld [vmem:[%s367 + $0x8b8] sm:$0xff]
        %v826 = vld [vmem:[%s367 + $0x8c0] sm:$0xff]
        %v827 = vld [vmem:[%s367 + $0x8c8] sm:$0xff]
        %v828 = vld [vmem:[%s367 + $0x8d0] sm:$0xff]
        %v829 = vld [vmem:[%s367 + $0x8d8] sm:$0xff]
        %v830 = vld [vmem:[%s367 + $0x8e0] sm:$0xff]
        %v831 = vld [vmem:[%s367 + $0x8e8] sm:$0xff]
        %v832 = vld [vmem:[%s367 + $0x8f0] sm:$0xff]
        %v833 = vld [vmem:[%s367 + $0x8f8] sm:$0xff]
        %v834 = vld [vmem:[%s367 + $0x900] sm:$0xff]
        %v835 = vld [vmem:[%s367 + $0x908] sm:$0xff]
        %v836 = vld [vmem:[%s367 + $0x910] sm:$0xff]
        %v837 = vld [vmem:[%s367 + $0x918] sm:$0xff]
        %v838 = vld [vmem:[%s367 + $0x920] sm:$0xff]
        %v839 = vld [vmem:[%s367 + $0x928] sm:$0xff]
        %v840 = vld [vmem:[%s367 + $0x930] sm:$0xff]
        %v841 = vld [vmem:[%s367 + $0x938] sm:$0xff]
        %v842 = vld [vmem:[%s367 + $0x940] sm:$0xff]
        %v843 = vld [vmem:[%s367 + $0x948] sm:$0xff]
        %v844 = vld [vmem:[%s367 + $0x950] sm:$0xff]
        %v845 = vld [vmem:[%s367 + $0x958] sm:$0xff]
        %v846 = vld [vmem:[%s367 + $0x960] sm:$0xff]
        %v847 = vld [vmem:[%s367 + $0x968] sm:$0xff]
        %v848 = vld [vmem:[%s367 + $0x970] sm:$0xff]
        %v849 = vld [vmem:[%s367 + $0x978] sm:$0xff]
        %v850 = vld [vmem:[%s367 + $0x980] sm:$0xff]
        %v851 = vld [vmem:[%s367 + $0x988] sm:$0xff]
        %v852 = vld [vmem:[%s367 + $0x990] sm:$0xff]
        %v853 = vld [vmem:[%s367 + $0x998] sm:$0xff]
        %v854 = vld [vmem:[%s367 + $0x9a0] sm:$0xff]
        %v855 = vld [vmem:[%s367 + $0x9a8] sm:$0xff]
        %v856 = vld [vmem:[%s367 + $0x9b0] sm:$0xff]
        %v857 = vld [vmem:[%s367 + $0x9b8] sm:$0xff]
        %v858 = vld [vmem:[%s367 + $0x9c0] sm:$0xff]
        %v859 = vld [vmem:[%s367 + $0x9c8] sm:$0xff]
        %v860 = vld [vmem:[%s367 + $0x9d0] sm:$0xff]
        %v861 = vld [vmem:[%s367 + $0x9d8] sm:$0xff]
        %v862 = vld [vmem:[%s367 + $0x9e0] sm:$0xff]
        %v863 = vld [vmem:[%s367 + $0x9e8] sm:$0xff]
        %v864 = vld [vmem:[%s367 + $0x9f0] sm:$0xff]
        %v865 = vld [vmem:[%s367 + $0x9f8] sm:$0xff]
        %v866 = vld [vmem:[%s367 + $0xa00] sm:$0xff]
        %v867 = vld [vmem:[%s367 + $0xa08] sm:$0xff]
        %v868 = vld [vmem:[%s367 + $0xa10] sm:$0xff]
        %v869 = vld [vmem:[%s367 + $0xa18] sm:$0xff]
        %v870 = vld [vmem:[%s367 + $0xa20] sm:$0xff]
        %v871 = vld [vmem:[%s367 + $0xa28] sm:$0xff]
        %v872 = vld [vmem:[%s367 + $0xa30] sm:$0xff]
        %v873 = vld [vmem:[%s367 + $0xa38] sm:$0xff]
        %v874 = vld [vmem:[%s367 + $0xa40] sm:$0xff]
        %v875 = vld [vmem:[%s367 + $0xa48] sm:$0xff]
        %v876 = vld [vmem:[%s367 + $0xa50] sm:$0xff]
        %v877 = vld [vmem:[%s367 + $0xa58] sm:$0xff]
        %v878 = vld [vmem:[%s367 + $0xa60] sm:$0xff]
        %v879 = vld [vmem:[%s367 + $0xa68] sm:$0xff]
        %v880 = vld [vmem:[%s367 + $0xa70] sm:$0xff]
        %v881 = vld [vmem:[%s367 + $0xa78] sm:$0xff]
        %v882 = vld [vmem:[%s367 + $0xa80] sm:$0xff]
        %v883 = vld [vmem:[%s367 + $0xa88] sm:$0xff]
        %v884 = vld [vmem:[%s367 + $0xa90] sm:$0xff]
        %v885 = vld [vmem:[%s367 + $0xa98] sm:$0xff]
        %v886 = vld [vmem:[%s367 + $0xaa0] sm:$0xff]
        %v887 = vld [vmem:[%s367 + $0xaa8] sm:$0xff]
        %v888 = vld [vmem:[%s367 + $0xab0] sm:$0xff]
        %v889 = vld [vmem:[%s367 + $0xab8] sm:$0xff]
        %v890 = vld [vmem:[%s367 + $0xac0] sm:$0xff]
        %v891 = vld [vmem:[%s367 + $0xac8] sm:$0xff]
        %v892 = vld [vmem:[%s367 + $0xad0] sm:$0xff]
        %v893 = vld [vmem:[%s367 + $0xad8] sm:$0xff]
        %v894 = vld [vmem:[%s367 + $0xae0] sm:$0xff]
        %v895 = vld [vmem:[%s367 + $0xae8] sm:$0xff]
        %v896 = vld [vmem:[%s367 + $0xaf0] sm:$0xff]
        %v897 = vld [vmem:[%s367 + $0xaf8] sm:$0xff]
        %v898 = vld [vmem:[%s367 + $0xb00] sm:$0xff]
        %v899 = vld [vmem:[%s367 + $0xb08] sm:$0xff]
        %v900 = vld [vmem:[%s367 + $0xb10] sm:$0xff]
        %v901 = vld [vmem:[%s367 + $0xb18] sm:$0xff]
        %v902 = vld [vmem:[%s367 + $0xb20] sm:$0xff]
        %v903 = vld [vmem:[%s367 + $0xb28] sm:$0xff]
        %v904 = vld [vmem:[%s367 + $0xb30] sm:$0xff]
        %v905 = vld [vmem:[%s367 + $0xb38] sm:$0xff]
        %v906 = vld [vmem:[%s367 + $0xb40] sm:$0xff]
        %v907 = vld [vmem:[%s367 + $0xb48] sm:$0xff]
        %v908 = vld [vmem:[%s367 + $0xb50] sm:$0xff]
        %v909 = vld [vmem:[%s367 + $0xb58] sm:$0xff]
        %v910 = vld [vmem:[%s367 + $0xb60] sm:$0xff]
        %v911 = vld [vmem:[%s367 + $0xb68] sm:$0xff]
        %v912 = vld [vmem:[%s367 + $0xb70] sm:$0xff]
        %v913 = vld [vmem:[%s367 + $0xb78] sm:$0xff]
        %v914 = vld [vmem:[%s367 + $0xb80] sm:$0xff]
        %v915 = vld [vmem:[%s367 + $0xb88] sm:$0xff]
        %v916 = vld [vmem:[%s367 + $0xb90] sm:$0xff]
        %v917 = vld [vmem:[%s367 + $0xb98] sm:$0xff]
        %v918 = vld [vmem:[%s367 + $0xba0] sm:$0xff]
        %v919 = vld [vmem:[%s367 + $0xba8] sm:$0xff]
        %v920 = vld [vmem:[%s367 + $0xbb0] sm:$0xff]
        %v921 = vld [vmem:[%s367 + $0xbb8] sm:$0xff]
        %v922 = vld [vmem:[%s367 + $0xbc0] sm:$0xff]
        %v923 = vld [vmem:[%s367 + $0xbc8] sm:$0xff]
        %v924 = vld [vmem:[%s367 + $0xbd0] sm:$0xff]
        %v925 = vld [vmem:[%s367 + $0xbd8] sm:$0xff]
        %v926 = vld [vmem:[%s367 + $0xbe0] sm:$0xff]
        %v927 = vld [vmem:[%s367 + $0xbe8] sm:$0xff]
        %v928 = vld [vmem:[%s367 + $0xbf0] sm:$0xff]
        %v929 = vld [vmem:[%s367 + $0xbf8] sm:$0xff]
        %v930 = vld [vmem:[%s367 + $0xc00] sm:$0xff]
        %v931 = vld [vmem:[%s367 + $0xc08] sm:$0xff]
        %v932 = vld [vmem:[%s367 + $0xc10] sm:$0xff]
        %v933 = vld [vmem:[%s367 + $0xc18] sm:$0xff]
        %v934 = vld [vmem:[%s367 + $0xc20] sm:$0xff]
        %v935 = vld [vmem:[%s367 + $0xc28] sm:$0xff]
        %v936 = vld [vmem:[%s367 + $0xc30] sm:$0xff]
        %v937 = vld [vmem:[%s367 + $0xc38] sm:$0xff]
        %v938 = vld [vmem:[%s367 + $0xc40] sm:$0xff]
        %v939 = vld [vmem:[%s367 + $0xc48] sm:$0xff]
        %v940 = vld [vmem:[%s367 + $0xc50] sm:$0xff]
        %v941 = vld [vmem:[%s367 + $0xc58] sm:$0xff]
        %v942 = vld [vmem:[%s367 + $0xc60] sm:$0xff]
        %v943 = vld [vmem:[%s367 + $0xc68] sm:$0xff]
        %v944 = vld [vmem:[%s367 + $0xc70] sm:$0xff]
        %v945 = vld [vmem:[%s367 + $0xc78] sm:$0xff]
        %v946 = vld [vmem:[%s367 + $0xc80] sm:$0xff]
        %v947 = vld [vmem:[%s367 + $0xc88] sm:$0xff]
        %v948 = vld [vmem:[%s367 + $0xc90] sm:$0xff]
        %v949 = vld [vmem:[%s367 + $0xc98] sm:$0xff]
        %v950 = vld [vmem:[%s367 + $0xca0] sm:$0xff]
        %v951 = vld [vmem:[%s367 + $0xca8] sm:$0xff]
        %v952 = vld [vmem:[%s367 + $0xcb0] sm:$0xff]
        %v953 = vld [vmem:[%s367 + $0xcb8] sm:$0xff]
        %v954 = vld [vmem:[%s367 + $0xcc0] sm:$0xff]
        %v955 = vld [vmem:[%s367 + $0xcc8] sm:$0xff]
        %v956 = vld [vmem:[%s367 + $0xcd0] sm:$0xff]
        %v957 = vld [vmem:[%s367 + $0xcd8] sm:$0xff]
        %v958 = vld [vmem:[%s367 + $0xce0] sm:$0xff]
        %v959 = vld [vmem:[%s367 + $0xce8] sm:$0xff]
        %v960 = vld [vmem:[%s367 + $0xcf0] sm:$0xff]
        %v961 = vld [vmem:[%s367 + $0xcf8] sm:$0xff]
        %v962 = vld [vmem:[%s367 + $0xd00] sm:$0xff]
        %v963 = vld [vmem:[%s367 + $0xd08] sm:$0xff]
        %v964 = vld [vmem:[%s367 + $0xd10] sm:$0xff]
        %v965 = vld [vmem:[%s367 + $0xd18] sm:$0xff]
        %v966 = vld [vmem:[%s367 + $0xd20] sm:$0xff]
        %v967 = vld [vmem:[%s367 + $0xd28] sm:$0xff]
        %v968 = vld [vmem:[%s367 + $0xd30] sm:$0xff]
        %v969 = vld [vmem:[%s367 + $0xd38] sm:$0xff]
        %v970 = vld [vmem:[%s367 + $0xd40] sm:$0xff]
        %v971 = vld [vmem:[%s367 + $0xd48] sm:$0xff]
        %v972 = vld [vmem:[%s367 + $0xd50] sm:$0xff]
        %v973 = vld [vmem:[%s367 + $0xd58] sm:$0xff]
        %v974 = vld [vmem:[%s367 + $0xd60] sm:$0xff]
        %v975 = vld [vmem:[%s367 + $0xd68] sm:$0xff]
        %v976 = vld [vmem:[%s367 + $0xd70] sm:$0xff]
        %v977 = vld [vmem:[%s367 + $0xd78] sm:$0xff]
        %v978 = vld [vmem:[%s367 + $0xd80] sm:$0xff]
        %v979 = vld [vmem:[%s367 + $0xd88] sm:$0xff]
        %v980 = vld [vmem:[%s367 + $0xd90] sm:$0xff]
        %v981 = vld [vmem:[%s367 + $0xd98] sm:$0xff]
        %v982 = vld [vmem:[%s367 + $0xda0] sm:$0xff]
        %v983 = vld [vmem:[%s367 + $0xda8] sm:$0xff]
        %v984 = vld [vmem:[%s367 + $0xdb0] sm:$0xff]
        %v985 = vld [vmem:[%s367 + $0xdb8] sm:$0xff]
        %v986 = vld [vmem:[%s367 + $0xdc0] sm:$0xff]
        %v987 = vld [vmem:[%s367 + $0xdc8] sm:$0xff]
        %v988 = vld [vmem:[%s367 + $0xdd0] sm:$0xff]
        %v989 = vld [vmem:[%s367 + $0xdd8] sm:$0xff]
        %v990 = vld [vmem:[%s367 + $0xde0] sm:$0xff]
        %v991 = vld [vmem:[%s367 + $0xde8] sm:$0xff]
        %v992 = vld [vmem:[%s367 + $0xdf0] sm:$0xff]
        %v993 = vld [vmem:[%s367 + $0xdf8] sm:$0xff]
        %v994 = vld [vmem:[%s367 + $0xe00] sm:$0xff]
        %v995 = vld [vmem:[%s367 + $0xe08] sm:$0xff]
        %v996 = vld [vmem:[%s367 + $0xe10] sm:$0xff]
        %v997 = vld [vmem:[%s367 + $0xe18] sm:$0xff]
        %v998 = vld [vmem:[%s367 + $0xe20] sm:$0xff]
        %v999 = vld [vmem:[%s367 + $0xe28] sm:$0xff]
        %v1000 = vld [vmem:[%s367 + $0xe30] sm:$0xff]
        %v1001 = vld [vmem:[%s367 + $0xe38] sm:$0xff]
        %v1002 = vld [vmem:[%s367 + $0xe40] sm:$0xff]
        %v1003 = vld [vmem:[%s367 + $0xe48] sm:$0xff]
        %v1004 = vld [vmem:[%s367 + $0xe50] sm:$0xff]
        %v1005 = vld [vmem:[%s367 + $0xe58] sm:$0xff]
        %v1006 = vld [vmem:[%s367 + $0xe60] sm:$0xff]
        %v1007 = vld [vmem:[%s367 + $0xe68] sm:$0xff]
        %v1008 = vld [vmem:[%s367 + $0xe70] sm:$0xff]
        %v1009 = vld [vmem:[%s367 + $0xe78] sm:$0xff]
        %v1010 = vld [vmem:[%s367 + $0xe80] sm:$0xff]
        %v1011 = vld [vmem:[%s367 + $0xe88] sm:$0xff]
        %v1012 = vld [vmem:[%s367 + $0xe90] sm:$0xff]
        %v1013 = vld [vmem:[%s367 + $0xe98] sm:$0xff]
        %v1014 = vld [vmem:[%s367 + $0xea0] sm:$0xff]
        %v1015 = vld [vmem:[%s367 + $0xea8] sm:$0xff]
        %v1016 = vld [vmem:[%s367 + $0xeb0] sm:$0xff]
        %v1017 = vld [vmem:[%s367 + $0xeb8] sm:$0xff]
        %v1018 = vld [vmem:[%s367 + $0xec0] sm:$0xff]
        %v1019 = vld [vmem:[%s367 + $0xec8] sm:$0xff]
        %v1020 = vld [vmem:[%s367 + $0xed0] sm:$0xff]
        %v1021 = vld [vmem:[%s367 + $0xed8] sm:$0xff]
        %v1022 = vld [vmem:[%s367 + $0xee0] sm:$0xff]
        %v1023 = vld [vmem:[%s367 + $0xee8] sm:$0xff]
        %v1024 = vld [vmem:[%s367 + $0xef0] sm:$0xff]
        %v1025 = vld [vmem:[%s367 + $0xef8] sm:$0xff]
        %v1026 = vld [vmem:[%s367 + $0xf00] sm:$0xff]
        %v1027 = vld [vmem:[%s367 + $0xf08] sm:$0xff]
        %v1028 = vld [vmem:[%s367 + $0xf10] sm:$0xff]
        %v1029 = vld [vmem:[%s367 + $0xf18] sm:$0xff]
        %v1030 = vld [vmem:[%s367 + $0xf20] sm:$0xff]
        %v1031 = vld [vmem:[%s367 + $0xf28] sm:$0xff]
        %v1032 = vld [vmem:[%s367 + $0xf30] sm:$0xff]
        %v1033 = vld [vmem:[%s367 + $0xf38] sm:$0xff]
        %v1034 = vld [vmem:[%s367 + $0xf40] sm:$0xff]
        %v1035 = vld [vmem:[%s367 + $0xf48] sm:$0xff]
        %v1036 = vld [vmem:[%s367 + $0xf50] sm:$0xff]
        %v1037 = vld [vmem:[%s367 + $0xf58] sm:$0xff]
        %v1038 = vld [vmem:[%s367 + $0xf60] sm:$0xff]
        %v1039 = vld [vmem:[%s367 + $0xf68] sm:$0xff]
        %v1040 = vld [vmem:[%s367 + $0xf70] sm:$0xff]
        %v1041 = vld [vmem:[%s367 + $0xf78] sm:$0xff]
        %v1042 = vld [vmem:[%s367 + $0xf80] sm:$0xff]
        %v1043 = vld [vmem:[%s367 + $0xf88] sm:$0xff]
        %v1044 = vld [vmem:[%s367 + $0xf90] sm:$0xff]
        %v1045 = vld [vmem:[%s367 + $0xf98] sm:$0xff]
        %v1046 = vld [vmem:[%s367 + $0xfa0] sm:$0xff]
        %v1047 = vld [vmem:[%s367 + $0xfa8] sm:$0xff]
        %v1048 = vld [vmem:[%s367 + $0xfb0] sm:$0xff]
        %v1049 = vld [vmem:[%s367 + $0xfb8] sm:$0xff]
        %v1050 = vld [vmem:[%s367 + $0xfc0] sm:$0xff]
        %v1051 = vld [vmem:[%s367 + $0xfc8] sm:$0xff]
        %v1052 = vld [vmem:[%s367 + $0xfd0] sm:$0xff]
        %v1053 = vld [vmem:[%s367 + $0xfd8] sm:$0xff]
        %v1054 = vld [vmem:[%s367 + $0xfe0] sm:$0xff]
        %v1055 = vld [vmem:[%s367 + $0xfe8] sm:$0xff]
        %v1056 = vld [vmem:[%s367 + $0xff0] sm:$0xff]
        %v1057 = vld [vmem:[%s367 + $0xff8] sm:$0xff]
        %v1058 = vld [vmem:[%s367 + $0x1000] sm:$0xff]
        %v1059 = vld [vmem:[%s367 + $0x1008] sm:$0xff]
        %v1060 = vld [vmem:[%s367 + $0x1010] sm:$0xff]
        %v1061 = vld [vmem:[%s367 + $0x1018] sm:$0xff]
        %v1062 = vld [vmem:[%s367 + $0x1020] sm:$0xff]
        %v1063 = vld [vmem:[%s367 + $0x1028] sm:$0xff]
        %v1064 = vld [vmem:[%s367 + $0x1030] sm:$0xff]
        %v1065 = vld [vmem:[%s367 + $0x1038] sm:$0xff]
        %v1066 = vld [vmem:[%s367 + $0x1040] sm:$0xff]
        %v1067 = vld [vmem:[%s367 + $0x1048] sm:$0xff]
        %v1068 = vld [vmem:[%s367 + $0x1050] sm:$0xff]
        %v1069 = vld [vmem:[%s367 + $0x1058] sm:$0xff]
        %v1070 = vld [vmem:[%s367 + $0x1060] sm:$0xff]
        %v1071 = vld [vmem:[%s367 + $0x1068] sm:$0xff]
        %v1072 = vld [vmem:[%s367 + $0x1070] sm:$0xff]
        %v1073 = vld [vmem:[%s367 + $0x1078] sm:$0xff]
        %v1074 = vld [vmem:[%s367 + $0x1080] sm:$0xff]
        %v1075 = vld [vmem:[%s367 + $0x1088] sm:$0xff]
        %v1076 = vld [vmem:[%s367 + $0x1090] sm:$0xff]
        %v1077 = vld [vmem:[%s367 + $0x1098] sm:$0xff]
        %v1078 = vld [vmem:[%s367 + $0x10a0] sm:$0xff]
        %v1079 = vld [vmem:[%s367 + $0x10a8] sm:$0xff]
        %v1080 = vld [vmem:[%s367 + $0x10b0] sm:$0xff]
        %v1081 = vld [vmem:[%s367 + $0x10b8] sm:$0xff]
        %v1082 = vld [vmem:[%s367 + $0x10c0] sm:$0xff]
        %v1083 = vld [vmem:[%s367 + $0x10c8] sm:$0xff]
        %v1084 = vld [vmem:[%s367 + $0x10d0] sm:$0xff]
        %v1085 = vld [vmem:[%s367 + $0x10d8] sm:$0xff]
        %v1086 = vld [vmem:[%s367 + $0x10e0] sm:$0xff]
        %v1087 = vld [vmem:[%s367 + $0x10e8] sm:$0xff]
        %v1088 = vld [vmem:[%s367 + $0x10f0] sm:$0xff]
        %v1089 = vld [vmem:[%s367 + $0x10f8] sm:$0xff]
        %v1090 = vld [vmem:[%s367 + $0x1100] sm:$0xff]
        %v1091 = vld [vmem:[%s367 + $0x1108] sm:$0xff]
        %v1092 = vld [vmem:[%s367 + $0x1110] sm:$0xff]
        %v1093 = vld [vmem:[%s367 + $0x1118] sm:$0xff]
        %v1094 = vld [vmem:[%s367 + $0x1120] sm:$0xff]
        %v1095 = vld [vmem:[%s367 + $0x1128] sm:$0xff]
        %v1096 = vld [vmem:[%s367 + $0x1130] sm:$0xff]
        %v1097 = vld [vmem:[%s367 + $0x1138] sm:$0xff]
        %v1098 = vld [vmem:[%s367 + $0x1140] sm:$0xff]
        %v1099 = vld [vmem:[%s367 + $0x1148] sm:$0xff]
        %v1100 = vld [vmem:[%s367 + $0x1150] sm:$0xff]
        %v1101 = vld [vmem:[%s367 + $0x1158] sm:$0xff]
        %v1102 = vld [vmem:[%s367 + $0x1160] sm:$0xff]
        %v1103 = vld [vmem:[%s367 + $0x1168] sm:$0xff]
        %v1104 = vld [vmem:[%s367 + $0x1170] sm:$0xff]
        %v1105 = vld [vmem:[%s367 + $0x1178] sm:$0xff]
        %v1106 = vld [vmem:[%s367 + $0x1180] sm:$0xff]
        %v1107 = vld [vmem:[%s367 + $0x1188] sm:$0xff]
        %v1108 = vld [vmem:[%s367 + $0x1190] sm:$0xff]
        %v1109 = vld [vmem:[%s367 + $0x1198] sm:$0xff]
        %v1110 = vld [vmem:[%s367 + $0x11a0] sm:$0xff]
        %v1111 = vld [vmem:[%s367 + $0x11a8] sm:$0xff]
        %v1112 = vld [vmem:[%s367 + $0x11b0] sm:$0xff]
        %v1113 = vld [vmem:[%s367 + $0x11b8] sm:$0xff]
        %v1114 = vld [vmem:[%s367 + $0x11c0] sm:$0xff]
        %v1115 = vld [vmem:[%s367 + $0x11c8] sm:$0xff]
        %v1116 = vld [vmem:[%s367 + $0x11d0] sm:$0xff]
        %v1117 = vld [vmem:[%s367 + $0x11d8] sm:$0xff]
        %v1118 = vld [vmem:[%s367 + $0x11e0] sm:$0xff]
        %v1119 = vld [vmem:[%s367 + $0x11e8] sm:$0xff]
        %v1120 = vld [vmem:[%s367 + $0x11f0] sm:$0xff]
        %v1121 = vld [vmem:[%s367 + $0x11f8] sm:$0xff]
        %v1122 = vld [vmem:[%s367 + $0x1200] sm:$0xff]
        %v1123 = vld [vmem:[%s367 + $0x1208] sm:$0xff]
        %v1124 = vld [vmem:[%s367 + $0x1210] sm:$0xff]
        %v1125 = vld [vmem:[%s367 + $0x1218] sm:$0xff]
        %v1126 = vld [vmem:[%s367 + $0x1220] sm:$0xff]
        %v1127 = vld [vmem:[%s367 + $0x1228] sm:$0xff]
        %v1128 = vld [vmem:[%s367 + $0x1230] sm:$0xff]
        %v1129 = vld [vmem:[%s367 + $0x1238] sm:$0xff]
        %v1130 = vld [vmem:[%s367 + $0x1240] sm:$0xff]
        %v1131 = vld [vmem:[%s367 + $0x1248] sm:$0xff]
        %v1132 = vld [vmem:[%s367 + $0x1250] sm:$0xff]
        %v1133 = vld [vmem:[%s367 + $0x1258] sm:$0xff]
        %v1134 = vld [vmem:[%s367 + $0x1260] sm:$0xff]
        %v1135 = vld [vmem:[%s367 + $0x1268] sm:$0xff]
        %v1136 = vld [vmem:[%s367 + $0x1270] sm:$0xff]
        %v1137 = vld [vmem:[%s367 + $0x1278] sm:$0xff]
        %v1138 = vld [vmem:[%s367 + $0x1280] sm:$0xff]
        %v1139 = vld [vmem:[%s367 + $0x1288] sm:$0xff]
        %v1140 = vld [vmem:[%s367 + $0x1290] sm:$0xff]
        %v1141 = vld [vmem:[%s367 + $0x1298] sm:$0xff]
        %v1142 = vld [vmem:[%s367 + $0x12a0] sm:$0xff]
        %v1143 = vld [vmem:[%s367 + $0x12a8] sm:$0xff]
        %v1144 = vld [vmem:[%s367 + $0x12b0] sm:$0xff]
        %v1145 = vld [vmem:[%s367 + $0x12b8] sm:$0xff]
        %v1146 = vld [vmem:[%s367 + $0x12c0] sm:$0xff]
        %v1147 = vld [vmem:[%s367 + $0x12c8] sm:$0xff]
        %v1148 = vld [vmem:[%s367 + $0x12d0] sm:$0xff]
        %v1149 = vld [vmem:[%s367 + $0x12d8] sm:$0xff]
        %v1150 = vld [vmem:[%s367 + $0x12e0] sm:$0xff]
        %v1151 = vld [vmem:[%s367 + $0x12e8] sm:$0xff]
        %v1152 = vld [vmem:[%s367 + $0x12f0] sm:$0xff]
        %v1153 = vld [vmem:[%s367 + $0x12f8] sm:$0xff]
        %v1154 = vld [vmem:[%s367 + $0x1300] sm:$0xff]
        %v1155 = vld [vmem:[%s367 + $0x1308] sm:$0xff]
        %v1156 = vld [vmem:[%s367 + $0x1310] sm:$0xff]
        %v1157 = vld [vmem:[%s367 + $0x1318] sm:$0xff]
        %v1158 = vld [vmem:[%s367 + $0x1320] sm:$0xff]
        %v1159 = vld [vmem:[%s367 + $0x1328] sm:$0xff]
        %v1160 = vld [vmem:[%s367 + $0x1330] sm:$0xff]
        %v1161 = vld [vmem:[%s367 + $0x1338] sm:$0xff]
        %v1162 = vld [vmem:[%s367 + $0x1340] sm:$0xff]
        %v1163 = vld [vmem:[%s367 + $0x1348] sm:$0xff]
        %v1164 = vld [vmem:[%s367 + $0x1350] sm:$0xff]
        %v1165 = vld [vmem:[%s367 + $0x1358] sm:$0xff]
        %v1166 = vld [vmem:[%s367 + $0x1360] sm:$0xff]
        %v1167 = vld [vmem:[%s367 + $0x1368] sm:$0xff]
        %v1168 = vld [vmem:[%s367 + $0x1370] sm:$0xff]
        %v1169 = vld [vmem:[%s367 + $0x1378] sm:$0xff]
        %v1170 = vld [vmem:[%s367 + $0x1380] sm:$0xff]
        %v1171 = vld [vmem:[%s367 + $0x1388] sm:$0xff]
        %v1172 = vld [vmem:[%s367 + $0x1390] sm:$0xff]
        %v1173 = vld [vmem:[%s367 + $0x1398] sm:$0xff]
        %v1174 = vld [vmem:[%s367 + $0x13a0] sm:$0xff]
        %v1175 = vld [vmem:[%s367 + $0x13a8] sm:$0xff]
        %v1176 = vld [vmem:[%s367 + $0x13b0] sm:$0xff]
        %v1177 = vld [vmem:[%s367 + $0x13b8] sm:$0xff]
        %v1178 = vld [vmem:[%s367 + $0x13c0] sm:$0xff]
        %v1179 = vld [vmem:[%s367 + $0x13c8] sm:$0xff]
        %v1180 = vld [vmem:[%s367 + $0x13d0] sm:$0xff]
        %v1181 = vld [vmem:[%s367 + $0x13d8] sm:$0xff]
        %v1182 = vld [vmem:[%s367 + $0x13e0] sm:$0xff]
        %v1183 = vld [vmem:[%s367 + $0x13e8] sm:$0xff]
        %v1184 = vld [vmem:[%s367 + $0x13f0] sm:$0xff]
        %v1185 = vld [vmem:[%s367 + $0x13f8] sm:$0xff]
        %v1186 = vld [vmem:[%s367 + $0x1400] sm:$0xff]
        %v1187 = vld [vmem:[%s367 + $0x1408] sm:$0xff]
        %v1188 = vld [vmem:[%s367 + $0x1410] sm:$0xff]
        %v1189 = vld [vmem:[%s367 + $0x1418] sm:$0xff]
        %v1190 = vld [vmem:[%s367 + $0x1420] sm:$0xff]
        %v1191 = vld [vmem:[%s367 + $0x1428] sm:$0xff]
        %v1192 = vld [vmem:[%s367 + $0x1430] sm:$0xff]
        %v1193 = vld [vmem:[%s367 + $0x1438] sm:$0xff]
        %v1194 = vld [vmem:[%s367 + $0x1440] sm:$0xff]
        %v1195 = vld [vmem:[%s367 + $0x1448] sm:$0xff]
        %v1196 = vld [vmem:[%s367 + $0x1450] sm:$0xff]
        %v1197 = vld [vmem:[%s367 + $0x1458] sm:$0xff]
        %v1198 = vld [vmem:[%s367 + $0x1460] sm:$0xff]
        %v1199 = vld [vmem:[%s367 + $0x1468] sm:$0xff]
        %v1200 = vld [vmem:[%s367 + $0x1470] sm:$0xff]
        %v1201 = vld [vmem:[%s367 + $0x1478] sm:$0xff]
        %v1202 = vld [vmem:[%s367 + $0x1480] sm:$0xff]
        %v1203 = vld [vmem:[%s367 + $0x1488] sm:$0xff]
        %v1204 = vld [vmem:[%s367 + $0x1490] sm:$0xff]
        %v1205 = vld [vmem:[%s367 + $0x1498] sm:$0xff]
        %v1206 = vld [vmem:[%s367 + $0x14a0] sm:$0xff]
        %v1207 = vld [vmem:[%s367 + $0x14a8] sm:$0xff]
        %v1208 = vld [vmem:[%s367 + $0x14b0] sm:$0xff]
        %v1209 = vld [vmem:[%s367 + $0x14b8] sm:$0xff]
        %v1210 = vld [vmem:[%s367 + $0x14c0] sm:$0xff]
        %v1211 = vld [vmem:[%s367 + $0x14c8] sm:$0xff]
        %v1212 = vld [vmem:[%s367 + $0x14d0] sm:$0xff]
        %v1213 = vld [vmem:[%s367 + $0x14d8] sm:$0xff]
        %v1214 = vld [vmem:[%s367 + $0x14e0] sm:$0xff]
        %v1215 = vld [vmem:[%s367 + $0x14e8] sm:$0xff]
        %v1216 = vld [vmem:[%s367 + $0x14f0] sm:$0xff]
        %v1217 = vld [vmem:[%s367 + $0x14f8] sm:$0xff]
        %v1218 = vld [vmem:[%s367 + $0x1500] sm:$0xff]
        %v1219 = vld [vmem:[%s367 + $0x1508] sm:$0xff]
        %v1220 = vld [vmem:[%s367 + $0x1510] sm:$0xff]
        %v1221 = vld [vmem:[%s367 + $0x1518] sm:$0xff]
        %v1222 = vld [vmem:[%s367 + $0x1520] sm:$0xff]
        %v1223 = vld [vmem:[%s367 + $0x1528] sm:$0xff]
        %v1224 = vld [vmem:[%s367 + $0x1530] sm:$0xff]
        %v1225 = vld [vmem:[%s367 + $0x1538] sm:$0xff]
        %v1226 = vld [vmem:[%s367 + $0x1540] sm:$0xff]
        %v1227 = vld [vmem:[%s367 + $0x1548] sm:$0xff]
        %v1228 = vld [vmem:[%s367 + $0x1550] sm:$0xff]
        %v1229 = vld [vmem:[%s367 + $0x1558] sm:$0xff]
        %v1230 = vld [vmem:[%s367 + $0x1560] sm:$0xff]
        %v1231 = vld [vmem:[%s367 + $0x1568] sm:$0xff]
        %v1232 = vld [vmem:[%s367 + $0x1570] sm:$0xff]
        %v1233 = vld [vmem:[%s367 + $0x1578] sm:$0xff]
        %v1234 = vld [vmem:[%s367 + $0x1580] sm:$0xff]
        %v1235 = vld [vmem:[%s367 + $0x1588] sm:$0xff]
        %v1236 = vld [vmem:[%s367 + $0x1590] sm:$0xff]
        %v1237 = vld [vmem:[%s367 + $0x1598] sm:$0xff]
        %v1238 = vld [vmem:[%s367 + $0x15a0] sm:$0xff]
        %v1239 = vld [vmem:[%s367 + $0x15a8] sm:$0xff]
        %v1240 = vld [vmem:[%s367 + $0x15b0] sm:$0xff]
        %v1241 = vld [vmem:[%s367 + $0x15b8] sm:$0xff]
        %v1242 = vld [vmem:[%s367 + $0x15c0] sm:$0xff]
        %v1243 = vld [vmem:[%s367 + $0x15c8] sm:$0xff]
        %v1244 = vld [vmem:[%s367 + $0x15d0] sm:$0xff]
        %v1245 = vld [vmem:[%s367 + $0x15d8] sm:$0xff]
        %v1246 = vld [vmem:[%s367 + $0x15e0] sm:$0xff]
        %v1247 = vld [vmem:[%s367 + $0x15e8] sm:$0xff]
        %v1248 = vld [vmem:[%s367 + $0x15f0] sm:$0xff]
        %v1249 = vld [vmem:[%s367 + $0x15f8] sm:$0xff]
        %v1250 = vld [vmem:[%s367 + $0x1600] sm:$0xff]
        %v1251 = vld [vmem:[%s367 + $0x1608] sm:$0xff]
        %v1252 = vld [vmem:[%s367 + $0x1610] sm:$0xff]
        %v1253 = vld [vmem:[%s367 + $0x1618] sm:$0xff]
        %v1254 = vld [vmem:[%s367 + $0x1620] sm:$0xff]
        %v1255 = vld [vmem:[%s367 + $0x1628] sm:$0xff]
        %v1256 = vld [vmem:[%s367 + $0x1630] sm:$0xff]
        %v1257 = vld [vmem:[%s367 + $0x1638] sm:$0xff]
        %v1258 = vld [vmem:[%s367 + $0x1640] sm:$0xff]
        %v1259 = vld [vmem:[%s367 + $0x1648] sm:$0xff]
        %v1260 = vld [vmem:[%s367 + $0x1650] sm:$0xff]
        %v1261 = vld [vmem:[%s367 + $0x1658] sm:$0xff]
        %v1262 = vld [vmem:[%s367 + $0x1660] sm:$0xff]
        %v1263 = vld [vmem:[%s367 + $0x1668] sm:$0xff]
        %v1264 = vld [vmem:[%s367 + $0x1670] sm:$0xff]
        %v1265 = vld [vmem:[%s367 + $0x1678] sm:$0xff]
        %v1266 = vld [vmem:[%s367 + $0x1680] sm:$0xff]
        %v1267 = vld [vmem:[%s367 + $0x1688] sm:$0xff]
        %v1268 = vld [vmem:[%s367 + $0x1690] sm:$0xff]
        %v1269 = vld [vmem:[%s367 + $0x1698] sm:$0xff]
        %v1270 = vld [vmem:[%s367 + $0x16a0] sm:$0xff]
        %v1271 = vld [vmem:[%s367 + $0x16a8] sm:$0xff]
        %v1272 = vld [vmem:[%s367 + $0x16b0] sm:$0xff]
        %v1273 = vld [vmem:[%s367 + $0x16b8] sm:$0xff]
        %v1274 = vld [vmem:[%s367 + $0x16c0] sm:$0xff]
        %v1275 = vld [vmem:[%s367 + $0x16c8] sm:$0xff]
        %v1276 = vld [vmem:[%s367 + $0x16d0] sm:$0xff]
        %v1277 = vld [vmem:[%s367 + $0x16d8] sm:$0xff]
        %v1278 = vld [vmem:[%s367 + $0x16e0] sm:$0xff]
        %v1279 = vld [vmem:[%s367 + $0x16e8] sm:$0xff]
        %v1280 = vld [vmem:[%s367 + $0x16f0] sm:$0xff]
        %v1281 = vld [vmem:[%s367 + $0x16f8] sm:$0xff]
        %v1282 = vld [vmem:[%s367 + $0x1700] sm:$0xff]
        %v1283 = vld [vmem:[%s367 + $0x1708] sm:$0xff]
        %v1284 = vld [vmem:[%s367 + $0x1710] sm:$0xff]
        %v1285 = vld [vmem:[%s367 + $0x1718] sm:$0xff]
        %v1286 = vld [vmem:[%s367 + $0x1720] sm:$0xff]
        %v1287 = vld [vmem:[%s367 + $0x1728] sm:$0xff]
        %v1288 = vld [vmem:[%s367 + $0x1730] sm:$0xff]
        %v1289 = vld [vmem:[%s367 + $0x1738] sm:$0xff]
        %v1290 = vld [vmem:[%s367 + $0x1740] sm:$0xff]
        %v1291 = vld [vmem:[%s367 + $0x1748] sm:$0xff]
        %v1292 = vld [vmem:[%s367 + $0x1750] sm:$0xff]
        %v1293 = vld [vmem:[%s367 + $0x1758] sm:$0xff]
        %v1294 = vld [vmem:[%s367 + $0x1760] sm:$0xff]
        %v1295 = vld [vmem:[%s367 + $0x1768] sm:$0xff]
        %v1296 = vld [vmem:[%s367 + $0x1770] sm:$0xff]
        %v1297 = vld [vmem:[%s367 + $0x1778] sm:$0xff]
        %v1298 = vld [vmem:[%s367 + $0x1780] sm:$0xff]
        %v1299 = vld [vmem:[%s367 + $0x1788] sm:$0xff]
        %v1300 = vld [vmem:[%s367 + $0x1790] sm:$0xff]
        %v1301 = vld [vmem:[%s367 + $0x1798] sm:$0xff]
        %v1302 = vld [vmem:[%s367 + $0x17a0] sm:$0xff]
        %v1303 = vld [vmem:[%s367 + $0x17a8] sm:$0xff]
        %v1304 = vld [vmem:[%s367 + $0x17b0] sm:$0xff]
        %v1305 = vld [vmem:[%s367 + $0x17b8] sm:$0xff]
        %v1306 = vld [vmem:[%s367 + $0x17c0] sm:$0xff]
        %v1307 = vld [vmem:[%s367 + $0x17c8] sm:$0xff]
        %v1308 = vld [vmem:[%s367 + $0x17d0] sm:$0xff]
        %v1309 = vld [vmem:[%s367 + $0x17d8] sm:$0xff]
        %v1310 = vld [vmem:[%s367 + $0x17e0] sm:$0xff]
        %v1311 = vld [vmem:[%s367 + $0x17e8] sm:$0xff]
        %v1312 = vld [vmem:[%s367 + $0x17f0] sm:$0xff]
        %v1313 = vld [vmem:[%s367 + $0x17f8] sm:$0xff]
        %v1314 = vld [vmem:[%s367 + $0x1800] sm:$0xff]
        %v1315 = vld [vmem:[%s367 + $0x1808] sm:$0xff]
        %v1316 = vld [vmem:[%s367 + $0x1810] sm:$0xff]
        %v1317 = vld [vmem:[%s367 + $0x1818] sm:$0xff]
        %v1318 = vld [vmem:[%s367 + $0x1820] sm:$0xff]
        %v1319 = vld [vmem:[%s367 + $0x1828] sm:$0xff]
        %v1320 = vld [vmem:[%s367 + $0x1830] sm:$0xff]
        %v1321 = vld [vmem:[%s367 + $0x1838] sm:$0xff]
        %v1322 = vld [vmem:[%s367 + $0x1840] sm:$0xff]
        %v1323 = vld [vmem:[%s367 + $0x1848] sm:$0xff]
        %v1324 = vld [vmem:[%s367 + $0x1850] sm:$0xff]
        %v1325 = vld [vmem:[%s367 + $0x1858] sm:$0xff]
        %v1326 = vld [vmem:[%s367 + $0x1860] sm:$0xff]
        %v1327 = vld [vmem:[%s367 + $0x1868] sm:$0xff]
        %v1328 = vld [vmem:[%s367 + $0x1870] sm:$0xff]
        %v1329 = vld [vmem:[%s367 + $0x1878] sm:$0xff]
        %v1330 = vld [vmem:[%s367 + $0x1880] sm:$0xff]
        %v1331 = vld [vmem:[%s367 + $0x1888] sm:$0xff]
        %v1332 = vld [vmem:[%s367 + $0x1890] sm:$0xff]
        %v1333 = vld [vmem:[%s367 + $0x1898] sm:$0xff]
        %v1334 = vld [vmem:[%s367 + $0x18a0] sm:$0xff]
        %v1335 = vld [vmem:[%s367 + $0x18a8] sm:$0xff]
        %v1336 = vld [vmem:[%s367 + $0x18b0] sm:$0xff]
        %v1337 = vld [vmem:[%s367 + $0x18b8] sm:$0xff]
        %v1338 = vld [vmem:[%s367 + $0x18c0] sm:$0xff]
        %v1339 = vld [vmem:[%s367 + $0x18c8] sm:$0xff]
        %v1340 = vld [vmem:[%s367 + $0x18d0] sm:$0xff]
        %v1341 = vld [vmem:[%s367 + $0x18d8] sm:$0xff]
        %v1342 = vld [vmem:[%s367 + $0x18e0] sm:$0xff]
        %v1343 = vld [vmem:[%s367 + $0x18e8] sm:$0xff]
        %v1344 = vld [vmem:[%s367 + $0x18f0] sm:$0xff]
        %v1345 = vld [vmem:[%s367 + $0x18f8] sm:$0xff]
        %v1346 = vld [vmem:[%s367 + $0x1900] sm:$0xff]
        %v1347 = vld [vmem:[%s367 + $0x1908] sm:$0xff]
        %v1348 = vld [vmem:[%s367 + $0x1910] sm:$0xff]
        %v1349 = vld [vmem:[%s367 + $0x1918] sm:$0xff]
        %v1350 = vld [vmem:[%s367 + $0x1920] sm:$0xff]
        %v1351 = vld [vmem:[%s367 + $0x1928] sm:$0xff]
        %v1352 = vld [vmem:[%s367 + $0x1930] sm:$0xff]
        %v1353 = vld [vmem:[%s367 + $0x1938] sm:$0xff]
        %v1354 = vld [vmem:[%s367 + $0x1940] sm:$0xff]
        %v1355 = vld [vmem:[%s367 + $0x1948] sm:$0xff]
        %v1356 = vld [vmem:[%s367 + $0x1950] sm:$0xff]
        %v1357 = vld [vmem:[%s367 + $0x1958] sm:$0xff]
        %v1358 = vld [vmem:[%s367 + $0x1960] sm:$0xff]
        %v1359 = vld [vmem:[%s367 + $0x1968] sm:$0xff]
        %v1360 = vld [vmem:[%s367 + $0x1970] sm:$0xff]
        %v1361 = vld [vmem:[%s367 + $0x1978] sm:$0xff]
        %v1362 = vld [vmem:[%s367 + $0x1980] sm:$0xff]
        %v1363 = vld [vmem:[%s367 + $0x1988] sm:$0xff]
        %v1364 = vld [vmem:[%s367 + $0x1990] sm:$0xff]
        %v1365 = vld [vmem:[%s367 + $0x1998] sm:$0xff]
        %v1366 = vld [vmem:[%s367 + $0x19a0] sm:$0xff]
        %v1367 = vld [vmem:[%s367 + $0x19a8] sm:$0xff]
        %v1368 = vld [vmem:[%s367 + $0x19b0] sm:$0xff]
        %v1369 = vld [vmem:[%s367 + $0x19b8] sm:$0xff]
        %v1370 = vld [vmem:[%s367 + $0x19c0] sm:$0xff]
        %v1371 = vld [vmem:[%s367 + $0x19c8] sm:$0xff]
        %v1372 = vld [vmem:[%s367 + $0x19d0] sm:$0xff]
        %v1373 = vld [vmem:[%s367 + $0x19d8] sm:$0xff]
        %v1374 = vld [vmem:[%s367 + $0x19e0] sm:$0xff]
        %v1375 = vld [vmem:[%s367 + $0x19e8] sm:$0xff]
        %v1376 = vld [vmem:[%s367 + $0x19f0] sm:$0xff]
        %v1377 = vld [vmem:[%s367 + $0x19f8] sm:$0xff]
        %v1378 = vld [vmem:[%s367 + $0x1a00] sm:$0xff]
        %v1379 = vld [vmem:[%s367 + $0x1a08] sm:$0xff]
        %v1380 = vld [vmem:[%s367 + $0x1a10] sm:$0xff]
        %v1381 = vld [vmem:[%s367 + $0x1a18] sm:$0xff]
        %v1382 = vld [vmem:[%s367 + $0x1a20] sm:$0xff]
        %v1383 = vld [vmem:[%s367 + $0x1a28] sm:$0xff]
        %v1384 = vld [vmem:[%s367 + $0x1a30] sm:$0xff]
        %v1385 = vld [vmem:[%s367 + $0x1a38] sm:$0xff]
        %v1386 = vld [vmem:[%s367 + $0x1a40] sm:$0xff]
        %v1387 = vld [vmem:[%s367 + $0x1a48] sm:$0xff]
        %v1388 = vld [vmem:[%s367 + $0x1a50] sm:$0xff]
        %v1389 = vld [vmem:[%s367 + $0x1a58] sm:$0xff]
        %v1390 = vld [vmem:[%s367 + $0x1a60] sm:$0xff]
        %v1391 = vld [vmem:[%s367 + $0x1a68] sm:$0xff]
        %v1392 = vld [vmem:[%s367 + $0x1a70] sm:$0xff]
        %v1393 = vld [vmem:[%s367 + $0x1a78] sm:$0xff]
        %v1394 = vld [vmem:[%s367 + $0x1a80] sm:$0xff]
        %v1395 = vld [vmem:[%s367 + $0x1a88] sm:$0xff]
        %v1396 = vld [vmem:[%s367 + $0x1a90] sm:$0xff]
        %v1397 = vld [vmem:[%s367 + $0x1a98] sm:$0xff]
        %v1398 = vld [vmem:[%s367 + $0x1aa0] sm:$0xff]
        %v1399 = vld [vmem:[%s367 + $0x1aa8] sm:$0xff]
        %v1400 = vld [vmem:[%s367 + $0x1ab0] sm:$0xff]
        %v1401 = vld [vmem:[%s367 + $0x1ab8] sm:$0xff]
        %v1402 = vld [vmem:[%s367 + $0x1ac0] sm:$0xff]
        %v1403 = vld [vmem:[%s367 + $0x1ac8] sm:$0xff]
        %v1404 = vld [vmem:[%s367 + $0x1ad0] sm:$0xff]
        %v1405 = vld [vmem:[%s367 + $0x1ad8] sm:$0xff]
        %v1406 = vld [vmem:[%s367 + $0x1ae0] sm:$0xff]
        %v1407 = vld [vmem:[%s367 + $0x1ae8] sm:$0xff]
        %v1408 = vld [vmem:[%s367 + $0x1af0] sm:$0xff]
        %v1409 = vld [vmem:[%s367 + $0x1af8] sm:$0xff]
        %v1410 = vld [vmem:[%s367 + $0x1b00] sm:$0xff]
        %v1411 = vld [vmem:[%s367 + $0x1b08] sm:$0xff]
        %v1412 = vld [vmem:[%s367 + $0x1b10] sm:$0xff]
        %v1413 = vld [vmem:[%s367 + $0x1b18] sm:$0xff]
        %v1414 = vld [vmem:[%s367 + $0x1b20] sm:$0xff]
        %v1415 = vld [vmem:[%s367 + $0x1b28] sm:$0xff]
        %v1416 = vld [vmem:[%s367 + $0x1b30] sm:$0xff]
        %v1417 = vld [vmem:[%s367 + $0x1b38] sm:$0xff]
        %v1418 = vld [vmem:[%s367 + $0x1b40] sm:$0xff]
        %v1419 = vld [vmem:[%s367 + $0x1b48] sm:$0xff]
        %v1420 = vld [vmem:[%s367 + $0x1b50] sm:$0xff]
        %v1421 = vld [vmem:[%s367 + $0x1b58] sm:$0xff]
        %v1422 = vld [vmem:[%s367 + $0x1b60] sm:$0xff]
        %v1423 = vld [vmem:[%s367 + $0x1b68] sm:$0xff]
        %v1424 = vld [vmem:[%s367 + $0x1b70] sm:$0xff]
        %v1425 = vld [vmem:[%s367 + $0x1b78] sm:$0xff]
        %v1426 = vld [vmem:[%s367 + $0x1b80] sm:$0xff]
        %v1427 = vld [vmem:[%s367 + $0x1b88] sm:$0xff]
        %v1428 = vld [vmem:[%s367 + $0x1b90] sm:$0xff]
        %v1429 = vld [vmem:[%s367 + $0x1b98] sm:$0xff]
        %v1430 = vld [vmem:[%s367 + $0x1ba0] sm:$0xff]
        %v1431 = vld [vmem:[%s367 + $0x1ba8] sm:$0xff]
        %v1432 = vld [vmem:[%s367 + $0x1bb0] sm:$0xff]
        %v1433 = vld [vmem:[%s367 + $0x1bb8] sm:$0xff]
        %v1434 = vld [vmem:[%s367 + $0x1bc0] sm:$0xff]
        %v1435 = vld [vmem:[%s367 + $0x1bc8] sm:$0xff]
        %v1436 = vld [vmem:[%s367 + $0x1bd0] sm:$0xff]
        %v1437 = vld [vmem:[%s367 + $0x1bd8] sm:$0xff]
        %v1438 = vld [vmem:[%s367 + $0x1be0] sm:$0xff]
        %v1439 = vld [vmem:[%s367 + $0x1be8] sm:$0xff]
        %v1440 = vld [vmem:[%s367 + $0x1bf0] sm:$0xff]
        %v1441 = vld [vmem:[%s367 + $0x1bf8] sm:$0xff]
        %v1442 = vld [vmem:[%s367 + $0x1c00] sm:$0xff]
        %v1443 = vld [vmem:[%s367 + $0x1c08] sm:$0xff]
        %v1444 = vld [vmem:[%s367 + $0x1c10] sm:$0xff]
        %v1445 = vld [vmem:[%s367 + $0x1c18] sm:$0xff]
        %v1446 = vld [vmem:[%s367 + $0x1c20] sm:$0xff]
        %v1447 = vld [vmem:[%s367 + $0x1c28] sm:$0xff]
        %v1448 = vld [vmem:[%s367 + $0x1c30] sm:$0xff]
        %v1449 = vld [vmem:[%s367 + $0x1c38] sm:$0xff]
        %v1450 = vld [vmem:[%s367 + $0x1c40] sm:$0xff]
        %v1451 = vld [vmem:[%s367 + $0x1c48] sm:$0xff]
        %v1452 = vld [vmem:[%s367 + $0x1c50] sm:$0xff]
        %v1453 = vld [vmem:[%s367 + $0x1c58] sm:$0xff]
        %v1454 = vld [vmem:[%s367 + $0x1c60] sm:$0xff]
        %v1455 = vld [vmem:[%s367 + $0x1c68] sm:$0xff]
        %v1456 = vld [vmem:[%s367 + $0x1c70] sm:$0xff]
        %v1457 = vld [vmem:[%s367 + $0x1c78] sm:$0xff]
        %v1458 = vld [vmem:[%s367 + $0x1c80] sm:$0xff]
        %v1459 = vld [vmem:[%s367 + $0x1c88] sm:$0xff]
        %v1460 = vld [vmem:[%s367 + $0x1c90] sm:$0xff]
        %v1461 = vld [vmem:[%s367 + $0x1c98] sm:$0xff]
        %v1462 = vld [vmem:[%s367 + $0x1ca0] sm:$0xff]
        %v1463 = vld [vmem:[%s367 + $0x1ca8] sm:$0xff]
        %v1464 = vld [vmem:[%s367 + $0x1cb0] sm:$0xff]
        %v1465 = vld [vmem:[%s367 + $0x1cb8] sm:$0xff]
        %v1466 = vld [vmem:[%s367 + $0x1cc0] sm:$0xff]
        %v1467 = vld [vmem:[%s367 + $0x1cc8] sm:$0xff]
        %v1468 = vld [vmem:[%s367 + $0x1cd0] sm:$0xff]
        %v1469 = vld [vmem:[%s367 + $0x1cd8] sm:$0xff]
        %v1470 = vld [vmem:[%s367 + $0x1ce0] sm:$0xff]
        %v1471 = vld [vmem:[%s367 + $0x1ce8] sm:$0xff]
        %v1472 = vld [vmem:[%s367 + $0x1cf0] sm:$0xff]
        %v1473 = vld [vmem:[%s367 + $0x1cf8] sm:$0xff]
        %v1474 = vld [vmem:[%s367 + $0x1d00] sm:$0xff]
        %v1475 = vld [vmem:[%s367 + $0x1d08] sm:$0xff]
        %v1476 = vld [vmem:[%s367 + $0x1d10] sm:$0xff]
        %v1477 = vld [vmem:[%s367 + $0x1d18] sm:$0xff]
        %v1478 = vld [vmem:[%s367 + $0x1d20] sm:$0xff]
        %v1479 = vld [vmem:[%s367 + $0x1d28] sm:$0xff]
        %v1480 = vld [vmem:[%s367 + $0x1d30] sm:$0xff]
        %v1481 = vld [vmem:[%s367 + $0x1d38] sm:$0xff]
        %v1482 = vld [vmem:[%s367 + $0x1d40] sm:$0xff]
        %v1483 = vld [vmem:[%s367 + $0x1d48] sm:$0xff]
        %v1484 = vld [vmem:[%s367 + $0x1d50] sm:$0xff]
        %v1485 = vld [vmem:[%s367 + $0x1d58] sm:$0xff]
        %v1486 = vld [vmem:[%s367 + $0x1d60] sm:$0xff]
        %v1487 = vld [vmem:[%s367 + $0x1d68] sm:$0xff]
        %v1488 = vld [vmem:[%s367 + $0x1d70] sm:$0xff]
        %v1489 = vld [vmem:[%s367 + $0x1d78] sm:$0xff]
        %v1490 = vld [vmem:[%s367 + $0x1d80] sm:$0xff]
        %v1491 = vld [vmem:[%s367 + $0x1d88] sm:$0xff]
        %v1492 = vld [vmem:[%s367 + $0x1d90] sm:$0xff]
        %v1493 = vld [vmem:[%s367 + $0x1d98] sm:$0xff]
        %v1494 = vld [vmem:[%s367 + $0x1da0] sm:$0xff]
        %v1495 = vld [vmem:[%s367 + $0x1da8] sm:$0xff]
        %v1496 = vld [vmem:[%s367 + $0x1db0] sm:$0xff]
        %v1497 = vld [vmem:[%s367 + $0x1db8] sm:$0xff]
        %v1498 = vld [vmem:[%s367 + $0x1dc0] sm:$0xff]
        %v1499 = vld [vmem:[%s367 + $0x1dc8] sm:$0xff]
        %v1500 = vld [vmem:[%s367 + $0x1dd0] sm:$0xff]
        %v1501 = vld [vmem:[%s367 + $0x1dd8] sm:$0xff]
        %v1502 = vld [vmem:[%s367 + $0x1de0] sm:$0xff]
        %v1503 = vld [vmem:[%s367 + $0x1de8] sm:$0xff]
        %v1504 = vld [vmem:[%s367 + $0x1df0] sm:$0xff]
        %v1505 = vld [vmem:[%s367 + $0x1df8] sm:$0xff]
        %v1506 = vld [vmem:[%s367 + $0x1e00] sm:$0xff]
        %v1507 = vld [vmem:[%s367 + $0x1e08] sm:$0xff]
        %v1508 = vld [vmem:[%s367 + $0x1e10] sm:$0xff]
        %v1509 = vld [vmem:[%s367 + $0x1e18] sm:$0xff]
        %v1510 = vld [vmem:[%s367 + $0x1e20] sm:$0xff]
        %v1511 = vld [vmem:[%s367 + $0x1e28] sm:$0xff]
        %v1512 = vld [vmem:[%s367 + $0x1e30] sm:$0xff]
        %v1513 = vld [vmem:[%s367 + $0x1e38] sm:$0xff]
        %v1514 = vld [vmem:[%s367 + $0x1e40] sm:$0xff]
        %v1515 = vld [vmem:[%s367 + $0x1e48] sm:$0xff]
        %v1516 = vld [vmem:[%s367 + $0x1e50] sm:$0xff]
        %v1517 = vld [vmem:[%s367 + $0x1e58] sm:$0xff]
        %v1518 = vld [vmem:[%s367 + $0x1e60] sm:$0xff]
        %v1519 = vld [vmem:[%s367 + $0x1e68] sm:$0xff]
        %v1520 = vld [vmem:[%s367 + $0x1e70] sm:$0xff]
        %v1521 = vld [vmem:[%s367 + $0x1e78] sm:$0xff]
        %v1522 = vld [vmem:[%s367 + $0x1e80] sm:$0xff]
        %v1523 = vld [vmem:[%s367 + $0x1e88] sm:$0xff]
        %v1524 = vld [vmem:[%s367 + $0x1e90] sm:$0xff]
        %v1525 = vld [vmem:[%s367 + $0x1e98] sm:$0xff]
        %v1526 = vld [vmem:[%s367 + $0x1ea0] sm:$0xff]
        %v1527 = vld [vmem:[%s367 + $0x1ea8] sm:$0xff]
        %v1528 = vld [vmem:[%s367 + $0x1eb0] sm:$0xff]
        %v1529 = vld [vmem:[%s367 + $0x1eb8] sm:$0xff]
        %v1530 = vld [vmem:[%s367 + $0x1ec0] sm:$0xff]
        %v1531 = vld [vmem:[%s367 + $0x1ec8] sm:$0xff]
        %v1532 = vld [vmem:[%s367 + $0x1ed0] sm:$0xff]
        %v1533 = vld [vmem:[%s367 + $0x1ed8] sm:$0xff]
        %v1534 = vld [vmem:[%s367 + $0x1ee0] sm:$0xff]
        %v1535 = vld [vmem:[%s367 + $0x1ee8] sm:$0xff]
        %v1536 = vld [vmem:[%s367 + $0x1ef0] sm:$0xff]
        %v1537 = vld [vmem:[%s367 + $0x1ef8] sm:$0xff]
        %v1538 = vld [vmem:[%s367 + $0x1f00] sm:$0xff]
        %v1539 = vld [vmem:[%s367 + $0x1f08] sm:$0xff]
        %v1540 = vld [vmem:[%s367 + $0x1f10] sm:$0xff]
        %v1541 = vld [vmem:[%s367 + $0x1f18] sm:$0xff]
        %v1542 = vld [vmem:[%s367 + $0x1f20] sm:$0xff]
        %v1543 = vld [vmem:[%s367 + $0x1f28] sm:$0xff]
        %v1544 = vld [vmem:[%s367 + $0x1f30] sm:$0xff]
        %v1545 = vld [vmem:[%s367 + $0x1f38] sm:$0xff]
        %v1546 = vld [vmem:[%s367 + $0x1f40] sm:$0xff]
        %v1547 = vld [vmem:[%s367 + $0x1f48] sm:$0xff]
        %v1548 = vld [vmem:[%s367 + $0x1f50] sm:$0xff]
        %v1549 = vld [vmem:[%s367 + $0x1f58] sm:$0xff]
        %v1550 = vld [vmem:[%s367 + $0x1f60] sm:$0xff]
        %v1551 = vld [vmem:[%s367 + $0x1f68] sm:$0xff]
        %v1552 = vld [vmem:[%s367 + $0x1f70] sm:$0xff]
        %v1553 = vld [vmem:[%s367 + $0x1f78] sm:$0xff]
        %v1554 = vld [vmem:[%s367 + $0x1f80] sm:$0xff]
        %v1555 = vld [vmem:[%s367 + $0x1f88] sm:$0xff]
        %v1556 = vld [vmem:[%s367 + $0x1f90] sm:$0xff]
        %v1557 = vld [vmem:[%s367 + $0x1f98] sm:$0xff]
        %v1558 = vld [vmem:[%s367 + $0x1fa0] sm:$0xff]
        %v1559 = vld [vmem:[%s367 + $0x1fa8] sm:$0xff]
        %v1560 = vld [vmem:[%s367 + $0x1fb0] sm:$0xff]
        %v1561 = vld [vmem:[%s367 + $0x1fb8] sm:$0xff]
        %v1562 = vld [vmem:[%s367 + $0x1fc0] sm:$0xff]
        %v1563 = vld [vmem:[%s367 + $0x1fc8] sm:$0xff]
        %v1564 = vld [vmem:[%s367 + $0x1fd0] sm:$0xff]
        %v1565 = vld [vmem:[%s367 + $0x1fd8] sm:$0xff]
        %v1566 = vld [vmem:[%s367 + $0x1fe0] sm:$0xff]
        %v1567 = vld [vmem:[%s367 + $0x1fe8] sm:$0xff]
        %v1568 = vld [vmem:[%s367 + $0x1ff0] sm:$0xff]
        %v1569 = vld [vmem:[%s367 + $0x1ff8] sm:$0xff]
        %v2594 = vunpack.c.l.b16 %v546
        %v2595 = vunpack.c.h.b16 %v546
        %v2596 = vunpack.c.l.b16 %v547
        %v2597 = vunpack.c.h.b16 %v547
        %v2598 = vunpack.c.l.b16 %v548
        %v2599 = vunpack.c.h.b16 %v548
        %v2600 = vunpack.c.l.b16 %v549
        %v2601 = vunpack.c.h.b16 %v549
        %v2602 = vunpack.c.l.b16 %v550
        %v2603 = vunpack.c.h.b16 %v550
        %v2604 = vunpack.c.l.b16 %v551
        %v2605 = vunpack.c.h.b16 %v551
        %v2606 = vunpack.c.l.b16 %v552
        %v2607 = vunpack.c.h.b16 %v552
        %v2608 = vunpack.c.l.b16 %v553
        %v2609 = vunpack.c.h.b16 %v553
        %v2610 = vunpack.c.l.b16 %v554
        %v2611 = vunpack.c.h.b16 %v554
        %v2612 = vunpack.c.l.b16 %v555
        %v2613 = vunpack.c.h.b16 %v555
        %v2614 = vunpack.c.l.b16 %v556
        %v2615 = vunpack.c.h.b16 %v556
        %v2616 = vunpack.c.l.b16 %v557
        %v2617 = vunpack.c.h.b16 %v557
        %v2618 = vunpack.c.l.b16 %v558
        %v2619 = vunpack.c.h.b16 %v558
        %v2620 = vunpack.c.l.b16 %v559
        %v2621 = vunpack.c.h.b16 %v559
        %v2622 = vunpack.c.l.b16 %v560
        %v2623 = vunpack.c.h.b16 %v560
        %v2624 = vunpack.c.l.b16 %v561
        %v2625 = vunpack.c.h.b16 %v561
        %v2626 = vunpack.c.l.b16 %v562
        %v2627 = vunpack.c.h.b16 %v562
        %v2628 = vunpack.c.l.b16 %v563
        %v2629 = vunpack.c.h.b16 %v563
        %v2630 = vunpack.c.l.b16 %v564
        %v2631 = vunpack.c.h.b16 %v564
        %v2632 = vunpack.c.l.b16 %v565
        %v2633 = vunpack.c.h.b16 %v565
        %v2634 = vunpack.c.l.b16 %v566
        %v2635 = vunpack.c.h.b16 %v566
        %v2636 = vunpack.c.l.b16 %v567
        %v2637 = vunpack.c.h.b16 %v567
        %v2638 = vunpack.c.l.b16 %v568
        %v2639 = vunpack.c.h.b16 %v568
        %v2640 = vunpack.c.l.b16 %v569
        %v2641 = vunpack.c.h.b16 %v569
        %v2642 = vunpack.c.l.b16 %v570
        %v2643 = vunpack.c.h.b16 %v570
        %v2644 = vunpack.c.l.b16 %v571
        %v2645 = vunpack.c.h.b16 %v571
        %v2646 = vunpack.c.l.b16 %v572
        %v2647 = vunpack.c.h.b16 %v572
        %v2648 = vunpack.c.l.b16 %v573
        %v2649 = vunpack.c.h.b16 %v573
        %v2650 = vunpack.c.l.b16 %v574
        %v2651 = vunpack.c.h.b16 %v574
        %v2652 = vunpack.c.l.b16 %v575
        %v2653 = vunpack.c.h.b16 %v575
        %v2654 = vunpack.c.l.b16 %v576
        %v2655 = vunpack.c.h.b16 %v576
        %v2656 = vunpack.c.l.b16 %v577
        %v2657 = vunpack.c.h.b16 %v577
        %v2658 = vunpack.c.l.b16 %v578
        %v2659 = vunpack.c.h.b16 %v578
        %v2660 = vunpack.c.l.b16 %v579
        %v2661 = vunpack.c.h.b16 %v579
        %v2662 = vunpack.c.l.b16 %v580
        %v2663 = vunpack.c.h.b16 %v580
        %v2664 = vunpack.c.l.b16 %v581
        %v2665 = vunpack.c.h.b16 %v581
        %v2666 = vunpack.c.l.b16 %v582
        %v2667 = vunpack.c.h.b16 %v582
        %v2668 = vunpack.c.l.b16 %v583
        %v2669 = vunpack.c.h.b16 %v583
        %v2670 = vunpack.c.l.b16 %v584
        %v2671 = vunpack.c.h.b16 %v584
        %v2672 = vunpack.c.l.b16 %v585
        %v2673 = vunpack.c.h.b16 %v585
        %v2674 = vunpack.c.l.b16 %v586
        %v2675 = vunpack.c.h.b16 %v586
        %v2676 = vunpack.c.l.b16 %v587
        %v2677 = vunpack.c.h.b16 %v587
        %v2678 = vunpack.c.l.b16 %v588
        %v2679 = vunpack.c.h.b16 %v588
        %v2680 = vunpack.c.l.b16 %v589
        %v2681 = vunpack.c.h.b16 %v589
        %v2682 = vunpack.c.l.b16 %v590
        %v2683 = vunpack.c.h.b16 %v590
        %v2684 = vunpack.c.l.b16 %v591
        %v2685 = vunpack.c.h.b16 %v591
        %v2686 = vunpack.c.l.b16 %v592
        %v2687 = vunpack.c.h.b16 %v592
        %v2688 = vunpack.c.l.b16 %v593
        %v2689 = vunpack.c.h.b16 %v593
        %v2690 = vunpack.c.l.b16 %v594
        %v2691 = vunpack.c.h.b16 %v594
        %v2692 = vunpack.c.l.b16 %v595
        %v2693 = vunpack.c.h.b16 %v595
        %v2694 = vunpack.c.l.b16 %v596
        %v2695 = vunpack.c.h.b16 %v596
        %v2696 = vunpack.c.l.b16 %v597
        %v2697 = vunpack.c.h.b16 %v597
        %v2698 = vunpack.c.l.b16 %v598
        %v2699 = vunpack.c.h.b16 %v598
        %v2700 = vunpack.c.l.b16 %v599
        %v2701 = vunpack.c.h.b16 %v599
        %v2702 = vunpack.c.l.b16 %v600
        %v2703 = vunpack.c.h.b16 %v600
        %v2704 = vunpack.c.l.b16 %v601
        %v2705 = vunpack.c.h.b16 %v601
        %v2706 = vunpack.c.l.b16 %v602
        %v2707 = vunpack.c.h.b16 %v602
        %v2708 = vunpack.c.l.b16 %v603
        %v2709 = vunpack.c.h.b16 %v603
        %v2710 = vunpack.c.l.b16 %v604
        %v2711 = vunpack.c.h.b16 %v604
        %v2712 = vunpack.c.l.b16 %v605
        %v2713 = vunpack.c.h.b16 %v605
        %v2714 = vunpack.c.l.b16 %v606
        %v2715 = vunpack.c.h.b16 %v606
        %v2716 = vunpack.c.l.b16 %v607
        %v2717 = vunpack.c.h.b16 %v607
        %v2718 = vunpack.c.l.b16 %v608
        %v2719 = vunpack.c.h.b16 %v608
        %v2720 = vunpack.c.l.b16 %v609
        %v2721 = vunpack.c.h.b16 %v609
        %v2722 = vunpack.c.l.b16 %v610
        %v2723 = vunpack.c.h.b16 %v610
        %v2724 = vunpack.c.l.b16 %v611
        %v2725 = vunpack.c.h.b16 %v611
        %v2726 = vunpack.c.l.b16 %v612
        %v2727 = vunpack.c.h.b16 %v612
        %v2728 = vunpack.c.l.b16 %v613
        %v2729 = vunpack.c.h.b16 %v613
        %v2730 = vunpack.c.l.b16 %v614
        %v2731 = vunpack.c.h.b16 %v614
        %v2732 = vunpack.c.l.b16 %v615
        %v2733 = vunpack.c.h.b16 %v615
        %v2734 = vunpack.c.l.b16 %v616
        %v2735 = vunpack.c.h.b16 %v616
        %v2736 = vunpack.c.l.b16 %v617
        %v2737 = vunpack.c.h.b16 %v617
        %v2738 = vunpack.c.l.b16 %v618
        %v2739 = vunpack.c.h.b16 %v618
        %v2740 = vunpack.c.l.b16 %v619
        %v2741 = vunpack.c.h.b16 %v619
        %v2742 = vunpack.c.l.b16 %v620
        %v2743 = vunpack.c.h.b16 %v620
        %v2744 = vunpack.c.l.b16 %v621
        %v2745 = vunpack.c.h.b16 %v621
        %v2746 = vunpack.c.l.b16 %v622
        %v2747 = vunpack.c.h.b16 %v622
        %v2748 = vunpack.c.l.b16 %v623
        %v2749 = vunpack.c.h.b16 %v623
        %v2750 = vunpack.c.l.b16 %v624
        %v2751 = vunpack.c.h.b16 %v624
        %v2752 = vunpack.c.l.b16 %v625
        %v2753 = vunpack.c.h.b16 %v625
        %v2754 = vunpack.c.l.b16 %v626
        %v2755 = vunpack.c.h.b16 %v626
        %v2756 = vunpack.c.l.b16 %v627
        %v2757 = vunpack.c.h.b16 %v627
        %v2758 = vunpack.c.l.b16 %v628
        %v2759 = vunpack.c.h.b16 %v628
        %v2760 = vunpack.c.l.b16 %v629
        %v2761 = vunpack.c.h.b16 %v629
        %v2762 = vunpack.c.l.b16 %v630
        %v2763 = vunpack.c.h.b16 %v630
        %v2764 = vunpack.c.l.b16 %v631
        %v2765 = vunpack.c.h.b16 %v631
        %v2766 = vunpack.c.l.b16 %v632
        %v2767 = vunpack.c.h.b16 %v632
        %v2768 = vunpack.c.l.b16 %v633
        %v2769 = vunpack.c.h.b16 %v633
        %v2770 = vunpack.c.l.b16 %v634
        %v2771 = vunpack.c.h.b16 %v634
        %v2772 = vunpack.c.l.b16 %v635
        %v2773 = vunpack.c.h.b16 %v635
        %v2774 = vunpack.c.l.b16 %v636
        %v2775 = vunpack.c.h.b16 %v636
        %v2776 = vunpack.c.l.b16 %v637
        %v2777 = vunpack.c.h.b16 %v637
        %v2778 = vunpack.c.l.b16 %v638
        %v2779 = vunpack.c.h.b16 %v638
        %v2780 = vunpack.c.l.b16 %v639
        %v2781 = vunpack.c.h.b16 %v639
        %v2782 = vunpack.c.l.b16 %v640
        %v2783 = vunpack.c.h.b16 %v640
        %v2784 = vunpack.c.l.b16 %v641
        %v2785 = vunpack.c.h.b16 %v641
        %v2786 = vunpack.c.l.b16 %v642
        %v2787 = vunpack.c.h.b16 %v642
        %v2788 = vunpack.c.l.b16 %v643
        %v2789 = vunpack.c.h.b16 %v643
        %v2790 = vunpack.c.l.b16 %v644
        %v2791 = vunpack.c.h.b16 %v644
        %v2792 = vunpack.c.l.b16 %v645
        %v2793 = vunpack.c.h.b16 %v645
        %v2794 = vunpack.c.l.b16 %v646
        %v2795 = vunpack.c.h.b16 %v646
        %v2796 = vunpack.c.l.b16 %v647
        %v2797 = vunpack.c.h.b16 %v647
        %v2798 = vunpack.c.l.b16 %v648
        %v2799 = vunpack.c.h.b16 %v648
        %v2800 = vunpack.c.l.b16 %v649
        %v2801 = vunpack.c.h.b16 %v649
        %v2802 = vunpack.c.l.b16 %v650
        %v2803 = vunpack.c.h.b16 %v650
        %v2804 = vunpack.c.l.b16 %v651
        %v2805 = vunpack.c.h.b16 %v651
        %v2806 = vunpack.c.l.b16 %v652
        %v2807 = vunpack.c.h.b16 %v652
        %v2808 = vunpack.c.l.b16 %v653
        %v2809 = vunpack.c.h.b16 %v653
        %v2810 = vunpack.c.l.b16 %v654
        %v2811 = vunpack.c.h.b16 %v654
        %v2812 = vunpack.c.l.b16 %v655
        %v2813 = vunpack.c.h.b16 %v655
        %v2814 = vunpack.c.l.b16 %v656
        %v2815 = vunpack.c.h.b16 %v656
        %v2816 = vunpack.c.l.b16 %v657
        %v2817 = vunpack.c.h.b16 %v657
        %v2818 = vunpack.c.l.b16 %v658
        %v2819 = vunpack.c.h.b16 %v658
        %v2820 = vunpack.c.l.b16 %v659
        %v2821 = vunpack.c.h.b16 %v659
        %v2822 = vunpack.c.l.b16 %v660
        %v2823 = vunpack.c.h.b16 %v660
        %v2824 = vunpack.c.l.b16 %v661
        %v2825 = vunpack.c.h.b16 %v661
        %v2826 = vunpack.c.l.b16 %v662
        %v2827 = vunpack.c.h.b16 %v662
        %v2828 = vunpack.c.l.b16 %v663
        %v2829 = vunpack.c.h.b16 %v663
        %v2830 = vunpack.c.l.b16 %v664
        %v2831 = vunpack.c.h.b16 %v664
        %v2832 = vunpack.c.l.b16 %v665
        %v2833 = vunpack.c.h.b16 %v665
        %v2834 = vunpack.c.l.b16 %v666
        %v2835 = vunpack.c.h.b16 %v666
        %v2836 = vunpack.c.l.b16 %v667
        %v2837 = vunpack.c.h.b16 %v667
        %v2838 = vunpack.c.l.b16 %v668
        %v2839 = vunpack.c.h.b16 %v668
        %v2840 = vunpack.c.l.b16 %v669
        %v2841 = vunpack.c.h.b16 %v669
        %v2842 = vunpack.c.l.b16 %v670
        %v2843 = vunpack.c.h.b16 %v670
        %v2844 = vunpack.c.l.b16 %v671
        %v2845 = vunpack.c.h.b16 %v671
        %v2846 = vunpack.c.l.b16 %v672
        %v2847 = vunpack.c.h.b16 %v672
        %v2848 = vunpack.c.l.b16 %v673
        %v2849 = vunpack.c.h.b16 %v673
        %v2850 = vunpack.c.l.b16 %v674
        %v2851 = vunpack.c.h.b16 %v674
        %v2852 = vunpack.c.l.b16 %v675
        %v2853 = vunpack.c.h.b16 %v675
        %v2854 = vunpack.c.l.b16 %v676
        %v2855 = vunpack.c.h.b16 %v676
        %v2856 = vunpack.c.l.b16 %v677
        %v2857 = vunpack.c.h.b16 %v677
        %v2858 = vunpack.c.l.b16 %v678
        %v2859 = vunpack.c.h.b16 %v678
        %v2860 = vunpack.c.l.b16 %v679
        %v2861 = vunpack.c.h.b16 %v679
        %v2862 = vunpack.c.l.b16 %v680
        %v2863 = vunpack.c.h.b16 %v680
        %v2864 = vunpack.c.l.b16 %v681
        %v2865 = vunpack.c.h.b16 %v681
        %v2866 = vunpack.c.l.b16 %v682
        %v2867 = vunpack.c.h.b16 %v682
        %v2868 = vunpack.c.l.b16 %v683
        %v2869 = vunpack.c.h.b16 %v683
        %v2870 = vunpack.c.l.b16 %v684
        %v2871 = vunpack.c.h.b16 %v684
        %v2872 = vunpack.c.l.b16 %v685
        %v2873 = vunpack.c.h.b16 %v685
        %v2874 = vunpack.c.l.b16 %v686
        %v2875 = vunpack.c.h.b16 %v686
        %v2876 = vunpack.c.l.b16 %v687
        %v2877 = vunpack.c.h.b16 %v687
        %v2878 = vunpack.c.l.b16 %v688
        %v2879 = vunpack.c.h.b16 %v688
        %v2880 = vunpack.c.l.b16 %v689
        %v2881 = vunpack.c.h.b16 %v689
        %v2882 = vunpack.c.l.b16 %v690
        %v2883 = vunpack.c.h.b16 %v690
        %v2884 = vunpack.c.l.b16 %v691
        %v2885 = vunpack.c.h.b16 %v691
        %v2886 = vunpack.c.l.b16 %v692
        %v2887 = vunpack.c.h.b16 %v692
        %v2888 = vunpack.c.l.b16 %v693
        %v2889 = vunpack.c.h.b16 %v693
        %v2890 = vunpack.c.l.b16 %v694
        %v2891 = vunpack.c.h.b16 %v694
        %v2892 = vunpack.c.l.b16 %v695
        %v2893 = vunpack.c.h.b16 %v695
        %v2894 = vunpack.c.l.b16 %v696
        %v2895 = vunpack.c.h.b16 %v696
        %v2896 = vunpack.c.l.b16 %v697
        %v2897 = vunpack.c.h.b16 %v697
        %v2898 = vunpack.c.l.b16 %v698
        %v2899 = vunpack.c.h.b16 %v698
        %v2900 = vunpack.c.l.b16 %v699
        %v2901 = vunpack.c.h.b16 %v699
        %v2902 = vunpack.c.l.b16 %v700
        %v2903 = vunpack.c.h.b16 %v700
        %v2904 = vunpack.c.l.b16 %v701
        %v2905 = vunpack.c.h.b16 %v701
        %v2906 = vunpack.c.l.b16 %v702
        %v2907 = vunpack.c.h.b16 %v702
        %v2908 = vunpack.c.l.b16 %v703
        %v2909 = vunpack.c.h.b16 %v703
        %v2910 = vunpack.c.l.b16 %v704
        %v2911 = vunpack.c.h.b16 %v704
        %v2912 = vunpack.c.l.b16 %v705
        %v2913 = vunpack.c.h.b16 %v705
        %v2914 = vunpack.c.l.b16 %v706
        %v2915 = vunpack.c.h.b16 %v706
        %v2916 = vunpack.c.l.b16 %v707
        %v2917 = vunpack.c.h.b16 %v707
        %v2918 = vunpack.c.l.b16 %v708
        %v2919 = vunpack.c.h.b16 %v708
        %v2920 = vunpack.c.l.b16 %v709
        %v2921 = vunpack.c.h.b16 %v709
        %v2922 = vunpack.c.l.b16 %v710
        %v2923 = vunpack.c.h.b16 %v710
        %v2924 = vunpack.c.l.b16 %v711
        %v2925 = vunpack.c.h.b16 %v711
        %v2926 = vunpack.c.l.b16 %v712
        %v2927 = vunpack.c.h.b16 %v712
        %v2928 = vunpack.c.l.b16 %v713
        %v2929 = vunpack.c.h.b16 %v713
        %v2930 = vunpack.c.l.b16 %v714
        %v2931 = vunpack.c.h.b16 %v714
        %v2932 = vunpack.c.l.b16 %v715
        %v2933 = vunpack.c.h.b16 %v715
        %v2934 = vunpack.c.l.b16 %v716
        %v2935 = vunpack.c.h.b16 %v716
        %v2936 = vunpack.c.l.b16 %v717
        %v2937 = vunpack.c.h.b16 %v717
        %v2938 = vunpack.c.l.b16 %v718
        %v2939 = vunpack.c.h.b16 %v718
        %v2940 = vunpack.c.l.b16 %v719
        %v2941 = vunpack.c.h.b16 %v719
        %v2942 = vunpack.c.l.b16 %v720
        %v2943 = vunpack.c.h.b16 %v720
        %v2944 = vunpack.c.l.b16 %v721
        %v2945 = vunpack.c.h.b16 %v721
        %v2946 = vunpack.c.l.b16 %v722
        %v2947 = vunpack.c.h.b16 %v722
        %v2948 = vunpack.c.l.b16 %v723
        %v2949 = vunpack.c.h.b16 %v723
        %v2950 = vunpack.c.l.b16 %v724
        %v2951 = vunpack.c.h.b16 %v724
        %v2952 = vunpack.c.l.b16 %v725
        %v2953 = vunpack.c.h.b16 %v725
        %v2954 = vunpack.c.l.b16 %v726
        %v2955 = vunpack.c.h.b16 %v726
        %v2956 = vunpack.c.l.b16 %v727
        %v2957 = vunpack.c.h.b16 %v727
        %v2958 = vunpack.c.l.b16 %v728
        %v2959 = vunpack.c.h.b16 %v728
        %v2960 = vunpack.c.l.b16 %v729
        %v2961 = vunpack.c.h.b16 %v729
        %v2962 = vunpack.c.l.b16 %v730
        %v2963 = vunpack.c.h.b16 %v730
        %v2964 = vunpack.c.l.b16 %v731
        %v2965 = vunpack.c.h.b16 %v731
        %v2966 = vunpack.c.l.b16 %v732
        %v2967 = vunpack.c.h.b16 %v732
        %v2968 = vunpack.c.l.b16 %v733
        %v2969 = vunpack.c.h.b16 %v733
        %v2970 = vunpack.c.l.b16 %v734
        %v2971 = vunpack.c.h.b16 %v734
        %v2972 = vunpack.c.l.b16 %v735
        %v2973 = vunpack.c.h.b16 %v735
        %v2974 = vunpack.c.l.b16 %v736
        %v2975 = vunpack.c.h.b16 %v736
        %v2976 = vunpack.c.l.b16 %v737
        %v2977 = vunpack.c.h.b16 %v737
        %v2978 = vunpack.c.l.b16 %v738
        %v2979 = vunpack.c.h.b16 %v738
        %v2980 = vunpack.c.l.b16 %v739
        %v2981 = vunpack.c.h.b16 %v739
        %v2982 = vunpack.c.l.b16 %v740
        %v2983 = vunpack.c.h.b16 %v740
        %v2984 = vunpack.c.l.b16 %v741
        %v2985 = vunpack.c.h.b16 %v741
        %v2986 = vunpack.c.l.b16 %v742
        %v2987 = vunpack.c.h.b16 %v742
        %v2988 = vunpack.c.l.b16 %v743
        %v2989 = vunpack.c.h.b16 %v743
        %v2990 = vunpack.c.l.b16 %v744
        %v2991 = vunpack.c.h.b16 %v744
        %v2992 = vunpack.c.l.b16 %v745
        %v2993 = vunpack.c.h.b16 %v745
        %v2994 = vunpack.c.l.b16 %v746
        %v2995 = vunpack.c.h.b16 %v746
        %v2996 = vunpack.c.l.b16 %v747
        %v2997 = vunpack.c.h.b16 %v747
        %v2998 = vunpack.c.l.b16 %v748
        %v2999 = vunpack.c.h.b16 %v748
        %v3000 = vunpack.c.l.b16 %v749
        %v3001 = vunpack.c.h.b16 %v749
        %v3002 = vunpack.c.l.b16 %v750
        %v3003 = vunpack.c.h.b16 %v750
        %v3004 = vunpack.c.l.b16 %v751
        %v3005 = vunpack.c.h.b16 %v751
        %v3006 = vunpack.c.l.b16 %v752
        %v3007 = vunpack.c.h.b16 %v752
        %v3008 = vunpack.c.l.b16 %v753
        %v3009 = vunpack.c.h.b16 %v753
        %v3010 = vunpack.c.l.b16 %v754
        %v3011 = vunpack.c.h.b16 %v754
        %v3012 = vunpack.c.l.b16 %v755
        %v3013 = vunpack.c.h.b16 %v755
        %v3014 = vunpack.c.l.b16 %v756
        %v3015 = vunpack.c.h.b16 %v756
        %v3016 = vunpack.c.l.b16 %v757
        %v3017 = vunpack.c.h.b16 %v757
        %v3018 = vunpack.c.l.b16 %v758
        %v3019 = vunpack.c.h.b16 %v758
        %v3020 = vunpack.c.l.b16 %v759
        %v3021 = vunpack.c.h.b16 %v759
        %v3022 = vunpack.c.l.b16 %v760
        %v3023 = vunpack.c.h.b16 %v760
        %v3024 = vunpack.c.l.b16 %v761
        %v3025 = vunpack.c.h.b16 %v761
        %v3026 = vunpack.c.l.b16 %v762
        %v3027 = vunpack.c.h.b16 %v762
        %v3028 = vunpack.c.l.b16 %v763
        %v3029 = vunpack.c.h.b16 %v763
        %v3030 = vunpack.c.l.b16 %v764
        %v3031 = vunpack.c.h.b16 %v764
        %v3032 = vunpack.c.l.b16 %v765
        %v3033 = vunpack.c.h.b16 %v765
        %v3034 = vunpack.c.l.b16 %v766
        %v3035 = vunpack.c.h.b16 %v766
        %v3036 = vunpack.c.l.b16 %v767
        %v3037 = vunpack.c.h.b16 %v767
        %v3038 = vunpack.c.l.b16 %v768
        %v3039 = vunpack.c.h.b16 %v768
        %v3040 = vunpack.c.l.b16 %v769
        %v3041 = vunpack.c.h.b16 %v769
        %v3042 = vunpack.c.l.b16 %v770
        %v3043 = vunpack.c.h.b16 %v770
        %v3044 = vunpack.c.l.b16 %v771
        %v3045 = vunpack.c.h.b16 %v771
        %v3046 = vunpack.c.l.b16 %v772
        %v3047 = vunpack.c.h.b16 %v772
        %v3048 = vunpack.c.l.b16 %v773
        %v3049 = vunpack.c.h.b16 %v773
        %v3050 = vunpack.c.l.b16 %v774
        %v3051 = vunpack.c.h.b16 %v774
        %v3052 = vunpack.c.l.b16 %v775
        %v3053 = vunpack.c.h.b16 %v775
        %v3054 = vunpack.c.l.b16 %v776
        %v3055 = vunpack.c.h.b16 %v776
        %v3056 = vunpack.c.l.b16 %v777
        %v3057 = vunpack.c.h.b16 %v777
        %v3058 = vunpack.c.l.b16 %v778
        %v3059 = vunpack.c.h.b16 %v778
        %v3060 = vunpack.c.l.b16 %v779
        %v3061 = vunpack.c.h.b16 %v779
        %v3062 = vunpack.c.l.b16 %v780
        %v3063 = vunpack.c.h.b16 %v780
        %v3064 = vunpack.c.l.b16 %v781
        %v3065 = vunpack.c.h.b16 %v781
        %v3066 = vunpack.c.l.b16 %v782
        %v3067 = vunpack.c.h.b16 %v782
        %v3068 = vunpack.c.l.b16 %v783
        %v3069 = vunpack.c.h.b16 %v783
        %v3070 = vunpack.c.l.b16 %v784
        %v3071 = vunpack.c.h.b16 %v784
        %v3072 = vunpack.c.l.b16 %v785
        %v3073 = vunpack.c.h.b16 %v785
        %v3074 = vunpack.c.l.b16 %v786
        %v3075 = vunpack.c.h.b16 %v786
        %v3076 = vunpack.c.l.b16 %v787
        %v3077 = vunpack.c.h.b16 %v787
        %v3078 = vunpack.c.l.b16 %v788
        %v3079 = vunpack.c.h.b16 %v788
        %v3080 = vunpack.c.l.b16 %v789
        %v3081 = vunpack.c.h.b16 %v789
        %v3082 = vunpack.c.l.b16 %v790
        %v3083 = vunpack.c.h.b16 %v790
        %v3084 = vunpack.c.l.b16 %v791
        %v3085 = vunpack.c.h.b16 %v791
        %v3086 = vunpack.c.l.b16 %v792
        %v3087 = vunpack.c.h.b16 %v792
        %v3088 = vunpack.c.l.b16 %v793
        %v3089 = vunpack.c.h.b16 %v793
        %v3090 = vunpack.c.l.b16 %v794
        %v3091 = vunpack.c.h.b16 %v794
        %v3092 = vunpack.c.l.b16 %v795
        %v3093 = vunpack.c.h.b16 %v795
        %v3094 = vunpack.c.l.b16 %v796
        %v3095 = vunpack.c.h.b16 %v796
        %v3096 = vunpack.c.l.b16 %v797
        %v3097 = vunpack.c.h.b16 %v797
        %v3098 = vunpack.c.l.b16 %v798
        %v3099 = vunpack.c.h.b16 %v798
        %v3100 = vunpack.c.l.b16 %v799
        %v3101 = vunpack.c.h.b16 %v799
        %v3102 = vunpack.c.l.b16 %v800
        %v3103 = vunpack.c.h.b16 %v800
        %v3104 = vunpack.c.l.b16 %v801
        %v3105 = vunpack.c.h.b16 %v801
        %v3106 = vunpack.c.l.b16 %v802
        %v3107 = vunpack.c.h.b16 %v802
        %v3108 = vunpack.c.l.b16 %v803
        %v3109 = vunpack.c.h.b16 %v803
        %v3110 = vunpack.c.l.b16 %v804
        %v3111 = vunpack.c.h.b16 %v804
        %v3112 = vunpack.c.l.b16 %v805
        %v3113 = vunpack.c.h.b16 %v805
        %v3114 = vunpack.c.l.b16 %v806
        %v3115 = vunpack.c.h.b16 %v806
        %v3116 = vunpack.c.l.b16 %v807
        %v3117 = vunpack.c.h.b16 %v807
        %v3118 = vunpack.c.l.b16 %v808
        %v3119 = vunpack.c.h.b16 %v808
        %v3120 = vunpack.c.l.b16 %v809
        %v3121 = vunpack.c.h.b16 %v809
        %v3122 = vunpack.c.l.b16 %v810
        %v3123 = vunpack.c.h.b16 %v810
        %v3124 = vunpack.c.l.b16 %v811
        %v3125 = vunpack.c.h.b16 %v811
        %v3126 = vunpack.c.l.b16 %v812
        %v3127 = vunpack.c.h.b16 %v812
        %v3128 = vunpack.c.l.b16 %v813
        %v3129 = vunpack.c.h.b16 %v813
        %v3130 = vunpack.c.l.b16 %v814
        %v3131 = vunpack.c.h.b16 %v814
        %v3132 = vunpack.c.l.b16 %v815
        %v3133 = vunpack.c.h.b16 %v815
        %v3134 = vunpack.c.l.b16 %v816
        %v3135 = vunpack.c.h.b16 %v816
        %v3136 = vunpack.c.l.b16 %v817
        %v3137 = vunpack.c.h.b16 %v817
        %v3138 = vunpack.c.l.b16 %v818
        %v3139 = vunpack.c.h.b16 %v818
        %v3140 = vunpack.c.l.b16 %v819
        %v3141 = vunpack.c.h.b16 %v819
        %v3142 = vunpack.c.l.b16 %v820
        %v3143 = vunpack.c.h.b16 %v820
        %v3144 = vunpack.c.l.b16 %v821
        %v3145 = vunpack.c.h.b16 %v821
        %v3146 = vunpack.c.l.b16 %v822
        %v3147 = vunpack.c.h.b16 %v822
        %v3148 = vunpack.c.l.b16 %v823
        %v3149 = vunpack.c.h.b16 %v823
        %v3150 = vunpack.c.l.b16 %v824
        %v3151 = vunpack.c.h.b16 %v824
        %v3152 = vunpack.c.l.b16 %v825
        %v3153 = vunpack.c.h.b16 %v825
        %v3154 = vunpack.c.l.b16 %v826
        %v3155 = vunpack.c.h.b16 %v826
        %v3156 = vunpack.c.l.b16 %v827
        %v3157 = vunpack.c.h.b16 %v827
        %v3158 = vunpack.c.l.b16 %v828
        %v3159 = vunpack.c.h.b16 %v828
        %v3160 = vunpack.c.l.b16 %v829
        %v3161 = vunpack.c.h.b16 %v829
        %v3162 = vunpack.c.l.b16 %v830
        %v3163 = vunpack.c.h.b16 %v830
        %v3164 = vunpack.c.l.b16 %v831
        %v3165 = vunpack.c.h.b16 %v831
        %v3166 = vunpack.c.l.b16 %v832
        %v3167 = vunpack.c.h.b16 %v832
        %v3168 = vunpack.c.l.b16 %v833
        %v3169 = vunpack.c.h.b16 %v833
        %v3170 = vunpack.c.l.b16 %v834
        %v3171 = vunpack.c.h.b16 %v834
        %v3172 = vunpack.c.l.b16 %v835
        %v3173 = vunpack.c.h.b16 %v835
        %v3174 = vunpack.c.l.b16 %v836
        %v3175 = vunpack.c.h.b16 %v836
        %v3176 = vunpack.c.l.b16 %v837
        %v3177 = vunpack.c.h.b16 %v837
        %v3178 = vunpack.c.l.b16 %v838
        %v3179 = vunpack.c.h.b16 %v838
        %v3180 = vunpack.c.l.b16 %v839
        %v3181 = vunpack.c.h.b16 %v839
        %v3182 = vunpack.c.l.b16 %v840
        %v3183 = vunpack.c.h.b16 %v840
        %v3184 = vunpack.c.l.b16 %v841
        %v3185 = vunpack.c.h.b16 %v841
        %v3186 = vunpack.c.l.b16 %v842
        %v3187 = vunpack.c.h.b16 %v842
        %v3188 = vunpack.c.l.b16 %v843
        %v3189 = vunpack.c.h.b16 %v843
        %v3190 = vunpack.c.l.b16 %v844
        %v3191 = vunpack.c.h.b16 %v844
        %v3192 = vunpack.c.l.b16 %v845
        %v3193 = vunpack.c.h.b16 %v845
        %v3194 = vunpack.c.l.b16 %v846
        %v3195 = vunpack.c.h.b16 %v846
        %v3196 = vunpack.c.l.b16 %v847
        %v3197 = vunpack.c.h.b16 %v847
        %v3198 = vunpack.c.l.b16 %v848
        %v3199 = vunpack.c.h.b16 %v848
        %v3200 = vunpack.c.l.b16 %v849
        %v3201 = vunpack.c.h.b16 %v849
        %v3202 = vunpack.c.l.b16 %v850
        %v3203 = vunpack.c.h.b16 %v850
        %v3204 = vunpack.c.l.b16 %v851
        %v3205 = vunpack.c.h.b16 %v851
        %v3206 = vunpack.c.l.b16 %v852
        %v3207 = vunpack.c.h.b16 %v852
        %v3208 = vunpack.c.l.b16 %v853
        %v3209 = vunpack.c.h.b16 %v853
        %v3210 = vunpack.c.l.b16 %v854
        %v3211 = vunpack.c.h.b16 %v854
        %v3212 = vunpack.c.l.b16 %v855
        %v3213 = vunpack.c.h.b16 %v855
        %v3214 = vunpack.c.l.b16 %v856
        %v3215 = vunpack.c.h.b16 %v856
        %v3216 = vunpack.c.l.b16 %v857
        %v3217 = vunpack.c.h.b16 %v857
        %v3218 = vunpack.c.l.b16 %v858
        %v3219 = vunpack.c.h.b16 %v858
        %v3220 = vunpack.c.l.b16 %v859
        %v3221 = vunpack.c.h.b16 %v859
        %v3222 = vunpack.c.l.b16 %v860
        %v3223 = vunpack.c.h.b16 %v860
        %v3224 = vunpack.c.l.b16 %v861
        %v3225 = vunpack.c.h.b16 %v861
        %v3226 = vunpack.c.l.b16 %v862
        %v3227 = vunpack.c.h.b16 %v862
        %v3228 = vunpack.c.l.b16 %v863
        %v3229 = vunpack.c.h.b16 %v863
        %v3230 = vunpack.c.l.b16 %v864
        %v3231 = vunpack.c.h.b16 %v864
        %v3232 = vunpack.c.l.b16 %v865
        %v3233 = vunpack.c.h.b16 %v865
        %v3234 = vunpack.c.l.b16 %v866
        %v3235 = vunpack.c.h.b16 %v866
        %v3236 = vunpack.c.l.b16 %v867
        %v3237 = vunpack.c.h.b16 %v867
        %v3238 = vunpack.c.l.b16 %v868
        %v3239 = vunpack.c.h.b16 %v868
        %v3240 = vunpack.c.l.b16 %v869
        %v3241 = vunpack.c.h.b16 %v869
        %v3242 = vunpack.c.l.b16 %v870
        %v3243 = vunpack.c.h.b16 %v870
        %v3244 = vunpack.c.l.b16 %v871
        %v3245 = vunpack.c.h.b16 %v871
        %v3246 = vunpack.c.l.b16 %v872
        %v3247 = vunpack.c.h.b16 %v872
        %v3248 = vunpack.c.l.b16 %v873
        %v3249 = vunpack.c.h.b16 %v873
        %v3250 = vunpack.c.l.b16 %v874
        %v3251 = vunpack.c.h.b16 %v874
        %v3252 = vunpack.c.l.b16 %v875
        %v3253 = vunpack.c.h.b16 %v875
        %v3254 = vunpack.c.l.b16 %v876
        %v3255 = vunpack.c.h.b16 %v876
        %v3256 = vunpack.c.l.b16 %v877
        %v3257 = vunpack.c.h.b16 %v877
        %v3258 = vunpack.c.l.b16 %v878
        %v3259 = vunpack.c.h.b16 %v878
        %v3260 = vunpack.c.l.b16 %v879
        %v3261 = vunpack.c.h.b16 %v879
        %v3262 = vunpack.c.l.b16 %v880
        %v3263 = vunpack.c.h.b16 %v880
        %v3264 = vunpack.c.l.b16 %v881
        %v3265 = vunpack.c.h.b16 %v881
        %v3266 = vunpack.c.l.b16 %v882
        %v3267 = vunpack.c.h.b16 %v882
        %v3268 = vunpack.c.l.b16 %v883
        %v3269 = vunpack.c.h.b16 %v883
        %v3270 = vunpack.c.l.b16 %v884
        %v3271 = vunpack.c.h.b16 %v884
        %v3272 = vunpack.c.l.b16 %v885
        %v3273 = vunpack.c.h.b16 %v885
        %v3274 = vunpack.c.l.b16 %v886
        %v3275 = vunpack.c.h.b16 %v886
        %v3276 = vunpack.c.l.b16 %v887
        %v3277 = vunpack.c.h.b16 %v887
        %v3278 = vunpack.c.l.b16 %v888
        %v3279 = vunpack.c.h.b16 %v888
        %v3280 = vunpack.c.l.b16 %v889
        %v3281 = vunpack.c.h.b16 %v889
        %v3282 = vunpack.c.l.b16 %v890
        %v3283 = vunpack.c.h.b16 %v890
        %v3284 = vunpack.c.l.b16 %v891
        %v3285 = vunpack.c.h.b16 %v891
        %v3286 = vunpack.c.l.b16 %v892
        %v3287 = vunpack.c.h.b16 %v892
        %v3288 = vunpack.c.l.b16 %v893
        %v3289 = vunpack.c.h.b16 %v893
        %v3290 = vunpack.c.l.b16 %v894
        %v3291 = vunpack.c.h.b16 %v894
        %v3292 = vunpack.c.l.b16 %v895
        %v3293 = vunpack.c.h.b16 %v895
        %v3294 = vunpack.c.l.b16 %v896
        %v3295 = vunpack.c.h.b16 %v896
        %v3296 = vunpack.c.l.b16 %v897
        %v3297 = vunpack.c.h.b16 %v897
        %v3298 = vunpack.c.l.b16 %v898
        %v3299 = vunpack.c.h.b16 %v898
        %v3300 = vunpack.c.l.b16 %v899
        %v3301 = vunpack.c.h.b16 %v899
        %v3302 = vunpack.c.l.b16 %v900
        %v3303 = vunpack.c.h.b16 %v900
        %v3304 = vunpack.c.l.b16 %v901
        %v3305 = vunpack.c.h.b16 %v901
        %v3306 = vunpack.c.l.b16 %v902
        %v3307 = vunpack.c.h.b16 %v902
        %v3308 = vunpack.c.l.b16 %v903
        %v3309 = vunpack.c.h.b16 %v903
        %v3310 = vunpack.c.l.b16 %v904
        %v3311 = vunpack.c.h.b16 %v904
        %v3312 = vunpack.c.l.b16 %v905
        %v3313 = vunpack.c.h.b16 %v905
        %v3314 = vunpack.c.l.b16 %v906
        %v3315 = vunpack.c.h.b16 %v906
        %v3316 = vunpack.c.l.b16 %v907
        %v3317 = vunpack.c.h.b16 %v907
        %v3318 = vunpack.c.l.b16 %v908
        %v3319 = vunpack.c.h.b16 %v908
        %v3320 = vunpack.c.l.b16 %v909
        %v3321 = vunpack.c.h.b16 %v909
        %v3322 = vunpack.c.l.b16 %v910
        %v3323 = vunpack.c.h.b16 %v910
        %v3324 = vunpack.c.l.b16 %v911
        %v3325 = vunpack.c.h.b16 %v911
        %v3326 = vunpack.c.l.b16 %v912
        %v3327 = vunpack.c.h.b16 %v912
        %v3328 = vunpack.c.l.b16 %v913
        %v3329 = vunpack.c.h.b16 %v913
        %v3330 = vunpack.c.l.b16 %v914
        %v3331 = vunpack.c.h.b16 %v914
        %v3332 = vunpack.c.l.b16 %v915
        %v3333 = vunpack.c.h.b16 %v915
        %v3334 = vunpack.c.l.b16 %v916
        %v3335 = vunpack.c.h.b16 %v916
        %v3336 = vunpack.c.l.b16 %v917
        %v3337 = vunpack.c.h.b16 %v917
        %v3338 = vunpack.c.l.b16 %v918
        %v3339 = vunpack.c.h.b16 %v918
        %v3340 = vunpack.c.l.b16 %v919
        %v3341 = vunpack.c.h.b16 %v919
        %v3342 = vunpack.c.l.b16 %v920
        %v3343 = vunpack.c.h.b16 %v920
        %v3344 = vunpack.c.l.b16 %v921
        %v3345 = vunpack.c.h.b16 %v921
        %v3346 = vunpack.c.l.b16 %v922
        %v3347 = vunpack.c.h.b16 %v922
        %v3348 = vunpack.c.l.b16 %v923
        %v3349 = vunpack.c.h.b16 %v923
        %v3350 = vunpack.c.l.b16 %v924
        %v3351 = vunpack.c.h.b16 %v924
        %v3352 = vunpack.c.l.b16 %v925
        %v3353 = vunpack.c.h.b16 %v925
        %v3354 = vunpack.c.l.b16 %v926
        %v3355 = vunpack.c.h.b16 %v926
        %v3356 = vunpack.c.l.b16 %v927
        %v3357 = vunpack.c.h.b16 %v927
        %v3358 = vunpack.c.l.b16 %v928
        %v3359 = vunpack.c.h.b16 %v928
        %v3360 = vunpack.c.l.b16 %v929
        %v3361 = vunpack.c.h.b16 %v929
        %v3362 = vunpack.c.l.b16 %v930
        %v3363 = vunpack.c.h.b16 %v930
        %v3364 = vunpack.c.l.b16 %v931
        %v3365 = vunpack.c.h.b16 %v931
        %v3366 = vunpack.c.l.b16 %v932
        %v3367 = vunpack.c.h.b16 %v932
        %v3368 = vunpack.c.l.b16 %v933
        %v3369 = vunpack.c.h.b16 %v933
        %v3370 = vunpack.c.l.b16 %v934
        %v3371 = vunpack.c.h.b16 %v934
        %v3372 = vunpack.c.l.b16 %v935
        %v3373 = vunpack.c.h.b16 %v935
        %v3374 = vunpack.c.l.b16 %v936
        %v3375 = vunpack.c.h.b16 %v936
        %v3376 = vunpack.c.l.b16 %v937
        %v3377 = vunpack.c.h.b16 %v937
        %v3378 = vunpack.c.l.b16 %v938
        %v3379 = vunpack.c.h.b16 %v938
        %v3380 = vunpack.c.l.b16 %v939
        %v3381 = vunpack.c.h.b16 %v939
        %v3382 = vunpack.c.l.b16 %v940
        %v3383 = vunpack.c.h.b16 %v940
        %v3384 = vunpack.c.l.b16 %v941
        %v3385 = vunpack.c.h.b16 %v941
        %v3386 = vunpack.c.l.b16 %v942
        %v3387 = vunpack.c.h.b16 %v942
        %v3388 = vunpack.c.l.b16 %v943
        %v3389 = vunpack.c.h.b16 %v943
        %v3390 = vunpack.c.l.b16 %v944
        %v3391 = vunpack.c.h.b16 %v944
        %v3392 = vunpack.c.l.b16 %v945
        %v3393 = vunpack.c.h.b16 %v945
        %v3394 = vunpack.c.l.b16 %v946
        %v3395 = vunpack.c.h.b16 %v946
        %v3396 = vunpack.c.l.b16 %v947
        %v3397 = vunpack.c.h.b16 %v947
        %v3398 = vunpack.c.l.b16 %v948
        %v3399 = vunpack.c.h.b16 %v948
        %v3400 = vunpack.c.l.b16 %v949
        %v3401 = vunpack.c.h.b16 %v949
        %v3402 = vunpack.c.l.b16 %v950
        %v3403 = vunpack.c.h.b16 %v950
        %v3404 = vunpack.c.l.b16 %v951
        %v3405 = vunpack.c.h.b16 %v951
        %v3406 = vunpack.c.l.b16 %v952
        %v3407 = vunpack.c.h.b16 %v952
        %v3408 = vunpack.c.l.b16 %v953
        %v3409 = vunpack.c.h.b16 %v953
        %v3410 = vunpack.c.l.b16 %v954
        %v3411 = vunpack.c.h.b16 %v954
        %v3412 = vunpack.c.l.b16 %v955
        %v3413 = vunpack.c.h.b16 %v955
        %v3414 = vunpack.c.l.b16 %v956
        %v3415 = vunpack.c.h.b16 %v956
        %v3416 = vunpack.c.l.b16 %v957
        %v3417 = vunpack.c.h.b16 %v957
        %v3418 = vunpack.c.l.b16 %v958
        %v3419 = vunpack.c.h.b16 %v958
        %v3420 = vunpack.c.l.b16 %v959
        %v3421 = vunpack.c.h.b16 %v959
        %v3422 = vunpack.c.l.b16 %v960
        %v3423 = vunpack.c.h.b16 %v960
        %v3424 = vunpack.c.l.b16 %v961
        %v3425 = vunpack.c.h.b16 %v961
        %v3426 = vunpack.c.l.b16 %v962
        %v3427 = vunpack.c.h.b16 %v962
        %v3428 = vunpack.c.l.b16 %v963
        %v3429 = vunpack.c.h.b16 %v963
        %v3430 = vunpack.c.l.b16 %v964
        %v3431 = vunpack.c.h.b16 %v964
        %v3432 = vunpack.c.l.b16 %v965
        %v3433 = vunpack.c.h.b16 %v965
        %v3434 = vunpack.c.l.b16 %v966
        %v3435 = vunpack.c.h.b16 %v966
        %v3436 = vunpack.c.l.b16 %v967
        %v3437 = vunpack.c.h.b16 %v967
        %v3438 = vunpack.c.l.b16 %v968
        %v3439 = vunpack.c.h.b16 %v968
        %v3440 = vunpack.c.l.b16 %v969
        %v3441 = vunpack.c.h.b16 %v969
        %v3442 = vunpack.c.l.b16 %v970
        %v3443 = vunpack.c.h.b16 %v970
        %v3444 = vunpack.c.l.b16 %v971
        %v3445 = vunpack.c.h.b16 %v971
        %v3446 = vunpack.c.l.b16 %v972
        %v3447 = vunpack.c.h.b16 %v972
        %v3448 = vunpack.c.l.b16 %v973
        %v3449 = vunpack.c.h.b16 %v973
        %v3450 = vunpack.c.l.b16 %v974
        %v3451 = vunpack.c.h.b16 %v974
        %v3452 = vunpack.c.l.b16 %v975
        %v3453 = vunpack.c.h.b16 %v975
        %v3454 = vunpack.c.l.b16 %v976
        %v3455 = vunpack.c.h.b16 %v976
        %v3456 = vunpack.c.l.b16 %v977
        %v3457 = vunpack.c.h.b16 %v977
        %v3458 = vunpack.c.l.b16 %v978
        %v3459 = vunpack.c.h.b16 %v978
        %v3460 = vunpack.c.l.b16 %v979
        %v3461 = vunpack.c.h.b16 %v979
        %v3462 = vunpack.c.l.b16 %v980
        %v3463 = vunpack.c.h.b16 %v980
        %v3464 = vunpack.c.l.b16 %v981
        %v3465 = vunpack.c.h.b16 %v981
        %v3466 = vunpack.c.l.b16 %v982
        %v3467 = vunpack.c.h.b16 %v982
        %v3468 = vunpack.c.l.b16 %v983
        %v3469 = vunpack.c.h.b16 %v983
        %v3470 = vunpack.c.l.b16 %v984
        %v3471 = vunpack.c.h.b16 %v984
        %v3472 = vunpack.c.l.b16 %v985
        %v3473 = vunpack.c.h.b16 %v985
        %v3474 = vunpack.c.l.b16 %v986
        %v3475 = vunpack.c.h.b16 %v986
        %v3476 = vunpack.c.l.b16 %v987
        %v3477 = vunpack.c.h.b16 %v987
        %v3478 = vunpack.c.l.b16 %v988
        %v3479 = vunpack.c.h.b16 %v988
        %v3480 = vunpack.c.l.b16 %v989
        %v3481 = vunpack.c.h.b16 %v989
        %v3482 = vunpack.c.l.b16 %v990
        %v3483 = vunpack.c.h.b16 %v990
        %v3484 = vunpack.c.l.b16 %v991
        %v3485 = vunpack.c.h.b16 %v991
        %v3486 = vunpack.c.l.b16 %v992
        %v3487 = vunpack.c.h.b16 %v992
        %v3488 = vunpack.c.l.b16 %v993
        %v3489 = vunpack.c.h.b16 %v993
        %v3490 = vunpack.c.l.b16 %v994
        %v3491 = vunpack.c.h.b16 %v994
        %v3492 = vunpack.c.l.b16 %v995
        %v3493 = vunpack.c.h.b16 %v995
        %v3494 = vunpack.c.l.b16 %v996
        %v3495 = vunpack.c.h.b16 %v996
        %v3496 = vunpack.c.l.b16 %v997
        %v3497 = vunpack.c.h.b16 %v997
        %v3498 = vunpack.c.l.b16 %v998
        %v3499 = vunpack.c.h.b16 %v998
        %v3500 = vunpack.c.l.b16 %v999
        %v3501 = vunpack.c.h.b16 %v999
        %v3502 = vunpack.c.l.b16 %v1000
        %v3503 = vunpack.c.h.b16 %v1000
        %v3504 = vunpack.c.l.b16 %v1001
        %v3505 = vunpack.c.h.b16 %v1001
        %v3506 = vunpack.c.l.b16 %v1002
        %v3507 = vunpack.c.h.b16 %v1002
        %v3508 = vunpack.c.l.b16 %v1003
        %v3509 = vunpack.c.h.b16 %v1003
        %v3510 = vunpack.c.l.b16 %v1004
        %v3511 = vunpack.c.h.b16 %v1004
        %v3512 = vunpack.c.l.b16 %v1005
        %v3513 = vunpack.c.h.b16 %v1005
        %v3514 = vunpack.c.l.b16 %v1006
        %v3515 = vunpack.c.h.b16 %v1006
        %v3516 = vunpack.c.l.b16 %v1007
        %v3517 = vunpack.c.h.b16 %v1007
        %v3518 = vunpack.c.l.b16 %v1008
        %v3519 = vunpack.c.h.b16 %v1008
        %v3520 = vunpack.c.l.b16 %v1009
        %v3521 = vunpack.c.h.b16 %v1009
        %v3522 = vunpack.c.l.b16 %v1010
        %v3523 = vunpack.c.h.b16 %v1010
        %v3524 = vunpack.c.l.b16 %v1011
        %v3525 = vunpack.c.h.b16 %v1011
        %v3526 = vunpack.c.l.b16 %v1012
        %v3527 = vunpack.c.h.b16 %v1012
        %v3528 = vunpack.c.l.b16 %v1013
        %v3529 = vunpack.c.h.b16 %v1013
        %v3530 = vunpack.c.l.b16 %v1014
        %v3531 = vunpack.c.h.b16 %v1014
        %v3532 = vunpack.c.l.b16 %v1015
        %v3533 = vunpack.c.h.b16 %v1015
        %v3534 = vunpack.c.l.b16 %v1016
        %v3535 = vunpack.c.h.b16 %v1016
        %v3536 = vunpack.c.l.b16 %v1017
        %v3537 = vunpack.c.h.b16 %v1017
        %v3538 = vunpack.c.l.b16 %v1018
        %v3539 = vunpack.c.h.b16 %v1018
        %v3540 = vunpack.c.l.b16 %v1019
        %v3541 = vunpack.c.h.b16 %v1019
        %v3542 = vunpack.c.l.b16 %v1020
        %v3543 = vunpack.c.h.b16 %v1020
        %v3544 = vunpack.c.l.b16 %v1021
        %v3545 = vunpack.c.h.b16 %v1021
        %v3546 = vunpack.c.l.b16 %v1022
        %v3547 = vunpack.c.h.b16 %v1022
        %v3548 = vunpack.c.l.b16 %v1023
        %v3549 = vunpack.c.h.b16 %v1023
        %v3550 = vunpack.c.l.b16 %v1024
        %v3551 = vunpack.c.h.b16 %v1024
        %v3552 = vunpack.c.l.b16 %v1025
        %v3553 = vunpack.c.h.b16 %v1025
        %v3554 = vunpack.c.l.b16 %v1026
        %v3555 = vunpack.c.h.b16 %v1026
        %v3556 = vunpack.c.l.b16 %v1027
        %v3557 = vunpack.c.h.b16 %v1027
        %v3558 = vunpack.c.l.b16 %v1028
        %v3559 = vunpack.c.h.b16 %v1028
        %v3560 = vunpack.c.l.b16 %v1029
        %v3561 = vunpack.c.h.b16 %v1029
        %v3562 = vunpack.c.l.b16 %v1030
        %v3563 = vunpack.c.h.b16 %v1030
        %v3564 = vunpack.c.l.b16 %v1031
        %v3565 = vunpack.c.h.b16 %v1031
        %v3566 = vunpack.c.l.b16 %v1032
        %v3567 = vunpack.c.h.b16 %v1032
        %v3568 = vunpack.c.l.b16 %v1033
        %v3569 = vunpack.c.h.b16 %v1033
        %v3570 = vunpack.c.l.b16 %v1034
        %v3571 = vunpack.c.h.b16 %v1034
        %v3572 = vunpack.c.l.b16 %v1035
        %v3573 = vunpack.c.h.b16 %v1035
        %v3574 = vunpack.c.l.b16 %v1036
        %v3575 = vunpack.c.h.b16 %v1036
        %v3576 = vunpack.c.l.b16 %v1037
        %v3577 = vunpack.c.h.b16 %v1037
        %v3578 = vunpack.c.l.b16 %v1038
        %v3579 = vunpack.c.h.b16 %v1038
        %v3580 = vunpack.c.l.b16 %v1039
        %v3581 = vunpack.c.h.b16 %v1039
        %v3582 = vunpack.c.l.b16 %v1040
        %v3583 = vunpack.c.h.b16 %v1040
        %v3584 = vunpack.c.l.b16 %v1041
        %v3585 = vunpack.c.h.b16 %v1041
        %v3586 = vunpack.c.l.b16 %v1042
        %v3587 = vunpack.c.h.b16 %v1042
        %v3588 = vunpack.c.l.b16 %v1043
        %v3589 = vunpack.c.h.b16 %v1043
        %v3590 = vunpack.c.l.b16 %v1044
        %v3591 = vunpack.c.h.b16 %v1044
        %v3592 = vunpack.c.l.b16 %v1045
        %v3593 = vunpack.c.h.b16 %v1045
        %v3594 = vunpack.c.l.b16 %v1046
        %v3595 = vunpack.c.h.b16 %v1046
        %v3596 = vunpack.c.l.b16 %v1047
        %v3597 = vunpack.c.h.b16 %v1047
        %v3598 = vunpack.c.l.b16 %v1048
        %v3599 = vunpack.c.h.b16 %v1048
        %v3600 = vunpack.c.l.b16 %v1049
        %v3601 = vunpack.c.h.b16 %v1049
        %v3602 = vunpack.c.l.b16 %v1050
        %v3603 = vunpack.c.h.b16 %v1050
        %v3604 = vunpack.c.l.b16 %v1051
        %v3605 = vunpack.c.h.b16 %v1051
        %v3606 = vunpack.c.l.b16 %v1052
        %v3607 = vunpack.c.h.b16 %v1052
        %v3608 = vunpack.c.l.b16 %v1053
        %v3609 = vunpack.c.h.b16 %v1053
        %v3610 = vunpack.c.l.b16 %v1054
        %v3611 = vunpack.c.h.b16 %v1054
        %v3612 = vunpack.c.l.b16 %v1055
        %v3613 = vunpack.c.h.b16 %v1055
        %v3614 = vunpack.c.l.b16 %v1056
        %v3615 = vunpack.c.h.b16 %v1056
        %v3616 = vunpack.c.l.b16 %v1057
        %v3617 = vunpack.c.h.b16 %v1057
        %v3618 = vunpack.c.l.b16 %v1058
        %v3619 = vunpack.c.h.b16 %v1058
        %v3620 = vunpack.c.l.b16 %v1059
        %v3621 = vunpack.c.h.b16 %v1059
        %v3622 = vunpack.c.l.b16 %v1060
        %v3623 = vunpack.c.h.b16 %v1060
        %v3624 = vunpack.c.l.b16 %v1061
        %v3625 = vunpack.c.h.b16 %v1061
        %v3626 = vunpack.c.l.b16 %v1062
        %v3627 = vunpack.c.h.b16 %v1062
        %v3628 = vunpack.c.l.b16 %v1063
        %v3629 = vunpack.c.h.b16 %v1063
        %v3630 = vunpack.c.l.b16 %v1064
        %v3631 = vunpack.c.h.b16 %v1064
        %v3632 = vunpack.c.l.b16 %v1065
        %v3633 = vunpack.c.h.b16 %v1065
        %v3634 = vunpack.c.l.b16 %v1066
        %v3635 = vunpack.c.h.b16 %v1066
        %v3636 = vunpack.c.l.b16 %v1067
        %v3637 = vunpack.c.h.b16 %v1067
        %v3638 = vunpack.c.l.b16 %v1068
        %v3639 = vunpack.c.h.b16 %v1068
        %v3640 = vunpack.c.l.b16 %v1069
        %v3641 = vunpack.c.h.b16 %v1069
        %v3642 = vunpack.c.l.b16 %v1070
        %v3643 = vunpack.c.h.b16 %v1070
        %v3644 = vunpack.c.l.b16 %v1071
        %v3645 = vunpack.c.h.b16 %v1071
        %v3646 = vunpack.c.l.b16 %v1072
        %v3647 = vunpack.c.h.b16 %v1072
        %v3648 = vunpack.c.l.b16 %v1073
        %v3649 = vunpack.c.h.b16 %v1073
        %v3650 = vunpack.c.l.b16 %v1074
        %v3651 = vunpack.c.h.b16 %v1074
        %v3652 = vunpack.c.l.b16 %v1075
        %v3653 = vunpack.c.h.b16 %v1075
        %v3654 = vunpack.c.l.b16 %v1076
        %v3655 = vunpack.c.h.b16 %v1076
        %v3656 = vunpack.c.l.b16 %v1077
        %v3657 = vunpack.c.h.b16 %v1077
        %v3658 = vunpack.c.l.b16 %v1078
        %v3659 = vunpack.c.h.b16 %v1078
        %v3660 = vunpack.c.l.b16 %v1079
        %v3661 = vunpack.c.h.b16 %v1079
        %v3662 = vunpack.c.l.b16 %v1080
        %v3663 = vunpack.c.h.b16 %v1080
        %v3664 = vunpack.c.l.b16 %v1081
        %v3665 = vunpack.c.h.b16 %v1081
        %v3666 = vunpack.c.l.b16 %v1082
        %v3667 = vunpack.c.h.b16 %v1082
        %v3668 = vunpack.c.l.b16 %v1083
        %v3669 = vunpack.c.h.b16 %v1083
        %v3670 = vunpack.c.l.b16 %v1084
        %v3671 = vunpack.c.h.b16 %v1084
        %v3672 = vunpack.c.l.b16 %v1085
        %v3673 = vunpack.c.h.b16 %v1085
        %v3674 = vunpack.c.l.b16 %v1086
        %v3675 = vunpack.c.h.b16 %v1086
        %v3676 = vunpack.c.l.b16 %v1087
        %v3677 = vunpack.c.h.b16 %v1087
        %v3678 = vunpack.c.l.b16 %v1088
        %v3679 = vunpack.c.h.b16 %v1088
        %v3680 = vunpack.c.l.b16 %v1089
        %v3681 = vunpack.c.h.b16 %v1089
        %v3682 = vunpack.c.l.b16 %v1090
        %v3683 = vunpack.c.h.b16 %v1090
        %v3684 = vunpack.c.l.b16 %v1091
        %v3685 = vunpack.c.h.b16 %v1091
        %v3686 = vunpack.c.l.b16 %v1092
        %v3687 = vunpack.c.h.b16 %v1092
        %v3688 = vunpack.c.l.b16 %v1093
        %v3689 = vunpack.c.h.b16 %v1093
        %v3690 = vunpack.c.l.b16 %v1094
        %v3691 = vunpack.c.h.b16 %v1094
        %v3692 = vunpack.c.l.b16 %v1095
        %v3693 = vunpack.c.h.b16 %v1095
        %v3694 = vunpack.c.l.b16 %v1096
        %v3695 = vunpack.c.h.b16 %v1096
        %v3696 = vunpack.c.l.b16 %v1097
        %v3697 = vunpack.c.h.b16 %v1097
        %v3698 = vunpack.c.l.b16 %v1098
        %v3699 = vunpack.c.h.b16 %v1098
        %v3700 = vunpack.c.l.b16 %v1099
        %v3701 = vunpack.c.h.b16 %v1099
        %v3702 = vunpack.c.l.b16 %v1100
        %v3703 = vunpack.c.h.b16 %v1100
        %v3704 = vunpack.c.l.b16 %v1101
        %v3705 = vunpack.c.h.b16 %v1101
        %v3706 = vunpack.c.l.b16 %v1102
        %v3707 = vunpack.c.h.b16 %v1102
        %v3708 = vunpack.c.l.b16 %v1103
        %v3709 = vunpack.c.h.b16 %v1103
        %v3710 = vunpack.c.l.b16 %v1104
        %v3711 = vunpack.c.h.b16 %v1104
        %v3712 = vunpack.c.l.b16 %v1105
        %v3713 = vunpack.c.h.b16 %v1105
        %v3714 = vunpack.c.l.b16 %v1106
        %v3715 = vunpack.c.h.b16 %v1106
        %v3716 = vunpack.c.l.b16 %v1107
        %v3717 = vunpack.c.h.b16 %v1107
        %v3718 = vunpack.c.l.b16 %v1108
        %v3719 = vunpack.c.h.b16 %v1108
        %v3720 = vunpack.c.l.b16 %v1109
        %v3721 = vunpack.c.h.b16 %v1109
        %v3722 = vunpack.c.l.b16 %v1110
        %v3723 = vunpack.c.h.b16 %v1110
        %v3724 = vunpack.c.l.b16 %v1111
        %v3725 = vunpack.c.h.b16 %v1111
        %v3726 = vunpack.c.l.b16 %v1112
        %v3727 = vunpack.c.h.b16 %v1112
        %v3728 = vunpack.c.l.b16 %v1113
        %v3729 = vunpack.c.h.b16 %v1113
        %v3730 = vunpack.c.l.b16 %v1114
        %v3731 = vunpack.c.h.b16 %v1114
        %v3732 = vunpack.c.l.b16 %v1115
        %v3733 = vunpack.c.h.b16 %v1115
        %v3734 = vunpack.c.l.b16 %v1116
        %v3735 = vunpack.c.h.b16 %v1116
        %v3736 = vunpack.c.l.b16 %v1117
        %v3737 = vunpack.c.h.b16 %v1117
        %v3738 = vunpack.c.l.b16 %v1118
        %v3739 = vunpack.c.h.b16 %v1118
        %v3740 = vunpack.c.l.b16 %v1119
        %v3741 = vunpack.c.h.b16 %v1119
        %v3742 = vunpack.c.l.b16 %v1120
        %v3743 = vunpack.c.h.b16 %v1120
        %v3744 = vunpack.c.l.b16 %v1121
        %v3745 = vunpack.c.h.b16 %v1121
        %v3746 = vunpack.c.l.b16 %v1122
        %v3747 = vunpack.c.h.b16 %v1122
        %v3748 = vunpack.c.l.b16 %v1123
        %v3749 = vunpack.c.h.b16 %v1123
        %v3750 = vunpack.c.l.b16 %v1124
        %v3751 = vunpack.c.h.b16 %v1124
        %v3752 = vunpack.c.l.b16 %v1125
        %v3753 = vunpack.c.h.b16 %v1125
        %v3754 = vunpack.c.l.b16 %v1126
        %v3755 = vunpack.c.h.b16 %v1126
        %v3756 = vunpack.c.l.b16 %v1127
        %v3757 = vunpack.c.h.b16 %v1127
        %v3758 = vunpack.c.l.b16 %v1128
        %v3759 = vunpack.c.h.b16 %v1128
        %v3760 = vunpack.c.l.b16 %v1129
        %v3761 = vunpack.c.h.b16 %v1129
        %v3762 = vunpack.c.l.b16 %v1130
        %v3763 = vunpack.c.h.b16 %v1130
        %v3764 = vunpack.c.l.b16 %v1131
        %v3765 = vunpack.c.h.b16 %v1131
        %v3766 = vunpack.c.l.b16 %v1132
        %v3767 = vunpack.c.h.b16 %v1132
        %v3768 = vunpack.c.l.b16 %v1133
        %v3769 = vunpack.c.h.b16 %v1133
        %v3770 = vunpack.c.l.b16 %v1134
        %v3771 = vunpack.c.h.b16 %v1134
        %v3772 = vunpack.c.l.b16 %v1135
        %v3773 = vunpack.c.h.b16 %v1135
        %v3774 = vunpack.c.l.b16 %v1136
        %v3775 = vunpack.c.h.b16 %v1136
        %v3776 = vunpack.c.l.b16 %v1137
        %v3777 = vunpack.c.h.b16 %v1137
        %v3778 = vunpack.c.l.b16 %v1138
        %v3779 = vunpack.c.h.b16 %v1138
        %v3780 = vunpack.c.l.b16 %v1139
        %v3781 = vunpack.c.h.b16 %v1139
        %v3782 = vunpack.c.l.b16 %v1140
        %v3783 = vunpack.c.h.b16 %v1140
        %v3784 = vunpack.c.l.b16 %v1141
        %v3785 = vunpack.c.h.b16 %v1141
        %v3786 = vunpack.c.l.b16 %v1142
        %v3787 = vunpack.c.h.b16 %v1142
        %v3788 = vunpack.c.l.b16 %v1143
        %v3789 = vunpack.c.h.b16 %v1143
        %v3790 = vunpack.c.l.b16 %v1144
        %v3791 = vunpack.c.h.b16 %v1144
        %v3792 = vunpack.c.l.b16 %v1145
        %v3793 = vunpack.c.h.b16 %v1145
        %v3794 = vunpack.c.l.b16 %v1146
        %v3795 = vunpack.c.h.b16 %v1146
        %v3796 = vunpack.c.l.b16 %v1147
        %v3797 = vunpack.c.h.b16 %v1147
        %v3798 = vunpack.c.l.b16 %v1148
        %v3799 = vunpack.c.h.b16 %v1148
        %v3800 = vunpack.c.l.b16 %v1149
        %v3801 = vunpack.c.h.b16 %v1149
        %v3802 = vunpack.c.l.b16 %v1150
        %v3803 = vunpack.c.h.b16 %v1150
        %v3804 = vunpack.c.l.b16 %v1151
        %v3805 = vunpack.c.h.b16 %v1151
        %v3806 = vunpack.c.l.b16 %v1152
        %v3807 = vunpack.c.h.b16 %v1152
        %v3808 = vunpack.c.l.b16 %v1153
        %v3809 = vunpack.c.h.b16 %v1153
        %v3810 = vunpack.c.l.b16 %v1154
        %v3811 = vunpack.c.h.b16 %v1154
        %v3812 = vunpack.c.l.b16 %v1155
        %v3813 = vunpack.c.h.b16 %v1155
        %v3814 = vunpack.c.l.b16 %v1156
        %v3815 = vunpack.c.h.b16 %v1156
        %v3816 = vunpack.c.l.b16 %v1157
        %v3817 = vunpack.c.h.b16 %v1157
        %v3818 = vunpack.c.l.b16 %v1158
        %v3819 = vunpack.c.h.b16 %v1158
        %v3820 = vunpack.c.l.b16 %v1159
        %v3821 = vunpack.c.h.b16 %v1159
        %v3822 = vunpack.c.l.b16 %v1160
        %v3823 = vunpack.c.h.b16 %v1160
        %v3824 = vunpack.c.l.b16 %v1161
        %v3825 = vunpack.c.h.b16 %v1161
        %v3826 = vunpack.c.l.b16 %v1162
        %v3827 = vunpack.c.h.b16 %v1162
        %v3828 = vunpack.c.l.b16 %v1163
        %v3829 = vunpack.c.h.b16 %v1163
        %v3830 = vunpack.c.l.b16 %v1164
        %v3831 = vunpack.c.h.b16 %v1164
        %v3832 = vunpack.c.l.b16 %v1165
        %v3833 = vunpack.c.h.b16 %v1165
        %v3834 = vunpack.c.l.b16 %v1166
        %v3835 = vunpack.c.h.b16 %v1166
        %v3836 = vunpack.c.l.b16 %v1167
        %v3837 = vunpack.c.h.b16 %v1167
        %v3838 = vunpack.c.l.b16 %v1168
        %v3839 = vunpack.c.h.b16 %v1168
        %v3840 = vunpack.c.l.b16 %v1169
        %v3841 = vunpack.c.h.b16 %v1169
        %v3842 = vunpack.c.l.b16 %v1170
        %v3843 = vunpack.c.h.b16 %v1170
        %v3844 = vunpack.c.l.b16 %v1171
        %v3845 = vunpack.c.h.b16 %v1171
        %v3846 = vunpack.c.l.b16 %v1172
        %v3847 = vunpack.c.h.b16 %v1172
        %v3848 = vunpack.c.l.b16 %v1173
        %v3849 = vunpack.c.h.b16 %v1173
        %v3850 = vunpack.c.l.b16 %v1174
        %v3851 = vunpack.c.h.b16 %v1174
        %v3852 = vunpack.c.l.b16 %v1175
        %v3853 = vunpack.c.h.b16 %v1175
        %v3854 = vunpack.c.l.b16 %v1176
        %v3855 = vunpack.c.h.b16 %v1176
        %v3856 = vunpack.c.l.b16 %v1177
        %v3857 = vunpack.c.h.b16 %v1177
        %v3858 = vunpack.c.l.b16 %v1178
        %v3859 = vunpack.c.h.b16 %v1178
        %v3860 = vunpack.c.l.b16 %v1179
        %v3861 = vunpack.c.h.b16 %v1179
        %v3862 = vunpack.c.l.b16 %v1180
        %v3863 = vunpack.c.h.b16 %v1180
        %v3864 = vunpack.c.l.b16 %v1181
        %v3865 = vunpack.c.h.b16 %v1181
        %v3866 = vunpack.c.l.b16 %v1182
        %v3867 = vunpack.c.h.b16 %v1182
        %v3868 = vunpack.c.l.b16 %v1183
        %v3869 = vunpack.c.h.b16 %v1183
        %v3870 = vunpack.c.l.b16 %v1184
        %v3871 = vunpack.c.h.b16 %v1184
        %v3872 = vunpack.c.l.b16 %v1185
        %v3873 = vunpack.c.h.b16 %v1185
        %v3874 = vunpack.c.l.b16 %v1186
        %v3875 = vunpack.c.h.b16 %v1186
        %v3876 = vunpack.c.l.b16 %v1187
        %v3877 = vunpack.c.h.b16 %v1187
        %v3878 = vunpack.c.l.b16 %v1188
        %v3879 = vunpack.c.h.b16 %v1188
        %v3880 = vunpack.c.l.b16 %v1189
        %v3881 = vunpack.c.h.b16 %v1189
        %v3882 = vunpack.c.l.b16 %v1190
        %v3883 = vunpack.c.h.b16 %v1190
        %v3884 = vunpack.c.l.b16 %v1191
        %v3885 = vunpack.c.h.b16 %v1191
        %v3886 = vunpack.c.l.b16 %v1192
        %v3887 = vunpack.c.h.b16 %v1192
        %v3888 = vunpack.c.l.b16 %v1193
        %v3889 = vunpack.c.h.b16 %v1193
        %v3890 = vunpack.c.l.b16 %v1194
        %v3891 = vunpack.c.h.b16 %v1194
        %v3892 = vunpack.c.l.b16 %v1195
        %v3893 = vunpack.c.h.b16 %v1195
        %v3894 = vunpack.c.l.b16 %v1196
        %v3895 = vunpack.c.h.b16 %v1196
        %v3896 = vunpack.c.l.b16 %v1197
        %v3897 = vunpack.c.h.b16 %v1197
        %v3898 = vunpack.c.l.b16 %v1198
        %v3899 = vunpack.c.h.b16 %v1198
        %v3900 = vunpack.c.l.b16 %v1199
        %v3901 = vunpack.c.h.b16 %v1199
        %v3902 = vunpack.c.l.b16 %v1200
        %v3903 = vunpack.c.h.b16 %v1200
        %v3904 = vunpack.c.l.b16 %v1201
        %v3905 = vunpack.c.h.b16 %v1201
        %v3906 = vunpack.c.l.b16 %v1202
        %v3907 = vunpack.c.h.b16 %v1202
        %v3908 = vunpack.c.l.b16 %v1203
        %v3909 = vunpack.c.h.b16 %v1203
        %v3910 = vunpack.c.l.b16 %v1204
        %v3911 = vunpack.c.h.b16 %v1204
        %v3912 = vunpack.c.l.b16 %v1205
        %v3913 = vunpack.c.h.b16 %v1205
        %v3914 = vunpack.c.l.b16 %v1206
        %v3915 = vunpack.c.h.b16 %v1206
        %v3916 = vunpack.c.l.b16 %v1207
        %v3917 = vunpack.c.h.b16 %v1207
        %v3918 = vunpack.c.l.b16 %v1208
        %v3919 = vunpack.c.h.b16 %v1208
        %v3920 = vunpack.c.l.b16 %v1209
        %v3921 = vunpack.c.h.b16 %v1209
        %v3922 = vunpack.c.l.b16 %v1210
        %v3923 = vunpack.c.h.b16 %v1210
        %v3924 = vunpack.c.l.b16 %v1211
        %v3925 = vunpack.c.h.b16 %v1211
        %v3926 = vunpack.c.l.b16 %v1212
        %v3927 = vunpack.c.h.b16 %v1212
        %v3928 = vunpack.c.l.b16 %v1213
        %v3929 = vunpack.c.h.b16 %v1213
        %v3930 = vunpack.c.l.b16 %v1214
        %v3931 = vunpack.c.h.b16 %v1214
        %v3932 = vunpack.c.l.b16 %v1215
        %v3933 = vunpack.c.h.b16 %v1215
        %v3934 = vunpack.c.l.b16 %v1216
        %v3935 = vunpack.c.h.b16 %v1216
        %v3936 = vunpack.c.l.b16 %v1217
        %v3937 = vunpack.c.h.b16 %v1217
        %v3938 = vunpack.c.l.b16 %v1218
        %v3939 = vunpack.c.h.b16 %v1218
        %v3940 = vunpack.c.l.b16 %v1219
        %v3941 = vunpack.c.h.b16 %v1219
        %v3942 = vunpack.c.l.b16 %v1220
        %v3943 = vunpack.c.h.b16 %v1220
        %v3944 = vunpack.c.l.b16 %v1221
        %v3945 = vunpack.c.h.b16 %v1221
        %v3946 = vunpack.c.l.b16 %v1222
        %v3947 = vunpack.c.h.b16 %v1222
        %v3948 = vunpack.c.l.b16 %v1223
        %v3949 = vunpack.c.h.b16 %v1223
        %v3950 = vunpack.c.l.b16 %v1224
        %v3951 = vunpack.c.h.b16 %v1224
        %v3952 = vunpack.c.l.b16 %v1225
        %v3953 = vunpack.c.h.b16 %v1225
        %v3954 = vunpack.c.l.b16 %v1226
        %v3955 = vunpack.c.h.b16 %v1226
        %v3956 = vunpack.c.l.b16 %v1227
        %v3957 = vunpack.c.h.b16 %v1227
        %v3958 = vunpack.c.l.b16 %v1228
        %v3959 = vunpack.c.h.b16 %v1228
        %v3960 = vunpack.c.l.b16 %v1229
        %v3961 = vunpack.c.h.b16 %v1229
        %v3962 = vunpack.c.l.b16 %v1230
        %v3963 = vunpack.c.h.b16 %v1230
        %v3964 = vunpack.c.l.b16 %v1231
        %v3965 = vunpack.c.h.b16 %v1231
        %v3966 = vunpack.c.l.b16 %v1232
        %v3967 = vunpack.c.h.b16 %v1232
        %v3968 = vunpack.c.l.b16 %v1233
        %v3969 = vunpack.c.h.b16 %v1233
        %v3970 = vunpack.c.l.b16 %v1234
        %v3971 = vunpack.c.h.b16 %v1234
        %v3972 = vunpack.c.l.b16 %v1235
        %v3973 = vunpack.c.h.b16 %v1235
        %v3974 = vunpack.c.l.b16 %v1236
        %v3975 = vunpack.c.h.b16 %v1236
        %v3976 = vunpack.c.l.b16 %v1237
        %v3977 = vunpack.c.h.b16 %v1237
        %v3978 = vunpack.c.l.b16 %v1238
        %v3979 = vunpack.c.h.b16 %v1238
        %v3980 = vunpack.c.l.b16 %v1239
        %v3981 = vunpack.c.h.b16 %v1239
        %v3982 = vunpack.c.l.b16 %v1240
        %v3983 = vunpack.c.h.b16 %v1240
        %v3984 = vunpack.c.l.b16 %v1241
        %v3985 = vunpack.c.h.b16 %v1241
        %v3986 = vunpack.c.l.b16 %v1242
        %v3987 = vunpack.c.h.b16 %v1242
        %v3988 = vunpack.c.l.b16 %v1243
        %v3989 = vunpack.c.h.b16 %v1243
        %v3990 = vunpack.c.l.b16 %v1244
        %v3991 = vunpack.c.h.b16 %v1244
        %v3992 = vunpack.c.l.b16 %v1245
        %v3993 = vunpack.c.h.b16 %v1245
        %v3994 = vunpack.c.l.b16 %v1246
        %v3995 = vunpack.c.h.b16 %v1246
        %v3996 = vunpack.c.l.b16 %v1247
        %v3997 = vunpack.c.h.b16 %v1247
        %v3998 = vunpack.c.l.b16 %v1248
        %v3999 = vunpack.c.h.b16 %v1248
        %v4000 = vunpack.c.l.b16 %v1249
        %v4001 = vunpack.c.h.b16 %v1249
        %v4002 = vunpack.c.l.b16 %v1250
        %v4003 = vunpack.c.h.b16 %v1250
        %v4004 = vunpack.c.l.b16 %v1251
        %v4005 = vunpack.c.h.b16 %v1251
        %v4006 = vunpack.c.l.b16 %v1252
        %v4007 = vunpack.c.h.b16 %v1252
        %v4008 = vunpack.c.l.b16 %v1253
        %v4009 = vunpack.c.h.b16 %v1253
        %v4010 = vunpack.c.l.b16 %v1254
        %v4011 = vunpack.c.h.b16 %v1254
        %v4012 = vunpack.c.l.b16 %v1255
        %v4013 = vunpack.c.h.b16 %v1255
        %v4014 = vunpack.c.l.b16 %v1256
        %v4015 = vunpack.c.h.b16 %v1256
        %v4016 = vunpack.c.l.b16 %v1257
        %v4017 = vunpack.c.h.b16 %v1257
        %v4018 = vunpack.c.l.b16 %v1258
        %v4019 = vunpack.c.h.b16 %v1258
        %v4020 = vunpack.c.l.b16 %v1259
        %v4021 = vunpack.c.h.b16 %v1259
        %v4022 = vunpack.c.l.b16 %v1260
        %v4023 = vunpack.c.h.b16 %v1260
        %v4024 = vunpack.c.l.b16 %v1261
        %v4025 = vunpack.c.h.b16 %v1261
        %v4026 = vunpack.c.l.b16 %v1262
        %v4027 = vunpack.c.h.b16 %v1262
        %v4028 = vunpack.c.l.b16 %v1263
        %v4029 = vunpack.c.h.b16 %v1263
        %v4030 = vunpack.c.l.b16 %v1264
        %v4031 = vunpack.c.h.b16 %v1264
        %v4032 = vunpack.c.l.b16 %v1265
        %v4033 = vunpack.c.h.b16 %v1265
        %v4034 = vunpack.c.l.b16 %v1266
        %v4035 = vunpack.c.h.b16 %v1266
        %v4036 = vunpack.c.l.b16 %v1267
        %v4037 = vunpack.c.h.b16 %v1267
        %v4038 = vunpack.c.l.b16 %v1268
        %v4039 = vunpack.c.h.b16 %v1268
        %v4040 = vunpack.c.l.b16 %v1269
        %v4041 = vunpack.c.h.b16 %v1269
        %v4042 = vunpack.c.l.b16 %v1270
        %v4043 = vunpack.c.h.b16 %v1270
        %v4044 = vunpack.c.l.b16 %v1271
        %v4045 = vunpack.c.h.b16 %v1271
        %v4046 = vunpack.c.l.b16 %v1272
        %v4047 = vunpack.c.h.b16 %v1272
        %v4048 = vunpack.c.l.b16 %v1273
        %v4049 = vunpack.c.h.b16 %v1273
        %v4050 = vunpack.c.l.b16 %v1274
        %v4051 = vunpack.c.h.b16 %v1274
        %v4052 = vunpack.c.l.b16 %v1275
        %v4053 = vunpack.c.h.b16 %v1275
        %v4054 = vunpack.c.l.b16 %v1276
        %v4055 = vunpack.c.h.b16 %v1276
        %v4056 = vunpack.c.l.b16 %v1277
        %v4057 = vunpack.c.h.b16 %v1277
        %v4058 = vunpack.c.l.b16 %v1278
        %v4059 = vunpack.c.h.b16 %v1278
        %v4060 = vunpack.c.l.b16 %v1279
        %v4061 = vunpack.c.h.b16 %v1279
        %v4062 = vunpack.c.l.b16 %v1280
        %v4063 = vunpack.c.h.b16 %v1280
        %v4064 = vunpack.c.l.b16 %v1281
        %v4065 = vunpack.c.h.b16 %v1281
        %v4066 = vunpack.c.l.b16 %v1282
        %v4067 = vunpack.c.h.b16 %v1282
        %v4068 = vunpack.c.l.b16 %v1283
        %v4069 = vunpack.c.h.b16 %v1283
        %v4070 = vunpack.c.l.b16 %v1284
        %v4071 = vunpack.c.h.b16 %v1284
        %v4072 = vunpack.c.l.b16 %v1285
        %v4073 = vunpack.c.h.b16 %v1285
        %v4074 = vunpack.c.l.b16 %v1286
        %v4075 = vunpack.c.h.b16 %v1286
        %v4076 = vunpack.c.l.b16 %v1287
        %v4077 = vunpack.c.h.b16 %v1287
        %v4078 = vunpack.c.l.b16 %v1288
        %v4079 = vunpack.c.h.b16 %v1288
        %v4080 = vunpack.c.l.b16 %v1289
        %v4081 = vunpack.c.h.b16 %v1289
        %v4082 = vunpack.c.l.b16 %v1290
        %v4083 = vunpack.c.h.b16 %v1290
        %v4084 = vunpack.c.l.b16 %v1291
        %v4085 = vunpack.c.h.b16 %v1291
        %v4086 = vunpack.c.l.b16 %v1292
        %v4087 = vunpack.c.h.b16 %v1292
        %v4088 = vunpack.c.l.b16 %v1293
        %v4089 = vunpack.c.h.b16 %v1293
        %v4090 = vunpack.c.l.b16 %v1294
        %v4091 = vunpack.c.h.b16 %v1294
        %v4092 = vunpack.c.l.b16 %v1295
        %v4093 = vunpack.c.h.b16 %v1295
        %v4094 = vunpack.c.l.b16 %v1296
        %v4095 = vunpack.c.h.b16 %v1296
        %v4096 = vunpack.c.l.b16 %v1297
        %v4097 = vunpack.c.h.b16 %v1297
        %v4098 = vunpack.c.l.b16 %v1298
        %v4099 = vunpack.c.h.b16 %v1298
        %v4100 = vunpack.c.l.b16 %v1299
        %v4101 = vunpack.c.h.b16 %v1299
        %v4102 = vunpack.c.l.b16 %v1300
        %v4103 = vunpack.c.h.b16 %v1300
        %v4104 = vunpack.c.l.b16 %v1301
        %v4105 = vunpack.c.h.b16 %v1301
        %v4106 = vunpack.c.l.b16 %v1302
        %v4107 = vunpack.c.h.b16 %v1302
        %v4108 = vunpack.c.l.b16 %v1303
        %v4109 = vunpack.c.h.b16 %v1303
        %v4110 = vunpack.c.l.b16 %v1304
        %v4111 = vunpack.c.h.b16 %v1304
        %v4112 = vunpack.c.l.b16 %v1305
        %v4113 = vunpack.c.h.b16 %v1305
        %v4114 = vunpack.c.l.b16 %v1306
        %v4115 = vunpack.c.h.b16 %v1306
        %v4116 = vunpack.c.l.b16 %v1307
        %v4117 = vunpack.c.h.b16 %v1307
        %v4118 = vunpack.c.l.b16 %v1308
        %v4119 = vunpack.c.h.b16 %v1308
        %v4120 = vunpack.c.l.b16 %v1309
        %v4121 = vunpack.c.h.b16 %v1309
        %v4122 = vunpack.c.l.b16 %v1310
        %v4123 = vunpack.c.h.b16 %v1310
        %v4124 = vunpack.c.l.b16 %v1311
        %v4125 = vunpack.c.h.b16 %v1311
        %v4126 = vunpack.c.l.b16 %v1312
        %v4127 = vunpack.c.h.b16 %v1312
        %v4128 = vunpack.c.l.b16 %v1313
        %v4129 = vunpack.c.h.b16 %v1313
        %v4130 = vunpack.c.l.b16 %v1314
        %v4131 = vunpack.c.h.b16 %v1314
        %v4132 = vunpack.c.l.b16 %v1315
        %v4133 = vunpack.c.h.b16 %v1315
        %v4134 = vunpack.c.l.b16 %v1316
        %v4135 = vunpack.c.h.b16 %v1316
        %v4136 = vunpack.c.l.b16 %v1317
        %v4137 = vunpack.c.h.b16 %v1317
        %v4138 = vunpack.c.l.b16 %v1318
        %v4139 = vunpack.c.h.b16 %v1318
        %v4140 = vunpack.c.l.b16 %v1319
        %v4141 = vunpack.c.h.b16 %v1319
        %v4142 = vunpack.c.l.b16 %v1320
        %v4143 = vunpack.c.h.b16 %v1320
        %v4144 = vunpack.c.l.b16 %v1321
        %v4145 = vunpack.c.h.b16 %v1321
        %v4146 = vunpack.c.l.b16 %v1322
        %v4147 = vunpack.c.h.b16 %v1322
        %v4148 = vunpack.c.l.b16 %v1323
        %v4149 = vunpack.c.h.b16 %v1323
        %v4150 = vunpack.c.l.b16 %v1324
        %v4151 = vunpack.c.h.b16 %v1324
        %v4152 = vunpack.c.l.b16 %v1325
        %v4153 = vunpack.c.h.b16 %v1325
        %v4154 = vunpack.c.l.b16 %v1326
        %v4155 = vunpack.c.h.b16 %v1326
        %v4156 = vunpack.c.l.b16 %v1327
        %v4157 = vunpack.c.h.b16 %v1327
        %v4158 = vunpack.c.l.b16 %v1328
        %v4159 = vunpack.c.h.b16 %v1328
        %v4160 = vunpack.c.l.b16 %v1329
        %v4161 = vunpack.c.h.b16 %v1329
        %v4162 = vunpack.c.l.b16 %v1330
        %v4163 = vunpack.c.h.b16 %v1330
        %v4164 = vunpack.c.l.b16 %v1331
        %v4165 = vunpack.c.h.b16 %v1331
        %v4166 = vunpack.c.l.b16 %v1332
        %v4167 = vunpack.c.h.b16 %v1332
        %v4168 = vunpack.c.l.b16 %v1333
        %v4169 = vunpack.c.h.b16 %v1333
        %v4170 = vunpack.c.l.b16 %v1334
        %v4171 = vunpack.c.h.b16 %v1334
        %v4172 = vunpack.c.l.b16 %v1335
        %v4173 = vunpack.c.h.b16 %v1335
        %v4174 = vunpack.c.l.b16 %v1336
        %v4175 = vunpack.c.h.b16 %v1336
        %v4176 = vunpack.c.l.b16 %v1337
        %v4177 = vunpack.c.h.b16 %v1337
        %v4178 = vunpack.c.l.b16 %v1338
        %v4179 = vunpack.c.h.b16 %v1338
        %v4180 = vunpack.c.l.b16 %v1339
        %v4181 = vunpack.c.h.b16 %v1339
        %v4182 = vunpack.c.l.b16 %v1340
        %v4183 = vunpack.c.h.b16 %v1340
        %v4184 = vunpack.c.l.b16 %v1341
        %v4185 = vunpack.c.h.b16 %v1341
        %v4186 = vunpack.c.l.b16 %v1342
        %v4187 = vunpack.c.h.b16 %v1342
        %v4188 = vunpack.c.l.b16 %v1343
        %v4189 = vunpack.c.h.b16 %v1343
        %v4190 = vunpack.c.l.b16 %v1344
        %v4191 = vunpack.c.h.b16 %v1344
        %v4192 = vunpack.c.l.b16 %v1345
        %v4193 = vunpack.c.h.b16 %v1345
        %v4194 = vunpack.c.l.b16 %v1346
        %v4195 = vunpack.c.h.b16 %v1346
        %v4196 = vunpack.c.l.b16 %v1347
        %v4197 = vunpack.c.h.b16 %v1347
        %v4198 = vunpack.c.l.b16 %v1348
        %v4199 = vunpack.c.h.b16 %v1348
        %v4200 = vunpack.c.l.b16 %v1349
        %v4201 = vunpack.c.h.b16 %v1349
        %v4202 = vunpack.c.l.b16 %v1350
        %v4203 = vunpack.c.h.b16 %v1350
        %v4204 = vunpack.c.l.b16 %v1351
        %v4205 = vunpack.c.h.b16 %v1351
        %v4206 = vunpack.c.l.b16 %v1352
        %v4207 = vunpack.c.h.b16 %v1352
        %v4208 = vunpack.c.l.b16 %v1353
        %v4209 = vunpack.c.h.b16 %v1353
        %v4210 = vunpack.c.l.b16 %v1354
        %v4211 = vunpack.c.h.b16 %v1354
        %v4212 = vunpack.c.l.b16 %v1355
        %v4213 = vunpack.c.h.b16 %v1355
        %v4214 = vunpack.c.l.b16 %v1356
        %v4215 = vunpack.c.h.b16 %v1356
        %v4216 = vunpack.c.l.b16 %v1357
        %v4217 = vunpack.c.h.b16 %v1357
        %v4218 = vunpack.c.l.b16 %v1358
        %v4219 = vunpack.c.h.b16 %v1358
        %v4220 = vunpack.c.l.b16 %v1359
        %v4221 = vunpack.c.h.b16 %v1359
        %v4222 = vunpack.c.l.b16 %v1360
        %v4223 = vunpack.c.h.b16 %v1360
        %v4224 = vunpack.c.l.b16 %v1361
        %v4225 = vunpack.c.h.b16 %v1361
        %v4226 = vunpack.c.l.b16 %v1362
        %v4227 = vunpack.c.h.b16 %v1362
        %v4228 = vunpack.c.l.b16 %v1363
        %v4229 = vunpack.c.h.b16 %v1363
        %v4230 = vunpack.c.l.b16 %v1364
        %v4231 = vunpack.c.h.b16 %v1364
        %v4232 = vunpack.c.l.b16 %v1365
        %v4233 = vunpack.c.h.b16 %v1365
        %v4234 = vunpack.c.l.b16 %v1366
        %v4235 = vunpack.c.h.b16 %v1366
        %v4236 = vunpack.c.l.b16 %v1367
        %v4237 = vunpack.c.h.b16 %v1367
        %v4238 = vunpack.c.l.b16 %v1368
        %v4239 = vunpack.c.h.b16 %v1368
        %v4240 = vunpack.c.l.b16 %v1369
        %v4241 = vunpack.c.h.b16 %v1369
        %v4242 = vunpack.c.l.b16 %v1370
        %v4243 = vunpack.c.h.b16 %v1370
        %v4244 = vunpack.c.l.b16 %v1371
        %v4245 = vunpack.c.h.b16 %v1371
        %v4246 = vunpack.c.l.b16 %v1372
        %v4247 = vunpack.c.h.b16 %v1372
        %v4248 = vunpack.c.l.b16 %v1373
        %v4249 = vunpack.c.h.b16 %v1373
        %v4250 = vunpack.c.l.b16 %v1374
        %v4251 = vunpack.c.h.b16 %v1374
        %v4252 = vunpack.c.l.b16 %v1375
        %v4253 = vunpack.c.h.b16 %v1375
        %v4254 = vunpack.c.l.b16 %v1376
        %v4255 = vunpack.c.h.b16 %v1376
        %v4256 = vunpack.c.l.b16 %v1377
        %v4257 = vunpack.c.h.b16 %v1377
        %v4258 = vunpack.c.l.b16 %v1378
        %v4259 = vunpack.c.h.b16 %v1378
        %v4260 = vunpack.c.l.b16 %v1379
        %v4261 = vunpack.c.h.b16 %v1379
        %v4262 = vunpack.c.l.b16 %v1380
        %v4263 = vunpack.c.h.b16 %v1380
        %v4264 = vunpack.c.l.b16 %v1381
        %v4265 = vunpack.c.h.b16 %v1381
        %v4266 = vunpack.c.l.b16 %v1382
        %v4267 = vunpack.c.h.b16 %v1382
        %v4268 = vunpack.c.l.b16 %v1383
        %v4269 = vunpack.c.h.b16 %v1383
        %v4270 = vunpack.c.l.b16 %v1384
        %v4271 = vunpack.c.h.b16 %v1384
        %v4272 = vunpack.c.l.b16 %v1385
        %v4273 = vunpack.c.h.b16 %v1385
        %v4274 = vunpack.c.l.b16 %v1386
        %v4275 = vunpack.c.h.b16 %v1386
        %v4276 = vunpack.c.l.b16 %v1387
        %v4277 = vunpack.c.h.b16 %v1387
        %v4278 = vunpack.c.l.b16 %v1388
        %v4279 = vunpack.c.h.b16 %v1388
        %v4280 = vunpack.c.l.b16 %v1389
        %v4281 = vunpack.c.h.b16 %v1389
        %v4282 = vunpack.c.l.b16 %v1390
        %v4283 = vunpack.c.h.b16 %v1390
        %v4284 = vunpack.c.l.b16 %v1391
        %v4285 = vunpack.c.h.b16 %v1391
        %v4286 = vunpack.c.l.b16 %v1392
        %v4287 = vunpack.c.h.b16 %v1392
        %v4288 = vunpack.c.l.b16 %v1393
        %v4289 = vunpack.c.h.b16 %v1393
        %v4290 = vunpack.c.l.b16 %v1394
        %v4291 = vunpack.c.h.b16 %v1394
        %v4292 = vunpack.c.l.b16 %v1395
        %v4293 = vunpack.c.h.b16 %v1395
        %v4294 = vunpack.c.l.b16 %v1396
        %v4295 = vunpack.c.h.b16 %v1396
        %v4296 = vunpack.c.l.b16 %v1397
        %v4297 = vunpack.c.h.b16 %v1397
        %v4298 = vunpack.c.l.b16 %v1398
        %v4299 = vunpack.c.h.b16 %v1398
        %v4300 = vunpack.c.l.b16 %v1399
        %v4301 = vunpack.c.h.b16 %v1399
        %v4302 = vunpack.c.l.b16 %v1400
        %v4303 = vunpack.c.h.b16 %v1400
        %v4304 = vunpack.c.l.b16 %v1401
        %v4305 = vunpack.c.h.b16 %v1401
        %v4306 = vunpack.c.l.b16 %v1402
        %v4307 = vunpack.c.h.b16 %v1402
        %v4308 = vunpack.c.l.b16 %v1403
        %v4309 = vunpack.c.h.b16 %v1403
        %v4310 = vunpack.c.l.b16 %v1404
        %v4311 = vunpack.c.h.b16 %v1404
        %v4312 = vunpack.c.l.b16 %v1405
        %v4313 = vunpack.c.h.b16 %v1405
        %v4314 = vunpack.c.l.b16 %v1406
        %v4315 = vunpack.c.h.b16 %v1406
        %v4316 = vunpack.c.l.b16 %v1407
        %v4317 = vunpack.c.h.b16 %v1407
        %v4318 = vunpack.c.l.b16 %v1408
        %v4319 = vunpack.c.h.b16 %v1408
        %v4320 = vunpack.c.l.b16 %v1409
        %v4321 = vunpack.c.h.b16 %v1409
        %v4322 = vunpack.c.l.b16 %v1410
        %v4323 = vunpack.c.h.b16 %v1410
        %v4324 = vunpack.c.l.b16 %v1411
        %v4325 = vunpack.c.h.b16 %v1411
        %v4326 = vunpack.c.l.b16 %v1412
        %v4327 = vunpack.c.h.b16 %v1412
        %v4328 = vunpack.c.l.b16 %v1413
        %v4329 = vunpack.c.h.b16 %v1413
        %v4330 = vunpack.c.l.b16 %v1414
        %v4331 = vunpack.c.h.b16 %v1414
        %v4332 = vunpack.c.l.b16 %v1415
        %v4333 = vunpack.c.h.b16 %v1415
        %v4334 = vunpack.c.l.b16 %v1416
        %v4335 = vunpack.c.h.b16 %v1416
        %v4336 = vunpack.c.l.b16 %v1417
        %v4337 = vunpack.c.h.b16 %v1417
        %v4338 = vunpack.c.l.b16 %v1418
        %v4339 = vunpack.c.h.b16 %v1418
        %v4340 = vunpack.c.l.b16 %v1419
        %v4341 = vunpack.c.h.b16 %v1419
        %v4342 = vunpack.c.l.b16 %v1420
        %v4343 = vunpack.c.h.b16 %v1420
        %v4344 = vunpack.c.l.b16 %v1421
        %v4345 = vunpack.c.h.b16 %v1421
        %v4346 = vunpack.c.l.b16 %v1422
        %v4347 = vunpack.c.h.b16 %v1422
        %v4348 = vunpack.c.l.b16 %v1423
        %v4349 = vunpack.c.h.b16 %v1423
        %v4350 = vunpack.c.l.b16 %v1424
        %v4351 = vunpack.c.h.b16 %v1424
        %v4352 = vunpack.c.l.b16 %v1425
        %v4353 = vunpack.c.h.b16 %v1425
        %v4354 = vunpack.c.l.b16 %v1426
        %v4355 = vunpack.c.h.b16 %v1426
        %v4356 = vunpack.c.l.b16 %v1427
        %v4357 = vunpack.c.h.b16 %v1427
        %v4358 = vunpack.c.l.b16 %v1428
        %v4359 = vunpack.c.h.b16 %v1428
        %v4360 = vunpack.c.l.b16 %v1429
        %v4361 = vunpack.c.h.b16 %v1429
        %v4362 = vunpack.c.l.b16 %v1430
        %v4363 = vunpack.c.h.b16 %v1430
        %v4364 = vunpack.c.l.b16 %v1431
        %v4365 = vunpack.c.h.b16 %v1431
        %v4366 = vunpack.c.l.b16 %v1432
        %v4367 = vunpack.c.h.b16 %v1432
        %v4368 = vunpack.c.l.b16 %v1433
        %v4369 = vunpack.c.h.b16 %v1433
        %v4370 = vunpack.c.l.b16 %v1434
        %v4371 = vunpack.c.h.b16 %v1434
        %v4372 = vunpack.c.l.b16 %v1435
        %v4373 = vunpack.c.h.b16 %v1435
        %v4374 = vunpack.c.l.b16 %v1436
        %v4375 = vunpack.c.h.b16 %v1436
        %v4376 = vunpack.c.l.b16 %v1437
        %v4377 = vunpack.c.h.b16 %v1437
        %v4378 = vunpack.c.l.b16 %v1438
        %v4379 = vunpack.c.h.b16 %v1438
        %v4380 = vunpack.c.l.b16 %v1439
        %v4381 = vunpack.c.h.b16 %v1439
        %v4382 = vunpack.c.l.b16 %v1440
        %v4383 = vunpack.c.h.b16 %v1440
        %v4384 = vunpack.c.l.b16 %v1441
        %v4385 = vunpack.c.h.b16 %v1441
        %v4386 = vunpack.c.l.b16 %v1442
        %v4387 = vunpack.c.h.b16 %v1442
        %v4388 = vunpack.c.l.b16 %v1443
        %v4389 = vunpack.c.h.b16 %v1443
        %v4390 = vunpack.c.l.b16 %v1444
        %v4391 = vunpack.c.h.b16 %v1444
        %v4392 = vunpack.c.l.b16 %v1445
        %v4393 = vunpack.c.h.b16 %v1445
        %v4394 = vunpack.c.l.b16 %v1446
        %v4395 = vunpack.c.h.b16 %v1446
        %v4396 = vunpack.c.l.b16 %v1447
        %v4397 = vunpack.c.h.b16 %v1447
        %v4398 = vunpack.c.l.b16 %v1448
        %v4399 = vunpack.c.h.b16 %v1448
        %v4400 = vunpack.c.l.b16 %v1449
        %v4401 = vunpack.c.h.b16 %v1449
        %v4402 = vunpack.c.l.b16 %v1450
        %v4403 = vunpack.c.h.b16 %v1450
        %v4404 = vunpack.c.l.b16 %v1451
        %v4405 = vunpack.c.h.b16 %v1451
        %v4406 = vunpack.c.l.b16 %v1452
        %v4407 = vunpack.c.h.b16 %v1452
        %v4408 = vunpack.c.l.b16 %v1453
        %v4409 = vunpack.c.h.b16 %v1453
        %v4410 = vunpack.c.l.b16 %v1454
        %v4411 = vunpack.c.h.b16 %v1454
        %v4412 = vunpack.c.l.b16 %v1455
        %v4413 = vunpack.c.h.b16 %v1455
        %v4414 = vunpack.c.l.b16 %v1456
        %v4415 = vunpack.c.h.b16 %v1456
        %v4416 = vunpack.c.l.b16 %v1457
        %v4417 = vunpack.c.h.b16 %v1457
        %v4418 = vunpack.c.l.b16 %v1458
        %v4419 = vunpack.c.h.b16 %v1458
        %v4420 = vunpack.c.l.b16 %v1459
        %v4421 = vunpack.c.h.b16 %v1459
        %v4422 = vunpack.c.l.b16 %v1460
        %v4423 = vunpack.c.h.b16 %v1460
        %v4424 = vunpack.c.l.b16 %v1461
        %v4425 = vunpack.c.h.b16 %v1461
        %v4426 = vunpack.c.l.b16 %v1462
        %v4427 = vunpack.c.h.b16 %v1462
        %v4428 = vunpack.c.l.b16 %v1463
        %v4429 = vunpack.c.h.b16 %v1463
        %v4430 = vunpack.c.l.b16 %v1464
        %v4431 = vunpack.c.h.b16 %v1464
        %v4432 = vunpack.c.l.b16 %v1465
        %v4433 = vunpack.c.h.b16 %v1465
        %v4434 = vunpack.c.l.b16 %v1466
        %v4435 = vunpack.c.h.b16 %v1466
        %v4436 = vunpack.c.l.b16 %v1467
        %v4437 = vunpack.c.h.b16 %v1467
        %v4438 = vunpack.c.l.b16 %v1468
        %v4439 = vunpack.c.h.b16 %v1468
        %v4440 = vunpack.c.l.b16 %v1469
        %v4441 = vunpack.c.h.b16 %v1469
        %v4442 = vunpack.c.l.b16 %v1470
        %v4443 = vunpack.c.h.b16 %v1470
        %v4444 = vunpack.c.l.b16 %v1471
        %v4445 = vunpack.c.h.b16 %v1471
        %v4446 = vunpack.c.l.b16 %v1472
        %v4447 = vunpack.c.h.b16 %v1472
        %v4448 = vunpack.c.l.b16 %v1473
        %v4449 = vunpack.c.h.b16 %v1473
        %v4450 = vunpack.c.l.b16 %v1474
        %v4451 = vunpack.c.h.b16 %v1474
        %v4452 = vunpack.c.l.b16 %v1475
        %v4453 = vunpack.c.h.b16 %v1475
        %v4454 = vunpack.c.l.b16 %v1476
        %v4455 = vunpack.c.h.b16 %v1476
        %v4456 = vunpack.c.l.b16 %v1477
        %v4457 = vunpack.c.h.b16 %v1477
        %v4458 = vunpack.c.l.b16 %v1478
        %v4459 = vunpack.c.h.b16 %v1478
        %v4460 = vunpack.c.l.b16 %v1479
        %v4461 = vunpack.c.h.b16 %v1479
        %v4462 = vunpack.c.l.b16 %v1480
        %v4463 = vunpack.c.h.b16 %v1480
        %v4464 = vunpack.c.l.b16 %v1481
        %v4465 = vunpack.c.h.b16 %v1481
        %v4466 = vunpack.c.l.b16 %v1482
        %v4467 = vunpack.c.h.b16 %v1482
        %v4468 = vunpack.c.l.b16 %v1483
        %v4469 = vunpack.c.h.b16 %v1483
        %v4470 = vunpack.c.l.b16 %v1484
        %v4471 = vunpack.c.h.b16 %v1484
        %v4472 = vunpack.c.l.b16 %v1485
        %v4473 = vunpack.c.h.b16 %v1485
        %v4474 = vunpack.c.l.b16 %v1486
        %v4475 = vunpack.c.h.b16 %v1486
        %v4476 = vunpack.c.l.b16 %v1487
        %v4477 = vunpack.c.h.b16 %v1487
        %v4478 = vunpack.c.l.b16 %v1488
        %v4479 = vunpack.c.h.b16 %v1488
        %v4480 = vunpack.c.l.b16 %v1489
        %v4481 = vunpack.c.h.b16 %v1489
        %v4482 = vunpack.c.l.b16 %v1490
        %v4483 = vunpack.c.h.b16 %v1490
        %v4484 = vunpack.c.l.b16 %v1491
        %v4485 = vunpack.c.h.b16 %v1491
        %v4486 = vunpack.c.l.b16 %v1492
        %v4487 = vunpack.c.h.b16 %v1492
        %v4488 = vunpack.c.l.b16 %v1493
        %v4489 = vunpack.c.h.b16 %v1493
        %v4490 = vunpack.c.l.b16 %v1494
        %v4491 = vunpack.c.h.b16 %v1494
        %v4492 = vunpack.c.l.b16 %v1495
        %v4493 = vunpack.c.h.b16 %v1495
        %v4494 = vunpack.c.l.b16 %v1496
        %v4495 = vunpack.c.h.b16 %v1496
        %v4496 = vunpack.c.l.b16 %v1497
        %v4497 = vunpack.c.h.b16 %v1497
        %v4498 = vunpack.c.l.b16 %v1498
        %v4499 = vunpack.c.h.b16 %v1498
        %v4500 = vunpack.c.l.b16 %v1499
        %v4501 = vunpack.c.h.b16 %v1499
        %v4502 = vunpack.c.l.b16 %v1500
        %v4503 = vunpack.c.h.b16 %v1500
        %v4504 = vunpack.c.l.b16 %v1501
        %v4505 = vunpack.c.h.b16 %v1501
        %v4506 = vunpack.c.l.b16 %v1502
        %v4507 = vunpack.c.h.b16 %v1502
        %v4508 = vunpack.c.l.b16 %v1503
        %v4509 = vunpack.c.h.b16 %v1503
        %v4510 = vunpack.c.l.b16 %v1504
        %v4511 = vunpack.c.h.b16 %v1504
        %v4512 = vunpack.c.l.b16 %v1505
        %v4513 = vunpack.c.h.b16 %v1505
        %v4514 = vunpack.c.l.b16 %v1506
        %v4515 = vunpack.c.h.b16 %v1506
        %v4516 = vunpack.c.l.b16 %v1507
        %v4517 = vunpack.c.h.b16 %v1507
        %v4518 = vunpack.c.l.b16 %v1508
        %v4519 = vunpack.c.h.b16 %v1508
        %v4520 = vunpack.c.l.b16 %v1509
        %v4521 = vunpack.c.h.b16 %v1509
        %v4522 = vunpack.c.l.b16 %v1510
        %v4523 = vunpack.c.h.b16 %v1510
        %v4524 = vunpack.c.l.b16 %v1511
        %v4525 = vunpack.c.h.b16 %v1511
        %v4526 = vunpack.c.l.b16 %v1512
        %v4527 = vunpack.c.h.b16 %v1512
        %v4528 = vunpack.c.l.b16 %v1513
        %v4529 = vunpack.c.h.b16 %v1513
        %v4530 = vunpack.c.l.b16 %v1514
        %v4531 = vunpack.c.h.b16 %v1514
        %v4532 = vunpack.c.l.b16 %v1515
        %v4533 = vunpack.c.h.b16 %v1515
        %v4534 = vunpack.c.l.b16 %v1516
        %v4535 = vunpack.c.h.b16 %v1516
        %v4536 = vunpack.c.l.b16 %v1517
        %v4537 = vunpack.c.h.b16 %v1517
        %v4538 = vunpack.c.l.b16 %v1518
        %v4539 = vunpack.c.h.b16 %v1518
        %v4540 = vunpack.c.l.b16 %v1519
        %v4541 = vunpack.c.h.b16 %v1519
        %v4542 = vunpack.c.l.b16 %v1520
        %v4543 = vunpack.c.h.b16 %v1520
        %v4544 = vunpack.c.l.b16 %v1521
        %v4545 = vunpack.c.h.b16 %v1521
        %v4546 = vunpack.c.l.b16 %v1522
        %v4547 = vunpack.c.h.b16 %v1522
        %v4548 = vunpack.c.l.b16 %v1523
        %v4549 = vunpack.c.h.b16 %v1523
        %v4550 = vunpack.c.l.b16 %v1524
        %v4551 = vunpack.c.h.b16 %v1524
        %v4552 = vunpack.c.l.b16 %v1525
        %v4553 = vunpack.c.h.b16 %v1525
        %v4554 = vunpack.c.l.b16 %v1526
        %v4555 = vunpack.c.h.b16 %v1526
        %v4556 = vunpack.c.l.b16 %v1527
        %v4557 = vunpack.c.h.b16 %v1527
        %v4558 = vunpack.c.l.b16 %v1528
        %v4559 = vunpack.c.h.b16 %v1528
        %v4560 = vunpack.c.l.b16 %v1529
        %v4561 = vunpack.c.h.b16 %v1529
        %v4562 = vunpack.c.l.b16 %v1530
        %v4563 = vunpack.c.h.b16 %v1530
        %v4564 = vunpack.c.l.b16 %v1531
        %v4565 = vunpack.c.h.b16 %v1531
        %v4566 = vunpack.c.l.b16 %v1532
        %v4567 = vunpack.c.h.b16 %v1532
        %v4568 = vunpack.c.l.b16 %v1533
        %v4569 = vunpack.c.h.b16 %v1533
        %v4570 = vunpack.c.l.b16 %v1534
        %v4571 = vunpack.c.h.b16 %v1534
        %v4572 = vunpack.c.l.b16 %v1535
        %v4573 = vunpack.c.h.b16 %v1535
        %v4574 = vunpack.c.l.b16 %v1536
        %v4575 = vunpack.c.h.b16 %v1536
        %v4576 = vunpack.c.l.b16 %v1537
        %v4577 = vunpack.c.h.b16 %v1537
        %v4578 = vunpack.c.l.b16 %v1538
        %v4579 = vunpack.c.h.b16 %v1538
        %v4580 = vunpack.c.l.b16 %v1539
        %v4581 = vunpack.c.h.b16 %v1539
        %v4582 = vunpack.c.l.b16 %v1540
        %v4583 = vunpack.c.h.b16 %v1540
        %v4584 = vunpack.c.l.b16 %v1541
        %v4585 = vunpack.c.h.b16 %v1541
        %v4586 = vunpack.c.l.b16 %v1542
        %v4587 = vunpack.c.h.b16 %v1542
        %v4588 = vunpack.c.l.b16 %v1543
        %v4589 = vunpack.c.h.b16 %v1543
        %v4590 = vunpack.c.l.b16 %v1544
        %v4591 = vunpack.c.h.b16 %v1544
        %v4592 = vunpack.c.l.b16 %v1545
        %v4593 = vunpack.c.h.b16 %v1545
        %v4594 = vunpack.c.l.b16 %v1546
        %v4595 = vunpack.c.h.b16 %v1546
        %v4596 = vunpack.c.l.b16 %v1547
        %v4597 = vunpack.c.h.b16 %v1547
        %v4598 = vunpack.c.l.b16 %v1548
        %v4599 = vunpack.c.h.b16 %v1548
        %v4600 = vunpack.c.l.b16 %v1549
        %v4601 = vunpack.c.h.b16 %v1549
        %v4602 = vunpack.c.l.b16 %v1550
        %v4603 = vunpack.c.h.b16 %v1550
        %v4604 = vunpack.c.l.b16 %v1551
        %v4605 = vunpack.c.h.b16 %v1551
        %v4606 = vunpack.c.l.b16 %v1552
        %v4607 = vunpack.c.h.b16 %v1552
        %v4608 = vunpack.c.l.b16 %v1553
        %v4609 = vunpack.c.h.b16 %v1553
        %v4610 = vunpack.c.l.b16 %v1554
        %v4611 = vunpack.c.h.b16 %v1554
        %v4612 = vunpack.c.l.b16 %v1555
        %v4613 = vunpack.c.h.b16 %v1555
        %v4614 = vunpack.c.l.b16 %v1556
        %v4615 = vunpack.c.h.b16 %v1556
        %v4616 = vunpack.c.l.b16 %v1557
        %v4617 = vunpack.c.h.b16 %v1557
        %v4618 = vunpack.c.l.b16 %v1558
        %v4619 = vunpack.c.h.b16 %v1558
        %v4620 = vunpack.c.l.b16 %v1559
        %v4621 = vunpack.c.h.b16 %v1559
        %v4622 = vunpack.c.l.b16 %v1560
        %v4623 = vunpack.c.h.b16 %v1560
        %v4624 = vunpack.c.l.b16 %v1561
        %v4625 = vunpack.c.h.b16 %v1561
        %v4626 = vunpack.c.l.b16 %v1562
        %v4627 = vunpack.c.h.b16 %v1562
        %v4628 = vunpack.c.l.b16 %v1563
        %v4629 = vunpack.c.h.b16 %v1563
        %v4630 = vunpack.c.l.b16 %v1564
        %v4631 = vunpack.c.h.b16 %v1564
        %v4632 = vunpack.c.l.b16 %v1565
        %v4633 = vunpack.c.h.b16 %v1565
        %v4634 = vunpack.c.l.b16 %v1566
        %v4635 = vunpack.c.h.b16 %v1566
        %v4636 = vunpack.c.l.b16 %v1567
        %v4637 = vunpack.c.h.b16 %v1567
        %v4638 = vunpack.c.l.b16 %v1568
        %v4639 = vunpack.c.h.b16 %v1568
        %v4640 = vunpack.c.l.b16 %v1569
        %v4641 = vunpack.c.h.b16 %v1569
        %v4642 = vpack.c.b16 %v2602, %v2594
        %v4643 = vpack.c.b16 %v2603, %v2595
        %v4644 = vpack.c.b16 %v2604, %v2596
        %v4645 = vpack.c.b16 %v2605, %v2597
        %v4646 = vpack.c.b16 %v2606, %v2598
        %v4647 = vpack.c.b16 %v2607, %v2599
        %v4648 = vpack.c.b16 %v2608, %v2600
        %v4649 = vpack.c.b16 %v2609, %v2601
        %v4650 = vpack.c.b16 %v2618, %v2610
        %v4651 = vpack.c.b16 %v2619, %v2611
        %v4652 = vpack.c.b16 %v2620, %v2612
        %v4653 = vpack.c.b16 %v2621, %v2613
        %v4654 = vpack.c.b16 %v2622, %v2614
        %v4655 = vpack.c.b16 %v2623, %v2615
        %v4656 = vpack.c.b16 %v2624, %v2616
        %v4657 = vpack.c.b16 %v2625, %v2617
        %v4658 = vpack.c.b16 %v2634, %v2626
        %v4659 = vpack.c.b16 %v2635, %v2627
        %v4660 = vpack.c.b16 %v2636, %v2628
        %v4661 = vpack.c.b16 %v2637, %v2629
        %v4662 = vpack.c.b16 %v2638, %v2630
        %v4663 = vpack.c.b16 %v2639, %v2631
        %v4664 = vpack.c.b16 %v2640, %v2632
        %v4665 = vpack.c.b16 %v2641, %v2633
        %v4666 = vpack.c.b16 %v2650, %v2642
        %v4667 = vpack.c.b16 %v2651, %v2643
        %v4668 = vpack.c.b16 %v2652, %v2644
        %v4669 = vpack.c.b16 %v2653, %v2645
        %v4670 = vpack.c.b16 %v2654, %v2646
        %v4671 = vpack.c.b16 %v2655, %v2647
        %v4672 = vpack.c.b16 %v2656, %v2648
        %v4673 = vpack.c.b16 %v2657, %v2649
        %v4674 = vpack.c.b16 %v2666, %v2658
        %v4675 = vpack.c.b16 %v2667, %v2659
        %v4676 = vpack.c.b16 %v2668, %v2660
        %v4677 = vpack.c.b16 %v2669, %v2661
        %v4678 = vpack.c.b16 %v2670, %v2662
        %v4679 = vpack.c.b16 %v2671, %v2663
        %v4680 = vpack.c.b16 %v2672, %v2664
        %v4681 = vpack.c.b16 %v2673, %v2665
        %v4682 = vpack.c.b16 %v2682, %v2674
        %v4683 = vpack.c.b16 %v2683, %v2675
        %v4684 = vpack.c.b16 %v2684, %v2676
        %v4685 = vpack.c.b16 %v2685, %v2677
        %v4686 = vpack.c.b16 %v2686, %v2678
        %v4687 = vpack.c.b16 %v2687, %v2679
        %v4688 = vpack.c.b16 %v2688, %v2680
        %v4689 = vpack.c.b16 %v2689, %v2681
        %v4690 = vpack.c.b16 %v2698, %v2690
        %v4691 = vpack.c.b16 %v2699, %v2691
        %v4692 = vpack.c.b16 %v2700, %v2692
        %v4693 = vpack.c.b16 %v2701, %v2693
        %v4694 = vpack.c.b16 %v2702, %v2694
        %v4695 = vpack.c.b16 %v2703, %v2695
        %v4696 = vpack.c.b16 %v2704, %v2696
        %v4697 = vpack.c.b16 %v2705, %v2697
        %v4698 = vpack.c.b16 %v2714, %v2706
        %v4699 = vpack.c.b16 %v2715, %v2707
        %v4700 = vpack.c.b16 %v2716, %v2708
        %v4701 = vpack.c.b16 %v2717, %v2709
        %v4702 = vpack.c.b16 %v2718, %v2710
        %v4703 = vpack.c.b16 %v2719, %v2711
        %v4704 = vpack.c.b16 %v2720, %v2712
        %v4705 = vpack.c.b16 %v2721, %v2713
        %v4706 = vpack.c.b16 %v2730, %v2722
        %v4707 = vpack.c.b16 %v2731, %v2723
        %v4708 = vpack.c.b16 %v2732, %v2724
        %v4709 = vpack.c.b16 %v2733, %v2725
        %v4710 = vpack.c.b16 %v2734, %v2726
        %v4711 = vpack.c.b16 %v2735, %v2727
        %v4712 = vpack.c.b16 %v2736, %v2728
        %v4713 = vpack.c.b16 %v2737, %v2729
        %v4714 = vpack.c.b16 %v2746, %v2738
        %v4715 = vpack.c.b16 %v2747, %v2739
        %v4716 = vpack.c.b16 %v2748, %v2740
        %v4717 = vpack.c.b16 %v2749, %v2741
        %v4718 = vpack.c.b16 %v2750, %v2742
        %v4719 = vpack.c.b16 %v2751, %v2743
        %v4720 = vpack.c.b16 %v2752, %v2744
        %v4721 = vpack.c.b16 %v2753, %v2745
        %v4722 = vpack.c.b16 %v2762, %v2754
        %v4723 = vpack.c.b16 %v2763, %v2755
        %v4724 = vpack.c.b16 %v2764, %v2756
        %v4725 = vpack.c.b16 %v2765, %v2757
        %v4726 = vpack.c.b16 %v2766, %v2758
        %v4727 = vpack.c.b16 %v2767, %v2759
        %v4728 = vpack.c.b16 %v2768, %v2760
        %v4729 = vpack.c.b16 %v2769, %v2761
        %v4730 = vpack.c.b16 %v2778, %v2770
        %v4731 = vpack.c.b16 %v2779, %v2771
        %v4732 = vpack.c.b16 %v2780, %v2772
        %v4733 = vpack.c.b16 %v2781, %v2773
        %v4734 = vpack.c.b16 %v2782, %v2774
        %v4735 = vpack.c.b16 %v2783, %v2775
        %v4736 = vpack.c.b16 %v2784, %v2776
        %v4737 = vpack.c.b16 %v2785, %v2777
        %v4738 = vpack.c.b16 %v2794, %v2786
        %v4739 = vpack.c.b16 %v2795, %v2787
        %v4740 = vpack.c.b16 %v2796, %v2788
        %v4741 = vpack.c.b16 %v2797, %v2789
        %v4742 = vpack.c.b16 %v2798, %v2790
        %v4743 = vpack.c.b16 %v2799, %v2791
        %v4744 = vpack.c.b16 %v2800, %v2792
        %v4745 = vpack.c.b16 %v2801, %v2793
        %v4746 = vpack.c.b16 %v2810, %v2802
        %v4747 = vpack.c.b16 %v2811, %v2803
        %v4748 = vpack.c.b16 %v2812, %v2804
        %v4749 = vpack.c.b16 %v2813, %v2805
        %v4750 = vpack.c.b16 %v2814, %v2806
        %v4751 = vpack.c.b16 %v2815, %v2807
        %v4752 = vpack.c.b16 %v2816, %v2808
        %v4753 = vpack.c.b16 %v2817, %v2809
        %v4754 = vpack.c.b16 %v2826, %v2818
        %v4755 = vpack.c.b16 %v2827, %v2819
        %v4756 = vpack.c.b16 %v2828, %v2820
        %v4757 = vpack.c.b16 %v2829, %v2821
        %v4758 = vpack.c.b16 %v2830, %v2822
        %v4759 = vpack.c.b16 %v2831, %v2823
        %v4760 = vpack.c.b16 %v2832, %v2824
        %v4761 = vpack.c.b16 %v2833, %v2825
        %v4762 = vpack.c.b16 %v2842, %v2834
        %v4763 = vpack.c.b16 %v2843, %v2835
        %v4764 = vpack.c.b16 %v2844, %v2836
        %v4765 = vpack.c.b16 %v2845, %v2837
        %v4766 = vpack.c.b16 %v2846, %v2838
        %v4767 = vpack.c.b16 %v2847, %v2839
        %v4768 = vpack.c.b16 %v2848, %v2840
        %v4769 = vpack.c.b16 %v2849, %v2841
        %v4770 = vpack.c.b16 %v2858, %v2850
        %v4771 = vpack.c.b16 %v2859, %v2851
        %v4772 = vpack.c.b16 %v2860, %v2852
        %v4773 = vpack.c.b16 %v2861, %v2853
        %v4774 = vpack.c.b16 %v2862, %v2854
        %v4775 = vpack.c.b16 %v2863, %v2855
        %v4776 = vpack.c.b16 %v2864, %v2856
        %v4777 = vpack.c.b16 %v2865, %v2857
        %v4778 = vpack.c.b16 %v2874, %v2866
        %v4779 = vpack.c.b16 %v2875, %v2867
        %v4780 = vpack.c.b16 %v2876, %v2868
        %v4781 = vpack.c.b16 %v2877, %v2869
        %v4782 = vpack.c.b16 %v2878, %v2870
        %v4783 = vpack.c.b16 %v2879, %v2871
        %v4784 = vpack.c.b16 %v2880, %v2872
        %v4785 = vpack.c.b16 %v2881, %v2873
        %v4786 = vpack.c.b16 %v2890, %v2882
        %v4787 = vpack.c.b16 %v2891, %v2883
        %v4788 = vpack.c.b16 %v2892, %v2884
        %v4789 = vpack.c.b16 %v2893, %v2885
        %v4790 = vpack.c.b16 %v2894, %v2886
        %v4791 = vpack.c.b16 %v2895, %v2887
        %v4792 = vpack.c.b16 %v2896, %v2888
        %v4793 = vpack.c.b16 %v2897, %v2889
        %v4794 = vpack.c.b16 %v2906, %v2898
        %v4795 = vpack.c.b16 %v2907, %v2899
        %v4796 = vpack.c.b16 %v2908, %v2900
        %v4797 = vpack.c.b16 %v2909, %v2901
        %v4798 = vpack.c.b16 %v2910, %v2902
        %v4799 = vpack.c.b16 %v2911, %v2903
        %v4800 = vpack.c.b16 %v2912, %v2904
        %v4801 = vpack.c.b16 %v2913, %v2905
        %v4802 = vpack.c.b16 %v2922, %v2914
        %v4803 = vpack.c.b16 %v2923, %v2915
        %v4804 = vpack.c.b16 %v2924, %v2916
        %v4805 = vpack.c.b16 %v2925, %v2917
        %v4806 = vpack.c.b16 %v2926, %v2918
        %v4807 = vpack.c.b16 %v2927, %v2919
        %v4808 = vpack.c.b16 %v2928, %v2920
        %v4809 = vpack.c.b16 %v2929, %v2921
        %v4810 = vpack.c.b16 %v2938, %v2930
        %v4811 = vpack.c.b16 %v2939, %v2931
        %v4812 = vpack.c.b16 %v2940, %v2932
        %v4813 = vpack.c.b16 %v2941, %v2933
        %v4814 = vpack.c.b16 %v2942, %v2934
        %v4815 = vpack.c.b16 %v2943, %v2935
        %v4816 = vpack.c.b16 %v2944, %v2936
        %v4817 = vpack.c.b16 %v2945, %v2937
        %v4818 = vpack.c.b16 %v2954, %v2946
        %v4819 = vpack.c.b16 %v2955, %v2947
        %v4820 = vpack.c.b16 %v2956, %v2948
        %v4821 = vpack.c.b16 %v2957, %v2949
        %v4822 = vpack.c.b16 %v2958, %v2950
        %v4823 = vpack.c.b16 %v2959, %v2951
        %v4824 = vpack.c.b16 %v2960, %v2952
        %v4825 = vpack.c.b16 %v2961, %v2953
        %v4826 = vpack.c.b16 %v2970, %v2962
        %v4827 = vpack.c.b16 %v2971, %v2963
        %v4828 = vpack.c.b16 %v2972, %v2964
        %v4829 = vpack.c.b16 %v2973, %v2965
        %v4830 = vpack.c.b16 %v2974, %v2966
        %v4831 = vpack.c.b16 %v2975, %v2967
        %v4832 = vpack.c.b16 %v2976, %v2968
        %v4833 = vpack.c.b16 %v2977, %v2969
        %v4834 = vpack.c.b16 %v2986, %v2978
        %v4835 = vpack.c.b16 %v2987, %v2979
        %v4836 = vpack.c.b16 %v2988, %v2980
        %v4837 = vpack.c.b16 %v2989, %v2981
        %v4838 = vpack.c.b16 %v2990, %v2982
        %v4839 = vpack.c.b16 %v2991, %v2983
        %v4840 = vpack.c.b16 %v2992, %v2984
        %v4841 = vpack.c.b16 %v2993, %v2985
        %v4842 = vpack.c.b16 %v3002, %v2994
        %v4843 = vpack.c.b16 %v3003, %v2995
        %v4844 = vpack.c.b16 %v3004, %v2996
        %v4845 = vpack.c.b16 %v3005, %v2997
        %v4846 = vpack.c.b16 %v3006, %v2998
        %v4847 = vpack.c.b16 %v3007, %v2999
        %v4848 = vpack.c.b16 %v3008, %v3000
        %v4849 = vpack.c.b16 %v3009, %v3001
        %v4850 = vpack.c.b16 %v3018, %v3010
        %v4851 = vpack.c.b16 %v3019, %v3011
        %v4852 = vpack.c.b16 %v3020, %v3012
        %v4853 = vpack.c.b16 %v3021, %v3013
        %v4854 = vpack.c.b16 %v3022, %v3014
        %v4855 = vpack.c.b16 %v3023, %v3015
        %v4856 = vpack.c.b16 %v3024, %v3016
        %v4857 = vpack.c.b16 %v3025, %v3017
        %v4858 = vpack.c.b16 %v3034, %v3026
        %v4859 = vpack.c.b16 %v3035, %v3027
        %v4860 = vpack.c.b16 %v3036, %v3028
        %v4861 = vpack.c.b16 %v3037, %v3029
        %v4862 = vpack.c.b16 %v3038, %v3030
        %v4863 = vpack.c.b16 %v3039, %v3031
        %v4864 = vpack.c.b16 %v3040, %v3032
        %v4865 = vpack.c.b16 %v3041, %v3033
        %v4866 = vpack.c.b16 %v3050, %v3042
        %v4867 = vpack.c.b16 %v3051, %v3043
        %v4868 = vpack.c.b16 %v3052, %v3044
        %v4869 = vpack.c.b16 %v3053, %v3045
        %v4870 = vpack.c.b16 %v3054, %v3046
        %v4871 = vpack.c.b16 %v3055, %v3047
        %v4872 = vpack.c.b16 %v3056, %v3048
        %v4873 = vpack.c.b16 %v3057, %v3049
        %v4874 = vpack.c.b16 %v3066, %v3058
        %v4875 = vpack.c.b16 %v3067, %v3059
        %v4876 = vpack.c.b16 %v3068, %v3060
        %v4877 = vpack.c.b16 %v3069, %v3061
        %v4878 = vpack.c.b16 %v3070, %v3062
        %v4879 = vpack.c.b16 %v3071, %v3063
        %v4880 = vpack.c.b16 %v3072, %v3064
        %v4881 = vpack.c.b16 %v3073, %v3065
        %v4882 = vpack.c.b16 %v3082, %v3074
        %v4883 = vpack.c.b16 %v3083, %v3075
        %v4884 = vpack.c.b16 %v3084, %v3076
        %v4885 = vpack.c.b16 %v3085, %v3077
        %v4886 = vpack.c.b16 %v3086, %v3078
        %v4887 = vpack.c.b16 %v3087, %v3079
        %v4888 = vpack.c.b16 %v3088, %v3080
        %v4889 = vpack.c.b16 %v3089, %v3081
        %v4890 = vpack.c.b16 %v3098, %v3090
        %v4891 = vpack.c.b16 %v3099, %v3091
        %v4892 = vpack.c.b16 %v3100, %v3092
        %v4893 = vpack.c.b16 %v3101, %v3093
        %v4894 = vpack.c.b16 %v3102, %v3094
        %v4895 = vpack.c.b16 %v3103, %v3095
        %v4896 = vpack.c.b16 %v3104, %v3096
        %v4897 = vpack.c.b16 %v3105, %v3097
        %v4898 = vpack.c.b16 %v3114, %v3106
        %v4899 = vpack.c.b16 %v3115, %v3107
        %v4900 = vpack.c.b16 %v3116, %v3108
        %v4901 = vpack.c.b16 %v3117, %v3109
        %v4902 = vpack.c.b16 %v3118, %v3110
        %v4903 = vpack.c.b16 %v3119, %v3111
        %v4904 = vpack.c.b16 %v3120, %v3112
        %v4905 = vpack.c.b16 %v3121, %v3113
        %v4906 = vpack.c.b16 %v3130, %v3122
        %v4907 = vpack.c.b16 %v3131, %v3123
        %v4908 = vpack.c.b16 %v3132, %v3124
        %v4909 = vpack.c.b16 %v3133, %v3125
        %v4910 = vpack.c.b16 %v3134, %v3126
        %v4911 = vpack.c.b16 %v3135, %v3127
        %v4912 = vpack.c.b16 %v3136, %v3128
        %v4913 = vpack.c.b16 %v3137, %v3129
        %v4914 = vpack.c.b16 %v3146, %v3138
        %v4915 = vpack.c.b16 %v3147, %v3139
        %v4916 = vpack.c.b16 %v3148, %v3140
        %v4917 = vpack.c.b16 %v3149, %v3141
        %v4918 = vpack.c.b16 %v3150, %v3142
        %v4919 = vpack.c.b16 %v3151, %v3143
        %v4920 = vpack.c.b16 %v3152, %v3144
        %v4921 = vpack.c.b16 %v3153, %v3145
        %v4922 = vpack.c.b16 %v3162, %v3154
        %v4923 = vpack.c.b16 %v3163, %v3155
        %v4924 = vpack.c.b16 %v3164, %v3156
        %v4925 = vpack.c.b16 %v3165, %v3157
        %v4926 = vpack.c.b16 %v3166, %v3158
        %v4927 = vpack.c.b16 %v3167, %v3159
        %v4928 = vpack.c.b16 %v3168, %v3160
        %v4929 = vpack.c.b16 %v3169, %v3161
        %v4930 = vpack.c.b16 %v3178, %v3170
        %v4931 = vpack.c.b16 %v3179, %v3171
        %v4932 = vpack.c.b16 %v3180, %v3172
        %v4933 = vpack.c.b16 %v3181, %v3173
        %v4934 = vpack.c.b16 %v3182, %v3174
        %v4935 = vpack.c.b16 %v3183, %v3175
        %v4936 = vpack.c.b16 %v3184, %v3176
        %v4937 = vpack.c.b16 %v3185, %v3177
        %v4938 = vpack.c.b16 %v3194, %v3186
        %v4939 = vpack.c.b16 %v3195, %v3187
        %v4940 = vpack.c.b16 %v3196, %v3188
        %v4941 = vpack.c.b16 %v3197, %v3189
        %v4942 = vpack.c.b16 %v3198, %v3190
        %v4943 = vpack.c.b16 %v3199, %v3191
        %v4944 = vpack.c.b16 %v3200, %v3192
        %v4945 = vpack.c.b16 %v3201, %v3193
        %v4946 = vpack.c.b16 %v3210, %v3202
        %v4947 = vpack.c.b16 %v3211, %v3203
        %v4948 = vpack.c.b16 %v3212, %v3204
        %v4949 = vpack.c.b16 %v3213, %v3205
        %v4950 = vpack.c.b16 %v3214, %v3206
        %v4951 = vpack.c.b16 %v3215, %v3207
        %v4952 = vpack.c.b16 %v3216, %v3208
        %v4953 = vpack.c.b16 %v3217, %v3209
        %v4954 = vpack.c.b16 %v3226, %v3218
        %v4955 = vpack.c.b16 %v3227, %v3219
        %v4956 = vpack.c.b16 %v3228, %v3220
        %v4957 = vpack.c.b16 %v3229, %v3221
        %v4958 = vpack.c.b16 %v3230, %v3222
        %v4959 = vpack.c.b16 %v3231, %v3223
        %v4960 = vpack.c.b16 %v3232, %v3224
        %v4961 = vpack.c.b16 %v3233, %v3225
        %v4962 = vpack.c.b16 %v3242, %v3234
        %v4963 = vpack.c.b16 %v3243, %v3235
        %v4964 = vpack.c.b16 %v3244, %v3236
        %v4965 = vpack.c.b16 %v3245, %v3237
        %v4966 = vpack.c.b16 %v3246, %v3238
        %v4967 = vpack.c.b16 %v3247, %v3239
        %v4968 = vpack.c.b16 %v3248, %v3240
        %v4969 = vpack.c.b16 %v3249, %v3241
        %v4970 = vpack.c.b16 %v3258, %v3250
        %v4971 = vpack.c.b16 %v3259, %v3251
        %v4972 = vpack.c.b16 %v3260, %v3252
        %v4973 = vpack.c.b16 %v3261, %v3253
        %v4974 = vpack.c.b16 %v3262, %v3254
        %v4975 = vpack.c.b16 %v3263, %v3255
        %v4976 = vpack.c.b16 %v3264, %v3256
        %v4977 = vpack.c.b16 %v3265, %v3257
        %v4978 = vpack.c.b16 %v3274, %v3266
        %v4979 = vpack.c.b16 %v3275, %v3267
        %v4980 = vpack.c.b16 %v3276, %v3268
        %v4981 = vpack.c.b16 %v3277, %v3269
        %v4982 = vpack.c.b16 %v3278, %v3270
        %v4983 = vpack.c.b16 %v3279, %v3271
        %v4984 = vpack.c.b16 %v3280, %v3272
        %v4985 = vpack.c.b16 %v3281, %v3273
        %v4986 = vpack.c.b16 %v3290, %v3282
        %v4987 = vpack.c.b16 %v3291, %v3283
        %v4988 = vpack.c.b16 %v3292, %v3284
        %v4989 = vpack.c.b16 %v3293, %v3285
        %v4990 = vpack.c.b16 %v3294, %v3286
        %v4991 = vpack.c.b16 %v3295, %v3287
        %v4992 = vpack.c.b16 %v3296, %v3288
        %v4993 = vpack.c.b16 %v3297, %v3289
        %v4994 = vpack.c.b16 %v3306, %v3298
        %v4995 = vpack.c.b16 %v3307, %v3299
        %v4996 = vpack.c.b16 %v3308, %v3300
        %v4997 = vpack.c.b16 %v3309, %v3301
        %v4998 = vpack.c.b16 %v3310, %v3302
        %v4999 = vpack.c.b16 %v3311, %v3303
        %v5000 = vpack.c.b16 %v3312, %v3304
        %v5001 = vpack.c.b16 %v3313, %v3305
        %v5002 = vpack.c.b16 %v3322, %v3314
        %v5003 = vpack.c.b16 %v3323, %v3315
        %v5004 = vpack.c.b16 %v3324, %v3316
        %v5005 = vpack.c.b16 %v3325, %v3317
        %v5006 = vpack.c.b16 %v3326, %v3318
        %v5007 = vpack.c.b16 %v3327, %v3319
        %v5008 = vpack.c.b16 %v3328, %v3320
        %v5009 = vpack.c.b16 %v3329, %v3321
        %v5010 = vpack.c.b16 %v3338, %v3330
        %v5011 = vpack.c.b16 %v3339, %v3331
        %v5012 = vpack.c.b16 %v3340, %v3332
        %v5013 = vpack.c.b16 %v3341, %v3333
        %v5014 = vpack.c.b16 %v3342, %v3334
        %v5015 = vpack.c.b16 %v3343, %v3335
        %v5016 = vpack.c.b16 %v3344, %v3336
        %v5017 = vpack.c.b16 %v3345, %v3337
        %v5018 = vpack.c.b16 %v3354, %v3346
        %v5019 = vpack.c.b16 %v3355, %v3347
        %v5020 = vpack.c.b16 %v3356, %v3348
        %v5021 = vpack.c.b16 %v3357, %v3349
        %v5022 = vpack.c.b16 %v3358, %v3350
        %v5023 = vpack.c.b16 %v3359, %v3351
        %v5024 = vpack.c.b16 %v3360, %v3352
        %v5025 = vpack.c.b16 %v3361, %v3353
        %v5026 = vpack.c.b16 %v3370, %v3362
        %v5027 = vpack.c.b16 %v3371, %v3363
        %v5028 = vpack.c.b16 %v3372, %v3364
        %v5029 = vpack.c.b16 %v3373, %v3365
        %v5030 = vpack.c.b16 %v3374, %v3366
        %v5031 = vpack.c.b16 %v3375, %v3367
        %v5032 = vpack.c.b16 %v3376, %v3368
        %v5033 = vpack.c.b16 %v3377, %v3369
        %v5034 = vpack.c.b16 %v3386, %v3378
        %v5035 = vpack.c.b16 %v3387, %v3379
        %v5036 = vpack.c.b16 %v3388, %v3380
        %v5037 = vpack.c.b16 %v3389, %v3381
        %v5038 = vpack.c.b16 %v3390, %v3382
        %v5039 = vpack.c.b16 %v3391, %v3383
        %v5040 = vpack.c.b16 %v3392, %v3384
        %v5041 = vpack.c.b16 %v3393, %v3385
        %v5042 = vpack.c.b16 %v3402, %v3394
        %v5043 = vpack.c.b16 %v3403, %v3395
        %v5044 = vpack.c.b16 %v3404, %v3396
        %v5045 = vpack.c.b16 %v3405, %v3397
        %v5046 = vpack.c.b16 %v3406, %v3398
        %v5047 = vpack.c.b16 %v3407, %v3399
        %v5048 = vpack.c.b16 %v3408, %v3400
        %v5049 = vpack.c.b16 %v3409, %v3401
        %v5050 = vpack.c.b16 %v3418, %v3410
        %v5051 = vpack.c.b16 %v3419, %v3411
        %v5052 = vpack.c.b16 %v3420, %v3412
        %v5053 = vpack.c.b16 %v3421, %v3413
        %v5054 = vpack.c.b16 %v3422, %v3414
        %v5055 = vpack.c.b16 %v3423, %v3415
        %v5056 = vpack.c.b16 %v3424, %v3416
        %v5057 = vpack.c.b16 %v3425, %v3417
        %v5058 = vpack.c.b16 %v3434, %v3426
        %v5059 = vpack.c.b16 %v3435, %v3427
        %v5060 = vpack.c.b16 %v3436, %v3428
        %v5061 = vpack.c.b16 %v3437, %v3429
        %v5062 = vpack.c.b16 %v3438, %v3430
        %v5063 = vpack.c.b16 %v3439, %v3431
        %v5064 = vpack.c.b16 %v3440, %v3432
        %v5065 = vpack.c.b16 %v3441, %v3433
        %v5066 = vpack.c.b16 %v3450, %v3442
        %v5067 = vpack.c.b16 %v3451, %v3443
        %v5068 = vpack.c.b16 %v3452, %v3444
        %v5069 = vpack.c.b16 %v3453, %v3445
        %v5070 = vpack.c.b16 %v3454, %v3446
        %v5071 = vpack.c.b16 %v3455, %v3447
        %v5072 = vpack.c.b16 %v3456, %v3448
        %v5073 = vpack.c.b16 %v3457, %v3449
        %v5074 = vpack.c.b16 %v3466, %v3458
        %v5075 = vpack.c.b16 %v3467, %v3459
        %v5076 = vpack.c.b16 %v3468, %v3460
        %v5077 = vpack.c.b16 %v3469, %v3461
        %v5078 = vpack.c.b16 %v3470, %v3462
        %v5079 = vpack.c.b16 %v3471, %v3463
        %v5080 = vpack.c.b16 %v3472, %v3464
        %v5081 = vpack.c.b16 %v3473, %v3465
        %v5082 = vpack.c.b16 %v3482, %v3474
        %v5083 = vpack.c.b16 %v3483, %v3475
        %v5084 = vpack.c.b16 %v3484, %v3476
        %v5085 = vpack.c.b16 %v3485, %v3477
        %v5086 = vpack.c.b16 %v3486, %v3478
        %v5087 = vpack.c.b16 %v3487, %v3479
        %v5088 = vpack.c.b16 %v3488, %v3480
        %v5089 = vpack.c.b16 %v3489, %v3481
        %v5090 = vpack.c.b16 %v3498, %v3490
        %v5091 = vpack.c.b16 %v3499, %v3491
        %v5092 = vpack.c.b16 %v3500, %v3492
        %v5093 = vpack.c.b16 %v3501, %v3493
        %v5094 = vpack.c.b16 %v3502, %v3494
        %v5095 = vpack.c.b16 %v3503, %v3495
        %v5096 = vpack.c.b16 %v3504, %v3496
        %v5097 = vpack.c.b16 %v3505, %v3497
        %v5098 = vpack.c.b16 %v3514, %v3506
        %v5099 = vpack.c.b16 %v3515, %v3507
        %v5100 = vpack.c.b16 %v3516, %v3508
        %v5101 = vpack.c.b16 %v3517, %v3509
        %v5102 = vpack.c.b16 %v3518, %v3510
        %v5103 = vpack.c.b16 %v3519, %v3511
        %v5104 = vpack.c.b16 %v3520, %v3512
        %v5105 = vpack.c.b16 %v3521, %v3513
        %v5106 = vpack.c.b16 %v3530, %v3522
        %v5107 = vpack.c.b16 %v3531, %v3523
        %v5108 = vpack.c.b16 %v3532, %v3524
        %v5109 = vpack.c.b16 %v3533, %v3525
        %v5110 = vpack.c.b16 %v3534, %v3526
        %v5111 = vpack.c.b16 %v3535, %v3527
        %v5112 = vpack.c.b16 %v3536, %v3528
        %v5113 = vpack.c.b16 %v3537, %v3529
        %v5114 = vpack.c.b16 %v3546, %v3538
        %v5115 = vpack.c.b16 %v3547, %v3539
        %v5116 = vpack.c.b16 %v3548, %v3540
        %v5117 = vpack.c.b16 %v3549, %v3541
        %v5118 = vpack.c.b16 %v3550, %v3542
        %v5119 = vpack.c.b16 %v3551, %v3543
        %v5120 = vpack.c.b16 %v3552, %v3544
        %v5121 = vpack.c.b16 %v3553, %v3545
        %v5122 = vpack.c.b16 %v3562, %v3554
        %v5123 = vpack.c.b16 %v3563, %v3555
        %v5124 = vpack.c.b16 %v3564, %v3556
        %v5125 = vpack.c.b16 %v3565, %v3557
        %v5126 = vpack.c.b16 %v3566, %v3558
        %v5127 = vpack.c.b16 %v3567, %v3559
        %v5128 = vpack.c.b16 %v3568, %v3560
        %v5129 = vpack.c.b16 %v3569, %v3561
        %v5130 = vpack.c.b16 %v3578, %v3570
        %v5131 = vpack.c.b16 %v3579, %v3571
        %v5132 = vpack.c.b16 %v3580, %v3572
        %v5133 = vpack.c.b16 %v3581, %v3573
        %v5134 = vpack.c.b16 %v3582, %v3574
        %v5135 = vpack.c.b16 %v3583, %v3575
        %v5136 = vpack.c.b16 %v3584, %v3576
        %v5137 = vpack.c.b16 %v3585, %v3577
        %v5138 = vpack.c.b16 %v3594, %v3586
        %v5139 = vpack.c.b16 %v3595, %v3587
        %v5140 = vpack.c.b16 %v3596, %v3588
        %v5141 = vpack.c.b16 %v3597, %v3589
        %v5142 = vpack.c.b16 %v3598, %v3590
        %v5143 = vpack.c.b16 %v3599, %v3591
        %v5144 = vpack.c.b16 %v3600, %v3592
        %v5145 = vpack.c.b16 %v3601, %v3593
        %v5146 = vpack.c.b16 %v3610, %v3602
        %v5147 = vpack.c.b16 %v3611, %v3603
        %v5148 = vpack.c.b16 %v3612, %v3604
        %v5149 = vpack.c.b16 %v3613, %v3605
        %v5150 = vpack.c.b16 %v3614, %v3606
        %v5151 = vpack.c.b16 %v3615, %v3607
        %v5152 = vpack.c.b16 %v3616, %v3608
        %v5153 = vpack.c.b16 %v3617, %v3609
        %v5154 = vpack.c.b16 %v3626, %v3618
        %v5155 = vpack.c.b16 %v3627, %v3619
        %v5156 = vpack.c.b16 %v3628, %v3620
        %v5157 = vpack.c.b16 %v3629, %v3621
        %v5158 = vpack.c.b16 %v3630, %v3622
        %v5159 = vpack.c.b16 %v3631, %v3623
        %v5160 = vpack.c.b16 %v3632, %v3624
        %v5161 = vpack.c.b16 %v3633, %v3625
        %v5162 = vpack.c.b16 %v3642, %v3634
        %v5163 = vpack.c.b16 %v3643, %v3635
        %v5164 = vpack.c.b16 %v3644, %v3636
        %v5165 = vpack.c.b16 %v3645, %v3637
        %v5166 = vpack.c.b16 %v3646, %v3638
        %v5167 = vpack.c.b16 %v3647, %v3639
        %v5168 = vpack.c.b16 %v3648, %v3640
        %v5169 = vpack.c.b16 %v3649, %v3641
        %v5170 = vpack.c.b16 %v3658, %v3650
        %v5171 = vpack.c.b16 %v3659, %v3651
        %v5172 = vpack.c.b16 %v3660, %v3652
        %v5173 = vpack.c.b16 %v3661, %v3653
        %v5174 = vpack.c.b16 %v3662, %v3654
        %v5175 = vpack.c.b16 %v3663, %v3655
        %v5176 = vpack.c.b16 %v3664, %v3656
        %v5177 = vpack.c.b16 %v3665, %v3657
        %v5178 = vpack.c.b16 %v3674, %v3666
        %v5179 = vpack.c.b16 %v3675, %v3667
        %v5180 = vpack.c.b16 %v3676, %v3668
        %v5181 = vpack.c.b16 %v3677, %v3669
        %v5182 = vpack.c.b16 %v3678, %v3670
        %v5183 = vpack.c.b16 %v3679, %v3671
        %v5184 = vpack.c.b16 %v3680, %v3672
        %v5185 = vpack.c.b16 %v3681, %v3673
        %v5186 = vpack.c.b16 %v3690, %v3682
        %v5187 = vpack.c.b16 %v3691, %v3683
        %v5188 = vpack.c.b16 %v3692, %v3684
        %v5189 = vpack.c.b16 %v3693, %v3685
        %v5190 = vpack.c.b16 %v3694, %v3686
        %v5191 = vpack.c.b16 %v3695, %v3687
        %v5192 = vpack.c.b16 %v3696, %v3688
        %v5193 = vpack.c.b16 %v3697, %v3689
        %v5194 = vpack.c.b16 %v3706, %v3698
        %v5195 = vpack.c.b16 %v3707, %v3699
        %v5196 = vpack.c.b16 %v3708, %v3700
        %v5197 = vpack.c.b16 %v3709, %v3701
        %v5198 = vpack.c.b16 %v3710, %v3702
        %v5199 = vpack.c.b16 %v3711, %v3703
        %v5200 = vpack.c.b16 %v3712, %v3704
        %v5201 = vpack.c.b16 %v3713, %v3705
        %v5202 = vpack.c.b16 %v3722, %v3714
        %v5203 = vpack.c.b16 %v3723, %v3715
        %v5204 = vpack.c.b16 %v3724, %v3716
        %v5205 = vpack.c.b16 %v3725, %v3717
        %v5206 = vpack.c.b16 %v3726, %v3718
        %v5207 = vpack.c.b16 %v3727, %v3719
        %v5208 = vpack.c.b16 %v3728, %v3720
        %v5209 = vpack.c.b16 %v3729, %v3721
        %v5210 = vpack.c.b16 %v3738, %v3730
        %v5211 = vpack.c.b16 %v3739, %v3731
        %v5212 = vpack.c.b16 %v3740, %v3732
        %v5213 = vpack.c.b16 %v3741, %v3733
        %v5214 = vpack.c.b16 %v3742, %v3734
        %v5215 = vpack.c.b16 %v3743, %v3735
        %v5216 = vpack.c.b16 %v3744, %v3736
        %v5217 = vpack.c.b16 %v3745, %v3737
        %v5218 = vpack.c.b16 %v3754, %v3746
        %v5219 = vpack.c.b16 %v3755, %v3747
        %v5220 = vpack.c.b16 %v3756, %v3748
        %v5221 = vpack.c.b16 %v3757, %v3749
        %v5222 = vpack.c.b16 %v3758, %v3750
        %v5223 = vpack.c.b16 %v3759, %v3751
        %v5224 = vpack.c.b16 %v3760, %v3752
        %v5225 = vpack.c.b16 %v3761, %v3753
        %v5226 = vpack.c.b16 %v3770, %v3762
        %v5227 = vpack.c.b16 %v3771, %v3763
        %v5228 = vpack.c.b16 %v3772, %v3764
        %v5229 = vpack.c.b16 %v3773, %v3765
        %v5230 = vpack.c.b16 %v3774, %v3766
        %v5231 = vpack.c.b16 %v3775, %v3767
        %v5232 = vpack.c.b16 %v3776, %v3768
        %v5233 = vpack.c.b16 %v3777, %v3769
        %v5234 = vpack.c.b16 %v3786, %v3778
        %v5235 = vpack.c.b16 %v3787, %v3779
        %v5236 = vpack.c.b16 %v3788, %v3780
        %v5237 = vpack.c.b16 %v3789, %v3781
        %v5238 = vpack.c.b16 %v3790, %v3782
        %v5239 = vpack.c.b16 %v3791, %v3783
        %v5240 = vpack.c.b16 %v3792, %v3784
        %v5241 = vpack.c.b16 %v3793, %v3785
        %v5242 = vpack.c.b16 %v3802, %v3794
        %v5243 = vpack.c.b16 %v3803, %v3795
        %v5244 = vpack.c.b16 %v3804, %v3796
        %v5245 = vpack.c.b16 %v3805, %v3797
        %v5246 = vpack.c.b16 %v3806, %v3798
        %v5247 = vpack.c.b16 %v3807, %v3799
        %v5248 = vpack.c.b16 %v3808, %v3800
        %v5249 = vpack.c.b16 %v3809, %v3801
        %v5250 = vpack.c.b16 %v3818, %v3810
        %v5251 = vpack.c.b16 %v3819, %v3811
        %v5252 = vpack.c.b16 %v3820, %v3812
        %v5253 = vpack.c.b16 %v3821, %v3813
        %v5254 = vpack.c.b16 %v3822, %v3814
        %v5255 = vpack.c.b16 %v3823, %v3815
        %v5256 = vpack.c.b16 %v3824, %v3816
        %v5257 = vpack.c.b16 %v3825, %v3817
        %v5258 = vpack.c.b16 %v3834, %v3826
        %v5259 = vpack.c.b16 %v3835, %v3827
        %v5260 = vpack.c.b16 %v3836, %v3828
        %v5261 = vpack.c.b16 %v3837, %v3829
        %v5262 = vpack.c.b16 %v3838, %v3830
        %v5263 = vpack.c.b16 %v3839, %v3831
        %v5264 = vpack.c.b16 %v3840, %v3832
        %v5265 = vpack.c.b16 %v3841, %v3833
        %v5266 = vpack.c.b16 %v3850, %v3842
        %v5267 = vpack.c.b16 %v3851, %v3843
        %v5268 = vpack.c.b16 %v3852, %v3844
        %v5269 = vpack.c.b16 %v3853, %v3845
        %v5270 = vpack.c.b16 %v3854, %v3846
        %v5271 = vpack.c.b16 %v3855, %v3847
        %v5272 = vpack.c.b16 %v3856, %v3848
        %v5273 = vpack.c.b16 %v3857, %v3849
        %v5274 = vpack.c.b16 %v3866, %v3858
        %v5275 = vpack.c.b16 %v3867, %v3859
        %v5276 = vpack.c.b16 %v3868, %v3860
        %v5277 = vpack.c.b16 %v3869, %v3861
        %v5278 = vpack.c.b16 %v3870, %v3862
        %v5279 = vpack.c.b16 %v3871, %v3863
        %v5280 = vpack.c.b16 %v3872, %v3864
        %v5281 = vpack.c.b16 %v3873, %v3865
        %v5282 = vpack.c.b16 %v3882, %v3874
        %v5283 = vpack.c.b16 %v3883, %v3875
        %v5284 = vpack.c.b16 %v3884, %v3876
        %v5285 = vpack.c.b16 %v3885, %v3877
        %v5286 = vpack.c.b16 %v3886, %v3878
        %v5287 = vpack.c.b16 %v3887, %v3879
        %v5288 = vpack.c.b16 %v3888, %v3880
        %v5289 = vpack.c.b16 %v3889, %v3881
        %v5290 = vpack.c.b16 %v3898, %v3890
        %v5291 = vpack.c.b16 %v3899, %v3891
        %v5292 = vpack.c.b16 %v3900, %v3892
        %v5293 = vpack.c.b16 %v3901, %v3893
        %v5294 = vpack.c.b16 %v3902, %v3894
        %v5295 = vpack.c.b16 %v3903, %v3895
        %v5296 = vpack.c.b16 %v3904, %v3896
        %v5297 = vpack.c.b16 %v3905, %v3897
        %v5298 = vpack.c.b16 %v3914, %v3906
        %v5299 = vpack.c.b16 %v3915, %v3907
        %v5300 = vpack.c.b16 %v3916, %v3908
        %v5301 = vpack.c.b16 %v3917, %v3909
        %v5302 = vpack.c.b16 %v3918, %v3910
        %v5303 = vpack.c.b16 %v3919, %v3911
        %v5304 = vpack.c.b16 %v3920, %v3912
        %v5305 = vpack.c.b16 %v3921, %v3913
        %v5306 = vpack.c.b16 %v3930, %v3922
        %v5307 = vpack.c.b16 %v3931, %v3923
        %v5308 = vpack.c.b16 %v3932, %v3924
        %v5309 = vpack.c.b16 %v3933, %v3925
        %v5310 = vpack.c.b16 %v3934, %v3926
        %v5311 = vpack.c.b16 %v3935, %v3927
        %v5312 = vpack.c.b16 %v3936, %v3928
        %v5313 = vpack.c.b16 %v3937, %v3929
        %v5314 = vpack.c.b16 %v3946, %v3938
        %v5315 = vpack.c.b16 %v3947, %v3939
        %v5316 = vpack.c.b16 %v3948, %v3940
        %v5317 = vpack.c.b16 %v3949, %v3941
        %v5318 = vpack.c.b16 %v3950, %v3942
        %v5319 = vpack.c.b16 %v3951, %v3943
        %v5320 = vpack.c.b16 %v3952, %v3944
        %v5321 = vpack.c.b16 %v3953, %v3945
        %v5322 = vpack.c.b16 %v3962, %v3954
        %v5323 = vpack.c.b16 %v3963, %v3955
        %v5324 = vpack.c.b16 %v3964, %v3956
        %v5325 = vpack.c.b16 %v3965, %v3957
        %v5326 = vpack.c.b16 %v3966, %v3958
        %v5327 = vpack.c.b16 %v3967, %v3959
        %v5328 = vpack.c.b16 %v3968, %v3960
        %v5329 = vpack.c.b16 %v3969, %v3961
        %v5330 = vpack.c.b16 %v3978, %v3970
        %v5331 = vpack.c.b16 %v3979, %v3971
        %v5332 = vpack.c.b16 %v3980, %v3972
        %v5333 = vpack.c.b16 %v3981, %v3973
        %v5334 = vpack.c.b16 %v3982, %v3974
        %v5335 = vpack.c.b16 %v3983, %v3975
        %v5336 = vpack.c.b16 %v3984, %v3976
        %v5337 = vpack.c.b16 %v3985, %v3977
        %v5338 = vpack.c.b16 %v3994, %v3986
        %v5339 = vpack.c.b16 %v3995, %v3987
        %v5340 = vpack.c.b16 %v3996, %v3988
        %v5341 = vpack.c.b16 %v3997, %v3989
        %v5342 = vpack.c.b16 %v3998, %v3990
        %v5343 = vpack.c.b16 %v3999, %v3991
        %v5344 = vpack.c.b16 %v4000, %v3992
        %v5345 = vpack.c.b16 %v4001, %v3993
        %v5346 = vpack.c.b16 %v4010, %v4002
        %v5347 = vpack.c.b16 %v4011, %v4003
        %v5348 = vpack.c.b16 %v4012, %v4004
        %v5349 = vpack.c.b16 %v4013, %v4005
        %v5350 = vpack.c.b16 %v4014, %v4006
        %v5351 = vpack.c.b16 %v4015, %v4007
        %v5352 = vpack.c.b16 %v4016, %v4008
        %v5353 = vpack.c.b16 %v4017, %v4009
        %v5354 = vpack.c.b16 %v4026, %v4018
        %v5355 = vpack.c.b16 %v4027, %v4019
        %v5356 = vpack.c.b16 %v4028, %v4020
        %v5357 = vpack.c.b16 %v4029, %v4021
        %v5358 = vpack.c.b16 %v4030, %v4022
        %v5359 = vpack.c.b16 %v4031, %v4023
        %v5360 = vpack.c.b16 %v4032, %v4024
        %v5361 = vpack.c.b16 %v4033, %v4025
        %v5362 = vpack.c.b16 %v4042, %v4034
        %v5363 = vpack.c.b16 %v4043, %v4035
        %v5364 = vpack.c.b16 %v4044, %v4036
        %v5365 = vpack.c.b16 %v4045, %v4037
        %v5366 = vpack.c.b16 %v4046, %v4038
        %v5367 = vpack.c.b16 %v4047, %v4039
        %v5368 = vpack.c.b16 %v4048, %v4040
        %v5369 = vpack.c.b16 %v4049, %v4041
        %v5370 = vpack.c.b16 %v4058, %v4050
        %v5371 = vpack.c.b16 %v4059, %v4051
        %v5372 = vpack.c.b16 %v4060, %v4052
        %v5373 = vpack.c.b16 %v4061, %v4053
        %v5374 = vpack.c.b16 %v4062, %v4054
        %v5375 = vpack.c.b16 %v4063, %v4055
        %v5376 = vpack.c.b16 %v4064, %v4056
        %v5377 = vpack.c.b16 %v4065, %v4057
        %v5378 = vpack.c.b16 %v4074, %v4066
        %v5379 = vpack.c.b16 %v4075, %v4067
        %v5380 = vpack.c.b16 %v4076, %v4068
        %v5381 = vpack.c.b16 %v4077, %v4069
        %v5382 = vpack.c.b16 %v4078, %v4070
        %v5383 = vpack.c.b16 %v4079, %v4071
        %v5384 = vpack.c.b16 %v4080, %v4072
        %v5385 = vpack.c.b16 %v4081, %v4073
        %v5386 = vpack.c.b16 %v4090, %v4082
        %v5387 = vpack.c.b16 %v4091, %v4083
        %v5388 = vpack.c.b16 %v4092, %v4084
        %v5389 = vpack.c.b16 %v4093, %v4085
        %v5390 = vpack.c.b16 %v4094, %v4086
        %v5391 = vpack.c.b16 %v4095, %v4087
        %v5392 = vpack.c.b16 %v4096, %v4088
        %v5393 = vpack.c.b16 %v4097, %v4089
        %v5394 = vpack.c.b16 %v4106, %v4098
        %v5395 = vpack.c.b16 %v4107, %v4099
        %v5396 = vpack.c.b16 %v4108, %v4100
        %v5397 = vpack.c.b16 %v4109, %v4101
        %v5398 = vpack.c.b16 %v4110, %v4102
        %v5399 = vpack.c.b16 %v4111, %v4103
        %v5400 = vpack.c.b16 %v4112, %v4104
        %v5401 = vpack.c.b16 %v4113, %v4105
        %v5402 = vpack.c.b16 %v4122, %v4114
        %v5403 = vpack.c.b16 %v4123, %v4115
        %v5404 = vpack.c.b16 %v4124, %v4116
        %v5405 = vpack.c.b16 %v4125, %v4117
        %v5406 = vpack.c.b16 %v4126, %v4118
        %v5407 = vpack.c.b16 %v4127, %v4119
        %v5408 = vpack.c.b16 %v4128, %v4120
        %v5409 = vpack.c.b16 %v4129, %v4121
        %v5410 = vpack.c.b16 %v4138, %v4130
        %v5411 = vpack.c.b16 %v4139, %v4131
        %v5412 = vpack.c.b16 %v4140, %v4132
        %v5413 = vpack.c.b16 %v4141, %v4133
        %v5414 = vpack.c.b16 %v4142, %v4134
        %v5415 = vpack.c.b16 %v4143, %v4135
        %v5416 = vpack.c.b16 %v4144, %v4136
        %v5417 = vpack.c.b16 %v4145, %v4137
        %v5418 = vpack.c.b16 %v4154, %v4146
        %v5419 = vpack.c.b16 %v4155, %v4147
        %v5420 = vpack.c.b16 %v4156, %v4148
        %v5421 = vpack.c.b16 %v4157, %v4149
        %v5422 = vpack.c.b16 %v4158, %v4150
        %v5423 = vpack.c.b16 %v4159, %v4151
        %v5424 = vpack.c.b16 %v4160, %v4152
        %v5425 = vpack.c.b16 %v4161, %v4153
        %v5426 = vpack.c.b16 %v4170, %v4162
        %v5427 = vpack.c.b16 %v4171, %v4163
        %v5428 = vpack.c.b16 %v4172, %v4164
        %v5429 = vpack.c.b16 %v4173, %v4165
        %v5430 = vpack.c.b16 %v4174, %v4166
        %v5431 = vpack.c.b16 %v4175, %v4167
        %v5432 = vpack.c.b16 %v4176, %v4168
        %v5433 = vpack.c.b16 %v4177, %v4169
        %v5434 = vpack.c.b16 %v4186, %v4178
        %v5435 = vpack.c.b16 %v4187, %v4179
        %v5436 = vpack.c.b16 %v4188, %v4180
        %v5437 = vpack.c.b16 %v4189, %v4181
        %v5438 = vpack.c.b16 %v4190, %v4182
        %v5439 = vpack.c.b16 %v4191, %v4183
        %v5440 = vpack.c.b16 %v4192, %v4184
        %v5441 = vpack.c.b16 %v4193, %v4185
        %v5442 = vpack.c.b16 %v4202, %v4194
        %v5443 = vpack.c.b16 %v4203, %v4195
        %v5444 = vpack.c.b16 %v4204, %v4196
        %v5445 = vpack.c.b16 %v4205, %v4197
        %v5446 = vpack.c.b16 %v4206, %v4198
        %v5447 = vpack.c.b16 %v4207, %v4199
        %v5448 = vpack.c.b16 %v4208, %v4200
        %v5449 = vpack.c.b16 %v4209, %v4201
        %v5450 = vpack.c.b16 %v4218, %v4210
        %v5451 = vpack.c.b16 %v4219, %v4211
        %v5452 = vpack.c.b16 %v4220, %v4212
        %v5453 = vpack.c.b16 %v4221, %v4213
        %v5454 = vpack.c.b16 %v4222, %v4214
        %v5455 = vpack.c.b16 %v4223, %v4215
        %v5456 = vpack.c.b16 %v4224, %v4216
        %v5457 = vpack.c.b16 %v4225, %v4217
        %v5458 = vpack.c.b16 %v4234, %v4226
        %v5459 = vpack.c.b16 %v4235, %v4227
        %v5460 = vpack.c.b16 %v4236, %v4228
        %v5461 = vpack.c.b16 %v4237, %v4229
        %v5462 = vpack.c.b16 %v4238, %v4230
        %v5463 = vpack.c.b16 %v4239, %v4231
        %v5464 = vpack.c.b16 %v4240, %v4232
        %v5465 = vpack.c.b16 %v4241, %v4233
        %v5466 = vpack.c.b16 %v4250, %v4242
        %v5467 = vpack.c.b16 %v4251, %v4243
        %v5468 = vpack.c.b16 %v4252, %v4244
        %v5469 = vpack.c.b16 %v4253, %v4245
        %v5470 = vpack.c.b16 %v4254, %v4246
        %v5471 = vpack.c.b16 %v4255, %v4247
        %v5472 = vpack.c.b16 %v4256, %v4248
        %v5473 = vpack.c.b16 %v4257, %v4249
        %v5474 = vpack.c.b16 %v4266, %v4258
        %v5475 = vpack.c.b16 %v4267, %v4259
        %v5476 = vpack.c.b16 %v4268, %v4260
        %v5477 = vpack.c.b16 %v4269, %v4261
        %v5478 = vpack.c.b16 %v4270, %v4262
        %v5479 = vpack.c.b16 %v4271, %v4263
        %v5480 = vpack.c.b16 %v4272, %v4264
        %v5481 = vpack.c.b16 %v4273, %v4265
        %v5482 = vpack.c.b16 %v4282, %v4274
        %v5483 = vpack.c.b16 %v4283, %v4275
        %v5484 = vpack.c.b16 %v4284, %v4276
        %v5485 = vpack.c.b16 %v4285, %v4277
        %v5486 = vpack.c.b16 %v4286, %v4278
        %v5487 = vpack.c.b16 %v4287, %v4279
        %v5488 = vpack.c.b16 %v4288, %v4280
        %v5489 = vpack.c.b16 %v4289, %v4281
        %v5490 = vpack.c.b16 %v4298, %v4290
        %v5491 = vpack.c.b16 %v4299, %v4291
        %v5492 = vpack.c.b16 %v4300, %v4292
        %v5493 = vpack.c.b16 %v4301, %v4293
        %v5494 = vpack.c.b16 %v4302, %v4294
        %v5495 = vpack.c.b16 %v4303, %v4295
        %v5496 = vpack.c.b16 %v4304, %v4296
        %v5497 = vpack.c.b16 %v4305, %v4297
        %v5498 = vpack.c.b16 %v4314, %v4306
        %v5499 = vpack.c.b16 %v4315, %v4307
        %v5500 = vpack.c.b16 %v4316, %v4308
        %v5501 = vpack.c.b16 %v4317, %v4309
        %v5502 = vpack.c.b16 %v4318, %v4310
        %v5503 = vpack.c.b16 %v4319, %v4311
        %v5504 = vpack.c.b16 %v4320, %v4312
        %v5505 = vpack.c.b16 %v4321, %v4313
        %v5506 = vpack.c.b16 %v4330, %v4322
        %v5507 = vpack.c.b16 %v4331, %v4323
        %v5508 = vpack.c.b16 %v4332, %v4324
        %v5509 = vpack.c.b16 %v4333, %v4325
        %v5510 = vpack.c.b16 %v4334, %v4326
        %v5511 = vpack.c.b16 %v4335, %v4327
        %v5512 = vpack.c.b16 %v4336, %v4328
        %v5513 = vpack.c.b16 %v4337, %v4329
        %v5514 = vpack.c.b16 %v4346, %v4338
        %v5515 = vpack.c.b16 %v4347, %v4339
        %v5516 = vpack.c.b16 %v4348, %v4340
        %v5517 = vpack.c.b16 %v4349, %v4341
        %v5518 = vpack.c.b16 %v4350, %v4342
        %v5519 = vpack.c.b16 %v4351, %v4343
        %v5520 = vpack.c.b16 %v4352, %v4344
        %v5521 = vpack.c.b16 %v4353, %v4345
        %v5522 = vpack.c.b16 %v4362, %v4354
        %v5523 = vpack.c.b16 %v4363, %v4355
        %v5524 = vpack.c.b16 %v4364, %v4356
        %v5525 = vpack.c.b16 %v4365, %v4357
        %v5526 = vpack.c.b16 %v4366, %v4358
        %v5527 = vpack.c.b16 %v4367, %v4359
        %v5528 = vpack.c.b16 %v4368, %v4360
        %v5529 = vpack.c.b16 %v4369, %v4361
        %v5530 = vpack.c.b16 %v4378, %v4370
        %v5531 = vpack.c.b16 %v4379, %v4371
        %v5532 = vpack.c.b16 %v4380, %v4372
        %v5533 = vpack.c.b16 %v4381, %v4373
        %v5534 = vpack.c.b16 %v4382, %v4374
        %v5535 = vpack.c.b16 %v4383, %v4375
        %v5536 = vpack.c.b16 %v4384, %v4376
        %v5537 = vpack.c.b16 %v4385, %v4377
        %v5538 = vpack.c.b16 %v4394, %v4386
        %v5539 = vpack.c.b16 %v4395, %v4387
        %v5540 = vpack.c.b16 %v4396, %v4388
        %v5541 = vpack.c.b16 %v4397, %v4389
        %v5542 = vpack.c.b16 %v4398, %v4390
        %v5543 = vpack.c.b16 %v4399, %v4391
        %v5544 = vpack.c.b16 %v4400, %v4392
        %v5545 = vpack.c.b16 %v4401, %v4393
        %v5546 = vpack.c.b16 %v4410, %v4402
        %v5547 = vpack.c.b16 %v4411, %v4403
        %v5548 = vpack.c.b16 %v4412, %v4404
        %v5549 = vpack.c.b16 %v4413, %v4405
        %v5550 = vpack.c.b16 %v4414, %v4406
        %v5551 = vpack.c.b16 %v4415, %v4407
        %v5552 = vpack.c.b16 %v4416, %v4408
        %v5553 = vpack.c.b16 %v4417, %v4409
        %v5554 = vpack.c.b16 %v4426, %v4418
        %v5555 = vpack.c.b16 %v4427, %v4419
        %v5556 = vpack.c.b16 %v4428, %v4420
        %v5557 = vpack.c.b16 %v4429, %v4421
        %v5558 = vpack.c.b16 %v4430, %v4422
        %v5559 = vpack.c.b16 %v4431, %v4423
        %v5560 = vpack.c.b16 %v4432, %v4424
        %v5561 = vpack.c.b16 %v4433, %v4425
        %v5562 = vpack.c.b16 %v4442, %v4434
        %v5563 = vpack.c.b16 %v4443, %v4435
        %v5564 = vpack.c.b16 %v4444, %v4436
        %v5565 = vpack.c.b16 %v4445, %v4437
        %v5566 = vpack.c.b16 %v4446, %v4438
        %v5567 = vpack.c.b16 %v4447, %v4439
        %v5568 = vpack.c.b16 %v4448, %v4440
        %v5569 = vpack.c.b16 %v4449, %v4441
        %v5570 = vpack.c.b16 %v4458, %v4450
        %v5571 = vpack.c.b16 %v4459, %v4451
        %v5572 = vpack.c.b16 %v4460, %v4452
        %v5573 = vpack.c.b16 %v4461, %v4453
        %v5574 = vpack.c.b16 %v4462, %v4454
        %v5575 = vpack.c.b16 %v4463, %v4455
        %v5576 = vpack.c.b16 %v4464, %v4456
        %v5577 = vpack.c.b16 %v4465, %v4457
        %v5578 = vpack.c.b16 %v4474, %v4466
        %v5579 = vpack.c.b16 %v4475, %v4467
        %v5580 = vpack.c.b16 %v4476, %v4468
        %v5581 = vpack.c.b16 %v4477, %v4469
        %v5582 = vpack.c.b16 %v4478, %v4470
        %v5583 = vpack.c.b16 %v4479, %v4471
        %v5584 = vpack.c.b16 %v4480, %v4472
        %v5585 = vpack.c.b16 %v4481, %v4473
        %v5586 = vpack.c.b16 %v4490, %v4482
        %v5587 = vpack.c.b16 %v4491, %v4483
        %v5588 = vpack.c.b16 %v4492, %v4484
        %v5589 = vpack.c.b16 %v4493, %v4485
        %v5590 = vpack.c.b16 %v4494, %v4486
        %v5591 = vpack.c.b16 %v4495, %v4487
        %v5592 = vpack.c.b16 %v4496, %v4488
        %v5593 = vpack.c.b16 %v4497, %v4489
        %v5594 = vpack.c.b16 %v4506, %v4498
        %v5595 = vpack.c.b16 %v4507, %v4499
        %v5596 = vpack.c.b16 %v4508, %v4500
        %v5597 = vpack.c.b16 %v4509, %v4501
        %v5598 = vpack.c.b16 %v4510, %v4502
        %v5599 = vpack.c.b16 %v4511, %v4503
        %v5600 = vpack.c.b16 %v4512, %v4504
        %v5601 = vpack.c.b16 %v4513, %v4505
        %v5602 = vpack.c.b16 %v4522, %v4514
        %v5603 = vpack.c.b16 %v4523, %v4515
        %v5604 = vpack.c.b16 %v4524, %v4516
        %v5605 = vpack.c.b16 %v4525, %v4517
        %v5606 = vpack.c.b16 %v4526, %v4518
        %v5607 = vpack.c.b16 %v4527, %v4519
        %v5608 = vpack.c.b16 %v4528, %v4520
        %v5609 = vpack.c.b16 %v4529, %v4521
        %v5610 = vpack.c.b16 %v4538, %v4530
        %v5611 = vpack.c.b16 %v4539, %v4531
        %v5612 = vpack.c.b16 %v4540, %v4532
        %v5613 = vpack.c.b16 %v4541, %v4533
        %v5614 = vpack.c.b16 %v4542, %v4534
        %v5615 = vpack.c.b16 %v4543, %v4535
        %v5616 = vpack.c.b16 %v4544, %v4536
        %v5617 = vpack.c.b16 %v4545, %v4537
        %v5618 = vpack.c.b16 %v4554, %v4546
        %v5619 = vpack.c.b16 %v4555, %v4547
        %v5620 = vpack.c.b16 %v4556, %v4548
        %v5621 = vpack.c.b16 %v4557, %v4549
        %v5622 = vpack.c.b16 %v4558, %v4550
        %v5623 = vpack.c.b16 %v4559, %v4551
        %v5624 = vpack.c.b16 %v4560, %v4552
        %v5625 = vpack.c.b16 %v4561, %v4553
        %v5626 = vpack.c.b16 %v4570, %v4562
        %v5627 = vpack.c.b16 %v4571, %v4563
        %v5628 = vpack.c.b16 %v4572, %v4564
        %v5629 = vpack.c.b16 %v4573, %v4565
        %v5630 = vpack.c.b16 %v4574, %v4566
        %v5631 = vpack.c.b16 %v4575, %v4567
        %v5632 = vpack.c.b16 %v4576, %v4568
        %v5633 = vpack.c.b16 %v4577, %v4569
        %v5634 = vpack.c.b16 %v4586, %v4578
        %v5635 = vpack.c.b16 %v4587, %v4579
        %v5636 = vpack.c.b16 %v4588, %v4580
        %v5637 = vpack.c.b16 %v4589, %v4581
        %v5638 = vpack.c.b16 %v4590, %v4582
        %v5639 = vpack.c.b16 %v4591, %v4583
        %v5640 = vpack.c.b16 %v4592, %v4584
        %v5641 = vpack.c.b16 %v4593, %v4585
        %v5642 = vpack.c.b16 %v4602, %v4594
        %v5643 = vpack.c.b16 %v4603, %v4595
        %v5644 = vpack.c.b16 %v4604, %v4596
        %v5645 = vpack.c.b16 %v4605, %v4597
        %v5646 = vpack.c.b16 %v4606, %v4598
        %v5647 = vpack.c.b16 %v4607, %v4599
        %v5648 = vpack.c.b16 %v4608, %v4600
        %v5649 = vpack.c.b16 %v4609, %v4601
        %v5650 = vpack.c.b16 %v4618, %v4610
        %v5651 = vpack.c.b16 %v4619, %v4611
        %v5652 = vpack.c.b16 %v4620, %v4612
        %v5653 = vpack.c.b16 %v4621, %v4613
        %v5654 = vpack.c.b16 %v4622, %v4614
        %v5655 = vpack.c.b16 %v4623, %v4615
        %v5656 = vpack.c.b16 %v4624, %v4616
        %v5657 = vpack.c.b16 %v4625, %v4617
        %v5658 = vpack.c.b16 %v4634, %v4626
        %v5659 = vpack.c.b16 %v4635, %v4627
        %v5660 = vpack.c.b16 %v4636, %v4628
        %v5661 = vpack.c.b16 %v4637, %v4629
        %v5662 = vpack.c.b16 %v4638, %v4630
        %v5663 = vpack.c.b16 %v4639, %v4631
        %v5664 = vpack.c.b16 %v4640, %v4632
        %v5665 = vpack.c.b16 %v4641, %v4633
        %6690 = vmatprep.subr.bf16.mxu0 %v4699
        %6691 = vmatpush1.bf16.msra.mxu0 %v4698
        %6692 = vmatprep.subr.bf16.mxu0 %v4691
        %6693 = vmatpush1.bf16.msra.mxu0 %v4690
        %6694 = vmatprep.subr.bf16.mxu0 %v4683
        %6695 = vmatpush1.bf16.msra.mxu0 %v4682
        %6696 = vmatprep.subr.bf16.mxu0 %v4675
        %6697 = vmatpush1.bf16.msra.mxu0 %v4674
        %6698 = vmatprep.subr.bf16.mxu0 %v4667
        %6699 = vmatpush1.bf16.msra.mxu0 %v4666
        %6700 = vmatprep.subr.bf16.mxu0 %v4659
        %6701 = vmatpush1.bf16.msra.mxu0 %v4658
        %6702 = vmatprep.subr.bf16.mxu0 %v4651
        %6703 = vmatpush1.bf16.msra.mxu0 %v4650
        %6704 = vmatprep.subr.bf16.mxu0 %v4643
        %6705 = vmatpush1.bf16.msra.mxu0 %v4642
        %6706 = vmatprep.subr.bf16.mxu0 %v4763
        %6707 = vmatpush2.bf16.msra.mxu0 %v4762
        %6708 = vmatprep.subr.bf16.mxu0 %v4755
        %6709 = vmatpush2.bf16.msra.mxu0 %v4754
        %6710 = vmatprep.subr.bf16.mxu0 %v4747
        %6711 = vmatpush2.bf16.msra.mxu0 %v4746
        %6712 = vmatprep.subr.bf16.mxu0 %v4739
        %6713 = vmatpush2.bf16.msra.mxu0 %v4738
        %6714 = vmatprep.subr.bf16.mxu0 %v4731
        %6715 = vmatpush2.bf16.msra.mxu0 %v4730
        %6716 = vmatprep.subr.bf16.mxu0 %v4723
        %6717 = vmatpush2.bf16.msra.mxu0 %v4722
        %6718 = vmatprep.subr.bf16.mxu0 %v4715
        %6719 = vmatpush2.bf16.msra.mxu0 %v4714
        %6720 = vmatprep.subr.bf16.mxu0 %v4707
        %6721 = vmatpush2.bf16.msra.mxu0 %v4706
        %6722 = vmatprep.mubr.bf16.mxu0 %v531
        %6723 = vmatmul.mubr.bf16.gmra.mxu0 %v530
        %v6724 = vpop.f32.mrf.mxu0
        %v6725 = vadd.f32 0.0, %v6724
        %v6726 = vpop.f32.mrf.mxu0
        %v6727 = vadd.f32 0.0, %v6726
        %v6728 = vpop.f32.mrf.mxu0
        %v6729 = vpop.f32.mrf.mxu0
        %6730 = vdwg.mxu0
        %6731 = vmatprep.subr.bf16.mxu0 %v4827
        %6732 = vmatpush1.bf16.msra.mxu0 %v4826
        %6733 = vmatprep.subr.bf16.mxu0 %v4819
        %6734 = vmatpush1.bf16.msra.mxu0 %v4818
        %6735 = vmatprep.subr.bf16.mxu0 %v4811
        %6736 = vmatpush1.bf16.msra.mxu0 %v4810
        %6737 = vmatprep.subr.bf16.mxu0 %v4803
        %6738 = vmatpush1.bf16.msra.mxu0 %v4802
        %6739 = vmatprep.subr.bf16.mxu0 %v4795
        %6740 = vmatpush1.bf16.msra.mxu0 %v4794
        %6741 = vmatprep.subr.bf16.mxu0 %v4787
        %6742 = vmatpush1.bf16.msra.mxu0 %v4786
        %6743 = vmatprep.subr.bf16.mxu0 %v4779
        %6744 = vmatpush1.bf16.msra.mxu0 %v4778
        %6745 = vmatprep.subr.bf16.mxu0 %v4771
        %6746 = vmatpush1.bf16.msra.mxu0 %v4770
        %6747 = vmatprep.subr.bf16.mxu0 %v4891
        %6748 = vmatpush2.bf16.msra.mxu0 %v4890
        %6749 = vmatprep.subr.bf16.mxu0 %v4883
        %6750 = vmatpush2.bf16.msra.mxu0 %v4882
        %6751 = vmatprep.subr.bf16.mxu0 %v4875
        %6752 = vmatpush2.bf16.msra.mxu0 %v4874
        %6753 = vmatprep.subr.bf16.mxu0 %v4867
        %6754 = vmatpush2.bf16.msra.mxu0 %v4866
        %6755 = vmatprep.subr.bf16.mxu0 %v4859
        %6756 = vmatpush2.bf16.msra.mxu0 %v4858
        %6757 = vmatprep.subr.bf16.mxu0 %v4851
        %6758 = vmatpush2.bf16.msra.mxu0 %v4850
        %6759 = vmatprep.subr.bf16.mxu0 %v4843
        %6760 = vmatpush2.bf16.msra.mxu0 %v4842
        %6761 = vmatprep.subr.bf16.mxu0 %v4835
        %6762 = vmatpush2.bf16.msra.mxu0 %v4834
        %6763 = vmatprep.mubr.bf16.mxu0 %v533
        %6764 = vmatmul.mubr.bf16.gmra.mxu0 %v532
        %v6765 = vpop.f32.mrf.mxu0
        %v6766 = vadd.f32 %v6725, %v6765
        %v6767 = vpop.f32.mrf.mxu0
        %v6768 = vadd.f32 %v6727, %v6767
        %v6769 = vpop.f32.mrf.mxu0
        %v6770 = vpop.f32.mrf.mxu0
        %6771 = vdwg.mxu0
        %6772 = vmatprep.subr.bf16.mxu0 %v4955
        %6773 = vmatpush1.bf16.msra.mxu0 %v4954
        %6774 = vmatprep.subr.bf16.mxu0 %v4947
        %6775 = vmatpush1.bf16.msra.mxu0 %v4946
        %6776 = vmatprep.subr.bf16.mxu0 %v4939
        %6777 = vmatpush1.bf16.msra.mxu0 %v4938
        %6778 = vmatprep.subr.bf16.mxu0 %v4931
        %6779 = vmatpush1.bf16.msra.mxu0 %v4930
        %6780 = vmatprep.subr.bf16.mxu0 %v4923
        %6781 = vmatpush1.bf16.msra.mxu0 %v4922
        %6782 = vmatprep.subr.bf16.mxu0 %v4915
        %6783 = vmatpush1.bf16.msra.mxu0 %v4914
        %6784 = vmatprep.subr.bf16.mxu0 %v4907
        %6785 = vmatpush1.bf16.msra.mxu0 %v4906
        %6786 = vmatprep.subr.bf16.mxu0 %v4899
        %6787 = vmatpush1.bf16.msra.mxu0 %v4898
        %6788 = vmatprep.subr.bf16.mxu0 %v5019
        %6789 = vmatpush2.bf16.msra.mxu0 %v5018
        %6790 = vmatprep.subr.bf16.mxu0 %v5011
        %6791 = vmatpush2.bf16.msra.mxu0 %v5010
        %6792 = vmatprep.subr.bf16.mxu0 %v5003
        %6793 = vmatpush2.bf16.msra.mxu0 %v5002
        %6794 = vmatprep.subr.bf16.mxu0 %v4995
        %6795 = vmatpush2.bf16.msra.mxu0 %v4994
        %6796 = vmatprep.subr.bf16.mxu0 %v4987
        %6797 = vmatpush2.bf16.msra.mxu0 %v4986
        %6798 = vmatprep.subr.bf16.mxu0 %v4979
        %6799 = vmatpush2.bf16.msra.mxu0 %v4978
        %6800 = vmatprep.subr.bf16.mxu0 %v4971
        %6801 = vmatpush2.bf16.msra.mxu0 %v4970
        %6802 = vmatprep.subr.bf16.mxu0 %v4963
        %6803 = vmatpush2.bf16.msra.mxu0 %v4962
        %6804 = vmatprep.mubr.bf16.mxu0 %v535
        %6805 = vmatmul.mubr.bf16.gmra.mxu0 %v534
        %v6806 = vpop.f32.mrf.mxu0
        %v6807 = vadd.f32 %v6766, %v6806
        %v6808 = vpop.f32.mrf.mxu0
        %v6809 = vadd.f32 %v6768, %v6808
        %v6810 = vpop.f32.mrf.mxu0
        %v6811 = vpop.f32.mrf.mxu0
        %6812 = vdwg.mxu0
        %6813 = vmatprep.subr.bf16.mxu0 %v5083
        %6814 = vmatpush1.bf16.msra.mxu0 %v5082
        %6815 = vmatprep.subr.bf16.mxu0 %v5075
        %6816 = vmatpush1.bf16.msra.mxu0 %v5074
        %6817 = vmatprep.subr.bf16.mxu0 %v5067
        %6818 = vmatpush1.bf16.msra.mxu0 %v5066
        %6819 = vmatprep.subr.bf16.mxu0 %v5059
        %6820 = vmatpush1.bf16.msra.mxu0 %v5058
        %6821 = vmatprep.subr.bf16.mxu0 %v5051
        %6822 = vmatpush1.bf16.msra.mxu0 %v5050
        %6823 = vmatprep.subr.bf16.mxu0 %v5043
        %6824 = vmatpush1.bf16.msra.mxu0 %v5042
        %6825 = vmatprep.subr.bf16.mxu0 %v5035
        %6826 = vmatpush1.bf16.msra.mxu0 %v5034
        %6827 = vmatprep.subr.bf16.mxu0 %v5027
        %6828 = vmatpush1.bf16.msra.mxu0 %v5026
        %6829 = vmatprep.subr.bf16.mxu0 %v5147
        %6830 = vmatpush2.bf16.msra.mxu0 %v5146
        %6831 = vmatprep.subr.bf16.mxu0 %v5139
        %6832 = vmatpush2.bf16.msra.mxu0 %v5138
        %6833 = vmatprep.subr.bf16.mxu0 %v5131
        %6834 = vmatpush2.bf16.msra.mxu0 %v5130
        %6835 = vmatprep.subr.bf16.mxu0 %v5123
        %6836 = vmatpush2.bf16.msra.mxu0 %v5122
        %6837 = vmatprep.subr.bf16.mxu0 %v5115
        %6838 = vmatpush2.bf16.msra.mxu0 %v5114
        %6839 = vmatprep.subr.bf16.mxu0 %v5107
        %6840 = vmatpush2.bf16.msra.mxu0 %v5106
        %6841 = vmatprep.subr.bf16.mxu0 %v5099
        %6842 = vmatpush2.bf16.msra.mxu0 %v5098
        %6843 = vmatprep.subr.bf16.mxu0 %v5091
        %6844 = vmatpush2.bf16.msra.mxu0 %v5090
        %6845 = vmatprep.mubr.bf16.mxu0 %v537
        %6846 = vmatmul.mubr.bf16.gmra.mxu0 %v536
        %v6847 = vpop.f32.mrf.mxu0
        %v6848 = vadd.f32 %v6807, %v6847
        %v6849 = vpop.f32.mrf.mxu0
        %v6850 = vadd.f32 %v6809, %v6849
        %v6851 = vpop.f32.mrf.mxu0
        %v6852 = vpop.f32.mrf.mxu0
        %6853 = vdwg.mxu0
        %6854 = vmatprep.subr.bf16.mxu0 %v5211
        %6855 = vmatpush1.bf16.msra.mxu0 %v5210
        %6856 = vmatprep.subr.bf16.mxu0 %v5203
        %6857 = vmatpush1.bf16.msra.mxu0 %v5202
        %6858 = vmatprep.subr.bf16.mxu0 %v5195
        %6859 = vmatpush1.bf16.msra.mxu0 %v5194
        %6860 = vmatprep.subr.bf16.mxu0 %v5187
        %6861 = vmatpush1.bf16.msra.mxu0 %v5186
        %6862 = vmatprep.subr.bf16.mxu0 %v5179
        %6863 = vmatpush1.bf16.msra.mxu0 %v5178
        %6864 = vmatprep.subr.bf16.mxu0 %v5171
        %6865 = vmatpush1.bf16.msra.mxu0 %v5170
        %6866 = vmatprep.subr.bf16.mxu0 %v5163
        %6867 = vmatpush1.bf16.msra.mxu0 %v5162
        %6868 = vmatprep.subr.bf16.mxu0 %v5155
        %6869 = vmatpush1.bf16.msra.mxu0 %v5154
        %6870 = vmatprep.subr.bf16.mxu0 %v5275
        %6871 = vmatpush2.bf16.msra.mxu0 %v5274
        %6872 = vmatprep.subr.bf16.mxu0 %v5267
        %6873 = vmatpush2.bf16.msra.mxu0 %v5266
        %6874 = vmatprep.subr.bf16.mxu0 %v5259
        %6875 = vmatpush2.bf16.msra.mxu0 %v5258
        %6876 = vmatprep.subr.bf16.mxu0 %v5251
        %6877 = vmatpush2.bf16.msra.mxu0 %v5250
        %6878 = vmatprep.subr.bf16.mxu0 %v5243
        %6879 = vmatpush2.bf16.msra.mxu0 %v5242
        %6880 = vmatprep.subr.bf16.mxu0 %v5235
        %6881 = vmatpush2.bf16.msra.mxu0 %v5234
        %6882 = vmatprep.subr.bf16.mxu0 %v5227
        %6883 = vmatpush2.bf16.msra.mxu0 %v5226
        %6884 = vmatprep.subr.bf16.mxu0 %v5219
        %6885 = vmatpush2.bf16.msra.mxu0 %v5218
        %6886 = vmatprep.mubr.bf16.mxu0 %v539
        %6887 = vmatmul.mubr.bf16.gmra.mxu0 %v538
        %v6888 = vpop.f32.mrf.mxu0
        %v6889 = vadd.f32 %v6848, %v6888
        %v6890 = vpop.f32.mrf.mxu0
        %v6891 = vadd.f32 %v6850, %v6890
        %v6892 = vpop.f32.mrf.mxu0
        %v6893 = vpop.f32.mrf.mxu0
        %6894 = vdwg.mxu0
        %6895 = vmatprep.subr.bf16.mxu0 %v5339
        %6896 = vmatpush1.bf16.msra.mxu0 %v5338
        %6897 = vmatprep.subr.bf16.mxu0 %v5331
        %6898 = vmatpush1.bf16.msra.mxu0 %v5330
        %6899 = vmatprep.subr.bf16.mxu0 %v5323
        %6900 = vmatpush1.bf16.msra.mxu0 %v5322
        %6901 = vmatprep.subr.bf16.mxu0 %v5315
        %6902 = vmatpush1.bf16.msra.mxu0 %v5314
        %6903 = vmatprep.subr.bf16.mxu0 %v5307
        %6904 = vmatpush1.bf16.msra.mxu0 %v5306
        %6905 = vmatprep.subr.bf16.mxu0 %v5299
        %6906 = vmatpush1.bf16.msra.mxu0 %v5298
        %6907 = vmatprep.subr.bf16.mxu0 %v5291
        %6908 = vmatpush1.bf16.msra.mxu0 %v5290
        %6909 = vmatprep.subr.bf16.mxu0 %v5283
        %6910 = vmatpush1.bf16.msra.mxu0 %v5282
        %6911 = vmatprep.subr.bf16.mxu0 %v5403
        %6912 = vmatpush2.bf16.msra.mxu0 %v5402
        %6913 = vmatprep.subr.bf16.mxu0 %v5395
        %6914 = vmatpush2.bf16.msra.mxu0 %v5394
        %6915 = vmatprep.subr.bf16.mxu0 %v5387
        %6916 = vmatpush2.bf16.msra.mxu0 %v5386
        %6917 = vmatprep.subr.bf16.mxu0 %v5379
        %6918 = vmatpush2.bf16.msra.mxu0 %v5378
        %6919 = vmatprep.subr.bf16.mxu0 %v5371
        %6920 = vmatpush2.bf16.msra.mxu0 %v5370
        %6921 = vmatprep.subr.bf16.mxu0 %v5363
        %6922 = vmatpush2.bf16.msra.mxu0 %v5362
        %6923 = vmatprep.subr.bf16.mxu0 %v5355
        %6924 = vmatpush2.bf16.msra.mxu0 %v5354
        %6925 = vmatprep.subr.bf16.mxu0 %v5347
        %6926 = vmatpush2.bf16.msra.mxu0 %v5346
        %6927 = vmatprep.mubr.bf16.mxu0 %v541
        %6928 = vmatmul.mubr.bf16.gmra.mxu0 %v540
        %v6929 = vpop.f32.mrf.mxu0
        %v6930 = vadd.f32 %v6889, %v6929
        %v6931 = vpop.f32.mrf.mxu0
        %v6932 = vadd.f32 %v6891, %v6931
        %v6933 = vpop.f32.mrf.mxu0
        %v6934 = vpop.f32.mrf.mxu0
        %6935 = vdwg.mxu0
        %6936 = vmatprep.subr.bf16.mxu0 %v5467
        %6937 = vmatpush1.bf16.msra.mxu0 %v5466
        %6938 = vmatprep.subr.bf16.mxu0 %v5459
        %6939 = vmatpush1.bf16.msra.mxu0 %v5458
        %6940 = vmatprep.subr.bf16.mxu0 %v5451
        %6941 = vmatpush1.bf16.msra.mxu0 %v5450
        %6942 = vmatprep.subr.bf16.mxu0 %v5443
        %6943 = vmatpush1.bf16.msra.mxu0 %v5442
        %6944 = vmatprep.subr.bf16.mxu0 %v5435
        %6945 = vmatpush1.bf16.msra.mxu0 %v5434
        %6946 = vmatprep.subr.bf16.mxu0 %v5427
        %6947 = vmatpush1.bf16.msra.mxu0 %v5426
        %6948 = vmatprep.subr.bf16.mxu0 %v5419
        %6949 = vmatpush1.bf16.msra.mxu0 %v5418
        %6950 = vmatprep.subr.bf16.mxu0 %v5411
        %6951 = vmatpush1.bf16.msra.mxu0 %v5410
        %6952 = vmatprep.subr.bf16.mxu0 %v5531
        %6953 = vmatpush2.bf16.msra.mxu0 %v5530
        %6954 = vmatprep.subr.bf16.mxu0 %v5523
        %6955 = vmatpush2.bf16.msra.mxu0 %v5522
        %6956 = vmatprep.subr.bf16.mxu0 %v5515
        %6957 = vmatpush2.bf16.msra.mxu0 %v5514
        %6958 = vmatprep.subr.bf16.mxu0 %v5507
        %6959 = vmatpush2.bf16.msra.mxu0 %v5506
        %6960 = vmatprep.subr.bf16.mxu0 %v5499
        %6961 = vmatpush2.bf16.msra.mxu0 %v5498
        %6962 = vmatprep.subr.bf16.mxu0 %v5491
        %6963 = vmatpush2.bf16.msra.mxu0 %v5490
        %6964 = vmatprep.subr.bf16.mxu0 %v5483
        %6965 = vmatpush2.bf16.msra.mxu0 %v5482
        %6966 = vmatprep.subr.bf16.mxu0 %v5475
        %6967 = vmatpush2.bf16.msra.mxu0 %v5474
        %6968 = vmatprep.mubr.bf16.mxu0 %v543
        %6969 = vmatmul.mubr.bf16.gmra.mxu0 %v542
        %v6970 = vpop.f32.mrf.mxu0
        %v6971 = vadd.f32 %v6930, %v6970
        %v6972 = vpop.f32.mrf.mxu0
        %v6973 = vadd.f32 %v6932, %v6972
        %v6974 = vpop.f32.mrf.mxu0
        %v6975 = vpop.f32.mrf.mxu0
        %6976 = vdwg.mxu0
        %6977 = vmatprep.subr.bf16.mxu0 %v5595
        %6978 = vmatpush1.bf16.msra.mxu0 %v5594
        %6979 = vmatprep.subr.bf16.mxu0 %v5587
        %6980 = vmatpush1.bf16.msra.mxu0 %v5586
        %6981 = vmatprep.subr.bf16.mxu0 %v5579
        %6982 = vmatpush1.bf16.msra.mxu0 %v5578
        %6983 = vmatprep.subr.bf16.mxu0 %v5571
        %6984 = vmatpush1.bf16.msra.mxu0 %v5570
        %6985 = vmatprep.subr.bf16.mxu0 %v5563
        %6986 = vmatpush1.bf16.msra.mxu0 %v5562
        %6987 = vmatprep.subr.bf16.mxu0 %v5555
        %6988 = vmatpush1.bf16.msra.mxu0 %v5554
        %6989 = vmatprep.subr.bf16.mxu0 %v5547
        %6990 = vmatpush1.bf16.msra.mxu0 %v5546
        %6991 = vmatprep.subr.bf16.mxu0 %v5539
        %6992 = vmatpush1.bf16.msra.mxu0 %v5538
        %6993 = vmatprep.subr.bf16.mxu0 %v5659
        %6994 = vmatpush2.bf16.msra.mxu0 %v5658
        %6995 = vmatprep.subr.bf16.mxu0 %v5651
        %6996 = vmatpush2.bf16.msra.mxu0 %v5650
        %6997 = vmatprep.subr.bf16.mxu0 %v5643
        %6998 = vmatpush2.bf16.msra.mxu0 %v5642
        %6999 = vmatprep.subr.bf16.mxu0 %v5635
        %7000 = vmatpush2.bf16.msra.mxu0 %v5634
        %7001 = vmatprep.subr.bf16.mxu0 %v5627
        %7002 = vmatpush2.bf16.msra.mxu0 %v5626
        %7003 = vmatprep.subr.bf16.mxu0 %v5619
        %7004 = vmatpush2.bf16.msra.mxu0 %v5618
        %7005 = vmatprep.subr.bf16.mxu0 %v5611
        %7006 = vmatpush2.bf16.msra.mxu0 %v5610
        %7007 = vmatprep.subr.bf16.mxu0 %v5603
        %7008 = vmatpush2.bf16.msra.mxu0 %v5602
        %7009 = vmatprep.mubr.bf16.mxu0 %v545
        %7010 = vmatmul.mubr.bf16.gmra.mxu0 %v544
        %v7011 = vpop.f32.mrf.mxu0
        %v7012 = vadd.f32 %v6971, %v7011
        %v7013 = vpop.f32.mrf.mxu0
        %v7014 = vadd.f32 %v6973, %v7013
        %v7015 = vpop.f32.mrf.mxu0
        %v7016 = vpop.f32.mrf.mxu0
        %7017 = vdwg.mxu0
        %7018 = vmatprep.subr.bf16.mxu0 %v4701
        %7019 = vmatpush1.bf16.msra.mxu0 %v4700
        %7020 = vmatprep.subr.bf16.mxu0 %v4693
        %7021 = vmatpush1.bf16.msra.mxu0 %v4692
        %7022 = vmatprep.subr.bf16.mxu0 %v4685
        %7023 = vmatpush1.bf16.msra.mxu0 %v4684
        %7024 = vmatprep.subr.bf16.mxu0 %v4677
        %7025 = vmatpush1.bf16.msra.mxu0 %v4676
        %7026 = vmatprep.subr.bf16.mxu0 %v4669
        %7027 = vmatpush1.bf16.msra.mxu0 %v4668
        %7028 = vmatprep.subr.bf16.mxu0 %v4661
        %7029 = vmatpush1.bf16.msra.mxu0 %v4660
        %7030 = vmatprep.subr.bf16.mxu0 %v4653
        %7031 = vmatpush1.bf16.msra.mxu0 %v4652
        %7032 = vmatprep.subr.bf16.mxu0 %v4645
        %7033 = vmatpush1.bf16.msra.mxu0 %v4644
        %7034 = vmatprep.subr.bf16.mxu0 %v4765
        %7035 = vmatpush2.bf16.msra.mxu0 %v4764
        %7036 = vmatprep.subr.bf16.mxu0 %v4757
        %7037 = vmatpush2.bf16.msra.mxu0 %v4756
        %7038 = vmatprep.subr.bf16.mxu0 %v4749
        %7039 = vmatpush2.bf16.msra.mxu0 %v4748
        %7040 = vmatprep.subr.bf16.mxu0 %v4741
        %7041 = vmatpush2.bf16.msra.mxu0 %v4740
        %7042 = vmatprep.subr.bf16.mxu0 %v4733
        %7043 = vmatpush2.bf16.msra.mxu0 %v4732
        %7044 = vmatprep.subr.bf16.mxu0 %v4725
        %7045 = vmatpush2.bf16.msra.mxu0 %v4724
        %7046 = vmatprep.subr.bf16.mxu0 %v4717
        %7047 = vmatpush2.bf16.msra.mxu0 %v4716
        %7048 = vmatprep.subr.bf16.mxu0 %v4709
        %7049 = vmatpush2.bf16.msra.mxu0 %v4708
        %7050 = vmatprep.mubr.bf16.mxu0 %v531
        %7051 = vmatmul.mubr.bf16.gmra.mxu0 %v530
        %v7052 = vpop.f32.mrf.mxu0
        %v7053 = vadd.f32 0.0, %v7052
        %v7054 = vpop.f32.mrf.mxu0
        %v7055 = vadd.f32 0.0, %v7054
        %v7056 = vpop.f32.mrf.mxu0
        %v7057 = vpop.f32.mrf.mxu0
        %7058 = vdwg.mxu0
        %7059 = vmatprep.subr.bf16.mxu0 %v4829
        %7060 = vmatpush1.bf16.msra.mxu0 %v4828
        %7061 = vmatprep.subr.bf16.mxu0 %v4821
        %7062 = vmatpush1.bf16.msra.mxu0 %v4820
        %7063 = vmatprep.subr.bf16.mxu0 %v4813
        %7064 = vmatpush1.bf16.msra.mxu0 %v4812
        %7065 = vmatprep.subr.bf16.mxu0 %v4805
        %7066 = vmatpush1.bf16.msra.mxu0 %v4804
        %7067 = vmatprep.subr.bf16.mxu0 %v4797
        %7068 = vmatpush1.bf16.msra.mxu0 %v4796
        %7069 = vmatprep.subr.bf16.mxu0 %v4789
        %7070 = vmatpush1.bf16.msra.mxu0 %v4788
        %7071 = vmatprep.subr.bf16.mxu0 %v4781
        %7072 = vmatpush1.bf16.msra.mxu0 %v4780
        %7073 = vmatprep.subr.bf16.mxu0 %v4773
        %7074 = vmatpush1.bf16.msra.mxu0 %v4772
        %7075 = vmatprep.subr.bf16.mxu0 %v4893
        %7076 = vmatpush2.bf16.msra.mxu0 %v4892
        %7077 = vmatprep.subr.bf16.mxu0 %v4885
        %7078 = vmatpush2.bf16.msra.mxu0 %v4884
        %7079 = vmatprep.subr.bf16.mxu0 %v4877
        %7080 = vmatpush2.bf16.msra.mxu0 %v4876
        %7081 = vmatprep.subr.bf16.mxu0 %v4869
        %7082 = vmatpush2.bf16.msra.mxu0 %v4868
        %7083 = vmatprep.subr.bf16.mxu0 %v4861
        %7084 = vmatpush2.bf16.msra.mxu0 %v4860
        %7085 = vmatprep.subr.bf16.mxu0 %v4853
        %7086 = vmatpush2.bf16.msra.mxu0 %v4852
        %7087 = vmatprep.subr.bf16.mxu0 %v4845
        %7088 = vmatpush2.bf16.msra.mxu0 %v4844
        %7089 = vmatprep.subr.bf16.mxu0 %v4837
        %7090 = vmatpush2.bf16.msra.mxu0 %v4836
        %7091 = vmatprep.mubr.bf16.mxu0 %v533
        %7092 = vmatmul.mubr.bf16.gmra.mxu0 %v532
        %v7093 = vpop.f32.mrf.mxu0
        %v7094 = vadd.f32 %v7053, %v7093
        %v7095 = vpop.f32.mrf.mxu0
        %v7096 = vadd.f32 %v7055, %v7095
        %v7097 = vpop.f32.mrf.mxu0
        %v7098 = vpop.f32.mrf.mxu0
        %7099 = vdwg.mxu0
        %7100 = vmatprep.subr.bf16.mxu0 %v4957
        %7101 = vmatpush1.bf16.msra.mxu0 %v4956
        %7102 = vmatprep.subr.bf16.mxu0 %v4949
        %7103 = vmatpush1.bf16.msra.mxu0 %v4948
        %7104 = vmatprep.subr.bf16.mxu0 %v4941
        %7105 = vmatpush1.bf16.msra.mxu0 %v4940
        %7106 = vmatprep.subr.bf16.mxu0 %v4933
        %7107 = vmatpush1.bf16.msra.mxu0 %v4932
        %7108 = vmatprep.subr.bf16.mxu0 %v4925
        %7109 = vmatpush1.bf16.msra.mxu0 %v4924
        %7110 = vmatprep.subr.bf16.mxu0 %v4917
        %7111 = vmatpush1.bf16.msra.mxu0 %v4916
        %7112 = vmatprep.subr.bf16.mxu0 %v4909
        %7113 = vmatpush1.bf16.msra.mxu0 %v4908
        %7114 = vmatprep.subr.bf16.mxu0 %v4901
        %7115 = vmatpush1.bf16.msra.mxu0 %v4900
        %7116 = vmatprep.subr.bf16.mxu0 %v5021
        %7117 = vmatpush2.bf16.msra.mxu0 %v5020
        %7118 = vmatprep.subr.bf16.mxu0 %v5013
        %7119 = vmatpush2.bf16.msra.mxu0 %v5012
        %7120 = vmatprep.subr.bf16.mxu0 %v5005
        %7121 = vmatpush2.bf16.msra.mxu0 %v5004
        %7122 = vmatprep.subr.bf16.mxu0 %v4997
        %7123 = vmatpush2.bf16.msra.mxu0 %v4996
        %7124 = vmatprep.subr.bf16.mxu0 %v4989
        %7125 = vmatpush2.bf16.msra.mxu0 %v4988
        %7126 = vmatprep.subr.bf16.mxu0 %v4981
        %7127 = vmatpush2.bf16.msra.mxu0 %v4980
        %7128 = vmatprep.subr.bf16.mxu0 %v4973
        %7129 = vmatpush2.bf16.msra.mxu0 %v4972
        %7130 = vmatprep.subr.bf16.mxu0 %v4965
        %7131 = vmatpush2.bf16.msra.mxu0 %v4964
        %7132 = vmatprep.mubr.bf16.mxu0 %v535
        %7133 = vmatmul.mubr.bf16.gmra.mxu0 %v534
        %v7134 = vpop.f32.mrf.mxu0
        %v7135 = vadd.f32 %v7094, %v7134
        %v7136 = vpop.f32.mrf.mxu0
        %v7137 = vadd.f32 %v7096, %v7136
        %v7138 = vpop.f32.mrf.mxu0
        %v7139 = vpop.f32.mrf.mxu0
        %7140 = vdwg.mxu0
        %7141 = vmatprep.subr.bf16.mxu0 %v5085
        %7142 = vmatpush1.bf16.msra.mxu0 %v5084
        %7143 = vmatprep.subr.bf16.mxu0 %v5077
        %7144 = vmatpush1.bf16.msra.mxu0 %v5076
        %7145 = vmatprep.subr.bf16.mxu0 %v5069
        %7146 = vmatpush1.bf16.msra.mxu0 %v5068
        %7147 = vmatprep.subr.bf16.mxu0 %v5061
        %7148 = vmatpush1.bf16.msra.mxu0 %v5060
        %7149 = vmatprep.subr.bf16.mxu0 %v5053
        %7150 = vmatpush1.bf16.msra.mxu0 %v5052
        %7151 = vmatprep.subr.bf16.mxu0 %v5045
        %7152 = vmatpush1.bf16.msra.mxu0 %v5044
        %7153 = vmatprep.subr.bf16.mxu0 %v5037
        %7154 = vmatpush1.bf16.msra.mxu0 %v5036
        %7155 = vmatprep.subr.bf16.mxu0 %v5029
        %7156 = vmatpush1.bf16.msra.mxu0 %v5028
        %7157 = vmatprep.subr.bf16.mxu0 %v5149
        %7158 = vmatpush2.bf16.msra.mxu0 %v5148
        %7159 = vmatprep.subr.bf16.mxu0 %v5141
        %7160 = vmatpush2.bf16.msra.mxu0 %v5140
        %7161 = vmatprep.subr.bf16.mxu0 %v5133
        %7162 = vmatpush2.bf16.msra.mxu0 %v5132
        %7163 = vmatprep.subr.bf16.mxu0 %v5125
        %7164 = vmatpush2.bf16.msra.mxu0 %v5124
        %7165 = vmatprep.subr.bf16.mxu0 %v5117
        %7166 = vmatpush2.bf16.msra.mxu0 %v5116
        %7167 = vmatprep.subr.bf16.mxu0 %v5109
        %7168 = vmatpush2.bf16.msra.mxu0 %v5108
        %7169 = vmatprep.subr.bf16.mxu0 %v5101
        %7170 = vmatpush2.bf16.msra.mxu0 %v5100
        %7171 = vmatprep.subr.bf16.mxu0 %v5093
        %7172 = vmatpush2.bf16.msra.mxu0 %v5092
        %7173 = vmatprep.mubr.bf16.mxu0 %v537
        %7174 = vmatmul.mubr.bf16.gmra.mxu0 %v536
        %v7175 = vpop.f32.mrf.mxu0
        %v7176 = vadd.f32 %v7135, %v7175
        %v7177 = vpop.f32.mrf.mxu0
        %v7178 = vadd.f32 %v7137, %v7177
        %v7179 = vpop.f32.mrf.mxu0
        %v7180 = vpop.f32.mrf.mxu0
        %7181 = vdwg.mxu0
        %7182 = vmatprep.subr.bf16.mxu0 %v5213
        %7183 = vmatpush1.bf16.msra.mxu0 %v5212
        %7184 = vmatprep.subr.bf16.mxu0 %v5205
        %7185 = vmatpush1.bf16.msra.mxu0 %v5204
        %7186 = vmatprep.subr.bf16.mxu0 %v5197
        %7187 = vmatpush1.bf16.msra.mxu0 %v5196
        %7188 = vmatprep.subr.bf16.mxu0 %v5189
        %7189 = vmatpush1.bf16.msra.mxu0 %v5188
        %7190 = vmatprep.subr.bf16.mxu0 %v5181
        %7191 = vmatpush1.bf16.msra.mxu0 %v5180
        %7192 = vmatprep.subr.bf16.mxu0 %v5173
        %7193 = vmatpush1.bf16.msra.mxu0 %v5172
        %7194 = vmatprep.subr.bf16.mxu0 %v5165
        %7195 = vmatpush1.bf16.msra.mxu0 %v5164
        %7196 = vmatprep.subr.bf16.mxu0 %v5157
        %7197 = vmatpush1.bf16.msra.mxu0 %v5156
        %7198 = vmatprep.subr.bf16.mxu0 %v5277
        %7199 = vmatpush2.bf16.msra.mxu0 %v5276
        %7200 = vmatprep.subr.bf16.mxu0 %v5269
        %7201 = vmatpush2.bf16.msra.mxu0 %v5268
        %7202 = vmatprep.subr.bf16.mxu0 %v5261
        %7203 = vmatpush2.bf16.msra.mxu0 %v5260
        %7204 = vmatprep.subr.bf16.mxu0 %v5253
        %7205 = vmatpush2.bf16.msra.mxu0 %v5252
        %7206 = vmatprep.subr.bf16.mxu0 %v5245
        %7207 = vmatpush2.bf16.msra.mxu0 %v5244
        %7208 = vmatprep.subr.bf16.mxu0 %v5237
        %7209 = vmatpush2.bf16.msra.mxu0 %v5236
        %7210 = vmatprep.subr.bf16.mxu0 %v5229
        %7211 = vmatpush2.bf16.msra.mxu0 %v5228
        %7212 = vmatprep.subr.bf16.mxu0 %v5221
        %7213 = vmatpush2.bf16.msra.mxu0 %v5220
        %7214 = vmatprep.mubr.bf16.mxu0 %v539
        %7215 = vmatmul.mubr.bf16.gmra.mxu0 %v538
        %v7216 = vpop.f32.mrf.mxu0
        %v7217 = vadd.f32 %v7176, %v7216
        %v7218 = vpop.f32.mrf.mxu0
        %v7219 = vadd.f32 %v7178, %v7218
        %v7220 = vpop.f32.mrf.mxu0
        %v7221 = vpop.f32.mrf.mxu0
        %7222 = vdwg.mxu0
        %7223 = vmatprep.subr.bf16.mxu0 %v5341
        %7224 = vmatpush1.bf16.msra.mxu0 %v5340
        %7225 = vmatprep.subr.bf16.mxu0 %v5333
        %7226 = vmatpush1.bf16.msra.mxu0 %v5332
        %7227 = vmatprep.subr.bf16.mxu0 %v5325
        %7228 = vmatpush1.bf16.msra.mxu0 %v5324
        %7229 = vmatprep.subr.bf16.mxu0 %v5317
        %7230 = vmatpush1.bf16.msra.mxu0 %v5316
        %7231 = vmatprep.subr.bf16.mxu0 %v5309
        %7232 = vmatpush1.bf16.msra.mxu0 %v5308
        %7233 = vmatprep.subr.bf16.mxu0 %v5301
        %7234 = vmatpush1.bf16.msra.mxu0 %v5300
        %7235 = vmatprep.subr.bf16.mxu0 %v5293
        %7236 = vmatpush1.bf16.msra.mxu0 %v5292
        %7237 = vmatprep.subr.bf16.mxu0 %v5285
        %7238 = vmatpush1.bf16.msra.mxu0 %v5284
        %7239 = vmatprep.subr.bf16.mxu0 %v5405
        %7240 = vmatpush2.bf16.msra.mxu0 %v5404
        %7241 = vmatprep.subr.bf16.mxu0 %v5397
        %7242 = vmatpush2.bf16.msra.mxu0 %v5396
        %7243 = vmatprep.subr.bf16.mxu0 %v5389
        %7244 = vmatpush2.bf16.msra.mxu0 %v5388
        %7245 = vmatprep.subr.bf16.mxu0 %v5381
        %7246 = vmatpush2.bf16.msra.mxu0 %v5380
        %7247 = vmatprep.subr.bf16.mxu0 %v5373
        %7248 = vmatpush2.bf16.msra.mxu0 %v5372
        %7249 = vmatprep.subr.bf16.mxu0 %v5365
        %7250 = vmatpush2.bf16.msra.mxu0 %v5364
        %7251 = vmatprep.subr.bf16.mxu0 %v5357
        %7252 = vmatpush2.bf16.msra.mxu0 %v5356
        %7253 = vmatprep.subr.bf16.mxu0 %v5349
        %7254 = vmatpush2.bf16.msra.mxu0 %v5348
        %7255 = vmatprep.mubr.bf16.mxu0 %v541
        %7256 = vmatmul.mubr.bf16.gmra.mxu0 %v540
        %v7257 = vpop.f32.mrf.mxu0
        %v7258 = vadd.f32 %v7217, %v7257
        %v7259 = vpop.f32.mrf.mxu0
        %v7260 = vadd.f32 %v7219, %v7259
        %v7261 = vpop.f32.mrf.mxu0
        %v7262 = vpop.f32.mrf.mxu0
        %7263 = vdwg.mxu0
        %7264 = vmatprep.subr.bf16.mxu0 %v5469
        %7265 = vmatpush1.bf16.msra.mxu0 %v5468
        %7266 = vmatprep.subr.bf16.mxu0 %v5461
        %7267 = vmatpush1.bf16.msra.mxu0 %v5460
        %7268 = vmatprep.subr.bf16.mxu0 %v5453
        %7269 = vmatpush1.bf16.msra.mxu0 %v5452
        %7270 = vmatprep.subr.bf16.mxu0 %v5445
        %7271 = vmatpush1.bf16.msra.mxu0 %v5444
        %7272 = vmatprep.subr.bf16.mxu0 %v5437
        %7273 = vmatpush1.bf16.msra.mxu0 %v5436
        %7274 = vmatprep.subr.bf16.mxu0 %v5429
        %7275 = vmatpush1.bf16.msra.mxu0 %v5428
        %7276 = vmatprep.subr.bf16.mxu0 %v5421
        %7277 = vmatpush1.bf16.msra.mxu0 %v5420
        %7278 = vmatprep.subr.bf16.mxu0 %v5413
        %7279 = vmatpush1.bf16.msra.mxu0 %v5412
        %7280 = vmatprep.subr.bf16.mxu0 %v5533
        %7281 = vmatpush2.bf16.msra.mxu0 %v5532
        %7282 = vmatprep.subr.bf16.mxu0 %v5525
        %7283 = vmatpush2.bf16.msra.mxu0 %v5524
        %7284 = vmatprep.subr.bf16.mxu0 %v5517
        %7285 = vmatpush2.bf16.msra.mxu0 %v5516
        %7286 = vmatprep.subr.bf16.mxu0 %v5509
        %7287 = vmatpush2.bf16.msra.mxu0 %v5508
        %7288 = vmatprep.subr.bf16.mxu0 %v5501
        %7289 = vmatpush2.bf16.msra.mxu0 %v5500
        %7290 = vmatprep.subr.bf16.mxu0 %v5493
        %7291 = vmatpush2.bf16.msra.mxu0 %v5492
        %7292 = vmatprep.subr.bf16.mxu0 %v5485
        %7293 = vmatpush2.bf16.msra.mxu0 %v5484
        %7294 = vmatprep.subr.bf16.mxu0 %v5477
        %7295 = vmatpush2.bf16.msra.mxu0 %v5476
        %7296 = vmatprep.mubr.bf16.mxu0 %v543
        %7297 = vmatmul.mubr.bf16.gmra.mxu0 %v542
        %v7298 = vpop.f32.mrf.mxu0
        %v7299 = vadd.f32 %v7258, %v7298
        %v7300 = vpop.f32.mrf.mxu0
        %v7301 = vadd.f32 %v7260, %v7300
        %v7302 = vpop.f32.mrf.mxu0
        %v7303 = vpop.f32.mrf.mxu0
        %7304 = vdwg.mxu0
        %7305 = vmatprep.subr.bf16.mxu0 %v5597
        %7306 = vmatpush1.bf16.msra.mxu0 %v5596
        %7307 = vmatprep.subr.bf16.mxu0 %v5589
        %7308 = vmatpush1.bf16.msra.mxu0 %v5588
        %7309 = vmatprep.subr.bf16.mxu0 %v5581
        %7310 = vmatpush1.bf16.msra.mxu0 %v5580
        %7311 = vmatprep.subr.bf16.mxu0 %v5573
        %7312 = vmatpush1.bf16.msra.mxu0 %v5572
        %7313 = vmatprep.subr.bf16.mxu0 %v5565
        %7314 = vmatpush1.bf16.msra.mxu0 %v5564
        %7315 = vmatprep.subr.bf16.mxu0 %v5557
        %7316 = vmatpush1.bf16.msra.mxu0 %v5556
        %7317 = vmatprep.subr.bf16.mxu0 %v5549
        %7318 = vmatpush1.bf16.msra.mxu0 %v5548
        %7319 = vmatprep.subr.bf16.mxu0 %v5541
        %7320 = vmatpush1.bf16.msra.mxu0 %v5540
        %7321 = vmatprep.subr.bf16.mxu0 %v5661
        %7322 = vmatpush2.bf16.msra.mxu0 %v5660
        %7323 = vmatprep.subr.bf16.mxu0 %v5653
        %7324 = vmatpush2.bf16.msra.mxu0 %v5652
        %7325 = vmatprep.subr.bf16.mxu0 %v5645
        %7326 = vmatpush2.bf16.msra.mxu0 %v5644
        %7327 = vmatprep.subr.bf16.mxu0 %v5637
        %7328 = vmatpush2.bf16.msra.mxu0 %v5636
        %7329 = vmatprep.subr.bf16.mxu0 %v5629
        %7330 = vmatpush2.bf16.msra.mxu0 %v5628
        %7331 = vmatprep.subr.bf16.mxu0 %v5621
        %7332 = vmatpush2.bf16.msra.mxu0 %v5620
        %7333 = vmatprep.subr.bf16.mxu0 %v5613
        %7334 = vmatpush2.bf16.msra.mxu0 %v5612
        %7335 = vmatprep.subr.bf16.mxu0 %v5605
        %7336 = vmatpush2.bf16.msra.mxu0 %v5604
        %7337 = vmatprep.mubr.bf16.mxu0 %v545
        %7338 = vmatmul.mubr.bf16.gmra.mxu0 %v544
        %v7339 = vpop.f32.mrf.mxu0
        %v7340 = vadd.f32 %v7299, %v7339
        %v7341 = vpop.f32.mrf.mxu0
        %v7342 = vadd.f32 %v7301, %v7341
        %v7343 = vpop.f32.mrf.mxu0
        %v7344 = vpop.f32.mrf.mxu0
        %7345 = vdwg.mxu0
        %7346 = vmatprep.subr.bf16.mxu0 %v4703
        %7347 = vmatpush1.bf16.msra.mxu0 %v4702
        %7348 = vmatprep.subr.bf16.mxu0 %v4695
        %7349 = vmatpush1.bf16.msra.mxu0 %v4694
        %7350 = vmatprep.subr.bf16.mxu0 %v4687
        %7351 = vmatpush1.bf16.msra.mxu0 %v4686
        %7352 = vmatprep.subr.bf16.mxu0 %v4679
        %7353 = vmatpush1.bf16.msra.mxu0 %v4678
        %7354 = vmatprep.subr.bf16.mxu0 %v4671
        %7355 = vmatpush1.bf16.msra.mxu0 %v4670
        %7356 = vmatprep.subr.bf16.mxu0 %v4663
        %7357 = vmatpush1.bf16.msra.mxu0 %v4662
        %7358 = vmatprep.subr.bf16.mxu0 %v4655
        %7359 = vmatpush1.bf16.msra.mxu0 %v4654
        %7360 = vmatprep.subr.bf16.mxu0 %v4647
        %7361 = vmatpush1.bf16.msra.mxu0 %v4646
        %7362 = vmatprep.subr.bf16.mxu0 %v4767
        %7363 = vmatpush2.bf16.msra.mxu0 %v4766
        %7364 = vmatprep.subr.bf16.mxu0 %v4759
        %7365 = vmatpush2.bf16.msra.mxu0 %v4758
        %7366 = vmatprep.subr.bf16.mxu0 %v4751
        %7367 = vmatpush2.bf16.msra.mxu0 %v4750
        %7368 = vmatprep.subr.bf16.mxu0 %v4743
        %7369 = vmatpush2.bf16.msra.mxu0 %v4742
        %7370 = vmatprep.subr.bf16.mxu0 %v4735
        %7371 = vmatpush2.bf16.msra.mxu0 %v4734
        %7372 = vmatprep.subr.bf16.mxu0 %v4727
        %7373 = vmatpush2.bf16.msra.mxu0 %v4726
        %7374 = vmatprep.subr.bf16.mxu0 %v4719
        %7375 = vmatpush2.bf16.msra.mxu0 %v4718
        %7376 = vmatprep.subr.bf16.mxu0 %v4711
        %7377 = vmatpush2.bf16.msra.mxu0 %v4710
        %7378 = vmatprep.mubr.bf16.mxu0 %v531
        %7379 = vmatmul.mubr.bf16.gmra.mxu0 %v530
        %v7380 = vpop.f32.mrf.mxu0
        %v7381 = vadd.f32 0.0, %v7380
        %v7382 = vpop.f32.mrf.mxu0
        %v7383 = vadd.f32 0.0, %v7382
        %v7384 = vpop.f32.mrf.mxu0
        %v7385 = vpop.f32.mrf.mxu0
        %7386 = vdwg.mxu0
        %7387 = vmatprep.subr.bf16.mxu0 %v4831
        %7388 = vmatpush1.bf16.msra.mxu0 %v4830
        %7389 = vmatprep.subr.bf16.mxu0 %v4823
        %7390 = vmatpush1.bf16.msra.mxu0 %v4822
        %7391 = vmatprep.subr.bf16.mxu0 %v4815
        %7392 = vmatpush1.bf16.msra.mxu0 %v4814
        %7393 = vmatprep.subr.bf16.mxu0 %v4807
        %7394 = vmatpush1.bf16.msra.mxu0 %v4806
        %7395 = vmatprep.subr.bf16.mxu0 %v4799
        %7396 = vmatpush1.bf16.msra.mxu0 %v4798
        %7397 = vmatprep.subr.bf16.mxu0 %v4791
        %7398 = vmatpush1.bf16.msra.mxu0 %v4790
        %7399 = vmatprep.subr.bf16.mxu0 %v4783
        %7400 = vmatpush1.bf16.msra.mxu0 %v4782
        %7401 = vmatprep.subr.bf16.mxu0 %v4775
        %7402 = vmatpush1.bf16.msra.mxu0 %v4774
        %7403 = vmatprep.subr.bf16.mxu0 %v4895
        %7404 = vmatpush2.bf16.msra.mxu0 %v4894
        %7405 = vmatprep.subr.bf16.mxu0 %v4887
        %7406 = vmatpush2.bf16.msra.mxu0 %v4886
        %7407 = vmatprep.subr.bf16.mxu0 %v4879
        %7408 = vmatpush2.bf16.msra.mxu0 %v4878
        %7409 = vmatprep.subr.bf16.mxu0 %v4871
        %7410 = vmatpush2.bf16.msra.mxu0 %v4870
        %7411 = vmatprep.subr.bf16.mxu0 %v4863
        %7412 = vmatpush2.bf16.msra.mxu0 %v4862
        %7413 = vmatprep.subr.bf16.mxu0 %v4855
        %7414 = vmatpush2.bf16.msra.mxu0 %v4854
        %7415 = vmatprep.subr.bf16.mxu0 %v4847
        %7416 = vmatpush2.bf16.msra.mxu0 %v4846
        %7417 = vmatprep.subr.bf16.mxu0 %v4839
        %7418 = vmatpush2.bf16.msra.mxu0 %v4838
        %7419 = vmatprep.mubr.bf16.mxu0 %v533
        %7420 = vmatmul.mubr.bf16.gmra.mxu0 %v532
        %v7421 = vpop.f32.mrf.mxu0
        %v7422 = vadd.f32 %v7381, %v7421
        %v7423 = vpop.f32.mrf.mxu0
        %v7424 = vadd.f32 %v7383, %v7423
        %v7425 = vpop.f32.mrf.mxu0
        %v7426 = vpop.f32.mrf.mxu0
        %7427 = vdwg.mxu0
        %7428 = vmatprep.subr.bf16.mxu0 %v4959
        %7429 = vmatpush1.bf16.msra.mxu0 %v4958
        %7430 = vmatprep.subr.bf16.mxu0 %v4951
        %7431 = vmatpush1.bf16.msra.mxu0 %v4950
        %7432 = vmatprep.subr.bf16.mxu0 %v4943
        %7433 = vmatpush1.bf16.msra.mxu0 %v4942
        %7434 = vmatprep.subr.bf16.mxu0 %v4935
        %7435 = vmatpush1.bf16.msra.mxu0 %v4934
        %7436 = vmatprep.subr.bf16.mxu0 %v4927
        %7437 = vmatpush1.bf16.msra.mxu0 %v4926
        %7438 = vmatprep.subr.bf16.mxu0 %v4919
        %7439 = vmatpush1.bf16.msra.mxu0 %v4918
        %7440 = vmatprep.subr.bf16.mxu0 %v4911
        %7441 = vmatpush1.bf16.msra.mxu0 %v4910
        %7442 = vmatprep.subr.bf16.mxu0 %v4903
        %7443 = vmatpush1.bf16.msra.mxu0 %v4902
        %7444 = vmatprep.subr.bf16.mxu0 %v5023
        %7445 = vmatpush2.bf16.msra.mxu0 %v5022
        %7446 = vmatprep.subr.bf16.mxu0 %v5015
        %7447 = vmatpush2.bf16.msra.mxu0 %v5014
        %7448 = vmatprep.subr.bf16.mxu0 %v5007
        %7449 = vmatpush2.bf16.msra.mxu0 %v5006
        %7450 = vmatprep.subr.bf16.mxu0 %v4999
        %7451 = vmatpush2.bf16.msra.mxu0 %v4998
        %7452 = vmatprep.subr.bf16.mxu0 %v4991
        %7453 = vmatpush2.bf16.msra.mxu0 %v4990
        %7454 = vmatprep.subr.bf16.mxu0 %v4983
        %7455 = vmatpush2.bf16.msra.mxu0 %v4982
        %7456 = vmatprep.subr.bf16.mxu0 %v4975
        %7457 = vmatpush2.bf16.msra.mxu0 %v4974
        %7458 = vmatprep.subr.bf16.mxu0 %v4967
        %7459 = vmatpush2.bf16.msra.mxu0 %v4966
        %7460 = vmatprep.mubr.bf16.mxu0 %v535
        %7461 = vmatmul.mubr.bf16.gmra.mxu0 %v534
        %v7462 = vpop.f32.mrf.mxu0
        %v7463 = vadd.f32 %v7422, %v7462
        %v7464 = vpop.f32.mrf.mxu0
        %v7465 = vadd.f32 %v7424, %v7464
        %v7466 = vpop.f32.mrf.mxu0
        %v7467 = vpop.f32.mrf.mxu0
        %7468 = vdwg.mxu0
        %7469 = vmatprep.subr.bf16.mxu0 %v5087
        %7470 = vmatpush1.bf16.msra.mxu0 %v5086
        %7471 = vmatprep.subr.bf16.mxu0 %v5079
        %7472 = vmatpush1.bf16.msra.mxu0 %v5078
        %7473 = vmatprep.subr.bf16.mxu0 %v5071
        %7474 = vmatpush1.bf16.msra.mxu0 %v5070
        %7475 = vmatprep.subr.bf16.mxu0 %v5063
        %7476 = vmatpush1.bf16.msra.mxu0 %v5062
        %7477 = vmatprep.subr.bf16.mxu0 %v5055
        %7478 = vmatpush1.bf16.msra.mxu0 %v5054
        %7479 = vmatprep.subr.bf16.mxu0 %v5047
        %7480 = vmatpush1.bf16.msra.mxu0 %v5046
        %7481 = vmatprep.subr.bf16.mxu0 %v5039
        %7482 = vmatpush1.bf16.msra.mxu0 %v5038
        %7483 = vmatprep.subr.bf16.mxu0 %v5031
        %7484 = vmatpush1.bf16.msra.mxu0 %v5030
        %7485 = vmatprep.subr.bf16.mxu0 %v5151
        %7486 = vmatpush2.bf16.msra.mxu0 %v5150
        %7487 = vmatprep.subr.bf16.mxu0 %v5143
        %7488 = vmatpush2.bf16.msra.mxu0 %v5142
        %7489 = vmatprep.subr.bf16.mxu0 %v5135
        %7490 = vmatpush2.bf16.msra.mxu0 %v5134
        %7491 = vmatprep.subr.bf16.mxu0 %v5127
        %7492 = vmatpush2.bf16.msra.mxu0 %v5126
        %7493 = vmatprep.subr.bf16.mxu0 %v5119
        %7494 = vmatpush2.bf16.msra.mxu0 %v5118
        %7495 = vmatprep.subr.bf16.mxu0 %v5111
        %7496 = vmatpush2.bf16.msra.mxu0 %v5110
        %7497 = vmatprep.subr.bf16.mxu0 %v5103
        %7498 = vmatpush2.bf16.msra.mxu0 %v5102
        %7499 = vmatprep.subr.bf16.mxu0 %v5095
        %7500 = vmatpush2.bf16.msra.mxu0 %v5094
        %7501 = vmatprep.mubr.bf16.mxu0 %v537
        %7502 = vmatmul.mubr.bf16.gmra.mxu0 %v536
        %v7503 = vpop.f32.mrf.mxu0
        %v7504 = vadd.f32 %v7463, %v7503
        %v7505 = vpop.f32.mrf.mxu0
        %v7506 = vadd.f32 %v7465, %v7505
        %v7507 = vpop.f32.mrf.mxu0
        %v7508 = vpop.f32.mrf.mxu0
        %7509 = vdwg.mxu0
        %7510 = vmatprep.subr.bf16.mxu0 %v5215
        %7511 = vmatpush1.bf16.msra.mxu0 %v5214
        %7512 = vmatprep.subr.bf16.mxu0 %v5207
        %7513 = vmatpush1.bf16.msra.mxu0 %v5206
        %7514 = vmatprep.subr.bf16.mxu0 %v5199
        %7515 = vmatpush1.bf16.msra.mxu0 %v5198
        %7516 = vmatprep.subr.bf16.mxu0 %v5191
        %7517 = vmatpush1.bf16.msra.mxu0 %v5190
        %7518 = vmatprep.subr.bf16.mxu0 %v5183
        %7519 = vmatpush1.bf16.msra.mxu0 %v5182
        %7520 = vmatprep.subr.bf16.mxu0 %v5175
        %7521 = vmatpush1.bf16.msra.mxu0 %v5174
        %7522 = vmatprep.subr.bf16.mxu0 %v5167
        %7523 = vmatpush1.bf16.msra.mxu0 %v5166
        %7524 = vmatprep.subr.bf16.mxu0 %v5159
        %7525 = vmatpush1.bf16.msra.mxu0 %v5158
        %7526 = vmatprep.subr.bf16.mxu0 %v5279
        %7527 = vmatpush2.bf16.msra.mxu0 %v5278
        %7528 = vmatprep.subr.bf16.mxu0 %v5271
        %7529 = vmatpush2.bf16.msra.mxu0 %v5270
        %7530 = vmatprep.subr.bf16.mxu0 %v5263
        %7531 = vmatpush2.bf16.msra.mxu0 %v5262
        %7532 = vmatprep.subr.bf16.mxu0 %v5255
        %7533 = vmatpush2.bf16.msra.mxu0 %v5254
        %7534 = vmatprep.subr.bf16.mxu0 %v5247
        %7535 = vmatpush2.bf16.msra.mxu0 %v5246
        %7536 = vmatprep.subr.bf16.mxu0 %v5239
        %7537 = vmatpush2.bf16.msra.mxu0 %v5238
        %7538 = vmatprep.subr.bf16.mxu0 %v5231
        %7539 = vmatpush2.bf16.msra.mxu0 %v5230
        %7540 = vmatprep.subr.bf16.mxu0 %v5223
        %7541 = vmatpush2.bf16.msra.mxu0 %v5222
        %7542 = vmatprep.mubr.bf16.mxu0 %v539
        %7543 = vmatmul.mubr.bf16.gmra.mxu0 %v538
        %v7544 = vpop.f32.mrf.mxu0
        %v7545 = vadd.f32 %v7504, %v7544
        %v7546 = vpop.f32.mrf.mxu0
        %v7547 = vadd.f32 %v7506, %v7546
        %v7548 = vpop.f32.mrf.mxu0
        %v7549 = vpop.f32.mrf.mxu0
        %7550 = vdwg.mxu0
        %7551 = vmatprep.subr.bf16.mxu0 %v5343
        %7552 = vmatpush1.bf16.msra.mxu0 %v5342
        %7553 = vmatprep.subr.bf16.mxu0 %v5335
        %7554 = vmatpush1.bf16.msra.mxu0 %v5334
        %7555 = vmatprep.subr.bf16.mxu0 %v5327
        %7556 = vmatpush1.bf16.msra.mxu0 %v5326
        %7557 = vmatprep.subr.bf16.mxu0 %v5319
        %7558 = vmatpush1.bf16.msra.mxu0 %v5318
        %7559 = vmatprep.subr.bf16.mxu0 %v5311
        %7560 = vmatpush1.bf16.msra.mxu0 %v5310
        %7561 = vmatprep.subr.bf16.mxu0 %v5303
        %7562 = vmatpush1.bf16.msra.mxu0 %v5302
        %7563 = vmatprep.subr.bf16.mxu0 %v5295
        %7564 = vmatpush1.bf16.msra.mxu0 %v5294
        %7565 = vmatprep.subr.bf16.mxu0 %v5287
        %7566 = vmatpush1.bf16.msra.mxu0 %v5286
        %7567 = vmatprep.subr.bf16.mxu0 %v5407
        %7568 = vmatpush2.bf16.msra.mxu0 %v5406
        %7569 = vmatprep.subr.bf16.mxu0 %v5399
        %7570 = vmatpush2.bf16.msra.mxu0 %v5398
        %7571 = vmatprep.subr.bf16.mxu0 %v5391
        %7572 = vmatpush2.bf16.msra.mxu0 %v5390
        %7573 = vmatprep.subr.bf16.mxu0 %v5383
        %7574 = vmatpush2.bf16.msra.mxu0 %v5382
        %7575 = vmatprep.subr.bf16.mxu0 %v5375
        %7576 = vmatpush2.bf16.msra.mxu0 %v5374
        %7577 = vmatprep.subr.bf16.mxu0 %v5367
        %7578 = vmatpush2.bf16.msra.mxu0 %v5366
        %7579 = vmatprep.subr.bf16.mxu0 %v5359
        %7580 = vmatpush2.bf16.msra.mxu0 %v5358
        %7581 = vmatprep.subr.bf16.mxu0 %v5351
        %7582 = vmatpush2.bf16.msra.mxu0 %v5350
        %7583 = vmatprep.mubr.bf16.mxu0 %v541
        %7584 = vmatmul.mubr.bf16.gmra.mxu0 %v540
        %v7585 = vpop.f32.mrf.mxu0
        %v7586 = vadd.f32 %v7545, %v7585
        %v7587 = vpop.f32.mrf.mxu0
        %v7588 = vadd.f32 %v7547, %v7587
        %v7589 = vpop.f32.mrf.mxu0
        %v7590 = vpop.f32.mrf.mxu0
        %7591 = vdwg.mxu0
        %7592 = vmatprep.subr.bf16.mxu0 %v5471
        %7593 = vmatpush1.bf16.msra.mxu0 %v5470
        %7594 = vmatprep.subr.bf16.mxu0 %v5463
        %7595 = vmatpush1.bf16.msra.mxu0 %v5462
        %7596 = vmatprep.subr.bf16.mxu0 %v5455
        %7597 = vmatpush1.bf16.msra.mxu0 %v5454
        %7598 = vmatprep.subr.bf16.mxu0 %v5447
        %7599 = vmatpush1.bf16.msra.mxu0 %v5446
        %7600 = vmatprep.subr.bf16.mxu0 %v5439
        %7601 = vmatpush1.bf16.msra.mxu0 %v5438
        %7602 = vmatprep.subr.bf16.mxu0 %v5431
        %7603 = vmatpush1.bf16.msra.mxu0 %v5430
        %7604 = vmatprep.subr.bf16.mxu0 %v5423
        %7605 = vmatpush1.bf16.msra.mxu0 %v5422
        %7606 = vmatprep.subr.bf16.mxu0 %v5415
        %7607 = vmatpush1.bf16.msra.mxu0 %v5414
        %7608 = vmatprep.subr.bf16.mxu0 %v5535
        %7609 = vmatpush2.bf16.msra.mxu0 %v5534
        %7610 = vmatprep.subr.bf16.mxu0 %v5527
        %7611 = vmatpush2.bf16.msra.mxu0 %v5526
        %7612 = vmatprep.subr.bf16.mxu0 %v5519
        %7613 = vmatpush2.bf16.msra.mxu0 %v5518
        %7614 = vmatprep.subr.bf16.mxu0 %v5511
        %7615 = vmatpush2.bf16.msra.mxu0 %v5510
        %7616 = vmatprep.subr.bf16.mxu0 %v5503
        %7617 = vmatpush2.bf16.msra.mxu0 %v5502
        %7618 = vmatprep.subr.bf16.mxu0 %v5495
        %7619 = vmatpush2.bf16.msra.mxu0 %v5494
        %7620 = vmatprep.subr.bf16.mxu0 %v5487
        %7621 = vmatpush2.bf16.msra.mxu0 %v5486
        %7622 = vmatprep.subr.bf16.mxu0 %v5479
        %7623 = vmatpush2.bf16.msra.mxu0 %v5478
        %7624 = vmatprep.mubr.bf16.mxu0 %v543
        %7625 = vmatmul.mubr.bf16.gmra.mxu0 %v542
        %v7626 = vpop.f32.mrf.mxu0
        %v7627 = vadd.f32 %v7586, %v7626
        %v7628 = vpop.f32.mrf.mxu0
        %v7629 = vadd.f32 %v7588, %v7628
        %v7630 = vpop.f32.mrf.mxu0
        %v7631 = vpop.f32.mrf.mxu0
        %7632 = vdwg.mxu0
        %7633 = vmatprep.subr.bf16.mxu0 %v5599
        %7634 = vmatpush1.bf16.msra.mxu0 %v5598
        %7635 = vmatprep.subr.bf16.mxu0 %v5591
        %7636 = vmatpush1.bf16.msra.mxu0 %v5590
        %7637 = vmatprep.subr.bf16.mxu0 %v5583
        %7638 = vmatpush1.bf16.msra.mxu0 %v5582
        %7639 = vmatprep.subr.bf16.mxu0 %v5575
        %7640 = vmatpush1.bf16.msra.mxu0 %v5574
        %7641 = vmatprep.subr.bf16.mxu0 %v5567
        %7642 = vmatpush1.bf16.msra.mxu0 %v5566
        %7643 = vmatprep.subr.bf16.mxu0 %v5559
        %7644 = vmatpush1.bf16.msra.mxu0 %v5558
        %7645 = vmatprep.subr.bf16.mxu0 %v5551
        %7646 = vmatpush1.bf16.msra.mxu0 %v5550
        %7647 = vmatprep.subr.bf16.mxu0 %v5543
        %7648 = vmatpush1.bf16.msra.mxu0 %v5542
        %7649 = vmatprep.subr.bf16.mxu0 %v5663
        %7650 = vmatpush2.bf16.msra.mxu0 %v5662
        %7651 = vmatprep.subr.bf16.mxu0 %v5655
        %7652 = vmatpush2.bf16.msra.mxu0 %v5654
        %7653 = vmatprep.subr.bf16.mxu0 %v5647
        %7654 = vmatpush2.bf16.msra.mxu0 %v5646
        %7655 = vmatprep.subr.bf16.mxu0 %v5639
        %7656 = vmatpush2.bf16.msra.mxu0 %v5638
        %7657 = vmatprep.subr.bf16.mxu0 %v5631
        %7658 = vmatpush2.bf16.msra.mxu0 %v5630
        %7659 = vmatprep.subr.bf16.mxu0 %v5623
        %7660 = vmatpush2.bf16.msra.mxu0 %v5622
        %7661 = vmatprep.subr.bf16.mxu0 %v5615
        %7662 = vmatpush2.bf16.msra.mxu0 %v5614
        %7663 = vmatprep.subr.bf16.mxu0 %v5607
        %7664 = vmatpush2.bf16.msra.mxu0 %v5606
        %7665 = vmatprep.mubr.bf16.mxu0 %v545
        %7666 = vmatmul.mubr.bf16.gmra.mxu0 %v544
        %v7667 = vpop.f32.mrf.mxu0
        %v7668 = vadd.f32 %v7627, %v7667
        %v7669 = vpop.f32.mrf.mxu0
        %v7670 = vadd.f32 %v7629, %v7669
        %v7671 = vpop.f32.mrf.mxu0
        %v7672 = vpop.f32.mrf.mxu0
        %7673 = vdwg.mxu0
        %7674 = vmatprep.subr.bf16.mxu0 %v4705
        %7675 = vmatpush1.bf16.msra.mxu0 %v4704
        %7676 = vmatprep.subr.bf16.mxu0 %v4697
        %7677 = vmatpush1.bf16.msra.mxu0 %v4696
        %7678 = vmatprep.subr.bf16.mxu0 %v4689
        %7679 = vmatpush1.bf16.msra.mxu0 %v4688
        %7680 = vmatprep.subr.bf16.mxu0 %v4681
        %7681 = vmatpush1.bf16.msra.mxu0 %v4680
        %7682 = vmatprep.subr.bf16.mxu0 %v4673
        %7683 = vmatpush1.bf16.msra.mxu0 %v4672
        %7684 = vmatprep.subr.bf16.mxu0 %v4665
        %7685 = vmatpush1.bf16.msra.mxu0 %v4664
        %7686 = vmatprep.subr.bf16.mxu0 %v4657
        %7687 = vmatpush1.bf16.msra.mxu0 %v4656
        %7688 = vmatprep.subr.bf16.mxu0 %v4649
        %7689 = vmatpush1.bf16.msra.mxu0 %v4648
        %7690 = vmatprep.subr.bf16.mxu0 %v4769
        %7691 = vmatpush2.bf16.msra.mxu0 %v4768
        %7692 = vmatprep.subr.bf16.mxu0 %v4761
        %7693 = vmatpush2.bf16.msra.mxu0 %v4760
        %7694 = vmatprep.subr.bf16.mxu0 %v4753
        %7695 = vmatpush2.bf16.msra.mxu0 %v4752
        %7696 = vmatprep.subr.bf16.mxu0 %v4745
        %7697 = vmatpush2.bf16.msra.mxu0 %v4744
        %7698 = vmatprep.subr.bf16.mxu0 %v4737
        %7699 = vmatpush2.bf16.msra.mxu0 %v4736
        %7700 = vmatprep.subr.bf16.mxu0 %v4729
        %7701 = vmatpush2.bf16.msra.mxu0 %v4728
        %7702 = vmatprep.subr.bf16.mxu0 %v4721
        %7703 = vmatpush2.bf16.msra.mxu0 %v4720
        %7704 = vmatprep.subr.bf16.mxu0 %v4713
        %7705 = vmatpush2.bf16.msra.mxu0 %v4712
        %7706 = vmatprep.mubr.bf16.mxu0 %v531
        %7707 = vmatmul.mubr.bf16.gmra.mxu0 %v530
        %v7708 = vpop.f32.mrf.mxu0
        %v7709 = vadd.f32 0.0, %v7708
        %v7710 = vpop.f32.mrf.mxu0
        %v7711 = vadd.f32 0.0, %v7710
        %v7712 = vpop.f32.mrf.mxu0
        %v7713 = vpop.f32.mrf.mxu0
        %7714 = vdwg.mxu0
        %7715 = vmatprep.subr.bf16.mxu0 %v4833
        %7716 = vmatpush1.bf16.msra.mxu0 %v4832
        %7717 = vmatprep.subr.bf16.mxu0 %v4825
        %7718 = vmatpush1.bf16.msra.mxu0 %v4824
        %7719 = vmatprep.subr.bf16.mxu0 %v4817
        %7720 = vmatpush1.bf16.msra.mxu0 %v4816
        %7721 = vmatprep.subr.bf16.mxu0 %v4809
        %7722 = vmatpush1.bf16.msra.mxu0 %v4808
        %7723 = vmatprep.subr.bf16.mxu0 %v4801
        %7724 = vmatpush1.bf16.msra.mxu0 %v4800
        %7725 = vmatprep.subr.bf16.mxu0 %v4793
        %7726 = vmatpush1.bf16.msra.mxu0 %v4792
        %7727 = vmatprep.subr.bf16.mxu0 %v4785
        %7728 = vmatpush1.bf16.msra.mxu0 %v4784
        %7729 = vmatprep.subr.bf16.mxu0 %v4777
        %7730 = vmatpush1.bf16.msra.mxu0 %v4776
        %7731 = vmatprep.subr.bf16.mxu0 %v4897
        %7732 = vmatpush2.bf16.msra.mxu0 %v4896
        %7733 = vmatprep.subr.bf16.mxu0 %v4889
        %7734 = vmatpush2.bf16.msra.mxu0 %v4888
        %7735 = vmatprep.subr.bf16.mxu0 %v4881
        %7736 = vmatpush2.bf16.msra.mxu0 %v4880
        %7737 = vmatprep.subr.bf16.mxu0 %v4873
        %7738 = vmatpush2.bf16.msra.mxu0 %v4872
        %7739 = vmatprep.subr.bf16.mxu0 %v4865
        %7740 = vmatpush2.bf16.msra.mxu0 %v4864
        %7741 = vmatprep.subr.bf16.mxu0 %v4857
        %7742 = vmatpush2.bf16.msra.mxu0 %v4856
        %7743 = vmatprep.subr.bf16.mxu0 %v4849
        %7744 = vmatpush2.bf16.msra.mxu0 %v4848
        %7745 = vmatprep.subr.bf16.mxu0 %v4841
        %7746 = vmatpush2.bf16.msra.mxu0 %v4840
        %7747 = vmatprep.mubr.bf16.mxu0 %v533
        %7748 = vmatmul.mubr.bf16.gmra.mxu0 %v532
        %v7749 = vpop.f32.mrf.mxu0
        %v7750 = vadd.f32 %v7709, %v7749
        %v7751 = vpop.f32.mrf.mxu0
        %v7752 = vadd.f32 %v7711, %v7751
        %v7753 = vpop.f32.mrf.mxu0
        %v7754 = vpop.f32.mrf.mxu0
        %7755 = vdwg.mxu0
        %7756 = vmatprep.subr.bf16.mxu0 %v4961
        %7757 = vmatpush1.bf16.msra.mxu0 %v4960
        %7758 = vmatprep.subr.bf16.mxu0 %v4953
        %7759 = vmatpush1.bf16.msra.mxu0 %v4952
        %7760 = vmatprep.subr.bf16.mxu0 %v4945
        %7761 = vmatpush1.bf16.msra.mxu0 %v4944
        %7762 = vmatprep.subr.bf16.mxu0 %v4937
        %7763 = vmatpush1.bf16.msra.mxu0 %v4936
        %7764 = vmatprep.subr.bf16.mxu0 %v4929
        %7765 = vmatpush1.bf16.msra.mxu0 %v4928
        %7766 = vmatprep.subr.bf16.mxu0 %v4921
        %7767 = vmatpush1.bf16.msra.mxu0 %v4920
        %7768 = vmatprep.subr.bf16.mxu0 %v4913
        %7769 = vmatpush1.bf16.msra.mxu0 %v4912
        %7770 = vmatprep.subr.bf16.mxu0 %v4905
        %7771 = vmatpush1.bf16.msra.mxu0 %v4904
        %7772 = vmatprep.subr.bf16.mxu0 %v5025
        %7773 = vmatpush2.bf16.msra.mxu0 %v5024
        %7774 = vmatprep.subr.bf16.mxu0 %v5017
        %7775 = vmatpush2.bf16.msra.mxu0 %v5016
        %7776 = vmatprep.subr.bf16.mxu0 %v5009
        %7777 = vmatpush2.bf16.msra.mxu0 %v5008
        %7778 = vmatprep.subr.bf16.mxu0 %v5001
        %7779 = vmatpush2.bf16.msra.mxu0 %v5000
        %7780 = vmatprep.subr.bf16.mxu0 %v4993
        %7781 = vmatpush2.bf16.msra.mxu0 %v4992
        %7782 = vmatprep.subr.bf16.mxu0 %v4985
        %7783 = vmatpush2.bf16.msra.mxu0 %v4984
        %7784 = vmatprep.subr.bf16.mxu0 %v4977
        %7785 = vmatpush2.bf16.msra.mxu0 %v4976
        %7786 = vmatprep.subr.bf16.mxu0 %v4969
        %7787 = vmatpush2.bf16.msra.mxu0 %v4968
        %7788 = vmatprep.mubr.bf16.mxu0 %v535
        %7789 = vmatmul.mubr.bf16.gmra.mxu0 %v534
        %v7790 = vpop.f32.mrf.mxu0
        %v7791 = vadd.f32 %v7750, %v7790
        %v7792 = vpop.f32.mrf.mxu0
        %v7793 = vadd.f32 %v7752, %v7792
        %v7794 = vpop.f32.mrf.mxu0
        %v7795 = vpop.f32.mrf.mxu0
        %7796 = vdwg.mxu0
        %7797 = vmatprep.subr.bf16.mxu0 %v5089
        %7798 = vmatpush1.bf16.msra.mxu0 %v5088
        %7799 = vmatprep.subr.bf16.mxu0 %v5081
        %7800 = vmatpush1.bf16.msra.mxu0 %v5080
        %7801 = vmatprep.subr.bf16.mxu0 %v5073
        %7802 = vmatpush1.bf16.msra.mxu0 %v5072
        %7803 = vmatprep.subr.bf16.mxu0 %v5065
        %7804 = vmatpush1.bf16.msra.mxu0 %v5064
        %7805 = vmatprep.subr.bf16.mxu0 %v5057
        %7806 = vmatpush1.bf16.msra.mxu0 %v5056
        %7807 = vmatprep.subr.bf16.mxu0 %v5049
        %7808 = vmatpush1.bf16.msra.mxu0 %v5048
        %7809 = vmatprep.subr.bf16.mxu0 %v5041
        %7810 = vmatpush1.bf16.msra.mxu0 %v5040
        %7811 = vmatprep.subr.bf16.mxu0 %v5033
        %7812 = vmatpush1.bf16.msra.mxu0 %v5032
        %7813 = vmatprep.subr.bf16.mxu0 %v5153
        %7814 = vmatpush2.bf16.msra.mxu0 %v5152
        %7815 = vmatprep.subr.bf16.mxu0 %v5145
        %7816 = vmatpush2.bf16.msra.mxu0 %v5144
        %7817 = vmatprep.subr.bf16.mxu0 %v5137
        %7818 = vmatpush2.bf16.msra.mxu0 %v5136
        %7819 = vmatprep.subr.bf16.mxu0 %v5129
        %7820 = vmatpush2.bf16.msra.mxu0 %v5128
        %7821 = vmatprep.subr.bf16.mxu0 %v5121
        %7822 = vmatpush2.bf16.msra.mxu0 %v5120
        %7823 = vmatprep.subr.bf16.mxu0 %v5113
        %7824 = vmatpush2.bf16.msra.mxu0 %v5112
        %7825 = vmatprep.subr.bf16.mxu0 %v5105
        %7826 = vmatpush2.bf16.msra.mxu0 %v5104
        %7827 = vmatprep.subr.bf16.mxu0 %v5097
        %7828 = vmatpush2.bf16.msra.mxu0 %v5096
        %7829 = vmatprep.mubr.bf16.mxu0 %v537
        %7830 = vmatmul.mubr.bf16.gmra.mxu0 %v536
        %v7831 = vpop.f32.mrf.mxu0
        %v7832 = vadd.f32 %v7791, %v7831
        %v7833 = vpop.f32.mrf.mxu0
        %v7834 = vadd.f32 %v7793, %v7833
        %v7835 = vpop.f32.mrf.mxu0
        %v7836 = vpop.f32.mrf.mxu0
        %7837 = vdwg.mxu0
        %7838 = vmatprep.subr.bf16.mxu0 %v5217
        %7839 = vmatpush1.bf16.msra.mxu0 %v5216
        %7840 = vmatprep.subr.bf16.mxu0 %v5209
        %7841 = vmatpush1.bf16.msra.mxu0 %v5208
        %7842 = vmatprep.subr.bf16.mxu0 %v5201
        %7843 = vmatpush1.bf16.msra.mxu0 %v5200
        %7844 = vmatprep.subr.bf16.mxu0 %v5193
        %7845 = vmatpush1.bf16.msra.mxu0 %v5192
        %7846 = vmatprep.subr.bf16.mxu0 %v5185
        %7847 = vmatpush1.bf16.msra.mxu0 %v5184
        %7848 = vmatprep.subr.bf16.mxu0 %v5177
        %7849 = vmatpush1.bf16.msra.mxu0 %v5176
        %7850 = vmatprep.subr.bf16.mxu0 %v5169
        %7851 = vmatpush1.bf16.msra.mxu0 %v5168
        %7852 = vmatprep.subr.bf16.mxu0 %v5161
        %7853 = vmatpush1.bf16.msra.mxu0 %v5160
        %7854 = vmatprep.subr.bf16.mxu0 %v5281
        %7855 = vmatpush2.bf16.msra.mxu0 %v5280
        %7856 = vmatprep.subr.bf16.mxu0 %v5273
        %7857 = vmatpush2.bf16.msra.mxu0 %v5272
        %7858 = vmatprep.subr.bf16.mxu0 %v5265
        %7859 = vmatpush2.bf16.msra.mxu0 %v5264
        %7860 = vmatprep.subr.bf16.mxu0 %v5257
        %7861 = vmatpush2.bf16.msra.mxu0 %v5256
        %7862 = vmatprep.subr.bf16.mxu0 %v5249
        %7863 = vmatpush2.bf16.msra.mxu0 %v5248
        %7864 = vmatprep.subr.bf16.mxu0 %v5241
        %7865 = vmatpush2.bf16.msra.mxu0 %v5240
        %7866 = vmatprep.subr.bf16.mxu0 %v5233
        %7867 = vmatpush2.bf16.msra.mxu0 %v5232
        %7868 = vmatprep.subr.bf16.mxu0 %v5225
        %7869 = vmatpush2.bf16.msra.mxu0 %v5224
        %7870 = vmatprep.mubr.bf16.mxu0 %v539
        %7871 = vmatmul.mubr.bf16.gmra.mxu0 %v538
        %v7872 = vpop.f32.mrf.mxu0
        %v7873 = vadd.f32 %v7832, %v7872
        %v7874 = vpop.f32.mrf.mxu0
        %v7875 = vadd.f32 %v7834, %v7874
        %v7876 = vpop.f32.mrf.mxu0
        %v7877 = vpop.f32.mrf.mxu0
        %7878 = vdwg.mxu0
        %7879 = vmatprep.subr.bf16.mxu0 %v5345
        %7880 = vmatpush1.bf16.msra.mxu0 %v5344
        %7881 = vmatprep.subr.bf16.mxu0 %v5337
        %7882 = vmatpush1.bf16.msra.mxu0 %v5336
        %7883 = vmatprep.subr.bf16.mxu0 %v5329
        %7884 = vmatpush1.bf16.msra.mxu0 %v5328
        %7885 = vmatprep.subr.bf16.mxu0 %v5321
        %7886 = vmatpush1.bf16.msra.mxu0 %v5320
        %7887 = vmatprep.subr.bf16.mxu0 %v5313
        %7888 = vmatpush1.bf16.msra.mxu0 %v5312
        %7889 = vmatprep.subr.bf16.mxu0 %v5305
        %7890 = vmatpush1.bf16.msra.mxu0 %v5304
        %7891 = vmatprep.subr.bf16.mxu0 %v5297
        %7892 = vmatpush1.bf16.msra.mxu0 %v5296
        %7893 = vmatprep.subr.bf16.mxu0 %v5289
        %7894 = vmatpush1.bf16.msra.mxu0 %v5288
        %7895 = vmatprep.subr.bf16.mxu0 %v5409
        %7896 = vmatpush2.bf16.msra.mxu0 %v5408
        %7897 = vmatprep.subr.bf16.mxu0 %v5401
        %7898 = vmatpush2.bf16.msra.mxu0 %v5400
        %7899 = vmatprep.subr.bf16.mxu0 %v5393
        %7900 = vmatpush2.bf16.msra.mxu0 %v5392
        %7901 = vmatprep.subr.bf16.mxu0 %v5385
        %7902 = vmatpush2.bf16.msra.mxu0 %v5384
        %7903 = vmatprep.subr.bf16.mxu0 %v5377
        %7904 = vmatpush2.bf16.msra.mxu0 %v5376
        %7905 = vmatprep.subr.bf16.mxu0 %v5369
        %7906 = vmatpush2.bf16.msra.mxu0 %v5368
        %7907 = vmatprep.subr.bf16.mxu0 %v5361
        %7908 = vmatpush2.bf16.msra.mxu0 %v5360
        %7909 = vmatprep.subr.bf16.mxu0 %v5353
        %7910 = vmatpush2.bf16.msra.mxu0 %v5352
        %7911 = vmatprep.mubr.bf16.mxu0 %v541
        %7912 = vmatmul.mubr.bf16.gmra.mxu0 %v540
        %v7913 = vpop.f32.mrf.mxu0
        %v7914 = vadd.f32 %v7873, %v7913
        %v7915 = vpop.f32.mrf.mxu0
        %v7916 = vadd.f32 %v7875, %v7915
        %v7917 = vpop.f32.mrf.mxu0
        %v7918 = vpop.f32.mrf.mxu0
        %7919 = vdwg.mxu0
        %7920 = vmatprep.subr.bf16.mxu0 %v5473
        %7921 = vmatpush1.bf16.msra.mxu0 %v5472
        %7922 = vmatprep.subr.bf16.mxu0 %v5465
        %7923 = vmatpush1.bf16.msra.mxu0 %v5464
        %7924 = vmatprep.subr.bf16.mxu0 %v5457
        %7925 = vmatpush1.bf16.msra.mxu0 %v5456
        %7926 = vmatprep.subr.bf16.mxu0 %v5449
        %7927 = vmatpush1.bf16.msra.mxu0 %v5448
        %7928 = vmatprep.subr.bf16.mxu0 %v5441
        %7929 = vmatpush1.bf16.msra.mxu0 %v5440
        %7930 = vmatprep.subr.bf16.mxu0 %v5433
        %7931 = vmatpush1.bf16.msra.mxu0 %v5432
        %7932 = vmatprep.subr.bf16.mxu0 %v5425
        %7933 = vmatpush1.bf16.msra.mxu0 %v5424
        %7934 = vmatprep.subr.bf16.mxu0 %v5417
        %7935 = vmatpush1.bf16.msra.mxu0 %v5416
        %7936 = vmatprep.subr.bf16.mxu0 %v5537
        %7937 = vmatpush2.bf16.msra.mxu0 %v5536
        %7938 = vmatprep.subr.bf16.mxu0 %v5529
        %7939 = vmatpush2.bf16.msra.mxu0 %v5528
        %7940 = vmatprep.subr.bf16.mxu0 %v5521
        %7941 = vmatpush2.bf16.msra.mxu0 %v5520
        %7942 = vmatprep.subr.bf16.mxu0 %v5513
        %7943 = vmatpush2.bf16.msra.mxu0 %v5512
        %7944 = vmatprep.subr.bf16.mxu0 %v5505
        %7945 = vmatpush2.bf16.msra.mxu0 %v5504
        %7946 = vmatprep.subr.bf16.mxu0 %v5497
        %7947 = vmatpush2.bf16.msra.mxu0 %v5496
        %7948 = vmatprep.subr.bf16.mxu0 %v5489
        %7949 = vmatpush2.bf16.msra.mxu0 %v5488
        %7950 = vmatprep.subr.bf16.mxu0 %v5481
        %7951 = vmatpush2.bf16.msra.mxu0 %v5480
        %7952 = vmatprep.mubr.bf16.mxu0 %v543
        %7953 = vmatmul.mubr.bf16.gmra.mxu0 %v542
        %v7954 = vpop.f32.mrf.mxu0
        %v7955 = vadd.f32 %v7914, %v7954
        %v7956 = vpop.f32.mrf.mxu0
        %v7957 = vadd.f32 %v7916, %v7956
        %v7958 = vpop.f32.mrf.mxu0
        %v7959 = vpop.f32.mrf.mxu0
        %7960 = vdwg.mxu0
        %7961 = vmatprep.subr.bf16.mxu0 %v5601
        %7962 = vmatpush1.bf16.msra.mxu0 %v5600
        %7963 = vmatprep.subr.bf16.mxu0 %v5593
        %7964 = vmatpush1.bf16.msra.mxu0 %v5592
        %7965 = vmatprep.subr.bf16.mxu0 %v5585
        %7966 = vmatpush1.bf16.msra.mxu0 %v5584
        %7967 = vmatprep.subr.bf16.mxu0 %v5577
        %7968 = vmatpush1.bf16.msra.mxu0 %v5576
        %7969 = vmatprep.subr.bf16.mxu0 %v5569
        %7970 = vmatpush1.bf16.msra.mxu0 %v5568
        %7971 = vmatprep.subr.bf16.mxu0 %v5561
        %7972 = vmatpush1.bf16.msra.mxu0 %v5560
        %7973 = vmatprep.subr.bf16.mxu0 %v5553
        %7974 = vmatpush1.bf16.msra.mxu0 %v5552
        %7975 = vmatprep.subr.bf16.mxu0 %v5545
        %7976 = vmatpush1.bf16.msra.mxu0 %v5544
        %7977 = vmatprep.subr.bf16.mxu0 %v5665
        %7978 = vmatpush2.bf16.msra.mxu0 %v5664
        %7979 = vmatprep.subr.bf16.mxu0 %v5657
        %7980 = vmatpush2.bf16.msra.mxu0 %v5656
        %7981 = vmatprep.subr.bf16.mxu0 %v5649
        %7982 = vmatpush2.bf16.msra.mxu0 %v5648
        %7983 = vmatprep.subr.bf16.mxu0 %v5641
        %7984 = vmatpush2.bf16.msra.mxu0 %v5640
        %7985 = vmatprep.subr.bf16.mxu0 %v5633
        %7986 = vmatpush2.bf16.msra.mxu0 %v5632
        %7987 = vmatprep.subr.bf16.mxu0 %v5625
        %7988 = vmatpush2.bf16.msra.mxu0 %v5624
        %7989 = vmatprep.subr.bf16.mxu0 %v5617
        %7990 = vmatpush2.bf16.msra.mxu0 %v5616
        %7991 = vmatprep.subr.bf16.mxu0 %v5609
        %7992 = vmatpush2.bf16.msra.mxu0 %v5608
        %7993 = vmatprep.mubr.bf16.mxu0 %v545
        %7994 = vmatmul.mubr.bf16.gmra.mxu0 %v544
        %v7995 = vpop.f32.mrf.mxu0
        %v7996 = vadd.f32 %v7955, %v7995
        %v7997 = vpop.f32.mrf.mxu0
        %v7998 = vadd.f32 %v7957, %v7997
        %v7999 = vpop.f32.mrf.mxu0
        %v8000 = vpop.f32.mrf.mxu0
        %8001 = vdwg.mxu0
        %v8010 = vcombine.low %v7012, %v7014
        %v8011 = vcombine.low %v7340, %v7342
        %v8013 = vunpack.c.l.s4 1983009808
        %v8014 = vunpack.c.0.s8 %v8013
        %v8015 = vlaneseq
        %v8016 = vshrl.u32 %v8015, 7
        %v8017 = vsub.s32 %v8014, %v8016
        %v8018 = vrot.slane %v8010, %v8017
        %v8020 = vunpack.c.l.s4 1983009808
        %v8021 = vunpack.c.0.s8 %v8020
        %v8022 = vlaneseq
        %v8023 = vshrl.u32 %v8022, 7
        %v8024 = vsub.s32 %v8021, %v8023
        %v8025 = vrot.slane %v8011, %v8024
        %v8026 = vcombine.low %v8018, %v8025
        %v8027 = vcombine.low %v7668, %v7670
        %v8028 = vcombine.low %v7996, %v7998
        %v8030 = vunpack.c.l.s4 1983009808
        %v8031 = vunpack.c.0.s8 %v8030
        %v8032 = vlaneseq
        %v8033 = vshrl.u32 %v8032, 7
        %v8034 = vsub.s32 %v8031, %v8033
        %v8035 = vrot.slane %v8027, %v8034
        %v8037 = vunpack.c.l.s4 1983009808
        %v8038 = vunpack.c.0.s8 %v8037
        %v8039 = vlaneseq
        %v8040 = vshrl.u32 %v8039, 7
        %v8041 = vsub.s32 %v8038, %v8040
        %v8042 = vrot.slane %v8028, %v8041
        %v8043 = vcombine.low %v8035, %v8042
        %v8046 = vadd.f32 %v436, %v8026
        %v8047 = vadd.f32 %v437, %v8043
        %8048 = vst [vmem:[#allocation2] sm:$0xff] %v8046
        %8049 = vst [vmem:[#allocation2 + $0x8] sm:$0xff] %v8047
        %p8050 = scmp.eq.s32.totalorder %s28, 1
        // Predicated region
        $region85: #{discriminator_forward.1} parent=55 // pred_check
          %p8051 = pneg %p8050
        $region86: #{discriminator_forward.1} parent=55 // pred_check_branch
          %8053 = sbr.rel (%p8051) target = $region88
        $region87: #{discriminator_forward.1} parent=55 // pred_region
          %v8054 = vld [vmem:[#allocation2] sm:$0xff]
          %v8055 = vld [vmem:[#allocation2 + $0x8] sm:$0xff]
          %v8056 = vld [vmem:[#allocation6] sm:$0xff]
          %v8058 = vlaneseq
          %v8059 = vshrl.u32 %v8058, 7
          %v8060 = vsub.s32 0, %v8059
          %v8061 = vrot.slane %v8056, %v8060
          %v8062 = vlaneseq
          %v8063 = vshrl.u32 %v8062, 7
          %v8064 = vsub.s32 1, %v8063
          %v8065 = vrot.slane %v8056, %v8064
          %v8066 = vlaneseq
          %v8067 = vshrl.u32 %v8066, 7
          %v8068 = vsub.s32 2, %v8067
          %v8069 = vrot.slane %v8056, %v8068
          %v8070 = vlaneseq
          %v8071 = vshrl.u32 %v8070, 7
          %v8072 = vsub.s32 3, %v8071
          %v8073 = vrot.slane %v8056, %v8072
          %v8074 = vlaneseq
          %v8075 = vshrl.u32 %v8074, 7
          %v8076 = vsub.s32 4, %v8075
          %v8077 = vrot.slane %v8056, %v8076
          %v8078 = vlaneseq
          %v8079 = vshrl.u32 %v8078, 7
          %v8080 = vsub.s32 5, %v8079
          %v8081 = vrot.slane %v8056, %v8080
          %v8082 = vlaneseq
          %v8083 = vshrl.u32 %v8082, 7
          %v8084 = vsub.s32 6, %v8083
          %v8085 = vrot.slane %v8056, %v8084
          %v8086 = vlaneseq
          %v8087 = vshrl.u32 %v8086, 7
          %v8088 = vsub.s32 7, %v8087
          %v8089 = vrot.slane %v8056, %v8088
          %v8090 = vcombine.low %v8061, %v8065
          %v8091 = vcombine.low %v8069, %v8073
          %v8093 = vunpack.c.l.s4 1983009808
          %v8094 = vunpack.c.0.s8 %v8093
          %v8095 = vlaneseq
          %v8096 = vshrl.u32 %v8095, 7
          %v8097 = vsub.s32 %v8094, %v8096
          %v8098 = vrot.slane %v8090, %v8097
          %v8100 = vunpack.c.l.s4 1983009808
          %v8101 = vunpack.c.0.s8 %v8100
          %v8102 = vlaneseq
          %v8103 = vshrl.u32 %v8102, 7
          %v8104 = vsub.s32 %v8101, %v8103
          %v8105 = vrot.slane %v8091, %v8104
          %v8106 = vcombine.low %v8098, %v8105
          %v8107 = vcombine.low %v8077, %v8081
          %v8108 = vcombine.low %v8085, %v8089
          %v8110 = vunpack.c.l.s4 1983009808
          %v8111 = vunpack.c.0.s8 %v8110
          %v8112 = vlaneseq
          %v8113 = vshrl.u32 %v8112, 7
          %v8114 = vsub.s32 %v8111, %v8113
          %v8115 = vrot.slane %v8107, %v8114
          %v8117 = vunpack.c.l.s4 1983009808
          %v8118 = vunpack.c.0.s8 %v8117
          %v8119 = vlaneseq
          %v8120 = vshrl.u32 %v8119, 7
          %v8121 = vsub.s32 %v8118, %v8120
          %v8122 = vrot.slane %v8108, %v8121
          %v8123 = vcombine.low %v8115, %v8122
          %v8126 = vadd.f32 %v8054, %v8106
          %v8127 = vadd.f32 %v8055, %v8123
          %v8128 = vmax.f32 %v8126, 0.0
          %v8129 = vmax.f32 %v8127, 0.0
          %v8132 = vcombine.high %v8128, %v8128
          %v8134 = vunpack.c.l.s4 1983009808
          %v8135 = vunpack.c.0.s8 %v8134
          %v8136 = vlaneseq
          %v8137 = vshrl.u32 %v8136, 7
          %v8138 = vsub.s32 %v8135, %v8137
          %v8139 = vrot.slane %v8128, %v8138
          %v8141 = vunpack.c.l.s4 1983009808
          %v8142 = vunpack.c.0.s8 %v8141
          %v8143 = vlaneseq
          %v8144 = vshrl.u32 %v8143, 7
          %v8145 = vsub.s32 %v8142, %v8144
          %v8146 = vrot.slane %v8132, %v8145
          %v8147 = vcombine.high %v8139, %v8139
          %v8148 = vcombine.high %v8146, %v8146
          %v8149 = vcombine.high %v8129, %v8129
          %v8151 = vunpack.c.l.s4 1983009808
          %v8152 = vunpack.c.0.s8 %v8151
          %v8153 = vlaneseq
          %v8154 = vshrl.u32 %v8153, 7
          %v8155 = vsub.s32 %v8152, %v8154
          %v8156 = vrot.slane %v8129, %v8155
          %v8158 = vunpack.c.l.s4 1983009808
          %v8159 = vunpack.c.0.s8 %v8158
          %v8160 = vlaneseq
          %v8161 = vshrl.u32 %v8160, 7
          %v8162 = vsub.s32 %v8159, %v8161
          %v8163 = vrot.slane %v8149, %v8162
          %v8164 = vcombine.high %v8156, %v8156
          %v8165 = vcombine.high %v8163, %v8163
          %v8174 = vpack.c.bf16 %v8139, %v8139
          %v8175 = vpack.c.bf16 %v8147, %v8147
          %v8176 = vpack.c.bf16 %v8146, %v8146
          %v8177 = vpack.c.bf16 %v8148, %v8148
          %v8178 = vpack.c.bf16 %v8156, %v8156
          %v8179 = vpack.c.bf16 %v8164, %v8164
          %v8180 = vpack.c.bf16 %v8163, %v8163
          %v8181 = vpack.c.bf16 %v8165, %v8165
          %v8182 = vld [vmem:[#allocation8] sm:$0xf]
          %v8183 = vld [vmem:[#allocation8 + $0x4] sm:$0xf]
          %v8184 = vld [vmem:[#allocation8 + $0x8] sm:$0xf]
          %v8185 = vld [vmem:[#allocation8 + $0xc] sm:$0xf]
          %v8186 = vld [vmem:[#allocation8 + $0x10] sm:$0xf]
          %v8187 = vld [vmem:[#allocation8 + $0x14] sm:$0xf]
          %v8188 = vld [vmem:[#allocation8 + $0x18] sm:$0xf]
          %v8189 = vld [vmem:[#allocation8 + $0x1c] sm:$0xf]
          %v8190 = vld [vmem:[#allocation8 + $0x20] sm:$0xf]
          %v8191 = vld [vmem:[#allocation8 + $0x24] sm:$0xf]
          %v8192 = vld [vmem:[#allocation8 + $0x28] sm:$0xf]
          %v8193 = vld [vmem:[#allocation8 + $0x2c] sm:$0xf]
          %v8194 = vld [vmem:[#allocation8 + $0x30] sm:$0xf]
          %v8195 = vld [vmem:[#allocation8 + $0x34] sm:$0xf]
          %v8196 = vld [vmem:[#allocation8 + $0x38] sm:$0xf]
          %v8197 = vld [vmem:[#allocation8 + $0x3c] sm:$0xf]
          %v8198 = vld [vmem:[#allocation8 + $0x40] sm:$0xf]
          %v8199 = vld [vmem:[#allocation8 + $0x44] sm:$0xf]
          %v8200 = vld [vmem:[#allocation8 + $0x48] sm:$0xf]
          %v8201 = vld [vmem:[#allocation8 + $0x4c] sm:$0xf]
          %v8202 = vld [vmem:[#allocation8 + $0x50] sm:$0xf]
          %v8203 = vld [vmem:[#allocation8 + $0x54] sm:$0xf]
          %v8204 = vld [vmem:[#allocation8 + $0x58] sm:$0xf]
          %v8205 = vld [vmem:[#allocation8 + $0x5c] sm:$0xf]
          %v8206 = vld [vmem:[#allocation8 + $0x60] sm:$0xf]
          %v8207 = vld [vmem:[#allocation8 + $0x64] sm:$0xf]
          %v8208 = vld [vmem:[#allocation8 + $0x68] sm:$0xf]
          %v8209 = vld [vmem:[#allocation8 + $0x6c] sm:$0xf]
          %v8210 = vld [vmem:[#allocation8 + $0x70] sm:$0xf]
          %v8211 = vld [vmem:[#allocation8 + $0x74] sm:$0xf]
          %v8212 = vld [vmem:[#allocation8 + $0x78] sm:$0xf]
          %v8213 = vld [vmem:[#allocation8 + $0x7c] sm:$0xf]
          %v8214 = vld [vmem:[#allocation8 + $0x80] sm:$0xf]
          %v8215 = vld [vmem:[#allocation8 + $0x84] sm:$0xf]
          %v8216 = vld [vmem:[#allocation8 + $0x88] sm:$0xf]
          %v8217 = vld [vmem:[#allocation8 + $0x8c] sm:$0xf]
          %v8218 = vld [vmem:[#allocation8 + $0x90] sm:$0xf]
          %v8219 = vld [vmem:[#allocation8 + $0x94] sm:$0xf]
          %v8220 = vld [vmem:[#allocation8 + $0x98] sm:$0xf]
          %v8221 = vld [vmem:[#allocation8 + $0x9c] sm:$0xf]
          %v8222 = vld [vmem:[#allocation8 + $0xa0] sm:$0xf]
          %v8223 = vld [vmem:[#allocation8 + $0xa4] sm:$0xf]
          %v8224 = vld [vmem:[#allocation8 + $0xa8] sm:$0xf]
          %v8225 = vld [vmem:[#allocation8 + $0xac] sm:$0xf]
          %v8226 = vld [vmem:[#allocation8 + $0xb0] sm:$0xf]
          %v8227 = vld [vmem:[#allocation8 + $0xb4] sm:$0xf]
          %v8228 = vld [vmem:[#allocation8 + $0xb8] sm:$0xf]
          %v8229 = vld [vmem:[#allocation8 + $0xbc] sm:$0xf]
          %v8230 = vld [vmem:[#allocation8 + $0xc0] sm:$0xf]
          %v8231 = vld [vmem:[#allocation8 + $0xc4] sm:$0xf]
          %v8232 = vld [vmem:[#allocation8 + $0xc8] sm:$0xf]
          %v8233 = vld [vmem:[#allocation8 + $0xcc] sm:$0xf]
          %v8234 = vld [vmem:[#allocation8 + $0xd0] sm:$0xf]
          %v8235 = vld [vmem:[#allocation8 + $0xd4] sm:$0xf]
          %v8236 = vld [vmem:[#allocation8 + $0xd8] sm:$0xf]
          %v8237 = vld [vmem:[#allocation8 + $0xdc] sm:$0xf]
          %v8238 = vld [vmem:[#allocation8 + $0xe0] sm:$0xf]
          %v8239 = vld [vmem:[#allocation8 + $0xe4] sm:$0xf]
          %v8240 = vld [vmem:[#allocation8 + $0xe8] sm:$0xf]
          %v8241 = vld [vmem:[#allocation8 + $0xec] sm:$0xf]
          %v8242 = vld [vmem:[#allocation8 + $0xf0] sm:$0xf]
          %v8243 = vld [vmem:[#allocation8 + $0xf4] sm:$0xf]
          %v8244 = vld [vmem:[#allocation8 + $0xf8] sm:$0xf]
          %v8245 = vld [vmem:[#allocation8 + $0xfc] sm:$0xf]
          %v8246 = vld [vmem:[#allocation8 + $0x100] sm:$0xf]
          %v8247 = vld [vmem:[#allocation8 + $0x104] sm:$0xf]
          %v8248 = vld [vmem:[#allocation8 + $0x108] sm:$0xf]
          %v8249 = vld [vmem:[#allocation8 + $0x10c] sm:$0xf]
          %v8250 = vld [vmem:[#allocation8 + $0x110] sm:$0xf]
          %v8251 = vld [vmem:[#allocation8 + $0x114] sm:$0xf]
          %v8252 = vld [vmem:[#allocation8 + $0x118] sm:$0xf]
          %v8253 = vld [vmem:[#allocation8 + $0x11c] sm:$0xf]
          %v8254 = vld [vmem:[#allocation8 + $0x120] sm:$0xf]
          %v8255 = vld [vmem:[#allocation8 + $0x124] sm:$0xf]
          %v8256 = vld [vmem:[#allocation8 + $0x128] sm:$0xf]
          %v8257 = vld [vmem:[#allocation8 + $0x12c] sm:$0xf]
          %v8258 = vld [vmem:[#allocation8 + $0x130] sm:$0xf]
          %v8259 = vld [vmem:[#allocation8 + $0x134] sm:$0xf]
          %v8260 = vld [vmem:[#allocation8 + $0x138] sm:$0xf]
          %v8261 = vld [vmem:[#allocation8 + $0x13c] sm:$0xf]
          %v8262 = vld [vmem:[#allocation8 + $0x140] sm:$0xf]
          %v8263 = vld [vmem:[#allocation8 + $0x144] sm:$0xf]
          %v8264 = vld [vmem:[#allocation8 + $0x148] sm:$0xf]
          %v8265 = vld [vmem:[#allocation8 + $0x14c] sm:$0xf]
          %v8266 = vld [vmem:[#allocation8 + $0x150] sm:$0xf]
          %v8267 = vld [vmem:[#allocation8 + $0x154] sm:$0xf]
          %v8268 = vld [vmem:[#allocation8 + $0x158] sm:$0xf]
          %v8269 = vld [vmem:[#allocation8 + $0x15c] sm:$0xf]
          %v8270 = vld [vmem:[#allocation8 + $0x160] sm:$0xf]
          %v8271 = vld [vmem:[#allocation8 + $0x164] sm:$0xf]
          %v8272 = vld [vmem:[#allocation8 + $0x168] sm:$0xf]
          %v8273 = vld [vmem:[#allocation8 + $0x16c] sm:$0xf]
          %v8274 = vld [vmem:[#allocation8 + $0x170] sm:$0xf]
          %v8275 = vld [vmem:[#allocation8 + $0x174] sm:$0xf]
          %v8276 = vld [vmem:[#allocation8 + $0x178] sm:$0xf]
          %v8277 = vld [vmem:[#allocation8 + $0x17c] sm:$0xf]
          %v8278 = vld [vmem:[#allocation8 + $0x180] sm:$0xf]
          %v8279 = vld [vmem:[#allocation8 + $0x184] sm:$0xf]
          %v8280 = vld [vmem:[#allocation8 + $0x188] sm:$0xf]
          %v8281 = vld [vmem:[#allocation8 + $0x18c] sm:$0xf]
          %v8282 = vld [vmem:[#allocation8 + $0x190] sm:$0xf]
          %v8283 = vld [vmem:[#allocation8 + $0x194] sm:$0xf]
          %v8284 = vld [vmem:[#allocation8 + $0x198] sm:$0xf]
          %v8285 = vld [vmem:[#allocation8 + $0x19c] sm:$0xf]
          %v8286 = vld [vmem:[#allocation8 + $0x1a0] sm:$0xf]
          %v8287 = vld [vmem:[#allocation8 + $0x1a4] sm:$0xf]
          %v8288 = vld [vmem:[#allocation8 + $0x1a8] sm:$0xf]
          %v8289 = vld [vmem:[#allocation8 + $0x1ac] sm:$0xf]
          %v8290 = vld [vmem:[#allocation8 + $0x1b0] sm:$0xf]
          %v8291 = vld [vmem:[#allocation8 + $0x1b4] sm:$0xf]
          %v8292 = vld [vmem:[#allocation8 + $0x1b8] sm:$0xf]
          %v8293 = vld [vmem:[#allocation8 + $0x1bc] sm:$0xf]
          %v8294 = vld [vmem:[#allocation8 + $0x1c0] sm:$0xf]
          %v8295 = vld [vmem:[#allocation8 + $0x1c4] sm:$0xf]
          %v8296 = vld [vmem:[#allocation8 + $0x1c8] sm:$0xf]
          %v8297 = vld [vmem:[#allocation8 + $0x1cc] sm:$0xf]
          %v8298 = vld [vmem:[#allocation8 + $0x1d0] sm:$0xf]
          %v8299 = vld [vmem:[#allocation8 + $0x1d4] sm:$0xf]
          %v8300 = vld [vmem:[#allocation8 + $0x1d8] sm:$0xf]
          %v8301 = vld [vmem:[#allocation8 + $0x1dc] sm:$0xf]
          %v8302 = vld [vmem:[#allocation8 + $0x1e0] sm:$0xf]
          %v8303 = vld [vmem:[#allocation8 + $0x1e4] sm:$0xf]
          %v8304 = vld [vmem:[#allocation8 + $0x1e8] sm:$0xf]
          %v8305 = vld [vmem:[#allocation8 + $0x1ec] sm:$0xf]
          %v8306 = vld [vmem:[#allocation8 + $0x1f0] sm:$0xf]
          %v8307 = vld [vmem:[#allocation8 + $0x1f4] sm:$0xf]
          %v8308 = vld [vmem:[#allocation8 + $0x1f8] sm:$0xf]
          %v8309 = vld [vmem:[#allocation8 + $0x1fc] sm:$0xf]
          %v8310 = vld [vmem:[#allocation9] sm:$0x1]
          %v8312 = vlaneseq
          %v8313 = vshrl.u32 %v8312, 7
          %v8314 = vsub.s32 0, %v8313
          %v8315 = vrot.slane %v8310, %v8314
          %v8445 = vunpack.c.l.b16 %v8182
          %v8446 = vunpack.c.l.b16 %v8183
          %v8447 = vunpack.c.l.b16 %v8184
          %v8448 = vunpack.c.l.b16 %v8185
          %v8449 = vunpack.c.l.b16 %v8186
          %v8450 = vunpack.c.l.b16 %v8187
          %v8451 = vunpack.c.l.b16 %v8188
          %v8452 = vunpack.c.l.b16 %v8189
          %v8453 = vunpack.c.l.b16 %v8190
          %v8454 = vunpack.c.l.b16 %v8191
          %v8455 = vunpack.c.l.b16 %v8192
          %v8456 = vunpack.c.l.b16 %v8193
          %v8457 = vunpack.c.l.b16 %v8194
          %v8458 = vunpack.c.l.b16 %v8195
          %v8459 = vunpack.c.l.b16 %v8196
          %v8460 = vunpack.c.l.b16 %v8197
          %v8461 = vunpack.c.l.b16 %v8198
          %v8462 = vunpack.c.l.b16 %v8199
          %v8463 = vunpack.c.l.b16 %v8200
          %v8464 = vunpack.c.l.b16 %v8201
          %v8465 = vunpack.c.l.b16 %v8202
          %v8466 = vunpack.c.l.b16 %v8203
          %v8467 = vunpack.c.l.b16 %v8204
          %v8468 = vunpack.c.l.b16 %v8205
          %v8469 = vunpack.c.l.b16 %v8206
          %v8470 = vunpack.c.l.b16 %v8207
          %v8471 = vunpack.c.l.b16 %v8208
          %v8472 = vunpack.c.l.b16 %v8209
          %v8473 = vunpack.c.l.b16 %v8210
          %v8474 = vunpack.c.l.b16 %v8211
          %v8475 = vunpack.c.l.b16 %v8212
          %v8476 = vunpack.c.l.b16 %v8213
          %v8477 = vunpack.c.l.b16 %v8214
          %v8478 = vunpack.c.l.b16 %v8215
          %v8479 = vunpack.c.l.b16 %v8216
          %v8480 = vunpack.c.l.b16 %v8217
          %v8481 = vunpack.c.l.b16 %v8218
          %v8482 = vunpack.c.l.b16 %v8219
          %v8483 = vunpack.c.l.b16 %v8220
          %v8484 = vunpack.c.l.b16 %v8221
          %v8485 = vunpack.c.l.b16 %v8222
          %v8486 = vunpack.c.l.b16 %v8223
          %v8487 = vunpack.c.l.b16 %v8224
          %v8488 = vunpack.c.l.b16 %v8225
          %v8489 = vunpack.c.l.b16 %v8226
          %v8490 = vunpack.c.l.b16 %v8227
          %v8491 = vunpack.c.l.b16 %v8228
          %v8492 = vunpack.c.l.b16 %v8229
          %v8493 = vunpack.c.l.b16 %v8230
          %v8494 = vunpack.c.l.b16 %v8231
          %v8495 = vunpack.c.l.b16 %v8232
          %v8496 = vunpack.c.l.b16 %v8233
          %v8497 = vunpack.c.l.b16 %v8234
          %v8498 = vunpack.c.l.b16 %v8235
          %v8499 = vunpack.c.l.b16 %v8236
          %v8500 = vunpack.c.l.b16 %v8237
          %v8501 = vunpack.c.l.b16 %v8238
          %v8502 = vunpack.c.l.b16 %v8239
          %v8503 = vunpack.c.l.b16 %v8240
          %v8504 = vunpack.c.l.b16 %v8241
          %v8505 = vunpack.c.l.b16 %v8242
          %v8506 = vunpack.c.l.b16 %v8243
          %v8507 = vunpack.c.l.b16 %v8244
          %v8508 = vunpack.c.l.b16 %v8245
          %v8509 = vunpack.c.l.b16 %v8246
          %v8510 = vunpack.c.l.b16 %v8247
          %v8511 = vunpack.c.l.b16 %v8248
          %v8512 = vunpack.c.l.b16 %v8249
          %v8513 = vunpack.c.l.b16 %v8250
          %v8514 = vunpack.c.l.b16 %v8251
          %v8515 = vunpack.c.l.b16 %v8252
          %v8516 = vunpack.c.l.b16 %v8253
          %v8517 = vunpack.c.l.b16 %v8254
          %v8518 = vunpack.c.l.b16 %v8255
          %v8519 = vunpack.c.l.b16 %v8256
          %v8520 = vunpack.c.l.b16 %v8257
          %v8521 = vunpack.c.l.b16 %v8258
          %v8522 = vunpack.c.l.b16 %v8259
          %v8523 = vunpack.c.l.b16 %v8260
          %v8524 = vunpack.c.l.b16 %v8261
          %v8525 = vunpack.c.l.b16 %v8262
          %v8526 = vunpack.c.l.b16 %v8263
          %v8527 = vunpack.c.l.b16 %v8264
          %v8528 = vunpack.c.l.b16 %v8265
          %v8529 = vunpack.c.l.b16 %v8266
          %v8530 = vunpack.c.l.b16 %v8267
          %v8531 = vunpack.c.l.b16 %v8268
          %v8532 = vunpack.c.l.b16 %v8269
          %v8533 = vunpack.c.l.b16 %v8270
          %v8534 = vunpack.c.l.b16 %v8271
          %v8535 = vunpack.c.l.b16 %v8272
          %v8536 = vunpack.c.l.b16 %v8273
          %v8537 = vunpack.c.l.b16 %v8274
          %v8538 = vunpack.c.l.b16 %v8275
          %v8539 = vunpack.c.l.b16 %v8276
          %v8540 = vunpack.c.l.b16 %v8277
          %v8541 = vunpack.c.l.b16 %v8278
          %v8542 = vunpack.c.l.b16 %v8279
          %v8543 = vunpack.c.l.b16 %v8280
          %v8544 = vunpack.c.l.b16 %v8281
          %v8545 = vunpack.c.l.b16 %v8282
          %v8546 = vunpack.c.l.b16 %v8283
          %v8547 = vunpack.c.l.b16 %v8284
          %v8548 = vunpack.c.l.b16 %v8285
          %v8549 = vunpack.c.l.b16 %v8286
          %v8550 = vunpack.c.l.b16 %v8287
          %v8551 = vunpack.c.l.b16 %v8288
          %v8552 = vunpack.c.l.b16 %v8289
          %v8553 = vunpack.c.l.b16 %v8290
          %v8554 = vunpack.c.l.b16 %v8291
          %v8555 = vunpack.c.l.b16 %v8292
          %v8556 = vunpack.c.l.b16 %v8293
          %v8557 = vunpack.c.l.b16 %v8294
          %v8558 = vunpack.c.l.b16 %v8295
          %v8559 = vunpack.c.l.b16 %v8296
          %v8560 = vunpack.c.l.b16 %v8297
          %v8561 = vunpack.c.l.b16 %v8298
          %v8562 = vunpack.c.l.b16 %v8299
          %v8563 = vunpack.c.l.b16 %v8300
          %v8564 = vunpack.c.l.b16 %v8301
          %v8565 = vunpack.c.l.b16 %v8302
          %v8566 = vunpack.c.l.b16 %v8303
          %v8567 = vunpack.c.l.b16 %v8304
          %v8568 = vunpack.c.l.b16 %v8305
          %v8569 = vunpack.c.l.b16 %v8306
          %v8570 = vunpack.c.l.b16 %v8307
          %v8571 = vunpack.c.l.b16 %v8308
          %v8572 = vunpack.c.l.b16 %v8309
          %v8573 = vpack.c.b16 %v8446, %v8445
          %v8574 = vpack.c.b16 %v8448, %v8447
          %v8575 = vpack.c.b16 %v8450, %v8449
          %v8576 = vpack.c.b16 %v8452, %v8451
          %v8577 = vpack.c.b16 %v8454, %v8453
          %v8578 = vpack.c.b16 %v8456, %v8455
          %v8579 = vpack.c.b16 %v8458, %v8457
          %v8580 = vpack.c.b16 %v8460, %v8459
          %v8581 = vpack.c.b16 %v8462, %v8461
          %v8582 = vpack.c.b16 %v8464, %v8463
          %v8583 = vpack.c.b16 %v8466, %v8465
          %v8584 = vpack.c.b16 %v8468, %v8467
          %v8585 = vpack.c.b16 %v8470, %v8469
          %v8586 = vpack.c.b16 %v8472, %v8471
          %v8587 = vpack.c.b16 %v8474, %v8473
          %v8588 = vpack.c.b16 %v8476, %v8475
          %v8589 = vpack.c.b16 %v8478, %v8477
          %v8590 = vpack.c.b16 %v8480, %v8479
          %v8591 = vpack.c.b16 %v8482, %v8481
          %v8592 = vpack.c.b16 %v8484, %v8483
          %v8593 = vpack.c.b16 %v8486, %v8485
          %v8594 = vpack.c.b16 %v8488, %v8487
          %v8595 = vpack.c.b16 %v8490, %v8489
          %v8596 = vpack.c.b16 %v8492, %v8491
          %v8597 = vpack.c.b16 %v8494, %v8493
          %v8598 = vpack.c.b16 %v8496, %v8495
          %v8599 = vpack.c.b16 %v8498, %v8497
          %v8600 = vpack.c.b16 %v8500, %v8499
          %v8601 = vpack.c.b16 %v8502, %v8501
          %v8602 = vpack.c.b16 %v8504, %v8503
          %v8603 = vpack.c.b16 %v8506, %v8505
          %v8604 = vpack.c.b16 %v8508, %v8507
          %v8605 = vpack.c.b16 %v8510, %v8509
          %v8606 = vpack.c.b16 %v8512, %v8511
          %v8607 = vpack.c.b16 %v8514, %v8513
          %v8608 = vpack.c.b16 %v8516, %v8515
          %v8609 = vpack.c.b16 %v8518, %v8517
          %v8610 = vpack.c.b16 %v8520, %v8519
          %v8611 = vpack.c.b16 %v8522, %v8521
          %v8612 = vpack.c.b16 %v8524, %v8523
          %v8613 = vpack.c.b16 %v8526, %v8525
          %v8614 = vpack.c.b16 %v8528, %v8527
          %v8615 = vpack.c.b16 %v8530, %v8529
          %v8616 = vpack.c.b16 %v8532, %v8531
          %v8617 = vpack.c.b16 %v8534, %v8533
          %v8618 = vpack.c.b16 %v8536, %v8535
          %v8619 = vpack.c.b16 %v8538, %v8537
          %v8620 = vpack.c.b16 %v8540, %v8539
          %v8621 = vpack.c.b16 %v8542, %v8541
          %v8622 = vpack.c.b16 %v8544, %v8543
          %v8623 = vpack.c.b16 %v8546, %v8545
          %v8624 = vpack.c.b16 %v8548, %v8547
          %v8625 = vpack.c.b16 %v8550, %v8549
          %v8626 = vpack.c.b16 %v8552, %v8551
          %v8627 = vpack.c.b16 %v8554, %v8553
          %v8628 = vpack.c.b16 %v8556, %v8555
          %v8629 = vpack.c.b16 %v8558, %v8557
          %v8630 = vpack.c.b16 %v8560, %v8559
          %v8631 = vpack.c.b16 %v8562, %v8561
          %v8632 = vpack.c.b16 %v8564, %v8563
          %v8633 = vpack.c.b16 %v8566, %v8565
          %v8634 = vpack.c.b16 %v8568, %v8567
          %v8635 = vpack.c.b16 %v8570, %v8569
          %v8636 = vpack.c.b16 %v8572, %v8571
          %8701 = vmatprep.subr.bf16.mxu0 0
          %8702 = vmatpush1.bf16.msra.mxu0 %v8580
          %8703 = vmatprep.subr.bf16.mxu0 0
          %8704 = vmatpush1.bf16.msra.mxu0 %v8579
          %8705 = vmatprep.subr.bf16.mxu0 0
          %8706 = vmatpush1.bf16.msra.mxu0 %v8578
          %8707 = vmatprep.subr.bf16.mxu0 0
          %8708 = vmatpush1.bf16.msra.mxu0 %v8577
          %8709 = vmatprep.subr.bf16.mxu0 0
          %8710 = vmatpush1.bf16.msra.mxu0 %v8576
          %8711 = vmatprep.subr.bf16.mxu0 0
          %8712 = vmatpush1.bf16.msra.mxu0 %v8575
          %8713 = vmatprep.subr.bf16.mxu0 0
          %8714 = vmatpush1.bf16.msra.mxu0 %v8574
          %8715 = vmatprep.subr.bf16.mxu0 0
          %8716 = vmatpush1.bf16.msra.mxu0 %v8573
          %8717 = vmatprep.subr.bf16.mxu0 0
          %8718 = vmatpush2.bf16.msra.mxu0 %v8588
          %8719 = vmatprep.subr.bf16.mxu0 0
          %8720 = vmatpush2.bf16.msra.mxu0 %v8587
          %8721 = vmatprep.subr.bf16.mxu0 0
          %8722 = vmatpush2.bf16.msra.mxu0 %v8586
          %8723 = vmatprep.subr.bf16.mxu0 0
          %8724 = vmatpush2.bf16.msra.mxu0 %v8585
          %8725 = vmatprep.subr.bf16.mxu0 0
          %8726 = vmatpush2.bf16.msra.mxu0 %v8584
          %8727 = vmatprep.subr.bf16.mxu0 0
          %8728 = vmatpush2.bf16.msra.mxu0 %v8583
          %8729 = vmatprep.subr.bf16.mxu0 0
          %8730 = vmatpush2.bf16.msra.mxu0 %v8582
          %8731 = vmatprep.subr.bf16.mxu0 0
          %8732 = vmatpush2.bf16.msra.mxu0 %v8581
          %8733 = vmatprep.mubr.bf16.mxu0 %v8175
          %8734 = vmatmul.mubr.bf16.gmra.mxu0 %v8174
          %v8735 = vpop.f32.mrf.mxu0
          %v8736 = vadd.f32 %v8315, %v8735
          %v8737 = vpop.f32.mrf.mxu0
          %v8738 = vpop.f32.mrf.mxu0
          %v8739 = vpop.f32.mrf.mxu0
          %8740 = vdwg.mxu0
          %8741 = vmatprep.subr.bf16.mxu0 0
          %8742 = vmatpush1.bf16.msra.mxu0 %v8596
          %8743 = vmatprep.subr.bf16.mxu0 0
          %8744 = vmatpush1.bf16.msra.mxu0 %v8595
          %8745 = vmatprep.subr.bf16.mxu0 0
          %8746 = vmatpush1.bf16.msra.mxu0 %v8594
          %8747 = vmatprep.subr.bf16.mxu0 0
          %8748 = vmatpush1.bf16.msra.mxu0 %v8593
          %8749 = vmatprep.subr.bf16.mxu0 0
          %8750 = vmatpush1.bf16.msra.mxu0 %v8592
          %8751 = vmatprep.subr.bf16.mxu0 0
          %8752 = vmatpush1.bf16.msra.mxu0 %v8591
          %8753 = vmatprep.subr.bf16.mxu0 0
          %8754 = vmatpush1.bf16.msra.mxu0 %v8590
          %8755 = vmatprep.subr.bf16.mxu0 0
          %8756 = vmatpush1.bf16.msra.mxu0 %v8589
          %8757 = vmatprep.subr.bf16.mxu0 0
          %8758 = vmatpush2.bf16.msra.mxu0 %v8604
          %8759 = vmatprep.subr.bf16.mxu0 0
          %8760 = vmatpush2.bf16.msra.mxu0 %v8603
          %8761 = vmatprep.subr.bf16.mxu0 0
          %8762 = vmatpush2.bf16.msra.mxu0 %v8602
          %8763 = vmatprep.subr.bf16.mxu0 0
          %8764 = vmatpush2.bf16.msra.mxu0 %v8601
          %8765 = vmatprep.subr.bf16.mxu0 0
          %8766 = vmatpush2.bf16.msra.mxu0 %v8600
          %8767 = vmatprep.subr.bf16.mxu0 0
          %8768 = vmatpush2.bf16.msra.mxu0 %v8599
          %8769 = vmatprep.subr.bf16.mxu0 0
          %8770 = vmatpush2.bf16.msra.mxu0 %v8598
          %8771 = vmatprep.subr.bf16.mxu0 0
          %8772 = vmatpush2.bf16.msra.mxu0 %v8597
          %8773 = vmatprep.mubr.bf16.mxu0 %v8177
          %8774 = vmatmul.mubr.bf16.gmra.mxu0 %v8176
          %v8775 = vpop.f32.mrf.mxu0
          %v8776 = vadd.f32 %v8736, %v8775
          %v8777 = vpop.f32.mrf.mxu0
          %v8778 = vpop.f32.mrf.mxu0
          %v8779 = vpop.f32.mrf.mxu0
          %8780 = vdwg.mxu0
          %8781 = vmatprep.subr.bf16.mxu0 0
          %8782 = vmatpush1.bf16.msra.mxu0 %v8612
          %8783 = vmatprep.subr.bf16.mxu0 0
          %8784 = vmatpush1.bf16.msra.mxu0 %v8611
          %8785 = vmatprep.subr.bf16.mxu0 0
          %8786 = vmatpush1.bf16.msra.mxu0 %v8610
          %8787 = vmatprep.subr.bf16.mxu0 0
          %8788 = vmatpush1.bf16.msra.mxu0 %v8609
          %8789 = vmatprep.subr.bf16.mxu0 0
          %8790 = vmatpush1.bf16.msra.mxu0 %v8608
          %8791 = vmatprep.subr.bf16.mxu0 0
          %8792 = vmatpush1.bf16.msra.mxu0 %v8607
          %8793 = vmatprep.subr.bf16.mxu0 0
          %8794 = vmatpush1.bf16.msra.mxu0 %v8606
          %8795 = vmatprep.subr.bf16.mxu0 0
          %8796 = vmatpush1.bf16.msra.mxu0 %v8605
          %8797 = vmatprep.subr.bf16.mxu0 0
          %8798 = vmatpush2.bf16.msra.mxu0 %v8620
          %8799 = vmatprep.subr.bf16.mxu0 0
          %8800 = vmatpush2.bf16.msra.mxu0 %v8619
          %8801 = vmatprep.subr.bf16.mxu0 0
          %8802 = vmatpush2.bf16.msra.mxu0 %v8618
          %8803 = vmatprep.subr.bf16.mxu0 0
          %8804 = vmatpush2.bf16.msra.mxu0 %v8617
          %8805 = vmatprep.subr.bf16.mxu0 0
          %8806 = vmatpush2.bf16.msra.mxu0 %v8616
          %8807 = vmatprep.subr.bf16.mxu0 0
          %8808 = vmatpush2.bf16.msra.mxu0 %v8615
          %8809 = vmatprep.subr.bf16.mxu0 0
          %8810 = vmatpush2.bf16.msra.mxu0 %v8614
          %8811 = vmatprep.subr.bf16.mxu0 0
          %8812 = vmatpush2.bf16.msra.mxu0 %v8613
          %8813 = vmatprep.mubr.bf16.mxu0 %v8179
          %8814 = vmatmul.mubr.bf16.gmra.mxu0 %v8178
          %v8815 = vpop.f32.mrf.mxu0
          %v8816 = vadd.f32 %v8776, %v8815
          %v8817 = vpop.f32.mrf.mxu0
          %v8818 = vpop.f32.mrf.mxu0
          %v8819 = vpop.f32.mrf.mxu0
          %8820 = vdwg.mxu0
          %8821 = vmatprep.subr.bf16.mxu0 0
          %8822 = vmatpush1.bf16.msra.mxu0 %v8628
          %8823 = vmatprep.subr.bf16.mxu0 0
          %8824 = vmatpush1.bf16.msra.mxu0 %v8627
          %8825 = vmatprep.subr.bf16.mxu0 0
          %8826 = vmatpush1.bf16.msra.mxu0 %v8626
          %8827 = vmatprep.subr.bf16.mxu0 0
          %8828 = vmatpush1.bf16.msra.mxu0 %v8625
          %8829 = vmatprep.subr.bf16.mxu0 0
          %8830 = vmatpush1.bf16.msra.mxu0 %v8624
          %8831 = vmatprep.subr.bf16.mxu0 0
          %8832 = vmatpush1.bf16.msra.mxu0 %v8623
          %8833 = vmatprep.subr.bf16.mxu0 0
          %8834 = vmatpush1.bf16.msra.mxu0 %v8622
          %8835 = vmatprep.subr.bf16.mxu0 0
          %8836 = vmatpush1.bf16.msra.mxu0 %v8621
          %8837 = vmatprep.subr.bf16.mxu0 0
          %8838 = vmatpush2.bf16.msra.mxu0 %v8636
          %8839 = vmatprep.subr.bf16.mxu0 0
          %8840 = vmatpush2.bf16.msra.mxu0 %v8635
          %8841 = vmatprep.subr.bf16.mxu0 0
          %8842 = vmatpush2.bf16.msra.mxu0 %v8634
          %8843 = vmatprep.subr.bf16.mxu0 0
          %8844 = vmatpush2.bf16.msra.mxu0 %v8633
          %8845 = vmatprep.subr.bf16.mxu0 0
          %8846 = vmatpush2.bf16.msra.mxu0 %v8632
          %8847 = vmatprep.subr.bf16.mxu0 0
          %8848 = vmatpush2.bf16.msra.mxu0 %v8631
          %8849 = vmatprep.subr.bf16.mxu0 0
          %8850 = vmatpush2.bf16.msra.mxu0 %v8630
          %8851 = vmatprep.subr.bf16.mxu0 0
          %8852 = vmatpush2.bf16.msra.mxu0 %v8629
          %8853 = vmatprep.mubr.bf16.mxu0 %v8181
          %8854 = vmatmul.mubr.bf16.gmra.mxu0 %v8180
          %v8855 = vpop.f32.mrf.mxu0
          %v8856 = vadd.f32 %v8816, %v8855
          %v8857 = vpop.f32.mrf.mxu0
          %v8858 = vpop.f32.mrf.mxu0
          %v8859 = vpop.f32.mrf.mxu0
          %8860 = vdwg.mxu0
          %v8861 = vmax.f32 %v8856, 0.0
          %v8862 = vld [vmem:[%s5] sm:$0xff]
          %v8863 = vld [vmem:[%s5 + $0x8] sm:$0xff]
          %v8864 = vld [vmem:[%s5 + $0x10] sm:$0xff]
          %v8865 = vld [vmem:[%s5 + $0x18] sm:$0xff]
          %v8866 = vld [vmem:[%s5 + $0x20] sm:$0xff]
          %v8867 = vld [vmem:[%s5 + $0x28] sm:$0xff]
          %v8868 = vld [vmem:[%s5 + $0x30] sm:$0xff]
          %v8869 = vld [vmem:[%s5 + $0x38] sm:$0xff]
          %v8870 = vld [vmem:[%s5 + $0x40] sm:$0xff]
          %v8871 = vld [vmem:[%s5 + $0x48] sm:$0xff]
          %v8872 = vld [vmem:[%s5 + $0x50] sm:$0xff]
          %v8873 = vld [vmem:[%s5 + $0x58] sm:$0xff]
          %v8874 = vld [vmem:[%s5 + $0x60] sm:$0xff]
          %v8875 = vld [vmem:[%s5 + $0x68] sm:$0xff]
          %v8876 = vld [vmem:[%s5 + $0x70] sm:$0xff]
          %v8877 = vld [vmem:[%s5 + $0x78] sm:$0xff]
          %v8878 = vld [vmem:[#allocation11] sm:$0x1]
          %v8880 = vlaneseq
          %v8881 = vshrl.u32 %v8880, 7
          %v8882 = vsub.s32 0, %v8881
          %v8883 = vrot.slane %v8878, %v8882
          %8885 = vmatprep.subr.mxu0 0.0
          %8886 = vmatpush1.msra.mxu0 %v8877
          %8887 = vmatprep.subr.mxu0 0.0
          %8888 = vmatpush1.msra.mxu0 %v8876
          %8889 = vmatprep.subr.mxu0 0.0
          %8890 = vmatpush1.msra.mxu0 %v8875
          %8891 = vmatprep.subr.mxu0 0.0
          %8892 = vmatpush1.msra.mxu0 %v8874
          %8893 = vmatprep.subr.mxu0 0.0
          %8894 = vmatpush1.msra.mxu0 %v8873
          %8895 = vmatprep.subr.mxu0 0.0
          %8896 = vmatpush1.msra.mxu0 %v8872
          %8897 = vmatprep.subr.mxu0 0.0
          %8898 = vmatpush1.msra.mxu0 %v8871
          %8899 = vmatprep.subr.mxu0 0.0
          %8900 = vmatpush1.msra.mxu0 %v8870
          %8901 = vmatprep.subr.mxu0 0.0
          %8902 = vmatpush1.msra.mxu0 %v8869
          %8903 = vmatprep.subr.mxu0 0.0
          %8904 = vmatpush1.msra.mxu0 %v8868
          %8905 = vmatprep.subr.mxu0 0.0
          %8906 = vmatpush1.msra.mxu0 %v8867
          %8907 = vmatprep.subr.mxu0 0.0
          %8908 = vmatpush1.msra.mxu0 %v8866
          %8909 = vmatprep.subr.mxu0 0.0
          %8910 = vmatpush1.msra.mxu0 %v8865
          %8911 = vmatprep.subr.mxu0 0.0
          %8912 = vmatpush1.msra.mxu0 %v8864
          %8913 = vmatprep.subr.mxu0 0.0
          %8914 = vmatpush1.msra.mxu0 %v8863
          %8915 = vmatprep.subr.mxu0 0.0
          %8916 = vmatpush1.msra.mxu0 %v8862
          %8917 = vmatprep.subr.mxu0 0.0
          %8918 = vmatpush2.msra.mxu0 0.0
          %8919 = vmatprep.subr.mxu0 0.0
          %8920 = vmatpush2.msra.mxu0 0.0
          %8921 = vmatprep.subr.mxu0 0.0
          %8922 = vmatpush2.msra.mxu0 0.0
          %8923 = vmatprep.subr.mxu0 0.0
          %8924 = vmatpush2.msra.mxu0 0.0
          %8925 = vmatprep.subr.mxu0 0.0
          %8926 = vmatpush2.msra.mxu0 0.0
          %8927 = vmatprep.subr.mxu0 0.0
          %8928 = vmatpush2.msra.mxu0 0.0
          %8929 = vmatprep.subr.mxu0 0.0
          %8930 = vmatpush2.msra.mxu0 0.0
          %8931 = vmatprep.subr.mxu0 0.0
          %8932 = vmatpush2.msra.mxu0 0.0
          %8933 = vmatprep.subr.mxu0 0.0
          %8934 = vmatpush2.msra.mxu0 0.0
          %8935 = vmatprep.subr.mxu0 0.0
          %8936 = vmatpush2.msra.mxu0 0.0
          %8937 = vmatprep.subr.mxu0 0.0
          %8938 = vmatpush2.msra.mxu0 0.0
          %8939 = vmatprep.subr.mxu0 0.0
          %8940 = vmatpush2.msra.mxu0 0.0
          %8941 = vmatprep.subr.mxu0 0.0
          %8942 = vmatpush2.msra.mxu0 0.0
          %8943 = vmatprep.subr.mxu0 0.0
          %8944 = vmatpush2.msra.mxu0 0.0
          %8945 = vmatprep.subr.mxu0 0.0
          %8946 = vmatpush2.msra.mxu0 0.0
          %8947 = vmatprep.subr.mxu0 0.0
          %8948 = vmatpush2.msra.mxu0 0.0
          %8949 = vmatprep.mubr.f32.mxu0 0.0
          %8950 = vmatmul.mubr.f32.gmra.mxu0 %v8861
          %v8951 = vpop.f32.mrf.mxu0
          %v8952 = vadd.f32 %v8883, %v8951
          %v8953 = vpop.f32.mrf.mxu0
          %8954 = vdwg.mxu0
          %v8955 = vmax.f32 %v8952, 0.0
          %v8956 = vld [vmem:[#allocation12] sm:$0x1]
          %v8958 = vlaneseq
          %v8959 = vshrl.u32 %v8958, 7
          %v8960 = vsub.s32 0, %v8959
          %v8961 = vrot.slane %v8956, %v8960
          %v8963 = vmul.f32 %v8955, %v8961
          %vm8964 = vcmask 123904
          %v8965 = vsel %vm8964, %v8963, 0.0
          %8966 = vadd.xlane.f32.xlu0 %v8965
          %v8967 = vpop.xlane.xlu0 %8966
          %v8968 = vld [vmem:[#allocation3] sm:$0x1]
          %v8970 = vlaneseq
          %v8971 = vshrl.u32 %v8970, 7
          %v8972 = vsub.s32 0, %v8971
          %v8973 = vrot.slane %v8968, %v8972
          %v8975 = vadd.f32 %v8967, %v8973
          %v8976 = vxor.u32 %v8975, 2147483648
          %v8977 = vmul.f32 %v8976, 1.442695
          %v8978 = vpow.pop %v8977
          %v8979 = vadd.f32 %v8978, 1.0
          %v8980 = vrcp.pop %v8979
          %v8981 = vmul.f32 1.0, %v8980
          %vm8982 = vcmask 1024
          %8983 = vst.msk [vmem:[%s9] sm:$0x3] %vm8982, %v8981
        $region88: #{discriminator_forward.1} parent=55 // pred_fallthru
          _
        // Predicated region
        $region89: #{discriminator_forward.1} parent=55 // pred_check
          %p8984 = pneg %p240
        $region90: #{discriminator_forward.1} parent=55 // pred_check_branch
          %8986 = sbr.rel (%p8984) target = $region92
        $region91: #{discriminator_forward.1} parent=55 // pred_region
          _
        $region92: #{discriminator_forward.1} parent=55 // pred_fallthru
          _
        // Predicated region
        $region93: #{discriminator_forward.1} parent=55 // pred_check
          %p8987 = pneg %p240
        $region94: #{discriminator_forward.1} parent=55 // pred_check_branch
          %8989 = sbr.rel (%p8987) target = $region96
        $region95: #{discriminator_forward.1} parent=55 // pred_region
          _
        $region96: #{discriminator_forward.1} parent=55 // pred_fallthru
          _
      $region56: #{discriminator_forward.1} parent=5 // pred_fallthru
        _
      %p8990 = scmp.le.s32.totalorder 2, %s23
      // Predicated region
      $region97: #{discriminator_forward.1} parent=5 // pred_check
        %p8991 = pneg %p8990
      $region98: #{discriminator_forward.1} parent=5 // pred_check_branch
        %8993 = sbr.rel (%p8991) target = $region100
      $region99: #{discriminator_forward.1} parent=5 // pred_region
        %s8994 = ssub.s32 %s23, 2
      $region100: #{discriminator_forward.1} parent=5 // pred_fallthru
        _
    $region6: #{discriminator_forward.1} parent=1 // loop_footer
      %s27 = sadd.s32 1, %s23
    $region7: #{discriminator_forward.1} parent=1 // loop_footer_branch
      %22 = sbr.rel target = $region3
    $region8: #{discriminator_forward.1} parent=1 // loop_exit
      _
    %8995 = vsyncpa [#allocation5], 1
    %s8996 = scalar_lea.sflag [#allocation5], 1
    %8997 = vsyncpa %s8996, 1
    %8998 = vsyncpa [#allocation7], 1
    %8999 = vsyncpa [#allocation10], 1
    %9000 = vsyncpa [#allocation13], 1

</llo_original>
